<compile_context>
chip_gen: v6e
topology: v6e:2x2x1
jax: 0.10.0
libtpu: 0.0.40
codegen_flags: <defaults>
</compile_context>

<pallas_src>
import functools
import math

import jax
import jax.numpy as jnp
from jax import lax
from jax.experimental import pallas as pl
from jax.experimental.pallas import tpu as pltpu


# ----------------------------------------------------------------------------- kernel
def _mha_kernel(x_ref, wqkv_ref, wo_ref, o_ref, *,
                batch, seq, heads, key_size, masked, compute_dtype):
    B, S, H, K = batch, seq, heads, key_size
    HK = H * K
    exact = jnp.dtype(compute_dtype) == jnp.dtype(jnp.float32)

    x = x_ref[...].astype(compute_dtype)                                   # (B*S, E)

    # Fused Q/K/V projection: one (B*S, E) @ (E, 3*H*K) MXU matmul, one weight DMA.
    qkv = jnp.dot(x, wqkv_ref[...], preferred_element_type=jnp.float32)   # (B*S, 3*HK) f32

    # Fold 1/sqrt(K) into Q once, in f32, before the (optional) low-precision cast.
    scale = jnp.float32(1.0 / math.sqrt(K))
    q = (qkv[:, 0 * HK:1 * HK] * scale).astype(compute_dtype).reshape(B, S, HK)
    k = qkv[:, 1 * HK:2 * HK].astype(compute_dtype).reshape(B, S, HK)
    v = qkv[:, 2 * HK:3 * HK].astype(compute_dtype).reshape(B, S, HK)

    # Head-invariant causal bias, built & broadcast once (hoisted out of the loop).
    if masked:
        row = lax.broadcasted_iota(jnp.int32, (S, S), 0)
        col = lax.broadcasted_iota(jnp.int32, (S, S), 1)
        bias = jnp.where(col > row, jnp.float32(-1e32), jnp.float32(0.0))  # (S, S)
        bias = jnp.broadcast_to(bias[None, :, :], (B, S, S))

    # Per-head attention, batched over sequences.  Single-batch-dim einsums are the
    # proven Mosaic dot_general path; H is small so the loop is a static unroll.
    # TODO(synk): a fully head-batched (B*H)-batch contraction would remove the
    # K-wide lane slices / concat but needs an in-kernel (B,S,H,K)->(B,H,S,K) relayout.
    head_outs = []
    for h in range(H):
        sl = slice(h * K, (h + 1) * K)
        s = jnp.einsum('bsk,btk->bst', q[:, :, sl], k[:, :, sl],
                       preferred_element_type=jnp.float32)                # (B, S, S) f32
        if masked:
            s = s + bias
        # Numerically-stable softmax in f32.  Approximate EUP reciprocal only on the
        # low-precision path; the f32 default path is exact.
        m = jnp.max(s, axis=-1, keepdims=True)
        e = jnp.exp(s - m)
        d = jnp.sum(e, axis=-1, keepdims=True)
        p = e / d if exact else e * pl.reciprocal(d, approx=True)
        head_outs.append(jnp.einsum('bst,btk->bsk', p.astype(compute_dtype),
                                    v[:, :, sl],
                                    preferred_element_type=jnp.float32))  # (B, S, K)

    concat = (jnp.concatenate(head_outs, axis=-1)
              .astype(compute_dtype).reshape(B * S, HK))
    # Single output matmul, written straight to o_ref as one (B*S, E) slab store.
    o_ref[...] = jnp.dot(concat, wo_ref[...],
                         preferred_element_type=jnp.float32).astype(o_ref.dtype)


# ----------------------------------------------------------------------------- wrapper
def prepare_params(wq, wk, wv, w, *, compute_dtype=jnp.float32):
    """One-time packing of per-head weights into kernel layout.

    Call at parameter-init time, NOT per forward call: the transpose / reshape /
    concat / cast ops are separate, un-hidden XLA ops that would otherwise be
    re-executed on every invocation.

    wq, wk, wv : (H, E, K) per-head projection weights
    w          : (H*K, E) output projection
    returns (w_qkv: (E, 3*H*K), w_o: (H*K, E)) in compute_dtype.
    """
    H, E, K = wq.shape
    if wk.shape != (H, E, K) or wv.shape != (H, E, K):
        raise ValueError(f"wq/wk/wv shapes disagree: {wq.shape} {wk.shape} {wv.shape}")
    if w.shape != (H * K, E):
        raise ValueError(f"w must be ({H * K}, {E}), got {w.shape}")

    def pack(p):  # (H, E, K) -> (E, H*K), head-major lanes (matches torch.cat order)
        return jnp.transpose(p, (1, 0, 2)).reshape(E, H * K)

    w_qkv = jnp.concatenate([pack(wq), pack(wk), pack(wv)], axis=1).astype(compute_dtype)
    w_o = w.astype(compute_dtype)
    return w_qkv, w_o


@functools.partial(jax.jit, static_argnames=("heads", "masked", "compute_dtype"))
def multi_head_attention(x, w_qkv, w_o, *, heads, masked=False,
                         compute_dtype=jnp.float32):
    """MultiHeadAttention.forward (self-attention path), batched over sequences.

    x      : (B, S, E) or (S, E) float32
    w_qkv  : (E, 3*heads*K)   packed by prepare_params
    w_o    : (heads*K, E)
    returns same leading shape as x, (…, S, E) float32.
    """
    squeeze = x.ndim == 2
    if squeeze:
        x = x[None]
    B, S, E = x.shape
    assert w_qkv.shape[0] == E and w_qkv.shape[1] % (3 * heads) == 0
    K = w_qkv.shape[1] // (3 * heads)
    assert w_o.shape == (heads * K, E)

    kernel = functools.partial(_mha_kernel, batch=B, seq=S, heads=heads,
                               key_size=K, masked=masked,
                               compute_dtype=compute_dtype)
    out = pl.pallas_call(
        kernel,
        out_shape=jax.ShapeDtypeStruct((B * S, E), jnp.float32),
        in_specs=[pl.BlockSpec(memory_space=pltpu.MemorySpace.VMEM)] * 3,
        out_specs=pl.BlockSpec(memory_space=pltpu.MemorySpace.VMEM),
    )(x.reshape(B * S, E).astype(jnp.float32), w_qkv, w_o)

    out = out.reshape(B, S, E)
    return out[0] if squeeze else out


# ----------------------------------------------------------------------------- references
def _reference_exact(x, wq, wk, wv, w, *, masked=False):
    """Pure-f32 JAX mirror of the PyTorch module, vmapped over the batch."""
    H, E, K = wq.shape
    hi = jax.lax.Precision.HIGHEST

    def one_seq(xs):                                        # xs: (S, E)
        outs = []
        for h in range(H):
            q = jnp.dot(xs, wq[h], precision=hi)
            k = jnp.dot(xs, wk[h], precision=hi)
            v = jnp.dot(xs, wv[h], precision=hi)
            s = jnp.dot(q, k.T, precision=hi) / jnp.sqrt(jnp.float32(K))
            if masked:
                m = jnp.triu(jnp.ones_like(s), k=1)
                s = jnp.where(m > 0, jnp.float32(-1e32), s)
            outs.append(jnp.dot(jax.nn.softmax(s, axis=-1), v, precision=hi))
        return jnp.dot(jnp.concatenate(outs, axis=1), w, precision=hi)

    return jax.vmap(one_seq)(x)


def _reference_like_kernel(x, w_qkv, w_o, *, heads, masked, compute_dtype):
    """Pure-JAX emulation with the same operand-dtype policy as the kernel
    (low-precision MXU operands, f32 accumulation, f32 softmax)."""
    B, S, E = x.shape
    HK = w_o.shape[0]
    K = HK // heads
    xc = x.reshape(B * S, E).astype(compute_dtype)
    qkv = jnp.dot(xc, w_qkv, preferred_element_type=jnp.float32)
    scale = jnp.float32(1.0 / math.sqrt(K))
    q = (qkv[:, :HK] * scale).astype(compute_dtype).reshape(B, S, HK)
    k = qkv[:, HK:2 * HK].astype(compute_dtype).reshape(B, S, HK)
    v = qkv[:, 2 * HK:].astype(compute_dtype).reshape(B, S, HK)
    outs = []
    for h in range(heads):
        sl = slice(h * K, (h + 1) * K)
        s = jnp.einsum('bsk,btk->bst', q[:, :, sl], k[:, :, sl],
                       preferred_element_type=jnp.float32)
        if masked:
            m = jnp.triu(jnp.ones((S, S), jnp.float32), k=1)[None]
            s = jnp.where(m > 0, jnp.float32(-1e32), s)
        p = jax.nn.softmax(s, axis=-1)
        outs.append(jnp.einsum('bst,btk->bsk', p.astype(compute_dtype), v[:, :, sl],
                               preferred_element_type=jnp.float32))
    c = jnp.concatenate(outs, axis=-1).astype(compute_dtype).reshape(B * S, HK)
    return jnp.dot(c, w_o, preferred_element_type=jnp.float32).reshape(B, S, E)


# ----------------------------------------------------------------------------- demo
if __name__ == "__main__":
    # Module-consistent sizes: seq=8, embedding=32, key=16, heads=4.
    # BATCH=16 -> B*S = 128 rows fills the sublanes of every matmul / store.
    SEQ, EMB, KEY, HEADS, BATCH = 8, 32, 16, 4, 16

    key = jax.random.PRNGKey(0)
    kx, kq, kk, kv, kw = jax.random.split(key, 5)
    x = jax.random.normal(kx, (BATCH, SEQ, EMB), dtype=jnp.float32)
    # 0.25 weight scale keeps attention logits O(1) so precision checks are not
    # dominated by near-degenerate softmax ties; forward semantics are unchanged.
    Wq = 0.25 * jax.random.normal(kq, (HEADS, EMB, KEY), dtype=jnp.float32)
    Wk = 0.25 * jax.random.normal(kk, (HEADS, EMB, KEY), dtype=jnp.float32)
    Wv = 0.25 * jax.random.normal(kv, (HEADS, EMB, KEY), dtype=jnp.float32)
    W = 0.25 * jax.random.normal(kw, (HEADS * KEY, EMB), dtype=jnp.float32)

    # One-time parameter packing (per compute dtype), outside the call path.
    wqkv_f32, wo_f32 = prepare_params(Wq, Wk, Wv, W, compute_dtype=jnp.float32)
    wqkv_bf16, wo_bf16 = prepare_params(Wq, Wk, Wv, W, compute_dtype=jnp.bfloat16)

    for masked in (False, True):
        ref = _reference_exact(x, Wq, Wk, Wv, W, masked=masked)

        # Default f32 compute path: exact softmax, tight check against the module.
        out32 = jax.block_until_ready(
            multi_head_attention(x, wqkv_f32, wo_f32, heads=HEADS, masked=masked,
                                 compute_dtype=jnp.float32))
        assert out32.shape == (BATCH, SEQ, EMB)
        err32 = jnp.max(jnp.abs(out32 - ref))
        assert jnp.allclose(out32, ref, rtol=1e-3, atol=1e-1), \
            f"masked={masked}: f32 path max abs diff {err32}"

        # bf16 MXU-operand path (v6e/v7x): checked against a dtype-matched
        # reference (the remaining deltas are the approx-EUP reciprocal and
        # accumulation order).
        out16 = jax.block_until_ready(
            multi_head_attention(x, wqkv_bf16, wo_bf16, heads=HEADS, masked=masked,
                                 compute_dtype=jnp.bfloat16))
        ref16 = _reference_like_kernel(x, wqkv_bf16, wo_bf16, heads=HEADS,
                                       masked=masked, compute_dtype=jnp.bfloat16)
        err16 = jnp.max(jnp.abs(out16 - ref16))
        assert jnp.allclose(out16, ref16, rtol=1e-2, atol=1e-1), \
            f"masked={masked}: bf16 path max abs diff {err16}"

    print("KERNEL_OK")
</pallas_src>

<mosaic_0001>
module attributes {stable_mosaic.version = 11 : i64} {
  func.func @_mha_kernel(%arg0: memref<128x32xf32, #tpu.memory_space<vmem>>, %arg1: memref<32x192xf32, #tpu.memory_space<vmem>>, %arg2: memref<64x32xf32, #tpu.memory_space<vmem>>, %arg3: memref<128x32xf32, #tpu.memory_space<vmem>>) attributes {dimension_semantics = [], scalar_prefetch = 0 : i64, scratch_operands = 0 : i64, tpu.core_type = #tpu.core_type<tc>} {
    %c0 = arith.constant 0 : index
    %c0_0 = arith.constant 0 : index
    %0 = vector.load %arg0[%c0, %c0_0] : memref<128x32xf32, #tpu.memory_space<vmem>>, vector<128x32xf32>
    %c0_1 = arith.constant 0 : index
    %c0_2 = arith.constant 0 : index
    %1 = vector.load %arg1[%c0_1, %c0_2] : memref<32x192xf32, #tpu.memory_space<vmem>>, vector<32x192xf32>
    %cst = arith.constant dense<0.000000e+00> : vector<128x192xf32>
    %2 = tpu.matmul %0, %1, %cst {dimension_numbers = #tpu.dot_dimension_numbers<[1], [0], [0], [1], [0, 0, 1, 1], [], []>} : vector<128x32xf32>, vector<32x192xf32>, vector<128x192xf32> -> vector<128x192xf32>
    %3 = vector.extract_strided_slice %2 {offsets = [0, 0], sizes = [128, 64], strides = [1, 1]} : vector<128x192xf32> to vector<128x64xf32>
    %cst_3 = arith.constant 2.500000e-01 : f32
    %4 = vector.broadcast %cst_3 : f32 to vector<128x64xf32>
    %5 = arith.mulf %3, %4 : vector<128x64xf32>
    %6 = vector.shape_cast %5 : vector<128x64xf32> to vector<16x8x64xf32>
    %7 = vector.extract_strided_slice %2 {offsets = [0, 64], sizes = [128, 64], strides = [1, 1]} : vector<128x192xf32> to vector<128x64xf32>
    %8 = vector.shape_cast %7 : vector<128x64xf32> to vector<16x8x64xf32>
    %9 = vector.extract_strided_slice %2 {offsets = [0, 128], sizes = [128, 64], strides = [1, 1]} : vector<128x192xf32> to vector<128x64xf32>
    %10 = vector.shape_cast %9 : vector<128x64xf32> to vector<16x8x64xf32>
    %11 = vector.extract_strided_slice %6 {offsets = [0, 0, 0], sizes = [16, 8, 16], strides = [1, 1, 1]} : vector<16x8x64xf32> to vector<16x8x16xf32>
    %12 = vector.extract_strided_slice %8 {offsets = [0, 0, 0], sizes = [16, 8, 16], strides = [1, 1, 1]} : vector<16x8x64xf32> to vector<16x8x16xf32>
    "tpu.trace_start"() <{level = 10 : i32, message = "bsk,btk->bst"}> : () -> ()
    %cst_4 = arith.constant dense<0.000000e+00> : vector<16x8x8xf32>
    %13 = tpu.matmul %11, %12, %cst_4 {dimension_numbers = #tpu.dot_dimension_numbers<[2], [2], [1], [1], [0, 0, 0, 1, 1, 1], [0], [0]>} : vector<16x8x16xf32>, vector<16x8x16xf32>, vector<16x8x8xf32> -> vector<16x8x8xf32>
    "tpu.trace_stop"() : () -> ()
    %cst_5 = arith.constant dense<0xFF800000> : vector<16x8xf32>
    %14 = vector.multi_reduction <maximumf>, %13, %cst_5 [2] : vector<16x8x8xf32> to vector<16x8xf32>
    %15 = vector.shape_cast %14 : vector<16x8xf32> to vector<16x8x1xf32>
    %16 = vector.broadcast %15 : vector<16x8x1xf32> to vector<16x8x8xf32>
    %17 = arith.subf %13, %16 : vector<16x8x8xf32>
    %18 = math.exp %17 : vector<16x8x8xf32>
    %cst_6 = arith.constant dense<0.000000e+00> : vector<16x8xf32>
    %19 = vector.multi_reduction <add>, %18, %cst_6 [2] : vector<16x8x8xf32> to vector<16x8xf32>
    %20 = vector.shape_cast %19 : vector<16x8xf32> to vector<16x8x1xf32>
    %21 = vector.broadcast %20 : vector<16x8x1xf32> to vector<16x8x8xf32>
    %22 = arith.divf %18, %21 : vector<16x8x8xf32>
    %23 = vector.extract_strided_slice %10 {offsets = [0, 0, 0], sizes = [16, 8, 16], strides = [1, 1, 1]} : vector<16x8x64xf32> to vector<16x8x16xf32>
    "tpu.trace_start"() <{level = 10 : i32, message = "bst,btk->bsk"}> : () -> ()
    %cst_7 = arith.constant dense<0.000000e+00> : vector<16x8x16xf32>
    %24 = tpu.matmul %22, %23, %cst_7 {dimension_numbers = #tpu.dot_dimension_numbers<[2], [1], [1], [2], [0, 0, 0, 1, 1, 2], [0], [0]>} : vector<16x8x8xf32>, vector<16x8x16xf32>, vector<16x8x16xf32> -> vector<16x8x16xf32>
    "tpu.trace_stop"() : () -> ()
    %25 = vector.extract_strided_slice %6 {offsets = [0, 0, 16], sizes = [16, 8, 16], strides = [1, 1, 1]} : vector<16x8x64xf32> to vector<16x8x16xf32>
    %26 = vector.extract_strided_slice %8 {offsets = [0, 0, 16], sizes = [16, 8, 16], strides = [1, 1, 1]} : vector<16x8x64xf32> to vector<16x8x16xf32>
    "tpu.trace_start"() <{level = 10 : i32, message = "bsk,btk->bst"}> : () -> ()
    %cst_8 = arith.constant dense<0.000000e+00> : vector<16x8x8xf32>
    %27 = tpu.matmul %25, %26, %cst_8 {dimension_numbers = #tpu.dot_dimension_numbers<[2], [2], [1], [1], [0, 0, 0, 1, 1, 1], [0], [0]>} : vector<16x8x16xf32>, vector<16x8x16xf32>, vector<16x8x8xf32> -> vector<16x8x8xf32>
    "tpu.trace_stop"() : () -> ()
    %cst_9 = arith.constant dense<0xFF800000> : vector<16x8xf32>
    %28 = vector.multi_reduction <maximumf>, %27, %cst_9 [2] : vector<16x8x8xf32> to vector<16x8xf32>
    %29 = vector.shape_cast %28 : vector<16x8xf32> to vector<16x8x1xf32>
    %30 = vector.broadcast %29 : vector<16x8x1xf32> to vector<16x8x8xf32>
    %31 = arith.subf %27, %30 : vector<16x8x8xf32>
    %32 = math.exp %31 : vector<16x8x8xf32>
    %cst_10 = arith.constant dense<0.000000e+00> : vector<16x8xf32>
    %33 = vector.multi_reduction <add>, %32, %cst_10 [2] : vector<16x8x8xf32> to vector<16x8xf32>
    %34 = vector.shape_cast %33 : vector<16x8xf32> to vector<16x8x1xf32>
    %35 = vector.broadcast %34 : vector<16x8x1xf32> to vector<16x8x8xf32>
    %36 = arith.divf %32, %35 : vector<16x8x8xf32>
    %37 = vector.extract_strided_slice %10 {offsets = [0, 0, 16], sizes = [16, 8, 16], strides = [1, 1, 1]} : vector<16x8x64xf32> to vector<16x8x16xf32>
    "tpu.trace_start"() <{level = 10 : i32, message = "bst,btk->bsk"}> : () -> ()
    %cst_11 = arith.constant dense<0.000000e+00> : vector<16x8x16xf32>
    %38 = tpu.matmul %36, %37, %cst_11 {dimension_numbers = #tpu.dot_dimension_numbers<[2], [1], [1], [2], [0, 0, 0, 1, 1, 2], [0], [0]>} : vector<16x8x8xf32>, vector<16x8x16xf32>, vector<16x8x16xf32> -> vector<16x8x16xf32>
    "tpu.trace_stop"() : () -> ()
    %39 = vector.extract_strided_slice %6 {offsets = [0, 0, 32], sizes = [16, 8, 16], strides = [1, 1, 1]} : vector<16x8x64xf32> to vector<16x8x16xf32>
    %40 = vector.extract_strided_slice %8 {offsets = [0, 0, 32], sizes = [16, 8, 16], strides = [1, 1, 1]} : vector<16x8x64xf32> to vector<16x8x16xf32>
    "tpu.trace_start"() <{level = 10 : i32, message = "bsk,btk->bst"}> : () -> ()
    %cst_12 = arith.constant dense<0.000000e+00> : vector<16x8x8xf32>
    %41 = tpu.matmul %39, %40, %cst_12 {dimension_numbers = #tpu.dot_dimension_numbers<[2], [2], [1], [1], [0, 0, 0, 1, 1, 1], [0], [0]>} : vector<16x8x16xf32>, vector<16x8x16xf32>, vector<16x8x8xf32> -> vector<16x8x8xf32>
    "tpu.trace_stop"() : () -> ()
    %cst_13 = arith.constant dense<0xFF800000> : vector<16x8xf32>
    %42 = vector.multi_reduction <maximumf>, %41, %cst_13 [2] : vector<16x8x8xf32> to vector<16x8xf32>
    %43 = vector.shape_cast %42 : vector<16x8xf32> to vector<16x8x1xf32>
    %44 = vector.broadcast %43 : vector<16x8x1xf32> to vector<16x8x8xf32>
    %45 = arith.subf %41, %44 : vector<16x8x8xf32>
    %46 = math.exp %45 : vector<16x8x8xf32>
    %cst_14 = arith.constant dense<0.000000e+00> : vector<16x8xf32>
    %47 = vector.multi_reduction <add>, %46, %cst_14 [2] : vector<16x8x8xf32> to vector<16x8xf32>
    %48 = vector.shape_cast %47 : vector<16x8xf32> to vector<16x8x1xf32>
    %49 = vector.broadcast %48 : vector<16x8x1xf32> to vector<16x8x8xf32>
    %50 = arith.divf %46, %49 : vector<16x8x8xf32>
    %51 = vector.extract_strided_slice %10 {offsets = [0, 0, 32], sizes = [16, 8, 16], strides = [1, 1, 1]} : vector<16x8x64xf32> to vector<16x8x16xf32>
    "tpu.trace_start"() <{level = 10 : i32, message = "bst,btk->bsk"}> : () -> ()
    %cst_15 = arith.constant dense<0.000000e+00> : vector<16x8x16xf32>
    %52 = tpu.matmul %50, %51, %cst_15 {dimension_numbers = #tpu.dot_dimension_numbers<[2], [1], [1], [2], [0, 0, 0, 1, 1, 2], [0], [0]>} : vector<16x8x8xf32>, vector<16x8x16xf32>, vector<16x8x16xf32> -> vector<16x8x16xf32>
    "tpu.trace_stop"() : () -> ()
    %53 = vector.extract_strided_slice %6 {offsets = [0, 0, 48], sizes = [16, 8, 16], strides = [1, 1, 1]} : vector<16x8x64xf32> to vector<16x8x16xf32>
    %54 = vector.extract_strided_slice %8 {offsets = [0, 0, 48], sizes = [16, 8, 16], strides = [1, 1, 1]} : vector<16x8x64xf32> to vector<16x8x16xf32>
    "tpu.trace_start"() <{level = 10 : i32, message = "bsk,btk->bst"}> : () -> ()
    %cst_16 = arith.constant dense<0.000000e+00> : vector<16x8x8xf32>
    %55 = tpu.matmul %53, %54, %cst_16 {dimension_numbers = #tpu.dot_dimension_numbers<[2], [2], [1], [1], [0, 0, 0, 1, 1, 1], [0], [0]>} : vector<16x8x16xf32>, vector<16x8x16xf32>, vector<16x8x8xf32> -> vector<16x8x8xf32>
    "tpu.trace_stop"() : () -> ()
    %cst_17 = arith.constant dense<0xFF800000> : vector<16x8xf32>
    %56 = vector.multi_reduction <maximumf>, %55, %cst_17 [2] : vector<16x8x8xf32> to vector<16x8xf32>
    %57 = vector.shape_cast %56 : vector<16x8xf32> to vector<16x8x1xf32>
    %58 = vector.broadcast %57 : vector<16x8x1xf32> to vector<16x8x8xf32>
    %59 = arith.subf %55, %58 : vector<16x8x8xf32>
    %60 = math.exp %59 : vector<16x8x8xf32>
    %cst_18 = arith.constant dense<0.000000e+00> : vector<16x8xf32>
    %61 = vector.multi_reduction <add>, %60, %cst_18 [2] : vector<16x8x8xf32> to vector<16x8xf32>
    %62 = vector.shape_cast %61 : vector<16x8xf32> to vector<16x8x1xf32>
    %63 = vector.broadcast %62 : vector<16x8x1xf32> to vector<16x8x8xf32>
    %64 = arith.divf %60, %63 : vector<16x8x8xf32>
    %65 = vector.extract_strided_slice %10 {offsets = [0, 0, 48], sizes = [16, 8, 16], strides = [1, 1, 1]} : vector<16x8x64xf32> to vector<16x8x16xf32>
    "tpu.trace_start"() <{level = 10 : i32, message = "bst,btk->bsk"}> : () -> ()
    %cst_19 = arith.constant dense<0.000000e+00> : vector<16x8x16xf32>
    %66 = tpu.matmul %64, %65, %cst_19 {dimension_numbers = #tpu.dot_dimension_numbers<[2], [1], [1], [2], [0, 0, 0, 1, 1, 2], [0], [0]>} : vector<16x8x8xf32>, vector<16x8x16xf32>, vector<16x8x16xf32> -> vector<16x8x16xf32>
    "tpu.trace_stop"() : () -> ()
    %67 = tpu.concatenate %24, %38, %52, %66 in 2 : vector<16x8x16xf32>, vector<16x8x16xf32>, vector<16x8x16xf32>, vector<16x8x16xf32> -> vector<16x8x64xf32>
    %68 = vector.shape_cast %67 : vector<16x8x64xf32> to vector<128x64xf32>
    %c0_20 = arith.constant 0 : index
    %c0_21 = arith.constant 0 : index
    %69 = vector.load %arg2[%c0_20, %c0_21] : memref<64x32xf32, #tpu.memory_space<vmem>>, vector<64x32xf32>
    %cst_22 = arith.constant dense<0.000000e+00> : vector<128x32xf32>
    %70 = tpu.matmul %68, %69, %cst_22 {dimension_numbers = #tpu.dot_dimension_numbers<[1], [0], [0], [1], [0, 0, 1, 1], [], []>} : vector<128x64xf32>, vector<64x32xf32>, vector<128x32xf32> -> vector<128x32xf32>
    %c0_23 = arith.constant 0 : index
    %c0_24 = arith.constant 0 : index
    %71 = vector.load %arg3[%c0_23, %c0_24] : memref<128x32xf32, #tpu.memory_space<vmem>>, vector<128x32xf32>
    tpu.vector_store %arg3[%c0_23, %c0_24], %70 {strides = array<i32>} : memref<128x32xf32, #tpu.memory_space<vmem>>, vector<128x32xf32>,
    return
  }
}

</mosaic_0001>

<llo_original>
// kernel: multi_head_attention.1
$region0: #{multi_head_attention.1}
  #allocation0 [shape = 'u32[]', space=smem, size = 0x4, offset = 0x4, fixed_abs, tag = 'smem constant byte address 0x4 - core index']
  #allocation1 [shape = 'u32[144,128]{1,0:T(1,128)}', space=vmem, size = 0x12000, scoped, tag = 'internal scratch']
  %s0 = inlined_call_operand.hbm [shape: f32[128,32], index: 0, kind: input, shape index: {}]
  %s1 = inlined_call_operand.vmem [shape: f32[32,192], index: 1, kind: input, shape index: {}]
  %s2 = inlined_call_operand.vmem [shape: f32[64,32], index: 2, kind: input, shape index: {}]
  %s3 = inlined_call_operand.hbm [shape: f32[128,32], index: 3, kind: output, shape index: {}]
  %s4 = sld [smem:[#allocation0]]
  $region26: #{multi_head_attention.1} parent=0
    _
  %s6 = ssub.s32 1, %s4
  %s7 = scalar_select 0, %s6, %s4
  $region1: #{multi_head_attention.1} parent=0
    #allocation2 [shape = 'u8[65536]{0}', space=vmem, size = 0x10000, scoped, tag = 'input window, operand 0, single buffered']
    #allocation3 [shape = 's32[1]{0}', space=sflag, size = 0x4, scoped, tag = 'scoped memory for multi_head_attention.1']
    #allocation4 [shape = 's32[1]{0}', space=sflag, size = 0x4, scoped, tag = 'scoped memory for multi_head_attention.1']
    #allocation5 [shape = 'u8[65536]{0}', space=vmem, size = 0x10000, scoped, tag = 'output window, operand 0, single buffered']
    %8 = vsyncpa [#allocation3], 0
    %9 = vsyncpa [#allocation4], 0
    // Predicated region
    $region2: #{multi_head_attention.1} parent=1 // pred_check
      _
    $region3: #{multi_head_attention.1} parent=1 // pred_check_branch
      %11 = sbr.rel (0) target = $region5
    $region4: #{multi_head_attention.1} parent=1 // pred_region
      %s13 = ssub.s32 2048, 2048
      %14 = vsyncadd [#allocation3], %s13
      %s15 = sshll.u32 [#allocation2], 4
      %s16 = int_to_ptr.vmem [resolvable:$true] %s15
      %21 = dma.hbm_to_vmem [thread:$0]  %s0, 2048, %s16, [#allocation3], 128, 128, 8
    $region5: #{multi_head_attention.1} parent=1 // pred_fallthru
      _
    // Predicated region
    $region6: #{multi_head_attention.1} parent=1 // pred_check
      _
    $region7: #{multi_head_attention.1} parent=1 // pred_check_branch
      %23 = sbr.rel (0) target = $region9
    $region8: #{multi_head_attention.1} parent=1 // pred_region
      _
    $region9: #{multi_head_attention.1} parent=1 // pred_fallthru
      _
    // Predicated region
    $region10: #{multi_head_attention.1} parent=1 // pred_check
      _
    $region11: #{multi_head_attention.1} parent=1 // pred_check_branch
      %25 = sbr.rel (0) target = $region13
    $region12: #{multi_head_attention.1} parent=1 // pred_region
      _
    $region13: #{multi_head_attention.1} parent=1 // pred_fallthru
      _
    // Predicated region
    $region14: #{multi_head_attention.1} parent=1 // pred_check
      _
    $region15: #{multi_head_attention.1} parent=1 // pred_check_branch
      %27 = sbr.rel (0) target = $region17
    $region16: #{multi_head_attention.1} parent=1 // pred_region
      %28 = dma.done [#allocation3], 2048
    $region17: #{multi_head_attention.1} parent=1 // pred_fallthru
      _
    %v29 = vld [vmem:[#allocation2] sm:$0xff]
    %v30 = vld [vmem:[#allocation2 + $0x8] sm:$0xff]
    %v31 = vld [vmem:[#allocation2 + $0x10] sm:$0xff]
    %v32 = vld [vmem:[#allocation2 + $0x18] sm:$0xff]
    %v33 = vld [vmem:[#allocation2 + $0x20] sm:$0xff]
    %v34 = vld [vmem:[#allocation2 + $0x28] sm:$0xff]
    %v35 = vld [vmem:[#allocation2 + $0x30] sm:$0xff]
    %v36 = vld [vmem:[#allocation2 + $0x38] sm:$0xff]
    %v37 = vld [vmem:[#allocation2 + $0x40] sm:$0xff]
    %v38 = vld [vmem:[#allocation2 + $0x48] sm:$0xff]
    %v39 = vld [vmem:[#allocation2 + $0x50] sm:$0xff]
    %v40 = vld [vmem:[#allocation2 + $0x58] sm:$0xff]
    %v41 = vld [vmem:[#allocation2 + $0x60] sm:$0xff]
    %v42 = vld [vmem:[#allocation2 + $0x68] sm:$0xff]
    %v43 = vld [vmem:[#allocation2 + $0x70] sm:$0xff]
    %v44 = vld [vmem:[#allocation2 + $0x78] sm:$0xff]
    %v45 = vld [vmem:[%s1] sm:$0xff]
    %v46 = vld [vmem:[%s1 + $0x8] sm:$0xff]
    %v47 = vld [vmem:[%s1 + $0x10] sm:$0xff]
    %v48 = vld [vmem:[%s1 + $0x18] sm:$0xff]
    %v49 = vld [vmem:[%s1 + $0x20] sm:$0xff]
    %v50 = vld [vmem:[%s1 + $0x28] sm:$0xff]
    %v51 = vld [vmem:[%s1 + $0x30] sm:$0xff]
    %v52 = vld [vmem:[%s1 + $0x38] sm:$0xff]
    %vm53 = vcmask 261120
    %v55 = vsel %vm53, %v29, 0
    %v58 = vsel %vm53, %v30, 0
    %v61 = vsel %vm53, %v31, 0
    %v64 = vsel %vm53, %v32, 0
    %v67 = vsel %vm53, %v33, 0
    %v70 = vsel %vm53, %v34, 0
    %v73 = vsel %vm53, %v35, 0
    %v76 = vsel %vm53, %v36, 0
    %v79 = vsel %vm53, %v37, 0
    %v82 = vsel %vm53, %v38, 0
    %v85 = vsel %vm53, %v39, 0
    %v88 = vsel %vm53, %v40, 0
    %v91 = vsel %vm53, %v41, 0
    %v94 = vsel %vm53, %v42, 0
    %v97 = vsel %vm53, %v43, 0
    %v100 = vsel %vm53, %v44, 0
    %102 = vmatprep.subr.mxu0 0.0
    %103 = vmatpush1.msra.mxu0 0.0
    %104 = vmatprep.subr.mxu0 0.0
    %105 = vmatpush1.msra.mxu0 0.0
    %106 = vmatprep.subr.mxu0 0.0
    %107 = vmatpush1.msra.mxu0 0.0
    %108 = vmatprep.subr.mxu0 0.0
    %109 = vmatpush1.msra.mxu0 0.0
    %110 = vmatprep.subr.mxu0 0.0
    %111 = vmatpush1.msra.mxu0 0.0
    %112 = vmatprep.subr.mxu0 0.0
    %113 = vmatpush1.msra.mxu0 0.0
    %114 = vmatprep.subr.mxu0 0.0
    %115 = vmatpush1.msra.mxu0 0.0
    %116 = vmatprep.subr.mxu0 0.0
    %117 = vmatpush1.msra.mxu0 0.0
    %118 = vmatprep.subr.mxu0 0.0
    %119 = vmatpush1.msra.mxu0 0.0
    %120 = vmatprep.subr.mxu0 0.0
    %121 = vmatpush1.msra.mxu0 0.0
    %122 = vmatprep.subr.mxu0 0.0
    %123 = vmatpush1.msra.mxu0 0.0
    %124 = vmatprep.subr.mxu0 0.0
    %125 = vmatpush1.msra.mxu0 0.0
    %126 = vmatprep.subr.mxu0 %v52
    %127 = vmatpush1.msra.mxu0 %v51
    %128 = vmatprep.subr.mxu0 %v50
    %129 = vmatpush1.msra.mxu0 %v49
    %130 = vmatprep.subr.mxu0 %v48
    %131 = vmatpush1.msra.mxu0 %v47
    %132 = vmatprep.subr.mxu0 %v46
    %133 = vmatpush1.msra.mxu0 %v45
    %134 = vmatprep.subr.mxu0 0.0
    %135 = vmatpush2.msra.mxu0 0.0
    %136 = vmatprep.subr.mxu0 0.0
    %137 = vmatpush2.msra.mxu0 0.0
    %138 = vmatprep.subr.mxu0 0.0
    %139 = vmatpush2.msra.mxu0 0.0
    %140 = vmatprep.subr.mxu0 0.0
    %141 = vmatpush2.msra.mxu0 0.0
    %142 = vmatprep.subr.mxu0 0.0
    %143 = vmatpush2.msra.mxu0 0.0
    %144 = vmatprep.subr.mxu0 0.0
    %145 = vmatpush2.msra.mxu0 0.0
    %146 = vmatprep.subr.mxu0 0.0
    %147 = vmatpush2.msra.mxu0 0.0
    %148 = vmatprep.subr.mxu0 0.0
    %149 = vmatpush2.msra.mxu0 0.0
    %150 = vmatprep.subr.mxu0 0.0
    %151 = vmatpush2.msra.mxu0 0.0
    %152 = vmatprep.subr.mxu0 0.0
    %153 = vmatpush2.msra.mxu0 0.0
    %154 = vmatprep.subr.mxu0 0.0
    %155 = vmatpush2.msra.mxu0 0.0
    %156 = vmatprep.subr.mxu0 0.0
    %157 = vmatpush2.msra.mxu0 0.0
    %158 = vmatprep.subr.mxu0 0.0
    %159 = vmatpush2.msra.mxu0 0.0
    %160 = vmatprep.subr.mxu0 0.0
    %161 = vmatpush2.msra.mxu0 0.0
    %162 = vmatprep.subr.mxu0 0.0
    %163 = vmatpush2.msra.mxu0 0.0
    %164 = vmatprep.subr.mxu0 0.0
    %165 = vmatpush2.msra.mxu0 0.0
    %166 = vmatprep.mubr.f32.mxu0 0.0
    %167 = vmatmul.mubr.f32.gmra.mxu0 %v55
    %v168 = vpop.f32.mrf.mxu0
    %v169 = vadd.f32 0.0, %v168
    %v170 = vpop.f32.mrf.mxu0
    %v171 = vadd.f32 0.0, %v170
    %172 = vmatprep.mubr.f32.mxu0 0.0
    %173 = vmatmul.mubr.f32.gmra.mxu0 %v58
    %v174 = vpop.f32.mrf.mxu0
    %v175 = vadd.f32 0.0, %v174
    %v176 = vpop.f32.mrf.mxu0
    %v177 = vadd.f32 0.0, %v176
    %178 = vmatprep.mubr.f32.mxu0 0.0
    %179 = vmatmul.mubr.f32.gmra.mxu0 %v61
    %v180 = vpop.f32.mrf.mxu0
    %v181 = vadd.f32 0.0, %v180
    %v182 = vpop.f32.mrf.mxu0
    %v183 = vadd.f32 0.0, %v182
    %184 = vmatprep.mubr.f32.mxu0 0.0
    %185 = vmatmul.mubr.f32.gmra.mxu0 %v64
    %v186 = vpop.f32.mrf.mxu0
    %v187 = vadd.f32 0.0, %v186
    %v188 = vpop.f32.mrf.mxu0
    %v189 = vadd.f32 0.0, %v188
    %190 = vmatprep.mubr.f32.mxu0 0.0
    %191 = vmatmul.mubr.f32.gmra.mxu0 %v67
    %v192 = vpop.f32.mrf.mxu0
    %v193 = vadd.f32 0.0, %v192
    %v194 = vpop.f32.mrf.mxu0
    %v195 = vadd.f32 0.0, %v194
    %196 = vmatprep.mubr.f32.mxu0 0.0
    %197 = vmatmul.mubr.f32.gmra.mxu0 %v70
    %v198 = vpop.f32.mrf.mxu0
    %v199 = vadd.f32 0.0, %v198
    %v200 = vpop.f32.mrf.mxu0
    %v201 = vadd.f32 0.0, %v200
    %202 = vmatprep.mubr.f32.mxu0 0.0
    %203 = vmatmul.mubr.f32.gmra.mxu0 %v73
    %v204 = vpop.f32.mrf.mxu0
    %v205 = vadd.f32 0.0, %v204
    %v206 = vpop.f32.mrf.mxu0
    %v207 = vadd.f32 0.0, %v206
    %208 = vmatprep.mubr.f32.mxu0 0.0
    %209 = vmatmul.mubr.f32.gmra.mxu0 %v76
    %v210 = vpop.f32.mrf.mxu0
    %v211 = vadd.f32 0.0, %v210
    %v212 = vpop.f32.mrf.mxu0
    %v213 = vadd.f32 0.0, %v212
    %214 = vmatprep.mubr.f32.mxu0 0.0
    %215 = vmatmul.mubr.f32.gmra.mxu0 %v79
    %v216 = vpop.f32.mrf.mxu0
    %v217 = vadd.f32 0.0, %v216
    %v218 = vpop.f32.mrf.mxu0
    %v219 = vadd.f32 0.0, %v218
    %220 = vmatprep.mubr.f32.mxu0 0.0
    %221 = vmatmul.mubr.f32.gmra.mxu0 %v82
    %v222 = vpop.f32.mrf.mxu0
    %v223 = vadd.f32 0.0, %v222
    %v224 = vpop.f32.mrf.mxu0
    %v225 = vadd.f32 0.0, %v224
    %226 = vmatprep.mubr.f32.mxu0 0.0
    %227 = vmatmul.mubr.f32.gmra.mxu0 %v85
    %v228 = vpop.f32.mrf.mxu0
    %v229 = vadd.f32 0.0, %v228
    %v230 = vpop.f32.mrf.mxu0
    %v231 = vadd.f32 0.0, %v230
    %232 = vmatprep.mubr.f32.mxu0 0.0
    %233 = vmatmul.mubr.f32.gmra.mxu0 %v88
    %v234 = vpop.f32.mrf.mxu0
    %v235 = vadd.f32 0.0, %v234
    %v236 = vpop.f32.mrf.mxu0
    %v237 = vadd.f32 0.0, %v236
    %238 = vmatprep.mubr.f32.mxu0 0.0
    %239 = vmatmul.mubr.f32.gmra.mxu0 %v91
    %v240 = vpop.f32.mrf.mxu0
    %v241 = vadd.f32 0.0, %v240
    %v242 = vpop.f32.mrf.mxu0
    %v243 = vadd.f32 0.0, %v242
    %244 = vmatprep.mubr.f32.mxu0 0.0
    %245 = vmatmul.mubr.f32.gmra.mxu0 %v94
    %v246 = vpop.f32.mrf.mxu0
    %v247 = vadd.f32 0.0, %v246
    %v248 = vpop.f32.mrf.mxu0
    %v249 = vadd.f32 0.0, %v248
    %250 = vmatprep.mubr.f32.mxu0 0.0
    %251 = vmatmul.mubr.f32.gmra.mxu0 %v97
    %v252 = vpop.f32.mrf.mxu0
    %v253 = vadd.f32 0.0, %v252
    %v254 = vpop.f32.mrf.mxu0
    %v255 = vadd.f32 0.0, %v254
    %256 = vmatprep.mubr.f32.mxu0 0.0
    %257 = vmatmul.mubr.f32.gmra.mxu0 %v100
    %v258 = vpop.f32.mrf.mxu0
    %v259 = vadd.f32 0.0, %v258
    %v260 = vpop.f32.mrf.mxu0
    %v261 = vadd.f32 0.0, %v260
    %262 = vdwg.mxu0
    %v263 = vmul.f32 %v169, 0.25
    %v264 = vmul.f32 %v175, 0.25
    %v265 = vmul.f32 %v181, 0.25
    %v266 = vmul.f32 %v187, 0.25
    %v267 = vmul.f32 %v193, 0.25
    %v268 = vmul.f32 %v199, 0.25
    %v269 = vmul.f32 %v205, 0.25
    %v270 = vmul.f32 %v211, 0.25
    %v271 = vmul.f32 %v217, 0.25
    %v272 = vmul.f32 %v223, 0.25
    %v273 = vmul.f32 %v229, 0.25
    %v274 = vmul.f32 %v235, 0.25
    %v275 = vmul.f32 %v241, 0.25
    %v276 = vmul.f32 %v247, 0.25
    %v277 = vmul.f32 %v253, 0.25
    %v278 = vmul.f32 %v259, 0.25
    %280 = vrot.lane.b32.xlu0 %v169, 64
    %v281 = vpop.permute.xlu0 %280
    %vm282 = vcmask 130048
    %v284 = vsel %vm282, %v263, 0
    %v286 = vsel %vm282, %v281, 0
    %288 = vmatprep.subr.mxu0 0.0
    %289 = vmatpush1.xpose.msra.mxu0 0.0
    %290 = vmatprep.subr.mxu0 0.0
    %291 = vmatpush1.xpose.msra.mxu0 0.0
    %292 = vmatprep.subr.mxu0 0.0
    %293 = vmatpush1.xpose.msra.mxu0 0.0
    %294 = vmatprep.subr.mxu0 0.0
    %295 = vmatpush1.xpose.msra.mxu0 0.0
    %296 = vmatprep.subr.mxu0 0.0
    %297 = vmatpush1.xpose.msra.mxu0 0.0
    %298 = vmatprep.subr.mxu0 0.0
    %299 = vmatpush1.xpose.msra.mxu0 0.0
    %300 = vmatprep.subr.mxu0 0.0
    %301 = vmatpush1.xpose.msra.mxu0 0.0
    %302 = vmatprep.subr.mxu0 0.0
    %303 = vmatpush1.xpose.msra.mxu0 0.0
    %304 = vmatprep.subr.mxu0 0.0
    %305 = vmatpush1.xpose.msra.mxu0 0.0
    %306 = vmatprep.subr.mxu0 0.0
    %307 = vmatpush1.xpose.msra.mxu0 0.0
    %308 = vmatprep.subr.mxu0 0.0
    %309 = vmatpush1.xpose.msra.mxu0 0.0
    %310 = vmatprep.subr.mxu0 0.0
    %311 = vmatpush1.xpose.msra.mxu0 0.0
    %312 = vmatprep.subr.mxu0 0.0
    %313 = vmatpush1.xpose.msra.mxu0 0.0
    %314 = vmatprep.subr.mxu0 0.0
    %315 = vmatpush1.xpose.msra.mxu0 0.0
    %316 = vmatprep.subr.mxu0 0.0
    %317 = vmatpush1.xpose.msra.mxu0 0.0
    %318 = vmatprep.subr.mxu0 0.0
    %319 = vmatpush1.xpose.msra.mxu0 %v286
    %320 = vmatprep.subr.mxu0 0.0
    %321 = vmatpush2.xpose.msra.mxu0 0.0
    %322 = vmatprep.subr.mxu0 0.0
    %323 = vmatpush2.xpose.msra.mxu0 0.0
    %324 = vmatprep.subr.mxu0 0.0
    %325 = vmatpush2.xpose.msra.mxu0 0.0
    %326 = vmatprep.subr.mxu0 0.0
    %327 = vmatpush2.xpose.msra.mxu0 0.0
    %328 = vmatprep.subr.mxu0 0.0
    %329 = vmatpush2.xpose.msra.mxu0 0.0
    %330 = vmatprep.subr.mxu0 0.0
    %331 = vmatpush2.xpose.msra.mxu0 0.0
    %332 = vmatprep.subr.mxu0 0.0
    %333 = vmatpush2.xpose.msra.mxu0 0.0
    %334 = vmatprep.subr.mxu0 0.0
    %335 = vmatpush2.xpose.msra.mxu0 0.0
    %336 = vmatprep.subr.mxu0 0.0
    %337 = vmatpush2.xpose.msra.mxu0 0.0
    %338 = vmatprep.subr.mxu0 0.0
    %339 = vmatpush2.xpose.msra.mxu0 0.0
    %340 = vmatprep.subr.mxu0 0.0
    %341 = vmatpush2.xpose.msra.mxu0 0.0
    %342 = vmatprep.subr.mxu0 0.0
    %343 = vmatpush2.xpose.msra.mxu0 0.0
    %344 = vmatprep.subr.mxu0 0.0
    %345 = vmatpush2.xpose.msra.mxu0 0.0
    %346 = vmatprep.subr.mxu0 0.0
    %347 = vmatpush2.xpose.msra.mxu0 0.0
    %348 = vmatprep.subr.mxu0 0.0
    %349 = vmatpush2.xpose.msra.mxu0 0.0
    %350 = vmatprep.subr.mxu0 0.0
    %351 = vmatpush2.xpose.msra.mxu0 0.0
    %352 = vmatprep.mubr.f32.mxu0 0.0
    %353 = vmatmul.mubr.f32.gmra.mxu0 %v284
    %v354 = vpop.f32.mrf.mxu0
    %v355 = vadd.f32 0.0, %v354
    %v356 = vpop.f32.mrf.mxu0
    %357 = vdwg.mxu0
    %359 = vrot.lane.b32.xlu0 %v175, 64
    %v360 = vpop.permute.xlu0 %359
    %v362 = vsel %vm282, %v264, 0
    %v364 = vsel %vm282, %v360, 0
    %366 = vmatprep.subr.mxu0 0.0
    %367 = vmatpush1.xpose.msra.mxu0 0.0
    %368 = vmatprep.subr.mxu0 0.0
    %369 = vmatpush1.xpose.msra.mxu0 0.0
    %370 = vmatprep.subr.mxu0 0.0
    %371 = vmatpush1.xpose.msra.mxu0 0.0
    %372 = vmatprep.subr.mxu0 0.0
    %373 = vmatpush1.xpose.msra.mxu0 0.0
    %374 = vmatprep.subr.mxu0 0.0
    %375 = vmatpush1.xpose.msra.mxu0 0.0
    %376 = vmatprep.subr.mxu0 0.0
    %377 = vmatpush1.xpose.msra.mxu0 0.0
    %378 = vmatprep.subr.mxu0 0.0
    %379 = vmatpush1.xpose.msra.mxu0 0.0
    %380 = vmatprep.subr.mxu0 0.0
    %381 = vmatpush1.xpose.msra.mxu0 0.0
    %382 = vmatprep.subr.mxu0 0.0
    %383 = vmatpush1.xpose.msra.mxu0 0.0
    %384 = vmatprep.subr.mxu0 0.0
    %385 = vmatpush1.xpose.msra.mxu0 0.0
    %386 = vmatprep.subr.mxu0 0.0
    %387 = vmatpush1.xpose.msra.mxu0 0.0
    %388 = vmatprep.subr.mxu0 0.0
    %389 = vmatpush1.xpose.msra.mxu0 0.0
    %390 = vmatprep.subr.mxu0 0.0
    %391 = vmatpush1.xpose.msra.mxu0 0.0
    %392 = vmatprep.subr.mxu0 0.0
    %393 = vmatpush1.xpose.msra.mxu0 0.0
    %394 = vmatprep.subr.mxu0 0.0
    %395 = vmatpush1.xpose.msra.mxu0 0.0
    %396 = vmatprep.subr.mxu0 0.0
    %397 = vmatpush1.xpose.msra.mxu0 %v364
    %398 = vmatprep.subr.mxu0 0.0
    %399 = vmatpush2.xpose.msra.mxu0 0.0
    %400 = vmatprep.subr.mxu0 0.0
    %401 = vmatpush2.xpose.msra.mxu0 0.0
    %402 = vmatprep.subr.mxu0 0.0
    %403 = vmatpush2.xpose.msra.mxu0 0.0
    %404 = vmatprep.subr.mxu0 0.0
    %405 = vmatpush2.xpose.msra.mxu0 0.0
    %406 = vmatprep.subr.mxu0 0.0
    %407 = vmatpush2.xpose.msra.mxu0 0.0
    %408 = vmatprep.subr.mxu0 0.0
    %409 = vmatpush2.xpose.msra.mxu0 0.0
    %410 = vmatprep.subr.mxu0 0.0
    %411 = vmatpush2.xpose.msra.mxu0 0.0
    %412 = vmatprep.subr.mxu0 0.0
    %413 = vmatpush2.xpose.msra.mxu0 0.0
    %414 = vmatprep.subr.mxu0 0.0
    %415 = vmatpush2.xpose.msra.mxu0 0.0
    %416 = vmatprep.subr.mxu0 0.0
    %417 = vmatpush2.xpose.msra.mxu0 0.0
    %418 = vmatprep.subr.mxu0 0.0
    %419 = vmatpush2.xpose.msra.mxu0 0.0
    %420 = vmatprep.subr.mxu0 0.0
    %421 = vmatpush2.xpose.msra.mxu0 0.0
    %422 = vmatprep.subr.mxu0 0.0
    %423 = vmatpush2.xpose.msra.mxu0 0.0
    %424 = vmatprep.subr.mxu0 0.0
    %425 = vmatpush2.xpose.msra.mxu0 0.0
    %426 = vmatprep.subr.mxu0 0.0
    %427 = vmatpush2.xpose.msra.mxu0 0.0
    %428 = vmatprep.subr.mxu0 0.0
    %429 = vmatpush2.xpose.msra.mxu0 0.0
    %430 = vmatprep.mubr.f32.mxu0 0.0
    %431 = vmatmul.mubr.f32.gmra.mxu0 %v362
    %v432 = vpop.f32.mrf.mxu0
    %v433 = vadd.f32 0.0, %v432
    %v434 = vpop.f32.mrf.mxu0
    %435 = vdwg.mxu0
    %437 = vrot.lane.b32.xlu0 %v181, 64
    %v438 = vpop.permute.xlu0 %437
    %v440 = vsel %vm282, %v265, 0
    %v442 = vsel %vm282, %v438, 0
    %444 = vmatprep.subr.mxu0 0.0
    %445 = vmatpush1.xpose.msra.mxu0 0.0
    %446 = vmatprep.subr.mxu0 0.0
    %447 = vmatpush1.xpose.msra.mxu0 0.0
    %448 = vmatprep.subr.mxu0 0.0
    %449 = vmatpush1.xpose.msra.mxu0 0.0
    %450 = vmatprep.subr.mxu0 0.0
    %451 = vmatpush1.xpose.msra.mxu0 0.0
    %452 = vmatprep.subr.mxu0 0.0
    %453 = vmatpush1.xpose.msra.mxu0 0.0
    %454 = vmatprep.subr.mxu0 0.0
    %455 = vmatpush1.xpose.msra.mxu0 0.0
    %456 = vmatprep.subr.mxu0 0.0
    %457 = vmatpush1.xpose.msra.mxu0 0.0
    %458 = vmatprep.subr.mxu0 0.0
    %459 = vmatpush1.xpose.msra.mxu0 0.0
    %460 = vmatprep.subr.mxu0 0.0
    %461 = vmatpush1.xpose.msra.mxu0 0.0
    %462 = vmatprep.subr.mxu0 0.0
    %463 = vmatpush1.xpose.msra.mxu0 0.0
    %464 = vmatprep.subr.mxu0 0.0
    %465 = vmatpush1.xpose.msra.mxu0 0.0
    %466 = vmatprep.subr.mxu0 0.0
    %467 = vmatpush1.xpose.msra.mxu0 0.0
    %468 = vmatprep.subr.mxu0 0.0
    %469 = vmatpush1.xpose.msra.mxu0 0.0
    %470 = vmatprep.subr.mxu0 0.0
    %471 = vmatpush1.xpose.msra.mxu0 0.0
    %472 = vmatprep.subr.mxu0 0.0
    %473 = vmatpush1.xpose.msra.mxu0 0.0
    %474 = vmatprep.subr.mxu0 0.0
    %475 = vmatpush1.xpose.msra.mxu0 %v442
    %476 = vmatprep.subr.mxu0 0.0
    %477 = vmatpush2.xpose.msra.mxu0 0.0
    %478 = vmatprep.subr.mxu0 0.0
    %479 = vmatpush2.xpose.msra.mxu0 0.0
    %480 = vmatprep.subr.mxu0 0.0
    %481 = vmatpush2.xpose.msra.mxu0 0.0
    %482 = vmatprep.subr.mxu0 0.0
    %483 = vmatpush2.xpose.msra.mxu0 0.0
    %484 = vmatprep.subr.mxu0 0.0
    %485 = vmatpush2.xpose.msra.mxu0 0.0
    %486 = vmatprep.subr.mxu0 0.0
    %487 = vmatpush2.xpose.msra.mxu0 0.0
    %488 = vmatprep.subr.mxu0 0.0
    %489 = vmatpush2.xpose.msra.mxu0 0.0
    %490 = vmatprep.subr.mxu0 0.0
    %491 = vmatpush2.xpose.msra.mxu0 0.0
    %492 = vmatprep.subr.mxu0 0.0
    %493 = vmatpush2.xpose.msra.mxu0 0.0
    %494 = vmatprep.subr.mxu0 0.0
    %495 = vmatpush2.xpose.msra.mxu0 0.0
    %496 = vmatprep.subr.mxu0 0.0
    %497 = vmatpush2.xpose.msra.mxu0 0.0
    %498 = vmatprep.subr.mxu0 0.0
    %499 = vmatpush2.xpose.msra.mxu0 0.0
    %500 = vmatprep.subr.mxu0 0.0
    %501 = vmatpush2.xpose.msra.mxu0 0.0
    %502 = vmatprep.subr.mxu0 0.0
    %503 = vmatpush2.xpose.msra.mxu0 0.0
    %504 = vmatprep.subr.mxu0 0.0
    %505 = vmatpush2.xpose.msra.mxu0 0.0
    %506 = vmatprep.subr.mxu0 0.0
    %507 = vmatpush2.xpose.msra.mxu0 0.0
    %508 = vmatprep.mubr.f32.mxu0 0.0
    %509 = vmatmul.mubr.f32.gmra.mxu0 %v440
    %v510 = vpop.f32.mrf.mxu0
    %v511 = vadd.f32 0.0, %v510
    %v512 = vpop.f32.mrf.mxu0
    %513 = vdwg.mxu0
    %515 = vrot.lane.b32.xlu0 %v187, 64
    %v516 = vpop.permute.xlu0 %515
    %v518 = vsel %vm282, %v266, 0
    %v520 = vsel %vm282, %v516, 0
    %522 = vmatprep.subr.mxu0 0.0
    %523 = vmatpush1.xpose.msra.mxu0 0.0
    %524 = vmatprep.subr.mxu0 0.0
    %525 = vmatpush1.xpose.msra.mxu0 0.0
    %526 = vmatprep.subr.mxu0 0.0
    %527 = vmatpush1.xpose.msra.mxu0 0.0
    %528 = vmatprep.subr.mxu0 0.0
    %529 = vmatpush1.xpose.msra.mxu0 0.0
    %530 = vmatprep.subr.mxu0 0.0
    %531 = vmatpush1.xpose.msra.mxu0 0.0
    %532 = vmatprep.subr.mxu0 0.0
    %533 = vmatpush1.xpose.msra.mxu0 0.0
    %534 = vmatprep.subr.mxu0 0.0
    %535 = vmatpush1.xpose.msra.mxu0 0.0
    %536 = vmatprep.subr.mxu0 0.0
    %537 = vmatpush1.xpose.msra.mxu0 0.0
    %538 = vmatprep.subr.mxu0 0.0
    %539 = vmatpush1.xpose.msra.mxu0 0.0
    %540 = vmatprep.subr.mxu0 0.0
    %541 = vmatpush1.xpose.msra.mxu0 0.0
    %542 = vmatprep.subr.mxu0 0.0
    %543 = vmatpush1.xpose.msra.mxu0 0.0
    %544 = vmatprep.subr.mxu0 0.0
    %545 = vmatpush1.xpose.msra.mxu0 0.0
    %546 = vmatprep.subr.mxu0 0.0
    %547 = vmatpush1.xpose.msra.mxu0 0.0
    %548 = vmatprep.subr.mxu0 0.0
    %549 = vmatpush1.xpose.msra.mxu0 0.0
    %550 = vmatprep.subr.mxu0 0.0
    %551 = vmatpush1.xpose.msra.mxu0 0.0
    %552 = vmatprep.subr.mxu0 0.0
    %553 = vmatpush1.xpose.msra.mxu0 %v520
    %554 = vmatprep.subr.mxu0 0.0
    %555 = vmatpush2.xpose.msra.mxu0 0.0
    %556 = vmatprep.subr.mxu0 0.0
    %557 = vmatpush2.xpose.msra.mxu0 0.0
    %558 = vmatprep.subr.mxu0 0.0
    %559 = vmatpush2.xpose.msra.mxu0 0.0
    %560 = vmatprep.subr.mxu0 0.0
    %561 = vmatpush2.xpose.msra.mxu0 0.0
    %562 = vmatprep.subr.mxu0 0.0
    %563 = vmatpush2.xpose.msra.mxu0 0.0
    %564 = vmatprep.subr.mxu0 0.0
    %565 = vmatpush2.xpose.msra.mxu0 0.0
    %566 = vmatprep.subr.mxu0 0.0
    %567 = vmatpush2.xpose.msra.mxu0 0.0
    %568 = vmatprep.subr.mxu0 0.0
    %569 = vmatpush2.xpose.msra.mxu0 0.0
    %570 = vmatprep.subr.mxu0 0.0
    %571 = vmatpush2.xpose.msra.mxu0 0.0
    %572 = vmatprep.subr.mxu0 0.0
    %573 = vmatpush2.xpose.msra.mxu0 0.0
    %574 = vmatprep.subr.mxu0 0.0
    %575 = vmatpush2.xpose.msra.mxu0 0.0
    %576 = vmatprep.subr.mxu0 0.0
    %577 = vmatpush2.xpose.msra.mxu0 0.0
    %578 = vmatprep.subr.mxu0 0.0
    %579 = vmatpush2.xpose.msra.mxu0 0.0
    %580 = vmatprep.subr.mxu0 0.0
    %581 = vmatpush2.xpose.msra.mxu0 0.0
    %582 = vmatprep.subr.mxu0 0.0
    %583 = vmatpush2.xpose.msra.mxu0 0.0
    %584 = vmatprep.subr.mxu0 0.0
    %585 = vmatpush2.xpose.msra.mxu0 0.0
    %586 = vmatprep.mubr.f32.mxu0 0.0
    %587 = vmatmul.mubr.f32.gmra.mxu0 %v518
    %v588 = vpop.f32.mrf.mxu0
    %v589 = vadd.f32 0.0, %v588
    %v590 = vpop.f32.mrf.mxu0
    %591 = vdwg.mxu0
    %593 = vrot.lane.b32.xlu0 %v193, 64
    %v594 = vpop.permute.xlu0 %593
    %v596 = vsel %vm282, %v267, 0
    %v598 = vsel %vm282, %v594, 0
    %600 = vmatprep.subr.mxu0 0.0
    %601 = vmatpush1.xpose.msra.mxu0 0.0
    %602 = vmatprep.subr.mxu0 0.0
    %603 = vmatpush1.xpose.msra.mxu0 0.0
    %604 = vmatprep.subr.mxu0 0.0
    %605 = vmatpush1.xpose.msra.mxu0 0.0
    %606 = vmatprep.subr.mxu0 0.0
    %607 = vmatpush1.xpose.msra.mxu0 0.0
    %608 = vmatprep.subr.mxu0 0.0
    %609 = vmatpush1.xpose.msra.mxu0 0.0
    %610 = vmatprep.subr.mxu0 0.0
    %611 = vmatpush1.xpose.msra.mxu0 0.0
    %612 = vmatprep.subr.mxu0 0.0
    %613 = vmatpush1.xpose.msra.mxu0 0.0
    %614 = vmatprep.subr.mxu0 0.0
    %615 = vmatpush1.xpose.msra.mxu0 0.0
    %616 = vmatprep.subr.mxu0 0.0
    %617 = vmatpush1.xpose.msra.mxu0 0.0
    %618 = vmatprep.subr.mxu0 0.0
    %619 = vmatpush1.xpose.msra.mxu0 0.0
    %620 = vmatprep.subr.mxu0 0.0
    %621 = vmatpush1.xpose.msra.mxu0 0.0
    %622 = vmatprep.subr.mxu0 0.0
    %623 = vmatpush1.xpose.msra.mxu0 0.0
    %624 = vmatprep.subr.mxu0 0.0
    %625 = vmatpush1.xpose.msra.mxu0 0.0
    %626 = vmatprep.subr.mxu0 0.0
    %627 = vmatpush1.xpose.msra.mxu0 0.0
    %628 = vmatprep.subr.mxu0 0.0
    %629 = vmatpush1.xpose.msra.mxu0 0.0
    %630 = vmatprep.subr.mxu0 0.0
    %631 = vmatpush1.xpose.msra.mxu0 %v598
    %632 = vmatprep.subr.mxu0 0.0
    %633 = vmatpush2.xpose.msra.mxu0 0.0
    %634 = vmatprep.subr.mxu0 0.0
    %635 = vmatpush2.xpose.msra.mxu0 0.0
    %636 = vmatprep.subr.mxu0 0.0
    %637 = vmatpush2.xpose.msra.mxu0 0.0
    %638 = vmatprep.subr.mxu0 0.0
    %639 = vmatpush2.xpose.msra.mxu0 0.0
    %640 = vmatprep.subr.mxu0 0.0
    %641 = vmatpush2.xpose.msra.mxu0 0.0
    %642 = vmatprep.subr.mxu0 0.0
    %643 = vmatpush2.xpose.msra.mxu0 0.0
    %644 = vmatprep.subr.mxu0 0.0
    %645 = vmatpush2.xpose.msra.mxu0 0.0
    %646 = vmatprep.subr.mxu0 0.0
    %647 = vmatpush2.xpose.msra.mxu0 0.0
    %648 = vmatprep.subr.mxu0 0.0
    %649 = vmatpush2.xpose.msra.mxu0 0.0
    %650 = vmatprep.subr.mxu0 0.0
    %651 = vmatpush2.xpose.msra.mxu0 0.0
    %652 = vmatprep.subr.mxu0 0.0
    %653 = vmatpush2.xpose.msra.mxu0 0.0
    %654 = vmatprep.subr.mxu0 0.0
    %655 = vmatpush2.xpose.msra.mxu0 0.0
    %656 = vmatprep.subr.mxu0 0.0
    %657 = vmatpush2.xpose.msra.mxu0 0.0
    %658 = vmatprep.subr.mxu0 0.0
    %659 = vmatpush2.xpose.msra.mxu0 0.0
    %660 = vmatprep.subr.mxu0 0.0
    %661 = vmatpush2.xpose.msra.mxu0 0.0
    %662 = vmatprep.subr.mxu0 0.0
    %663 = vmatpush2.xpose.msra.mxu0 0.0
    %664 = vmatprep.mubr.f32.mxu0 0.0
    %665 = vmatmul.mubr.f32.gmra.mxu0 %v596
    %v666 = vpop.f32.mrf.mxu0
    %v667 = vadd.f32 0.0, %v666
    %v668 = vpop.f32.mrf.mxu0
    %669 = vdwg.mxu0
    %671 = vrot.lane.b32.xlu0 %v199, 64
    %v672 = vpop.permute.xlu0 %671
    %v674 = vsel %vm282, %v268, 0
    %v676 = vsel %vm282, %v672, 0
    %678 = vmatprep.subr.mxu0 0.0
    %679 = vmatpush1.xpose.msra.mxu0 0.0
    %680 = vmatprep.subr.mxu0 0.0
    %681 = vmatpush1.xpose.msra.mxu0 0.0
    %682 = vmatprep.subr.mxu0 0.0
    %683 = vmatpush1.xpose.msra.mxu0 0.0
    %684 = vmatprep.subr.mxu0 0.0
    %685 = vmatpush1.xpose.msra.mxu0 0.0
    %686 = vmatprep.subr.mxu0 0.0
    %687 = vmatpush1.xpose.msra.mxu0 0.0
    %688 = vmatprep.subr.mxu0 0.0
    %689 = vmatpush1.xpose.msra.mxu0 0.0
    %690 = vmatprep.subr.mxu0 0.0
    %691 = vmatpush1.xpose.msra.mxu0 0.0
    %692 = vmatprep.subr.mxu0 0.0
    %693 = vmatpush1.xpose.msra.mxu0 0.0
    %694 = vmatprep.subr.mxu0 0.0
    %695 = vmatpush1.xpose.msra.mxu0 0.0
    %696 = vmatprep.subr.mxu0 0.0
    %697 = vmatpush1.xpose.msra.mxu0 0.0
    %698 = vmatprep.subr.mxu0 0.0
    %699 = vmatpush1.xpose.msra.mxu0 0.0
    %700 = vmatprep.subr.mxu0 0.0
    %701 = vmatpush1.xpose.msra.mxu0 0.0
    %702 = vmatprep.subr.mxu0 0.0
    %703 = vmatpush1.xpose.msra.mxu0 0.0
    %704 = vmatprep.subr.mxu0 0.0
    %705 = vmatpush1.xpose.msra.mxu0 0.0
    %706 = vmatprep.subr.mxu0 0.0
    %707 = vmatpush1.xpose.msra.mxu0 0.0
    %708 = vmatprep.subr.mxu0 0.0
    %709 = vmatpush1.xpose.msra.mxu0 %v676
    %710 = vmatprep.subr.mxu0 0.0
    %711 = vmatpush2.xpose.msra.mxu0 0.0
    %712 = vmatprep.subr.mxu0 0.0
    %713 = vmatpush2.xpose.msra.mxu0 0.0
    %714 = vmatprep.subr.mxu0 0.0
    %715 = vmatpush2.xpose.msra.mxu0 0.0
    %716 = vmatprep.subr.mxu0 0.0
    %717 = vmatpush2.xpose.msra.mxu0 0.0
    %718 = vmatprep.subr.mxu0 0.0
    %719 = vmatpush2.xpose.msra.mxu0 0.0
    %720 = vmatprep.subr.mxu0 0.0
    %721 = vmatpush2.xpose.msra.mxu0 0.0
    %722 = vmatprep.subr.mxu0 0.0
    %723 = vmatpush2.xpose.msra.mxu0 0.0
    %724 = vmatprep.subr.mxu0 0.0
    %725 = vmatpush2.xpose.msra.mxu0 0.0
    %726 = vmatprep.subr.mxu0 0.0
    %727 = vmatpush2.xpose.msra.mxu0 0.0
    %728 = vmatprep.subr.mxu0 0.0
    %729 = vmatpush2.xpose.msra.mxu0 0.0
    %730 = vmatprep.subr.mxu0 0.0
    %731 = vmatpush2.xpose.msra.mxu0 0.0
    %732 = vmatprep.subr.mxu0 0.0
    %733 = vmatpush2.xpose.msra.mxu0 0.0
    %734 = vmatprep.subr.mxu0 0.0
    %735 = vmatpush2.xpose.msra.mxu0 0.0
    %736 = vmatprep.subr.mxu0 0.0
    %737 = vmatpush2.xpose.msra.mxu0 0.0
    %738 = vmatprep.subr.mxu0 0.0
    %739 = vmatpush2.xpose.msra.mxu0 0.0
    %740 = vmatprep.subr.mxu0 0.0
    %741 = vmatpush2.xpose.msra.mxu0 0.0
    %742 = vmatprep.mubr.f32.mxu0 0.0
    %743 = vmatmul.mubr.f32.gmra.mxu0 %v674
    %v744 = vpop.f32.mrf.mxu0
    %v745 = vadd.f32 0.0, %v744
    %v746 = vpop.f32.mrf.mxu0
    %747 = vdwg.mxu0
    %749 = vrot.lane.b32.xlu0 %v205, 64
    %v750 = vpop.permute.xlu0 %749
    %v752 = vsel %vm282, %v269, 0
    %v754 = vsel %vm282, %v750, 0
    %756 = vmatprep.subr.mxu0 0.0
    %757 = vmatpush1.xpose.msra.mxu0 0.0
    %758 = vmatprep.subr.mxu0 0.0
    %759 = vmatpush1.xpose.msra.mxu0 0.0
    %760 = vmatprep.subr.mxu0 0.0
    %761 = vmatpush1.xpose.msra.mxu0 0.0
    %762 = vmatprep.subr.mxu0 0.0
    %763 = vmatpush1.xpose.msra.mxu0 0.0
    %764 = vmatprep.subr.mxu0 0.0
    %765 = vmatpush1.xpose.msra.mxu0 0.0
    %766 = vmatprep.subr.mxu0 0.0
    %767 = vmatpush1.xpose.msra.mxu0 0.0
    %768 = vmatprep.subr.mxu0 0.0
    %769 = vmatpush1.xpose.msra.mxu0 0.0
    %770 = vmatprep.subr.mxu0 0.0
    %771 = vmatpush1.xpose.msra.mxu0 0.0
    %772 = vmatprep.subr.mxu0 0.0
    %773 = vmatpush1.xpose.msra.mxu0 0.0
    %774 = vmatprep.subr.mxu0 0.0
    %775 = vmatpush1.xpose.msra.mxu0 0.0
    %776 = vmatprep.subr.mxu0 0.0
    %777 = vmatpush1.xpose.msra.mxu0 0.0
    %778 = vmatprep.subr.mxu0 0.0
    %779 = vmatpush1.xpose.msra.mxu0 0.0
    %780 = vmatprep.subr.mxu0 0.0
    %781 = vmatpush1.xpose.msra.mxu0 0.0
    %782 = vmatprep.subr.mxu0 0.0
    %783 = vmatpush1.xpose.msra.mxu0 0.0
    %784 = vmatprep.subr.mxu0 0.0
    %785 = vmatpush1.xpose.msra.mxu0 0.0
    %786 = vmatprep.subr.mxu0 0.0
    %787 = vmatpush1.xpose.msra.mxu0 %v754
    %788 = vmatprep.subr.mxu0 0.0
    %789 = vmatpush2.xpose.msra.mxu0 0.0
    %790 = vmatprep.subr.mxu0 0.0
    %791 = vmatpush2.xpose.msra.mxu0 0.0
    %792 = vmatprep.subr.mxu0 0.0
    %793 = vmatpush2.xpose.msra.mxu0 0.0
    %794 = vmatprep.subr.mxu0 0.0
    %795 = vmatpush2.xpose.msra.mxu0 0.0
    %796 = vmatprep.subr.mxu0 0.0
    %797 = vmatpush2.xpose.msra.mxu0 0.0
    %798 = vmatprep.subr.mxu0 0.0
    %799 = vmatpush2.xpose.msra.mxu0 0.0
    %800 = vmatprep.subr.mxu0 0.0
    %801 = vmatpush2.xpose.msra.mxu0 0.0
    %802 = vmatprep.subr.mxu0 0.0
    %803 = vmatpush2.xpose.msra.mxu0 0.0
    %804 = vmatprep.subr.mxu0 0.0
    %805 = vmatpush2.xpose.msra.mxu0 0.0
    %806 = vmatprep.subr.mxu0 0.0
    %807 = vmatpush2.xpose.msra.mxu0 0.0
    %808 = vmatprep.subr.mxu0 0.0
    %809 = vmatpush2.xpose.msra.mxu0 0.0
    %810 = vmatprep.subr.mxu0 0.0
    %811 = vmatpush2.xpose.msra.mxu0 0.0
    %812 = vmatprep.subr.mxu0 0.0
    %813 = vmatpush2.xpose.msra.mxu0 0.0
    %814 = vmatprep.subr.mxu0 0.0
    %815 = vmatpush2.xpose.msra.mxu0 0.0
    %816 = vmatprep.subr.mxu0 0.0
    %817 = vmatpush2.xpose.msra.mxu0 0.0
    %818 = vmatprep.subr.mxu0 0.0
    %819 = vmatpush2.xpose.msra.mxu0 0.0
    %820 = vmatprep.mubr.f32.mxu0 0.0
    %821 = vmatmul.mubr.f32.gmra.mxu0 %v752
    %v822 = vpop.f32.mrf.mxu0
    %v823 = vadd.f32 0.0, %v822
    %v824 = vpop.f32.mrf.mxu0
    %825 = vdwg.mxu0
    %827 = vrot.lane.b32.xlu0 %v211, 64
    %v828 = vpop.permute.xlu0 %827
    %v830 = vsel %vm282, %v270, 0
    %v832 = vsel %vm282, %v828, 0
    %834 = vmatprep.subr.mxu0 0.0
    %835 = vmatpush1.xpose.msra.mxu0 0.0
    %836 = vmatprep.subr.mxu0 0.0
    %837 = vmatpush1.xpose.msra.mxu0 0.0
    %838 = vmatprep.subr.mxu0 0.0
    %839 = vmatpush1.xpose.msra.mxu0 0.0
    %840 = vmatprep.subr.mxu0 0.0
    %841 = vmatpush1.xpose.msra.mxu0 0.0
    %842 = vmatprep.subr.mxu0 0.0
    %843 = vmatpush1.xpose.msra.mxu0 0.0
    %844 = vmatprep.subr.mxu0 0.0
    %845 = vmatpush1.xpose.msra.mxu0 0.0
    %846 = vmatprep.subr.mxu0 0.0
    %847 = vmatpush1.xpose.msra.mxu0 0.0
    %848 = vmatprep.subr.mxu0 0.0
    %849 = vmatpush1.xpose.msra.mxu0 0.0
    %850 = vmatprep.subr.mxu0 0.0
    %851 = vmatpush1.xpose.msra.mxu0 0.0
    %852 = vmatprep.subr.mxu0 0.0
    %853 = vmatpush1.xpose.msra.mxu0 0.0
    %854 = vmatprep.subr.mxu0 0.0
    %855 = vmatpush1.xpose.msra.mxu0 0.0
    %856 = vmatprep.subr.mxu0 0.0
    %857 = vmatpush1.xpose.msra.mxu0 0.0
    %858 = vmatprep.subr.mxu0 0.0
    %859 = vmatpush1.xpose.msra.mxu0 0.0
    %860 = vmatprep.subr.mxu0 0.0
    %861 = vmatpush1.xpose.msra.mxu0 0.0
    %862 = vmatprep.subr.mxu0 0.0
    %863 = vmatpush1.xpose.msra.mxu0 0.0
    %864 = vmatprep.subr.mxu0 0.0
    %865 = vmatpush1.xpose.msra.mxu0 %v832
    %866 = vmatprep.subr.mxu0 0.0
    %867 = vmatpush2.xpose.msra.mxu0 0.0
    %868 = vmatprep.subr.mxu0 0.0
    %869 = vmatpush2.xpose.msra.mxu0 0.0
    %870 = vmatprep.subr.mxu0 0.0
    %871 = vmatpush2.xpose.msra.mxu0 0.0
    %872 = vmatprep.subr.mxu0 0.0
    %873 = vmatpush2.xpose.msra.mxu0 0.0
    %874 = vmatprep.subr.mxu0 0.0
    %875 = vmatpush2.xpose.msra.mxu0 0.0
    %876 = vmatprep.subr.mxu0 0.0
    %877 = vmatpush2.xpose.msra.mxu0 0.0
    %878 = vmatprep.subr.mxu0 0.0
    %879 = vmatpush2.xpose.msra.mxu0 0.0
    %880 = vmatprep.subr.mxu0 0.0
    %881 = vmatpush2.xpose.msra.mxu0 0.0
    %882 = vmatprep.subr.mxu0 0.0
    %883 = vmatpush2.xpose.msra.mxu0 0.0
    %884 = vmatprep.subr.mxu0 0.0
    %885 = vmatpush2.xpose.msra.mxu0 0.0
    %886 = vmatprep.subr.mxu0 0.0
    %887 = vmatpush2.xpose.msra.mxu0 0.0
    %888 = vmatprep.subr.mxu0 0.0
    %889 = vmatpush2.xpose.msra.mxu0 0.0
    %890 = vmatprep.subr.mxu0 0.0
    %891 = vmatpush2.xpose.msra.mxu0 0.0
    %892 = vmatprep.subr.mxu0 0.0
    %893 = vmatpush2.xpose.msra.mxu0 0.0
    %894 = vmatprep.subr.mxu0 0.0
    %895 = vmatpush2.xpose.msra.mxu0 0.0
    %896 = vmatprep.subr.mxu0 0.0
    %897 = vmatpush2.xpose.msra.mxu0 0.0
    %898 = vmatprep.mubr.f32.mxu0 0.0
    %899 = vmatmul.mubr.f32.gmra.mxu0 %v830
    %v900 = vpop.f32.mrf.mxu0
    %v901 = vadd.f32 0.0, %v900
    %v902 = vpop.f32.mrf.mxu0
    %903 = vdwg.mxu0
    %905 = vrot.lane.b32.xlu0 %v217, 64
    %v906 = vpop.permute.xlu0 %905
    %v908 = vsel %vm282, %v271, 0
    %v910 = vsel %vm282, %v906, 0
    %912 = vmatprep.subr.mxu0 0.0
    %913 = vmatpush1.xpose.msra.mxu0 0.0
    %914 = vmatprep.subr.mxu0 0.0
    %915 = vmatpush1.xpose.msra.mxu0 0.0
    %916 = vmatprep.subr.mxu0 0.0
    %917 = vmatpush1.xpose.msra.mxu0 0.0
    %918 = vmatprep.subr.mxu0 0.0
    %919 = vmatpush1.xpose.msra.mxu0 0.0
    %920 = vmatprep.subr.mxu0 0.0
    %921 = vmatpush1.xpose.msra.mxu0 0.0
    %922 = vmatprep.subr.mxu0 0.0
    %923 = vmatpush1.xpose.msra.mxu0 0.0
    %924 = vmatprep.subr.mxu0 0.0
    %925 = vmatpush1.xpose.msra.mxu0 0.0
    %926 = vmatprep.subr.mxu0 0.0
    %927 = vmatpush1.xpose.msra.mxu0 0.0
    %928 = vmatprep.subr.mxu0 0.0
    %929 = vmatpush1.xpose.msra.mxu0 0.0
    %930 = vmatprep.subr.mxu0 0.0
    %931 = vmatpush1.xpose.msra.mxu0 0.0
    %932 = vmatprep.subr.mxu0 0.0
    %933 = vmatpush1.xpose.msra.mxu0 0.0
    %934 = vmatprep.subr.mxu0 0.0
    %935 = vmatpush1.xpose.msra.mxu0 0.0
    %936 = vmatprep.subr.mxu0 0.0
    %937 = vmatpush1.xpose.msra.mxu0 0.0
    %938 = vmatprep.subr.mxu0 0.0
    %939 = vmatpush1.xpose.msra.mxu0 0.0
    %940 = vmatprep.subr.mxu0 0.0
    %941 = vmatpush1.xpose.msra.mxu0 0.0
    %942 = vmatprep.subr.mxu0 0.0
    %943 = vmatpush1.xpose.msra.mxu0 %v910
    %944 = vmatprep.subr.mxu0 0.0
    %945 = vmatpush2.xpose.msra.mxu0 0.0
    %946 = vmatprep.subr.mxu0 0.0
    %947 = vmatpush2.xpose.msra.mxu0 0.0
    %948 = vmatprep.subr.mxu0 0.0
    %949 = vmatpush2.xpose.msra.mxu0 0.0
    %950 = vmatprep.subr.mxu0 0.0
    %951 = vmatpush2.xpose.msra.mxu0 0.0
    %952 = vmatprep.subr.mxu0 0.0
    %953 = vmatpush2.xpose.msra.mxu0 0.0
    %954 = vmatprep.subr.mxu0 0.0
    %955 = vmatpush2.xpose.msra.mxu0 0.0
    %956 = vmatprep.subr.mxu0 0.0
    %957 = vmatpush2.xpose.msra.mxu0 0.0
    %958 = vmatprep.subr.mxu0 0.0
    %959 = vmatpush2.xpose.msra.mxu0 0.0
    %960 = vmatprep.subr.mxu0 0.0
    %961 = vmatpush2.xpose.msra.mxu0 0.0
    %962 = vmatprep.subr.mxu0 0.0
    %963 = vmatpush2.xpose.msra.mxu0 0.0
    %964 = vmatprep.subr.mxu0 0.0
    %965 = vmatpush2.xpose.msra.mxu0 0.0
    %966 = vmatprep.subr.mxu0 0.0
    %967 = vmatpush2.xpose.msra.mxu0 0.0
    %968 = vmatprep.subr.mxu0 0.0
    %969 = vmatpush2.xpose.msra.mxu0 0.0
    %970 = vmatprep.subr.mxu0 0.0
    %971 = vmatpush2.xpose.msra.mxu0 0.0
    %972 = vmatprep.subr.mxu0 0.0
    %973 = vmatpush2.xpose.msra.mxu0 0.0
    %974 = vmatprep.subr.mxu0 0.0
    %975 = vmatpush2.xpose.msra.mxu0 0.0
    %976 = vmatprep.mubr.f32.mxu0 0.0
    %977 = vmatmul.mubr.f32.gmra.mxu0 %v908
    %v978 = vpop.f32.mrf.mxu0
    %v979 = vadd.f32 0.0, %v978
    %v980 = vpop.f32.mrf.mxu0
    %981 = vdwg.mxu0
    %983 = vrot.lane.b32.xlu0 %v223, 64
    %v984 = vpop.permute.xlu0 %983
    %v986 = vsel %vm282, %v272, 0
    %v988 = vsel %vm282, %v984, 0
    %990 = vmatprep.subr.mxu0 0.0
    %991 = vmatpush1.xpose.msra.mxu0 0.0
    %992 = vmatprep.subr.mxu0 0.0
    %993 = vmatpush1.xpose.msra.mxu0 0.0
    %994 = vmatprep.subr.mxu0 0.0
    %995 = vmatpush1.xpose.msra.mxu0 0.0
    %996 = vmatprep.subr.mxu0 0.0
    %997 = vmatpush1.xpose.msra.mxu0 0.0
    %998 = vmatprep.subr.mxu0 0.0
    %999 = vmatpush1.xpose.msra.mxu0 0.0
    %1000 = vmatprep.subr.mxu0 0.0
    %1001 = vmatpush1.xpose.msra.mxu0 0.0
    %1002 = vmatprep.subr.mxu0 0.0
    %1003 = vmatpush1.xpose.msra.mxu0 0.0
    %1004 = vmatprep.subr.mxu0 0.0
    %1005 = vmatpush1.xpose.msra.mxu0 0.0
    %1006 = vmatprep.subr.mxu0 0.0
    %1007 = vmatpush1.xpose.msra.mxu0 0.0
    %1008 = vmatprep.subr.mxu0 0.0
    %1009 = vmatpush1.xpose.msra.mxu0 0.0
    %1010 = vmatprep.subr.mxu0 0.0
    %1011 = vmatpush1.xpose.msra.mxu0 0.0
    %1012 = vmatprep.subr.mxu0 0.0
    %1013 = vmatpush1.xpose.msra.mxu0 0.0
    %1014 = vmatprep.subr.mxu0 0.0
    %1015 = vmatpush1.xpose.msra.mxu0 0.0
    %1016 = vmatprep.subr.mxu0 0.0
    %1017 = vmatpush1.xpose.msra.mxu0 0.0
    %1018 = vmatprep.subr.mxu0 0.0
    %1019 = vmatpush1.xpose.msra.mxu0 0.0
    %1020 = vmatprep.subr.mxu0 0.0
    %1021 = vmatpush1.xpose.msra.mxu0 %v988
    %1022 = vmatprep.subr.mxu0 0.0
    %1023 = vmatpush2.xpose.msra.mxu0 0.0
    %1024 = vmatprep.subr.mxu0 0.0
    %1025 = vmatpush2.xpose.msra.mxu0 0.0
    %1026 = vmatprep.subr.mxu0 0.0
    %1027 = vmatpush2.xpose.msra.mxu0 0.0
    %1028 = vmatprep.subr.mxu0 0.0
    %1029 = vmatpush2.xpose.msra.mxu0 0.0
    %1030 = vmatprep.subr.mxu0 0.0
    %1031 = vmatpush2.xpose.msra.mxu0 0.0
    %1032 = vmatprep.subr.mxu0 0.0
    %1033 = vmatpush2.xpose.msra.mxu0 0.0
    %1034 = vmatprep.subr.mxu0 0.0
    %1035 = vmatpush2.xpose.msra.mxu0 0.0
    %1036 = vmatprep.subr.mxu0 0.0
    %1037 = vmatpush2.xpose.msra.mxu0 0.0
    %1038 = vmatprep.subr.mxu0 0.0
    %1039 = vmatpush2.xpose.msra.mxu0 0.0
    %1040 = vmatprep.subr.mxu0 0.0
    %1041 = vmatpush2.xpose.msra.mxu0 0.0
    %1042 = vmatprep.subr.mxu0 0.0
    %1043 = vmatpush2.xpose.msra.mxu0 0.0
    %1044 = vmatprep.subr.mxu0 0.0
    %1045 = vmatpush2.xpose.msra.mxu0 0.0
    %1046 = vmatprep.subr.mxu0 0.0
    %1047 = vmatpush2.xpose.msra.mxu0 0.0
    %1048 = vmatprep.subr.mxu0 0.0
    %1049 = vmatpush2.xpose.msra.mxu0 0.0
    %1050 = vmatprep.subr.mxu0 0.0
    %1051 = vmatpush2.xpose.msra.mxu0 0.0
    %1052 = vmatprep.subr.mxu0 0.0
    %1053 = vmatpush2.xpose.msra.mxu0 0.0
    %1054 = vmatprep.mubr.f32.mxu0 0.0
    %1055 = vmatmul.mubr.f32.gmra.mxu0 %v986
    %v1056 = vpop.f32.mrf.mxu0
    %v1057 = vadd.f32 0.0, %v1056
    %v1058 = vpop.f32.mrf.mxu0
    %1059 = vdwg.mxu0
    %1061 = vrot.lane.b32.xlu0 %v229, 64
    %v1062 = vpop.permute.xlu0 %1061
    %v1064 = vsel %vm282, %v273, 0
    %v1066 = vsel %vm282, %v1062, 0
    %1068 = vmatprep.subr.mxu0 0.0
    %1069 = vmatpush1.xpose.msra.mxu0 0.0
    %1070 = vmatprep.subr.mxu0 0.0
    %1071 = vmatpush1.xpose.msra.mxu0 0.0
    %1072 = vmatprep.subr.mxu0 0.0
    %1073 = vmatpush1.xpose.msra.mxu0 0.0
    %1074 = vmatprep.subr.mxu0 0.0
    %1075 = vmatpush1.xpose.msra.mxu0 0.0
    %1076 = vmatprep.subr.mxu0 0.0
    %1077 = vmatpush1.xpose.msra.mxu0 0.0
    %1078 = vmatprep.subr.mxu0 0.0
    %1079 = vmatpush1.xpose.msra.mxu0 0.0
    %1080 = vmatprep.subr.mxu0 0.0
    %1081 = vmatpush1.xpose.msra.mxu0 0.0
    %1082 = vmatprep.subr.mxu0 0.0
    %1083 = vmatpush1.xpose.msra.mxu0 0.0
    %1084 = vmatprep.subr.mxu0 0.0
    %1085 = vmatpush1.xpose.msra.mxu0 0.0
    %1086 = vmatprep.subr.mxu0 0.0
    %1087 = vmatpush1.xpose.msra.mxu0 0.0
    %1088 = vmatprep.subr.mxu0 0.0
    %1089 = vmatpush1.xpose.msra.mxu0 0.0
    %1090 = vmatprep.subr.mxu0 0.0
    %1091 = vmatpush1.xpose.msra.mxu0 0.0
    %1092 = vmatprep.subr.mxu0 0.0
    %1093 = vmatpush1.xpose.msra.mxu0 0.0
    %1094 = vmatprep.subr.mxu0 0.0
    %1095 = vmatpush1.xpose.msra.mxu0 0.0
    %1096 = vmatprep.subr.mxu0 0.0
    %1097 = vmatpush1.xpose.msra.mxu0 0.0
    %1098 = vmatprep.subr.mxu0 0.0
    %1099 = vmatpush1.xpose.msra.mxu0 %v1066
    %1100 = vmatprep.subr.mxu0 0.0
    %1101 = vmatpush2.xpose.msra.mxu0 0.0
    %1102 = vmatprep.subr.mxu0 0.0
    %1103 = vmatpush2.xpose.msra.mxu0 0.0
    %1104 = vmatprep.subr.mxu0 0.0
    %1105 = vmatpush2.xpose.msra.mxu0 0.0
    %1106 = vmatprep.subr.mxu0 0.0
    %1107 = vmatpush2.xpose.msra.mxu0 0.0
    %1108 = vmatprep.subr.mxu0 0.0
    %1109 = vmatpush2.xpose.msra.mxu0 0.0
    %1110 = vmatprep.subr.mxu0 0.0
    %1111 = vmatpush2.xpose.msra.mxu0 0.0
    %1112 = vmatprep.subr.mxu0 0.0
    %1113 = vmatpush2.xpose.msra.mxu0 0.0
    %1114 = vmatprep.subr.mxu0 0.0
    %1115 = vmatpush2.xpose.msra.mxu0 0.0
    %1116 = vmatprep.subr.mxu0 0.0
    %1117 = vmatpush2.xpose.msra.mxu0 0.0
    %1118 = vmatprep.subr.mxu0 0.0
    %1119 = vmatpush2.xpose.msra.mxu0 0.0
    %1120 = vmatprep.subr.mxu0 0.0
    %1121 = vmatpush2.xpose.msra.mxu0 0.0
    %1122 = vmatprep.subr.mxu0 0.0
    %1123 = vmatpush2.xpose.msra.mxu0 0.0
    %1124 = vmatprep.subr.mxu0 0.0
    %1125 = vmatpush2.xpose.msra.mxu0 0.0
    %1126 = vmatprep.subr.mxu0 0.0
    %1127 = vmatpush2.xpose.msra.mxu0 0.0
    %1128 = vmatprep.subr.mxu0 0.0
    %1129 = vmatpush2.xpose.msra.mxu0 0.0
    %1130 = vmatprep.subr.mxu0 0.0
    %1131 = vmatpush2.xpose.msra.mxu0 0.0
    %1132 = vmatprep.mubr.f32.mxu0 0.0
    %1133 = vmatmul.mubr.f32.gmra.mxu0 %v1064
    %v1134 = vpop.f32.mrf.mxu0
    %v1135 = vadd.f32 0.0, %v1134
    %v1136 = vpop.f32.mrf.mxu0
    %1137 = vdwg.mxu0
    %1139 = vrot.lane.b32.xlu0 %v235, 64
    %v1140 = vpop.permute.xlu0 %1139
    %v1142 = vsel %vm282, %v274, 0
    %v1144 = vsel %vm282, %v1140, 0
    %1146 = vmatprep.subr.mxu0 0.0
    %1147 = vmatpush1.xpose.msra.mxu0 0.0
    %1148 = vmatprep.subr.mxu0 0.0
    %1149 = vmatpush1.xpose.msra.mxu0 0.0
    %1150 = vmatprep.subr.mxu0 0.0
    %1151 = vmatpush1.xpose.msra.mxu0 0.0
    %1152 = vmatprep.subr.mxu0 0.0
    %1153 = vmatpush1.xpose.msra.mxu0 0.0
    %1154 = vmatprep.subr.mxu0 0.0
    %1155 = vmatpush1.xpose.msra.mxu0 0.0
    %1156 = vmatprep.subr.mxu0 0.0
    %1157 = vmatpush1.xpose.msra.mxu0 0.0
    %1158 = vmatprep.subr.mxu0 0.0
    %1159 = vmatpush1.xpose.msra.mxu0 0.0
    %1160 = vmatprep.subr.mxu0 0.0
    %1161 = vmatpush1.xpose.msra.mxu0 0.0
    %1162 = vmatprep.subr.mxu0 0.0
    %1163 = vmatpush1.xpose.msra.mxu0 0.0
    %1164 = vmatprep.subr.mxu0 0.0
    %1165 = vmatpush1.xpose.msra.mxu0 0.0
    %1166 = vmatprep.subr.mxu0 0.0
    %1167 = vmatpush1.xpose.msra.mxu0 0.0
    %1168 = vmatprep.subr.mxu0 0.0
    %1169 = vmatpush1.xpose.msra.mxu0 0.0
    %1170 = vmatprep.subr.mxu0 0.0
    %1171 = vmatpush1.xpose.msra.mxu0 0.0
    %1172 = vmatprep.subr.mxu0 0.0
    %1173 = vmatpush1.xpose.msra.mxu0 0.0
    %1174 = vmatprep.subr.mxu0 0.0
    %1175 = vmatpush1.xpose.msra.mxu0 0.0
    %1176 = vmatprep.subr.mxu0 0.0
    %1177 = vmatpush1.xpose.msra.mxu0 %v1144
    %1178 = vmatprep.subr.mxu0 0.0
    %1179 = vmatpush2.xpose.msra.mxu0 0.0
    %1180 = vmatprep.subr.mxu0 0.0
    %1181 = vmatpush2.xpose.msra.mxu0 0.0
    %1182 = vmatprep.subr.mxu0 0.0
    %1183 = vmatpush2.xpose.msra.mxu0 0.0
    %1184 = vmatprep.subr.mxu0 0.0
    %1185 = vmatpush2.xpose.msra.mxu0 0.0
    %1186 = vmatprep.subr.mxu0 0.0
    %1187 = vmatpush2.xpose.msra.mxu0 0.0
    %1188 = vmatprep.subr.mxu0 0.0
    %1189 = vmatpush2.xpose.msra.mxu0 0.0
    %1190 = vmatprep.subr.mxu0 0.0
    %1191 = vmatpush2.xpose.msra.mxu0 0.0
    %1192 = vmatprep.subr.mxu0 0.0
    %1193 = vmatpush2.xpose.msra.mxu0 0.0
    %1194 = vmatprep.subr.mxu0 0.0
    %1195 = vmatpush2.xpose.msra.mxu0 0.0
    %1196 = vmatprep.subr.mxu0 0.0
    %1197 = vmatpush2.xpose.msra.mxu0 0.0
    %1198 = vmatprep.subr.mxu0 0.0
    %1199 = vmatpush2.xpose.msra.mxu0 0.0
    %1200 = vmatprep.subr.mxu0 0.0
    %1201 = vmatpush2.xpose.msra.mxu0 0.0
    %1202 = vmatprep.subr.mxu0 0.0
    %1203 = vmatpush2.xpose.msra.mxu0 0.0
    %1204 = vmatprep.subr.mxu0 0.0
    %1205 = vmatpush2.xpose.msra.mxu0 0.0
    %1206 = vmatprep.subr.mxu0 0.0
    %1207 = vmatpush2.xpose.msra.mxu0 0.0
    %1208 = vmatprep.subr.mxu0 0.0
    %1209 = vmatpush2.xpose.msra.mxu0 0.0
    %1210 = vmatprep.mubr.f32.mxu0 0.0
    %1211 = vmatmul.mubr.f32.gmra.mxu0 %v1142
    %v1212 = vpop.f32.mrf.mxu0
    %v1213 = vadd.f32 0.0, %v1212
    %v1214 = vpop.f32.mrf.mxu0
    %1215 = vdwg.mxu0
    %1217 = vrot.lane.b32.xlu0 %v241, 64
    %v1218 = vpop.permute.xlu0 %1217
    %v1220 = vsel %vm282, %v275, 0
    %v1222 = vsel %vm282, %v1218, 0
    %1224 = vmatprep.subr.mxu0 0.0
    %1225 = vmatpush1.xpose.msra.mxu0 0.0
    %1226 = vmatprep.subr.mxu0 0.0
    %1227 = vmatpush1.xpose.msra.mxu0 0.0
    %1228 = vmatprep.subr.mxu0 0.0
    %1229 = vmatpush1.xpose.msra.mxu0 0.0
    %1230 = vmatprep.subr.mxu0 0.0
    %1231 = vmatpush1.xpose.msra.mxu0 0.0
    %1232 = vmatprep.subr.mxu0 0.0
    %1233 = vmatpush1.xpose.msra.mxu0 0.0
    %1234 = vmatprep.subr.mxu0 0.0
    %1235 = vmatpush1.xpose.msra.mxu0 0.0
    %1236 = vmatprep.subr.mxu0 0.0
    %1237 = vmatpush1.xpose.msra.mxu0 0.0
    %1238 = vmatprep.subr.mxu0 0.0
    %1239 = vmatpush1.xpose.msra.mxu0 0.0
    %1240 = vmatprep.subr.mxu0 0.0
    %1241 = vmatpush1.xpose.msra.mxu0 0.0
    %1242 = vmatprep.subr.mxu0 0.0
    %1243 = vmatpush1.xpose.msra.mxu0 0.0
    %1244 = vmatprep.subr.mxu0 0.0
    %1245 = vmatpush1.xpose.msra.mxu0 0.0
    %1246 = vmatprep.subr.mxu0 0.0
    %1247 = vmatpush1.xpose.msra.mxu0 0.0
    %1248 = vmatprep.subr.mxu0 0.0
    %1249 = vmatpush1.xpose.msra.mxu0 0.0
    %1250 = vmatprep.subr.mxu0 0.0
    %1251 = vmatpush1.xpose.msra.mxu0 0.0
    %1252 = vmatprep.subr.mxu0 0.0
    %1253 = vmatpush1.xpose.msra.mxu0 0.0
    %1254 = vmatprep.subr.mxu0 0.0
    %1255 = vmatpush1.xpose.msra.mxu0 %v1222
    %1256 = vmatprep.subr.mxu0 0.0
    %1257 = vmatpush2.xpose.msra.mxu0 0.0
    %1258 = vmatprep.subr.mxu0 0.0
    %1259 = vmatpush2.xpose.msra.mxu0 0.0
    %1260 = vmatprep.subr.mxu0 0.0
    %1261 = vmatpush2.xpose.msra.mxu0 0.0
    %1262 = vmatprep.subr.mxu0 0.0
    %1263 = vmatpush2.xpose.msra.mxu0 0.0
    %1264 = vmatprep.subr.mxu0 0.0
    %1265 = vmatpush2.xpose.msra.mxu0 0.0
    %1266 = vmatprep.subr.mxu0 0.0
    %1267 = vmatpush2.xpose.msra.mxu0 0.0
    %1268 = vmatprep.subr.mxu0 0.0
    %1269 = vmatpush2.xpose.msra.mxu0 0.0
    %1270 = vmatprep.subr.mxu0 0.0
    %1271 = vmatpush2.xpose.msra.mxu0 0.0
    %1272 = vmatprep.subr.mxu0 0.0
    %1273 = vmatpush2.xpose.msra.mxu0 0.0
    %1274 = vmatprep.subr.mxu0 0.0
    %1275 = vmatpush2.xpose.msra.mxu0 0.0
    %1276 = vmatprep.subr.mxu0 0.0
    %1277 = vmatpush2.xpose.msra.mxu0 0.0
    %1278 = vmatprep.subr.mxu0 0.0
    %1279 = vmatpush2.xpose.msra.mxu0 0.0
    %1280 = vmatprep.subr.mxu0 0.0
    %1281 = vmatpush2.xpose.msra.mxu0 0.0
    %1282 = vmatprep.subr.mxu0 0.0
    %1283 = vmatpush2.xpose.msra.mxu0 0.0
    %1284 = vmatprep.subr.mxu0 0.0
    %1285 = vmatpush2.xpose.msra.mxu0 0.0
    %1286 = vmatprep.subr.mxu0 0.0
    %1287 = vmatpush2.xpose.msra.mxu0 0.0
    %1288 = vmatprep.mubr.f32.mxu0 0.0
    %1289 = vmatmul.mubr.f32.gmra.mxu0 %v1220
    %v1290 = vpop.f32.mrf.mxu0
    %v1291 = vadd.f32 0.0, %v1290
    %v1292 = vpop.f32.mrf.mxu0
    %1293 = vdwg.mxu0
    %1295 = vrot.lane.b32.xlu0 %v247, 64
    %v1296 = vpop.permute.xlu0 %1295
    %v1298 = vsel %vm282, %v276, 0
    %v1300 = vsel %vm282, %v1296, 0
    %1302 = vmatprep.subr.mxu0 0.0
    %1303 = vmatpush1.xpose.msra.mxu0 0.0
    %1304 = vmatprep.subr.mxu0 0.0
    %1305 = vmatpush1.xpose.msra.mxu0 0.0
    %1306 = vmatprep.subr.mxu0 0.0
    %1307 = vmatpush1.xpose.msra.mxu0 0.0
    %1308 = vmatprep.subr.mxu0 0.0
    %1309 = vmatpush1.xpose.msra.mxu0 0.0
    %1310 = vmatprep.subr.mxu0 0.0
    %1311 = vmatpush1.xpose.msra.mxu0 0.0
    %1312 = vmatprep.subr.mxu0 0.0
    %1313 = vmatpush1.xpose.msra.mxu0 0.0
    %1314 = vmatprep.subr.mxu0 0.0
    %1315 = vmatpush1.xpose.msra.mxu0 0.0
    %1316 = vmatprep.subr.mxu0 0.0
    %1317 = vmatpush1.xpose.msra.mxu0 0.0
    %1318 = vmatprep.subr.mxu0 0.0
    %1319 = vmatpush1.xpose.msra.mxu0 0.0
    %1320 = vmatprep.subr.mxu0 0.0
    %1321 = vmatpush1.xpose.msra.mxu0 0.0
    %1322 = vmatprep.subr.mxu0 0.0
    %1323 = vmatpush1.xpose.msra.mxu0 0.0
    %1324 = vmatprep.subr.mxu0 0.0
    %1325 = vmatpush1.xpose.msra.mxu0 0.0
    %1326 = vmatprep.subr.mxu0 0.0
    %1327 = vmatpush1.xpose.msra.mxu0 0.0
    %1328 = vmatprep.subr.mxu0 0.0
    %1329 = vmatpush1.xpose.msra.mxu0 0.0
    %1330 = vmatprep.subr.mxu0 0.0
    %1331 = vmatpush1.xpose.msra.mxu0 0.0
    %1332 = vmatprep.subr.mxu0 0.0
    %1333 = vmatpush1.xpose.msra.mxu0 %v1300
    %1334 = vmatprep.subr.mxu0 0.0
    %1335 = vmatpush2.xpose.msra.mxu0 0.0
    %1336 = vmatprep.subr.mxu0 0.0
    %1337 = vmatpush2.xpose.msra.mxu0 0.0
    %1338 = vmatprep.subr.mxu0 0.0
    %1339 = vmatpush2.xpose.msra.mxu0 0.0
    %1340 = vmatprep.subr.mxu0 0.0
    %1341 = vmatpush2.xpose.msra.mxu0 0.0
    %1342 = vmatprep.subr.mxu0 0.0
    %1343 = vmatpush2.xpose.msra.mxu0 0.0
    %1344 = vmatprep.subr.mxu0 0.0
    %1345 = vmatpush2.xpose.msra.mxu0 0.0
    %1346 = vmatprep.subr.mxu0 0.0
    %1347 = vmatpush2.xpose.msra.mxu0 0.0
    %1348 = vmatprep.subr.mxu0 0.0
    %1349 = vmatpush2.xpose.msra.mxu0 0.0
    %1350 = vmatprep.subr.mxu0 0.0
    %1351 = vmatpush2.xpose.msra.mxu0 0.0
    %1352 = vmatprep.subr.mxu0 0.0
    %1353 = vmatpush2.xpose.msra.mxu0 0.0
    %1354 = vmatprep.subr.mxu0 0.0
    %1355 = vmatpush2.xpose.msra.mxu0 0.0
    %1356 = vmatprep.subr.mxu0 0.0
    %1357 = vmatpush2.xpose.msra.mxu0 0.0
    %1358 = vmatprep.subr.mxu0 0.0
    %1359 = vmatpush2.xpose.msra.mxu0 0.0
    %1360 = vmatprep.subr.mxu0 0.0
    %1361 = vmatpush2.xpose.msra.mxu0 0.0
    %1362 = vmatprep.subr.mxu0 0.0
    %1363 = vmatpush2.xpose.msra.mxu0 0.0
    %1364 = vmatprep.subr.mxu0 0.0
    %1365 = vmatpush2.xpose.msra.mxu0 0.0
    %1366 = vmatprep.mubr.f32.mxu0 0.0
    %1367 = vmatmul.mubr.f32.gmra.mxu0 %v1298
    %v1368 = vpop.f32.mrf.mxu0
    %v1369 = vadd.f32 0.0, %v1368
    %v1370 = vpop.f32.mrf.mxu0
    %1371 = vdwg.mxu0
    %1373 = vrot.lane.b32.xlu0 %v253, 64
    %v1374 = vpop.permute.xlu0 %1373
    %v1376 = vsel %vm282, %v277, 0
    %v1378 = vsel %vm282, %v1374, 0
    %1380 = vmatprep.subr.mxu0 0.0
    %1381 = vmatpush1.xpose.msra.mxu0 0.0
    %1382 = vmatprep.subr.mxu0 0.0
    %1383 = vmatpush1.xpose.msra.mxu0 0.0
    %1384 = vmatprep.subr.mxu0 0.0
    %1385 = vmatpush1.xpose.msra.mxu0 0.0
    %1386 = vmatprep.subr.mxu0 0.0
    %1387 = vmatpush1.xpose.msra.mxu0 0.0
    %1388 = vmatprep.subr.mxu0 0.0
    %1389 = vmatpush1.xpose.msra.mxu0 0.0
    %1390 = vmatprep.subr.mxu0 0.0
    %1391 = vmatpush1.xpose.msra.mxu0 0.0
    %1392 = vmatprep.subr.mxu0 0.0
    %1393 = vmatpush1.xpose.msra.mxu0 0.0
    %1394 = vmatprep.subr.mxu0 0.0
    %1395 = vmatpush1.xpose.msra.mxu0 0.0
    %1396 = vmatprep.subr.mxu0 0.0
    %1397 = vmatpush1.xpose.msra.mxu0 0.0
    %1398 = vmatprep.subr.mxu0 0.0
    %1399 = vmatpush1.xpose.msra.mxu0 0.0
    %1400 = vmatprep.subr.mxu0 0.0
    %1401 = vmatpush1.xpose.msra.mxu0 0.0
    %1402 = vmatprep.subr.mxu0 0.0
    %1403 = vmatpush1.xpose.msra.mxu0 0.0
    %1404 = vmatprep.subr.mxu0 0.0
    %1405 = vmatpush1.xpose.msra.mxu0 0.0
    %1406 = vmatprep.subr.mxu0 0.0
    %1407 = vmatpush1.xpose.msra.mxu0 0.0
    %1408 = vmatprep.subr.mxu0 0.0
    %1409 = vmatpush1.xpose.msra.mxu0 0.0
    %1410 = vmatprep.subr.mxu0 0.0
    %1411 = vmatpush1.xpose.msra.mxu0 %v1378
    %1412 = vmatprep.subr.mxu0 0.0
    %1413 = vmatpush2.xpose.msra.mxu0 0.0
    %1414 = vmatprep.subr.mxu0 0.0
    %1415 = vmatpush2.xpose.msra.mxu0 0.0
    %1416 = vmatprep.subr.mxu0 0.0
    %1417 = vmatpush2.xpose.msra.mxu0 0.0
    %1418 = vmatprep.subr.mxu0 0.0
    %1419 = vmatpush2.xpose.msra.mxu0 0.0
    %1420 = vmatprep.subr.mxu0 0.0
    %1421 = vmatpush2.xpose.msra.mxu0 0.0
    %1422 = vmatprep.subr.mxu0 0.0
    %1423 = vmatpush2.xpose.msra.mxu0 0.0
    %1424 = vmatprep.subr.mxu0 0.0
    %1425 = vmatpush2.xpose.msra.mxu0 0.0
    %1426 = vmatprep.subr.mxu0 0.0
    %1427 = vmatpush2.xpose.msra.mxu0 0.0
    %1428 = vmatprep.subr.mxu0 0.0
    %1429 = vmatpush2.xpose.msra.mxu0 0.0
    %1430 = vmatprep.subr.mxu0 0.0
    %1431 = vmatpush2.xpose.msra.mxu0 0.0
    %1432 = vmatprep.subr.mxu0 0.0
    %1433 = vmatpush2.xpose.msra.mxu0 0.0
    %1434 = vmatprep.subr.mxu0 0.0
    %1435 = vmatpush2.xpose.msra.mxu0 0.0
    %1436 = vmatprep.subr.mxu0 0.0
    %1437 = vmatpush2.xpose.msra.mxu0 0.0
    %1438 = vmatprep.subr.mxu0 0.0
    %1439 = vmatpush2.xpose.msra.mxu0 0.0
    %1440 = vmatprep.subr.mxu0 0.0
    %1441 = vmatpush2.xpose.msra.mxu0 0.0
    %1442 = vmatprep.subr.mxu0 0.0
    %1443 = vmatpush2.xpose.msra.mxu0 0.0
    %1444 = vmatprep.mubr.f32.mxu0 0.0
    %1445 = vmatmul.mubr.f32.gmra.mxu0 %v1376
    %v1446 = vpop.f32.mrf.mxu0
    %v1447 = vadd.f32 0.0, %v1446
    %v1448 = vpop.f32.mrf.mxu0
    %1449 = vdwg.mxu0
    %1451 = vrot.lane.b32.xlu0 %v259, 64
    %v1452 = vpop.permute.xlu0 %1451
    %v1454 = vsel %vm282, %v278, 0
    %v1456 = vsel %vm282, %v1452, 0
    %1458 = vmatprep.subr.mxu0 0.0
    %1459 = vmatpush1.xpose.msra.mxu0 0.0
    %1460 = vmatprep.subr.mxu0 0.0
    %1461 = vmatpush1.xpose.msra.mxu0 0.0
    %1462 = vmatprep.subr.mxu0 0.0
    %1463 = vmatpush1.xpose.msra.mxu0 0.0
    %1464 = vmatprep.subr.mxu0 0.0
    %1465 = vmatpush1.xpose.msra.mxu0 0.0
    %1466 = vmatprep.subr.mxu0 0.0
    %1467 = vmatpush1.xpose.msra.mxu0 0.0
    %1468 = vmatprep.subr.mxu0 0.0
    %1469 = vmatpush1.xpose.msra.mxu0 0.0
    %1470 = vmatprep.subr.mxu0 0.0
    %1471 = vmatpush1.xpose.msra.mxu0 0.0
    %1472 = vmatprep.subr.mxu0 0.0
    %1473 = vmatpush1.xpose.msra.mxu0 0.0
    %1474 = vmatprep.subr.mxu0 0.0
    %1475 = vmatpush1.xpose.msra.mxu0 0.0
    %1476 = vmatprep.subr.mxu0 0.0
    %1477 = vmatpush1.xpose.msra.mxu0 0.0
    %1478 = vmatprep.subr.mxu0 0.0
    %1479 = vmatpush1.xpose.msra.mxu0 0.0
    %1480 = vmatprep.subr.mxu0 0.0
    %1481 = vmatpush1.xpose.msra.mxu0 0.0
    %1482 = vmatprep.subr.mxu0 0.0
    %1483 = vmatpush1.xpose.msra.mxu0 0.0
    %1484 = vmatprep.subr.mxu0 0.0
    %1485 = vmatpush1.xpose.msra.mxu0 0.0
    %1486 = vmatprep.subr.mxu0 0.0
    %1487 = vmatpush1.xpose.msra.mxu0 0.0
    %1488 = vmatprep.subr.mxu0 0.0
    %1489 = vmatpush1.xpose.msra.mxu0 %v1456
    %1490 = vmatprep.subr.mxu0 0.0
    %1491 = vmatpush2.xpose.msra.mxu0 0.0
    %1492 = vmatprep.subr.mxu0 0.0
    %1493 = vmatpush2.xpose.msra.mxu0 0.0
    %1494 = vmatprep.subr.mxu0 0.0
    %1495 = vmatpush2.xpose.msra.mxu0 0.0
    %1496 = vmatprep.subr.mxu0 0.0
    %1497 = vmatpush2.xpose.msra.mxu0 0.0
    %1498 = vmatprep.subr.mxu0 0.0
    %1499 = vmatpush2.xpose.msra.mxu0 0.0
    %1500 = vmatprep.subr.mxu0 0.0
    %1501 = vmatpush2.xpose.msra.mxu0 0.0
    %1502 = vmatprep.subr.mxu0 0.0
    %1503 = vmatpush2.xpose.msra.mxu0 0.0
    %1504 = vmatprep.subr.mxu0 0.0
    %1505 = vmatpush2.xpose.msra.mxu0 0.0
    %1506 = vmatprep.subr.mxu0 0.0
    %1507 = vmatpush2.xpose.msra.mxu0 0.0
    %1508 = vmatprep.subr.mxu0 0.0
    %1509 = vmatpush2.xpose.msra.mxu0 0.0
    %1510 = vmatprep.subr.mxu0 0.0
    %1511 = vmatpush2.xpose.msra.mxu0 0.0
    %1512 = vmatprep.subr.mxu0 0.0
    %1513 = vmatpush2.xpose.msra.mxu0 0.0
    %1514 = vmatprep.subr.mxu0 0.0
    %1515 = vmatpush2.xpose.msra.mxu0 0.0
    %1516 = vmatprep.subr.mxu0 0.0
    %1517 = vmatpush2.xpose.msra.mxu0 0.0
    %1518 = vmatprep.subr.mxu0 0.0
    %1519 = vmatpush2.xpose.msra.mxu0 0.0
    %1520 = vmatprep.subr.mxu0 0.0
    %1521 = vmatpush2.xpose.msra.mxu0 0.0
    %1522 = vmatprep.mubr.f32.mxu0 0.0
    %1523 = vmatmul.mubr.f32.gmra.mxu0 %v1454
    %v1524 = vpop.f32.mrf.mxu0
    %v1525 = vadd.f32 0.0, %v1524
    %v1526 = vpop.f32.mrf.mxu0
    %1527 = vdwg.mxu0
    %vm1528 = vcmask 64512
    %v1529 = vsel %vm1528, %v355, -inf
    %1530 = vmax.xlane.f32.xlu0 %v1529
    %v1531 = vpop.xlane.xlu0 %1530
    %v1532 = vsel %vm1528, %v433, -inf
    %1533 = vmax.xlane.f32.xlu0 %v1532
    %v1534 = vpop.xlane.xlu0 %1533
    %v1535 = vsel %vm1528, %v511, -inf
    %1536 = vmax.xlane.f32.xlu0 %v1535
    %v1537 = vpop.xlane.xlu0 %1536
    %v1538 = vsel %vm1528, %v589, -inf
    %1539 = vmax.xlane.f32.xlu0 %v1538
    %v1540 = vpop.xlane.xlu0 %1539
    %v1541 = vsel %vm1528, %v667, -inf
    %1542 = vmax.xlane.f32.xlu0 %v1541
    %v1543 = vpop.xlane.xlu0 %1542
    %v1544 = vsel %vm1528, %v745, -inf
    %1545 = vmax.xlane.f32.xlu0 %v1544
    %v1546 = vpop.xlane.xlu0 %1545
    %v1547 = vsel %vm1528, %v823, -inf
    %1548 = vmax.xlane.f32.xlu0 %v1547
    %v1549 = vpop.xlane.xlu0 %1548
    %v1550 = vsel %vm1528, %v901, -inf
    %1551 = vmax.xlane.f32.xlu0 %v1550
    %v1552 = vpop.xlane.xlu0 %1551
    %v1553 = vsel %vm1528, %v979, -inf
    %1554 = vmax.xlane.f32.xlu0 %v1553
    %v1555 = vpop.xlane.xlu0 %1554
    %v1556 = vsel %vm1528, %v1057, -inf
    %1557 = vmax.xlane.f32.xlu0 %v1556
    %v1558 = vpop.xlane.xlu0 %1557
    %v1559 = vsel %vm1528, %v1135, -inf
    %1560 = vmax.xlane.f32.xlu0 %v1559
    %v1561 = vpop.xlane.xlu0 %1560
    %v1562 = vsel %vm1528, %v1213, -inf
    %1563 = vmax.xlane.f32.xlu0 %v1562
    %v1564 = vpop.xlane.xlu0 %1563
    %v1565 = vsel %vm1528, %v1291, -inf
    %1566 = vmax.xlane.f32.xlu0 %v1565
    %v1567 = vpop.xlane.xlu0 %1566
    %v1568 = vsel %vm1528, %v1369, -inf
    %1569 = vmax.xlane.f32.xlu0 %v1568
    %v1570 = vpop.xlane.xlu0 %1569
    %v1571 = vsel %vm1528, %v1447, -inf
    %1572 = vmax.xlane.f32.xlu0 %v1571
    %v1573 = vpop.xlane.xlu0 %1572
    %v1574 = vsel %vm1528, %v1525, -inf
    %1575 = vmax.xlane.f32.xlu0 %v1574
    %v1576 = vpop.xlane.xlu0 %1575
    %v1577 = vsub.f32 %v355, %v1531
    %v1578 = vsub.f32 %v433, %v1534
    %v1579 = vsub.f32 %v511, %v1537
    %v1580 = vsub.f32 %v589, %v1540
    %v1581 = vsub.f32 %v667, %v1543
    %v1582 = vsub.f32 %v745, %v1546
    %v1583 = vsub.f32 %v823, %v1549
    %v1584 = vsub.f32 %v901, %v1552
    %v1585 = vsub.f32 %v979, %v1555
    %v1586 = vsub.f32 %v1057, %v1558
    %v1587 = vsub.f32 %v1135, %v1561
    %v1588 = vsub.f32 %v1213, %v1564
    %v1589 = vsub.f32 %v1291, %v1567
    %v1590 = vsub.f32 %v1369, %v1570
    %v1591 = vsub.f32 %v1447, %v1573
    %v1592 = vsub.f32 %v1525, %v1576
    %v1593 = vmul.f32 %v1577, 1.442695
    %v1594 = vpow.pop %v1593
    %v1595 = vmul.f32 %v1578, 1.442695
    %v1596 = vpow.pop %v1595
    %v1597 = vmul.f32 %v1579, 1.442695
    %v1598 = vpow.pop %v1597
    %v1599 = vmul.f32 %v1580, 1.442695
    %v1600 = vpow.pop %v1599
    %v1601 = vmul.f32 %v1581, 1.442695
    %v1602 = vpow.pop %v1601
    %v1603 = vmul.f32 %v1582, 1.442695
    %v1604 = vpow.pop %v1603
    %v1605 = vmul.f32 %v1583, 1.442695
    %v1606 = vpow.pop %v1605
    %v1607 = vmul.f32 %v1584, 1.442695
    %v1608 = vpow.pop %v1607
    %v1609 = vmul.f32 %v1585, 1.442695
    %v1610 = vpow.pop %v1609
    %v1611 = vmul.f32 %v1586, 1.442695
    %v1612 = vpow.pop %v1611
    %v1613 = vmul.f32 %v1587, 1.442695
    %v1614 = vpow.pop %v1613
    %v1615 = vmul.f32 %v1588, 1.442695
    %v1616 = vpow.pop %v1615
    %v1617 = vmul.f32 %v1589, 1.442695
    %v1618 = vpow.pop %v1617
    %v1619 = vmul.f32 %v1590, 1.442695
    %v1620 = vpow.pop %v1619
    %v1621 = vmul.f32 %v1591, 1.442695
    %v1622 = vpow.pop %v1621
    %v1623 = vmul.f32 %v1592, 1.442695
    %v1624 = vpow.pop %v1623
    %v1625 = vsel %vm1528, %v1594, 0.0
    %1626 = vadd.xlane.f32.xlu0 %v1625
    %v1627 = vpop.xlane.xlu0 %1626
    %v1628 = vsel %vm1528, %v1596, 0.0
    %1629 = vadd.xlane.f32.xlu0 %v1628
    %v1630 = vpop.xlane.xlu0 %1629
    %v1631 = vsel %vm1528, %v1598, 0.0
    %1632 = vadd.xlane.f32.xlu0 %v1631
    %v1633 = vpop.xlane.xlu0 %1632
    %v1634 = vsel %vm1528, %v1600, 0.0
    %1635 = vadd.xlane.f32.xlu0 %v1634
    %v1636 = vpop.xlane.xlu0 %1635
    %v1637 = vsel %vm1528, %v1602, 0.0
    %1638 = vadd.xlane.f32.xlu0 %v1637
    %v1639 = vpop.xlane.xlu0 %1638
    %v1640 = vsel %vm1528, %v1604, 0.0
    %1641 = vadd.xlane.f32.xlu0 %v1640
    %v1642 = vpop.xlane.xlu0 %1641
    %v1643 = vsel %vm1528, %v1606, 0.0
    %1644 = vadd.xlane.f32.xlu0 %v1643
    %v1645 = vpop.xlane.xlu0 %1644
    %v1646 = vsel %vm1528, %v1608, 0.0
    %1647 = vadd.xlane.f32.xlu0 %v1646
    %v1648 = vpop.xlane.xlu0 %1647
    %v1649 = vsel %vm1528, %v1610, 0.0
    %1650 = vadd.xlane.f32.xlu0 %v1649
    %v1651 = vpop.xlane.xlu0 %1650
    %v1652 = vsel %vm1528, %v1612, 0.0
    %1653 = vadd.xlane.f32.xlu0 %v1652
    %v1654 = vpop.xlane.xlu0 %1653
    %v1655 = vsel %vm1528, %v1614, 0.0
    %1656 = vadd.xlane.f32.xlu0 %v1655
    %v1657 = vpop.xlane.xlu0 %1656
    %v1658 = vsel %vm1528, %v1616, 0.0
    %1659 = vadd.xlane.f32.xlu0 %v1658
    %v1660 = vpop.xlane.xlu0 %1659
    %v1661 = vsel %vm1528, %v1618, 0.0
    %1662 = vadd.xlane.f32.xlu0 %v1661
    %v1663 = vpop.xlane.xlu0 %1662
    %v1664 = vsel %vm1528, %v1620, 0.0
    %1665 = vadd.xlane.f32.xlu0 %v1664
    %v1666 = vpop.xlane.xlu0 %1665
    %v1667 = vsel %vm1528, %v1622, 0.0
    %1668 = vadd.xlane.f32.xlu0 %v1667
    %v1669 = vpop.xlane.xlu0 %1668
    %v1670 = vsel %vm1528, %v1624, 0.0
    %1671 = vadd.xlane.f32.xlu0 %v1670
    %v1672 = vpop.xlane.xlu0 %1671
    %v1673 = vrcp.pop %v1627
    %v1674 = vmul.f32 %v1594, %v1673
    %v1675 = vrcp.pop %v1630
    %v1676 = vmul.f32 %v1596, %v1675
    %v1677 = vrcp.pop %v1633
    %v1678 = vmul.f32 %v1598, %v1677
    %v1679 = vrcp.pop %v1636
    %v1680 = vmul.f32 %v1600, %v1679
    %v1681 = vrcp.pop %v1639
    %v1682 = vmul.f32 %v1602, %v1681
    %v1683 = vrcp.pop %v1642
    %v1684 = vmul.f32 %v1604, %v1683
    %v1685 = vrcp.pop %v1645
    %v1686 = vmul.f32 %v1606, %v1685
    %v1687 = vrcp.pop %v1648
    %v1688 = vmul.f32 %v1608, %v1687
    %v1689 = vrcp.pop %v1651
    %v1690 = vmul.f32 %v1610, %v1689
    %v1691 = vrcp.pop %v1654
    %v1692 = vmul.f32 %v1612, %v1691
    %v1693 = vrcp.pop %v1657
    %v1694 = vmul.f32 %v1614, %v1693
    %v1695 = vrcp.pop %v1660
    %v1696 = vmul.f32 %v1616, %v1695
    %v1697 = vrcp.pop %v1663
    %v1698 = vmul.f32 %v1618, %v1697
    %v1699 = vrcp.pop %v1666
    %v1700 = vmul.f32 %v1620, %v1699
    %v1701 = vrcp.pop %v1669
    %v1702 = vmul.f32 %v1622, %v1701
    %v1703 = vrcp.pop %v1672
    %v1704 = vmul.f32 %v1624, %v1703
    %v1706 = vsel %vm1528, %v1674, 0
    %1708 = vmatprep.subr.mxu0 0.0
    %1709 = vmatpush1.msra.mxu0 0.0
    %1710 = vmatprep.subr.mxu0 0.0
    %1711 = vmatpush1.msra.mxu0 0.0
    %1712 = vmatprep.subr.mxu0 0.0
    %1713 = vmatpush1.msra.mxu0 0.0
    %1714 = vmatprep.subr.mxu0 0.0
    %1715 = vmatpush1.msra.mxu0 0.0
    %1716 = vmatprep.subr.mxu0 0.0
    %1717 = vmatpush1.msra.mxu0 0.0
    %1718 = vmatprep.subr.mxu0 0.0
    %1719 = vmatpush1.msra.mxu0 0.0
    %1720 = vmatprep.subr.mxu0 0.0
    %1721 = vmatpush1.msra.mxu0 0.0
    %1722 = vmatprep.subr.mxu0 0.0
    %1723 = vmatpush1.msra.mxu0 0.0
    %1724 = vmatprep.subr.mxu0 0.0
    %1725 = vmatpush1.msra.mxu0 0.0
    %1726 = vmatprep.subr.mxu0 0.0
    %1727 = vmatpush1.msra.mxu0 0.0
    %1728 = vmatprep.subr.mxu0 0.0
    %1729 = vmatpush1.msra.mxu0 0.0
    %1730 = vmatprep.subr.mxu0 0.0
    %1731 = vmatpush1.msra.mxu0 0.0
    %1732 = vmatprep.subr.mxu0 0.0
    %1733 = vmatpush1.msra.mxu0 0.0
    %1734 = vmatprep.subr.mxu0 0.0
    %1735 = vmatpush1.msra.mxu0 0.0
    %1736 = vmatprep.subr.mxu0 0.0
    %1737 = vmatpush1.msra.mxu0 0.0
    %1738 = vmatprep.subr.mxu0 0.0
    %1739 = vmatpush1.msra.mxu0 %v171
    %1740 = vmatprep.subr.mxu0 0.0
    %1741 = vmatpush2.msra.mxu0 0.0
    %1742 = vmatprep.subr.mxu0 0.0
    %1743 = vmatpush2.msra.mxu0 0.0
    %1744 = vmatprep.subr.mxu0 0.0
    %1745 = vmatpush2.msra.mxu0 0.0
    %1746 = vmatprep.subr.mxu0 0.0
    %1747 = vmatpush2.msra.mxu0 0.0
    %1748 = vmatprep.subr.mxu0 0.0
    %1749 = vmatpush2.msra.mxu0 0.0
    %1750 = vmatprep.subr.mxu0 0.0
    %1751 = vmatpush2.msra.mxu0 0.0
    %1752 = vmatprep.subr.mxu0 0.0
    %1753 = vmatpush2.msra.mxu0 0.0
    %1754 = vmatprep.subr.mxu0 0.0
    %1755 = vmatpush2.msra.mxu0 0.0
    %1756 = vmatprep.subr.mxu0 0.0
    %1757 = vmatpush2.msra.mxu0 0.0
    %1758 = vmatprep.subr.mxu0 0.0
    %1759 = vmatpush2.msra.mxu0 0.0
    %1760 = vmatprep.subr.mxu0 0.0
    %1761 = vmatpush2.msra.mxu0 0.0
    %1762 = vmatprep.subr.mxu0 0.0
    %1763 = vmatpush2.msra.mxu0 0.0
    %1764 = vmatprep.subr.mxu0 0.0
    %1765 = vmatpush2.msra.mxu0 0.0
    %1766 = vmatprep.subr.mxu0 0.0
    %1767 = vmatpush2.msra.mxu0 0.0
    %1768 = vmatprep.subr.mxu0 0.0
    %1769 = vmatpush2.msra.mxu0 0.0
    %1770 = vmatprep.subr.mxu0 0.0
    %1771 = vmatpush2.msra.mxu0 0.0
    %1772 = vmatprep.mubr.f32.mxu0 0.0
    %1773 = vmatmul.mubr.f32.gmra.mxu0 %v1706
    %v1774 = vpop.f32.mrf.mxu0
    %v1775 = vadd.f32 0.0, %v1774
    %v1776 = vpop.f32.mrf.mxu0
    %1777 = vdwg.mxu0
    %v1779 = vsel %vm1528, %v1676, 0
    %1781 = vmatprep.subr.mxu0 0.0
    %1782 = vmatpush1.msra.mxu0 0.0
    %1783 = vmatprep.subr.mxu0 0.0
    %1784 = vmatpush1.msra.mxu0 0.0
    %1785 = vmatprep.subr.mxu0 0.0
    %1786 = vmatpush1.msra.mxu0 0.0
    %1787 = vmatprep.subr.mxu0 0.0
    %1788 = vmatpush1.msra.mxu0 0.0
    %1789 = vmatprep.subr.mxu0 0.0
    %1790 = vmatpush1.msra.mxu0 0.0
    %1791 = vmatprep.subr.mxu0 0.0
    %1792 = vmatpush1.msra.mxu0 0.0
    %1793 = vmatprep.subr.mxu0 0.0
    %1794 = vmatpush1.msra.mxu0 0.0
    %1795 = vmatprep.subr.mxu0 0.0
    %1796 = vmatpush1.msra.mxu0 0.0
    %1797 = vmatprep.subr.mxu0 0.0
    %1798 = vmatpush1.msra.mxu0 0.0
    %1799 = vmatprep.subr.mxu0 0.0
    %1800 = vmatpush1.msra.mxu0 0.0
    %1801 = vmatprep.subr.mxu0 0.0
    %1802 = vmatpush1.msra.mxu0 0.0
    %1803 = vmatprep.subr.mxu0 0.0
    %1804 = vmatpush1.msra.mxu0 0.0
    %1805 = vmatprep.subr.mxu0 0.0
    %1806 = vmatpush1.msra.mxu0 0.0
    %1807 = vmatprep.subr.mxu0 0.0
    %1808 = vmatpush1.msra.mxu0 0.0
    %1809 = vmatprep.subr.mxu0 0.0
    %1810 = vmatpush1.msra.mxu0 0.0
    %1811 = vmatprep.subr.mxu0 0.0
    %1812 = vmatpush1.msra.mxu0 %v177
    %1813 = vmatprep.subr.mxu0 0.0
    %1814 = vmatpush2.msra.mxu0 0.0
    %1815 = vmatprep.subr.mxu0 0.0
    %1816 = vmatpush2.msra.mxu0 0.0
    %1817 = vmatprep.subr.mxu0 0.0
    %1818 = vmatpush2.msra.mxu0 0.0
    %1819 = vmatprep.subr.mxu0 0.0
    %1820 = vmatpush2.msra.mxu0 0.0
    %1821 = vmatprep.subr.mxu0 0.0
    %1822 = vmatpush2.msra.mxu0 0.0
    %1823 = vmatprep.subr.mxu0 0.0
    %1824 = vmatpush2.msra.mxu0 0.0
    %1825 = vmatprep.subr.mxu0 0.0
    %1826 = vmatpush2.msra.mxu0 0.0
    %1827 = vmatprep.subr.mxu0 0.0
    %1828 = vmatpush2.msra.mxu0 0.0
    %1829 = vmatprep.subr.mxu0 0.0
    %1830 = vmatpush2.msra.mxu0 0.0
    %1831 = vmatprep.subr.mxu0 0.0
    %1832 = vmatpush2.msra.mxu0 0.0
    %1833 = vmatprep.subr.mxu0 0.0
    %1834 = vmatpush2.msra.mxu0 0.0
    %1835 = vmatprep.subr.mxu0 0.0
    %1836 = vmatpush2.msra.mxu0 0.0
    %1837 = vmatprep.subr.mxu0 0.0
    %1838 = vmatpush2.msra.mxu0 0.0
    %1839 = vmatprep.subr.mxu0 0.0
    %1840 = vmatpush2.msra.mxu0 0.0
    %1841 = vmatprep.subr.mxu0 0.0
    %1842 = vmatpush2.msra.mxu0 0.0
    %1843 = vmatprep.subr.mxu0 0.0
    %1844 = vmatpush2.msra.mxu0 0.0
    %1845 = vmatprep.mubr.f32.mxu0 0.0
    %1846 = vmatmul.mubr.f32.gmra.mxu0 %v1779
    %v1847 = vpop.f32.mrf.mxu0
    %v1848 = vadd.f32 0.0, %v1847
    %v1849 = vpop.f32.mrf.mxu0
    %1850 = vdwg.mxu0
    %v1852 = vsel %vm1528, %v1678, 0
    %1854 = vmatprep.subr.mxu0 0.0
    %1855 = vmatpush1.msra.mxu0 0.0
    %1856 = vmatprep.subr.mxu0 0.0
    %1857 = vmatpush1.msra.mxu0 0.0
    %1858 = vmatprep.subr.mxu0 0.0
    %1859 = vmatpush1.msra.mxu0 0.0
    %1860 = vmatprep.subr.mxu0 0.0
    %1861 = vmatpush1.msra.mxu0 0.0
    %1862 = vmatprep.subr.mxu0 0.0
    %1863 = vmatpush1.msra.mxu0 0.0
    %1864 = vmatprep.subr.mxu0 0.0
    %1865 = vmatpush1.msra.mxu0 0.0
    %1866 = vmatprep.subr.mxu0 0.0
    %1867 = vmatpush1.msra.mxu0 0.0
    %1868 = vmatprep.subr.mxu0 0.0
    %1869 = vmatpush1.msra.mxu0 0.0
    %1870 = vmatprep.subr.mxu0 0.0
    %1871 = vmatpush1.msra.mxu0 0.0
    %1872 = vmatprep.subr.mxu0 0.0
    %1873 = vmatpush1.msra.mxu0 0.0
    %1874 = vmatprep.subr.mxu0 0.0
    %1875 = vmatpush1.msra.mxu0 0.0
    %1876 = vmatprep.subr.mxu0 0.0
    %1877 = vmatpush1.msra.mxu0 0.0
    %1878 = vmatprep.subr.mxu0 0.0
    %1879 = vmatpush1.msra.mxu0 0.0
    %1880 = vmatprep.subr.mxu0 0.0
    %1881 = vmatpush1.msra.mxu0 0.0
    %1882 = vmatprep.subr.mxu0 0.0
    %1883 = vmatpush1.msra.mxu0 0.0
    %1884 = vmatprep.subr.mxu0 0.0
    %1885 = vmatpush1.msra.mxu0 %v183
    %1886 = vmatprep.subr.mxu0 0.0
    %1887 = vmatpush2.msra.mxu0 0.0
    %1888 = vmatprep.subr.mxu0 0.0
    %1889 = vmatpush2.msra.mxu0 0.0
    %1890 = vmatprep.subr.mxu0 0.0
    %1891 = vmatpush2.msra.mxu0 0.0
    %1892 = vmatprep.subr.mxu0 0.0
    %1893 = vmatpush2.msra.mxu0 0.0
    %1894 = vmatprep.subr.mxu0 0.0
    %1895 = vmatpush2.msra.mxu0 0.0
    %1896 = vmatprep.subr.mxu0 0.0
    %1897 = vmatpush2.msra.mxu0 0.0
    %1898 = vmatprep.subr.mxu0 0.0
    %1899 = vmatpush2.msra.mxu0 0.0
    %1900 = vmatprep.subr.mxu0 0.0
    %1901 = vmatpush2.msra.mxu0 0.0
    %1902 = vmatprep.subr.mxu0 0.0
    %1903 = vmatpush2.msra.mxu0 0.0
    %1904 = vmatprep.subr.mxu0 0.0
    %1905 = vmatpush2.msra.mxu0 0.0
    %1906 = vmatprep.subr.mxu0 0.0
    %1907 = vmatpush2.msra.mxu0 0.0
    %1908 = vmatprep.subr.mxu0 0.0
    %1909 = vmatpush2.msra.mxu0 0.0
    %1910 = vmatprep.subr.mxu0 0.0
    %1911 = vmatpush2.msra.mxu0 0.0
    %1912 = vmatprep.subr.mxu0 0.0
    %1913 = vmatpush2.msra.mxu0 0.0
    %1914 = vmatprep.subr.mxu0 0.0
    %1915 = vmatpush2.msra.mxu0 0.0
    %1916 = vmatprep.subr.mxu0 0.0
    %1917 = vmatpush2.msra.mxu0 0.0
    %1918 = vmatprep.mubr.f32.mxu0 0.0
    %1919 = vmatmul.mubr.f32.gmra.mxu0 %v1852
    %v1920 = vpop.f32.mrf.mxu0
    %v1921 = vadd.f32 0.0, %v1920
    %v1922 = vpop.f32.mrf.mxu0
    %1923 = vdwg.mxu0
    %v1925 = vsel %vm1528, %v1680, 0
    %1927 = vmatprep.subr.mxu0 0.0
    %1928 = vmatpush1.msra.mxu0 0.0
    %1929 = vmatprep.subr.mxu0 0.0
    %1930 = vmatpush1.msra.mxu0 0.0
    %1931 = vmatprep.subr.mxu0 0.0
    %1932 = vmatpush1.msra.mxu0 0.0
    %1933 = vmatprep.subr.mxu0 0.0
    %1934 = vmatpush1.msra.mxu0 0.0
    %1935 = vmatprep.subr.mxu0 0.0
    %1936 = vmatpush1.msra.mxu0 0.0
    %1937 = vmatprep.subr.mxu0 0.0
    %1938 = vmatpush1.msra.mxu0 0.0
    %1939 = vmatprep.subr.mxu0 0.0
    %1940 = vmatpush1.msra.mxu0 0.0
    %1941 = vmatprep.subr.mxu0 0.0
    %1942 = vmatpush1.msra.mxu0 0.0
    %1943 = vmatprep.subr.mxu0 0.0
    %1944 = vmatpush1.msra.mxu0 0.0
    %1945 = vmatprep.subr.mxu0 0.0
    %1946 = vmatpush1.msra.mxu0 0.0
    %1947 = vmatprep.subr.mxu0 0.0
    %1948 = vmatpush1.msra.mxu0 0.0
    %1949 = vmatprep.subr.mxu0 0.0
    %1950 = vmatpush1.msra.mxu0 0.0
    %1951 = vmatprep.subr.mxu0 0.0
    %1952 = vmatpush1.msra.mxu0 0.0
    %1953 = vmatprep.subr.mxu0 0.0
    %1954 = vmatpush1.msra.mxu0 0.0
    %1955 = vmatprep.subr.mxu0 0.0
    %1956 = vmatpush1.msra.mxu0 0.0
    %1957 = vmatprep.subr.mxu0 0.0
    %1958 = vmatpush1.msra.mxu0 %v189
    %1959 = vmatprep.subr.mxu0 0.0
    %1960 = vmatpush2.msra.mxu0 0.0
    %1961 = vmatprep.subr.mxu0 0.0
    %1962 = vmatpush2.msra.mxu0 0.0
    %1963 = vmatprep.subr.mxu0 0.0
    %1964 = vmatpush2.msra.mxu0 0.0
    %1965 = vmatprep.subr.mxu0 0.0
    %1966 = vmatpush2.msra.mxu0 0.0
    %1967 = vmatprep.subr.mxu0 0.0
    %1968 = vmatpush2.msra.mxu0 0.0
    %1969 = vmatprep.subr.mxu0 0.0
    %1970 = vmatpush2.msra.mxu0 0.0
    %1971 = vmatprep.subr.mxu0 0.0
    %1972 = vmatpush2.msra.mxu0 0.0
    %1973 = vmatprep.subr.mxu0 0.0
    %1974 = vmatpush2.msra.mxu0 0.0
    %1975 = vmatprep.subr.mxu0 0.0
    %1976 = vmatpush2.msra.mxu0 0.0
    %1977 = vmatprep.subr.mxu0 0.0
    %1978 = vmatpush2.msra.mxu0 0.0
    %1979 = vmatprep.subr.mxu0 0.0
    %1980 = vmatpush2.msra.mxu0 0.0
    %1981 = vmatprep.subr.mxu0 0.0
    %1982 = vmatpush2.msra.mxu0 0.0
    %1983 = vmatprep.subr.mxu0 0.0
    %1984 = vmatpush2.msra.mxu0 0.0
    %1985 = vmatprep.subr.mxu0 0.0
    %1986 = vmatpush2.msra.mxu0 0.0
    %1987 = vmatprep.subr.mxu0 0.0
    %1988 = vmatpush2.msra.mxu0 0.0
    %1989 = vmatprep.subr.mxu0 0.0
    %1990 = vmatpush2.msra.mxu0 0.0
    %1991 = vmatprep.mubr.f32.mxu0 0.0
    %1992 = vmatmul.mubr.f32.gmra.mxu0 %v1925
    %v1993 = vpop.f32.mrf.mxu0
    %v1994 = vadd.f32 0.0, %v1993
    %v1995 = vpop.f32.mrf.mxu0
    %1996 = vdwg.mxu0
    %v1998 = vsel %vm1528, %v1682, 0
    %2000 = vmatprep.subr.mxu0 0.0
    %2001 = vmatpush1.msra.mxu0 0.0
    %2002 = vmatprep.subr.mxu0 0.0
    %2003 = vmatpush1.msra.mxu0 0.0
    %2004 = vmatprep.subr.mxu0 0.0
    %2005 = vmatpush1.msra.mxu0 0.0
    %2006 = vmatprep.subr.mxu0 0.0
    %2007 = vmatpush1.msra.mxu0 0.0
    %2008 = vmatprep.subr.mxu0 0.0
    %2009 = vmatpush1.msra.mxu0 0.0
    %2010 = vmatprep.subr.mxu0 0.0
    %2011 = vmatpush1.msra.mxu0 0.0
    %2012 = vmatprep.subr.mxu0 0.0
    %2013 = vmatpush1.msra.mxu0 0.0
    %2014 = vmatprep.subr.mxu0 0.0
    %2015 = vmatpush1.msra.mxu0 0.0
    %2016 = vmatprep.subr.mxu0 0.0
    %2017 = vmatpush1.msra.mxu0 0.0
    %2018 = vmatprep.subr.mxu0 0.0
    %2019 = vmatpush1.msra.mxu0 0.0
    %2020 = vmatprep.subr.mxu0 0.0
    %2021 = vmatpush1.msra.mxu0 0.0
    %2022 = vmatprep.subr.mxu0 0.0
    %2023 = vmatpush1.msra.mxu0 0.0
    %2024 = vmatprep.subr.mxu0 0.0
    %2025 = vmatpush1.msra.mxu0 0.0
    %2026 = vmatprep.subr.mxu0 0.0
    %2027 = vmatpush1.msra.mxu0 0.0
    %2028 = vmatprep.subr.mxu0 0.0
    %2029 = vmatpush1.msra.mxu0 0.0
    %2030 = vmatprep.subr.mxu0 0.0
    %2031 = vmatpush1.msra.mxu0 %v195
    %2032 = vmatprep.subr.mxu0 0.0
    %2033 = vmatpush2.msra.mxu0 0.0
    %2034 = vmatprep.subr.mxu0 0.0
    %2035 = vmatpush2.msra.mxu0 0.0
    %2036 = vmatprep.subr.mxu0 0.0
    %2037 = vmatpush2.msra.mxu0 0.0
    %2038 = vmatprep.subr.mxu0 0.0
    %2039 = vmatpush2.msra.mxu0 0.0
    %2040 = vmatprep.subr.mxu0 0.0
    %2041 = vmatpush2.msra.mxu0 0.0
    %2042 = vmatprep.subr.mxu0 0.0
    %2043 = vmatpush2.msra.mxu0 0.0
    %2044 = vmatprep.subr.mxu0 0.0
    %2045 = vmatpush2.msra.mxu0 0.0
    %2046 = vmatprep.subr.mxu0 0.0
    %2047 = vmatpush2.msra.mxu0 0.0
    %2048 = vmatprep.subr.mxu0 0.0
    %2049 = vmatpush2.msra.mxu0 0.0
    %2050 = vmatprep.subr.mxu0 0.0
    %2051 = vmatpush2.msra.mxu0 0.0
    %2052 = vmatprep.subr.mxu0 0.0
    %2053 = vmatpush2.msra.mxu0 0.0
    %2054 = vmatprep.subr.mxu0 0.0
    %2055 = vmatpush2.msra.mxu0 0.0
    %2056 = vmatprep.subr.mxu0 0.0
    %2057 = vmatpush2.msra.mxu0 0.0
    %2058 = vmatprep.subr.mxu0 0.0
    %2059 = vmatpush2.msra.mxu0 0.0
    %2060 = vmatprep.subr.mxu0 0.0
    %2061 = vmatpush2.msra.mxu0 0.0
    %2062 = vmatprep.subr.mxu0 0.0
    %2063 = vmatpush2.msra.mxu0 0.0
    %2064 = vmatprep.mubr.f32.mxu0 0.0
    %2065 = vmatmul.mubr.f32.gmra.mxu0 %v1998
    %v2066 = vpop.f32.mrf.mxu0
    %v2067 = vadd.f32 0.0, %v2066
    %v2068 = vpop.f32.mrf.mxu0
    %2069 = vdwg.mxu0
    %v2071 = vsel %vm1528, %v1684, 0
    %2073 = vmatprep.subr.mxu0 0.0
    %2074 = vmatpush1.msra.mxu0 0.0
    %2075 = vmatprep.subr.mxu0 0.0
    %2076 = vmatpush1.msra.mxu0 0.0
    %2077 = vmatprep.subr.mxu0 0.0
    %2078 = vmatpush1.msra.mxu0 0.0
    %2079 = vmatprep.subr.mxu0 0.0
    %2080 = vmatpush1.msra.mxu0 0.0
    %2081 = vmatprep.subr.mxu0 0.0
    %2082 = vmatpush1.msra.mxu0 0.0
    %2083 = vmatprep.subr.mxu0 0.0
    %2084 = vmatpush1.msra.mxu0 0.0
    %2085 = vmatprep.subr.mxu0 0.0
    %2086 = vmatpush1.msra.mxu0 0.0
    %2087 = vmatprep.subr.mxu0 0.0
    %2088 = vmatpush1.msra.mxu0 0.0
    %2089 = vmatprep.subr.mxu0 0.0
    %2090 = vmatpush1.msra.mxu0 0.0
    %2091 = vmatprep.subr.mxu0 0.0
    %2092 = vmatpush1.msra.mxu0 0.0
    %2093 = vmatprep.subr.mxu0 0.0
    %2094 = vmatpush1.msra.mxu0 0.0
    %2095 = vmatprep.subr.mxu0 0.0
    %2096 = vmatpush1.msra.mxu0 0.0
    %2097 = vmatprep.subr.mxu0 0.0
    %2098 = vmatpush1.msra.mxu0 0.0
    %2099 = vmatprep.subr.mxu0 0.0
    %2100 = vmatpush1.msra.mxu0 0.0
    %2101 = vmatprep.subr.mxu0 0.0
    %2102 = vmatpush1.msra.mxu0 0.0
    %2103 = vmatprep.subr.mxu0 0.0
    %2104 = vmatpush1.msra.mxu0 %v201
    %2105 = vmatprep.subr.mxu0 0.0
    %2106 = vmatpush2.msra.mxu0 0.0
    %2107 = vmatprep.subr.mxu0 0.0
    %2108 = vmatpush2.msra.mxu0 0.0
    %2109 = vmatprep.subr.mxu0 0.0
    %2110 = vmatpush2.msra.mxu0 0.0
    %2111 = vmatprep.subr.mxu0 0.0
    %2112 = vmatpush2.msra.mxu0 0.0
    %2113 = vmatprep.subr.mxu0 0.0
    %2114 = vmatpush2.msra.mxu0 0.0
    %2115 = vmatprep.subr.mxu0 0.0
    %2116 = vmatpush2.msra.mxu0 0.0
    %2117 = vmatprep.subr.mxu0 0.0
    %2118 = vmatpush2.msra.mxu0 0.0
    %2119 = vmatprep.subr.mxu0 0.0
    %2120 = vmatpush2.msra.mxu0 0.0
    %2121 = vmatprep.subr.mxu0 0.0
    %2122 = vmatpush2.msra.mxu0 0.0
    %2123 = vmatprep.subr.mxu0 0.0
    %2124 = vmatpush2.msra.mxu0 0.0
    %2125 = vmatprep.subr.mxu0 0.0
    %2126 = vmatpush2.msra.mxu0 0.0
    %2127 = vmatprep.subr.mxu0 0.0
    %2128 = vmatpush2.msra.mxu0 0.0
    %2129 = vmatprep.subr.mxu0 0.0
    %2130 = vmatpush2.msra.mxu0 0.0
    %2131 = vmatprep.subr.mxu0 0.0
    %2132 = vmatpush2.msra.mxu0 0.0
    %2133 = vmatprep.subr.mxu0 0.0
    %2134 = vmatpush2.msra.mxu0 0.0
    %2135 = vmatprep.subr.mxu0 0.0
    %2136 = vmatpush2.msra.mxu0 0.0
    %2137 = vmatprep.mubr.f32.mxu0 0.0
    %2138 = vmatmul.mubr.f32.gmra.mxu0 %v2071
    %v2139 = vpop.f32.mrf.mxu0
    %v2140 = vadd.f32 0.0, %v2139
    %v2141 = vpop.f32.mrf.mxu0
    %2142 = vdwg.mxu0
    %v2144 = vsel %vm1528, %v1686, 0
    %2146 = vmatprep.subr.mxu0 0.0
    %2147 = vmatpush1.msra.mxu0 0.0
    %2148 = vmatprep.subr.mxu0 0.0
    %2149 = vmatpush1.msra.mxu0 0.0
    %2150 = vmatprep.subr.mxu0 0.0
    %2151 = vmatpush1.msra.mxu0 0.0
    %2152 = vmatprep.subr.mxu0 0.0
    %2153 = vmatpush1.msra.mxu0 0.0
    %2154 = vmatprep.subr.mxu0 0.0
    %2155 = vmatpush1.msra.mxu0 0.0
    %2156 = vmatprep.subr.mxu0 0.0
    %2157 = vmatpush1.msra.mxu0 0.0
    %2158 = vmatprep.subr.mxu0 0.0
    %2159 = vmatpush1.msra.mxu0 0.0
    %2160 = vmatprep.subr.mxu0 0.0
    %2161 = vmatpush1.msra.mxu0 0.0
    %2162 = vmatprep.subr.mxu0 0.0
    %2163 = vmatpush1.msra.mxu0 0.0
    %2164 = vmatprep.subr.mxu0 0.0
    %2165 = vmatpush1.msra.mxu0 0.0
    %2166 = vmatprep.subr.mxu0 0.0
    %2167 = vmatpush1.msra.mxu0 0.0
    %2168 = vmatprep.subr.mxu0 0.0
    %2169 = vmatpush1.msra.mxu0 0.0
    %2170 = vmatprep.subr.mxu0 0.0
    %2171 = vmatpush1.msra.mxu0 0.0
    %2172 = vmatprep.subr.mxu0 0.0
    %2173 = vmatpush1.msra.mxu0 0.0
    %2174 = vmatprep.subr.mxu0 0.0
    %2175 = vmatpush1.msra.mxu0 0.0
    %2176 = vmatprep.subr.mxu0 0.0
    %2177 = vmatpush1.msra.mxu0 %v207
    %2178 = vmatprep.subr.mxu0 0.0
    %2179 = vmatpush2.msra.mxu0 0.0
    %2180 = vmatprep.subr.mxu0 0.0
    %2181 = vmatpush2.msra.mxu0 0.0
    %2182 = vmatprep.subr.mxu0 0.0
    %2183 = vmatpush2.msra.mxu0 0.0
    %2184 = vmatprep.subr.mxu0 0.0
    %2185 = vmatpush2.msra.mxu0 0.0
    %2186 = vmatprep.subr.mxu0 0.0
    %2187 = vmatpush2.msra.mxu0 0.0
    %2188 = vmatprep.subr.mxu0 0.0
    %2189 = vmatpush2.msra.mxu0 0.0
    %2190 = vmatprep.subr.mxu0 0.0
    %2191 = vmatpush2.msra.mxu0 0.0
    %2192 = vmatprep.subr.mxu0 0.0
    %2193 = vmatpush2.msra.mxu0 0.0
    %2194 = vmatprep.subr.mxu0 0.0
    %2195 = vmatpush2.msra.mxu0 0.0
    %2196 = vmatprep.subr.mxu0 0.0
    %2197 = vmatpush2.msra.mxu0 0.0
    %2198 = vmatprep.subr.mxu0 0.0
    %2199 = vmatpush2.msra.mxu0 0.0
    %2200 = vmatprep.subr.mxu0 0.0
    %2201 = vmatpush2.msra.mxu0 0.0
    %2202 = vmatprep.subr.mxu0 0.0
    %2203 = vmatpush2.msra.mxu0 0.0
    %2204 = vmatprep.subr.mxu0 0.0
    %2205 = vmatpush2.msra.mxu0 0.0
    %2206 = vmatprep.subr.mxu0 0.0
    %2207 = vmatpush2.msra.mxu0 0.0
    %2208 = vmatprep.subr.mxu0 0.0
    %2209 = vmatpush2.msra.mxu0 0.0
    %2210 = vmatprep.mubr.f32.mxu0 0.0
    %2211 = vmatmul.mubr.f32.gmra.mxu0 %v2144
    %v2212 = vpop.f32.mrf.mxu0
    %v2213 = vadd.f32 0.0, %v2212
    %v2214 = vpop.f32.mrf.mxu0
    %2215 = vdwg.mxu0
    %v2217 = vsel %vm1528, %v1688, 0
    %2219 = vmatprep.subr.mxu0 0.0
    %2220 = vmatpush1.msra.mxu0 0.0
    %2221 = vmatprep.subr.mxu0 0.0
    %2222 = vmatpush1.msra.mxu0 0.0
    %2223 = vmatprep.subr.mxu0 0.0
    %2224 = vmatpush1.msra.mxu0 0.0
    %2225 = vmatprep.subr.mxu0 0.0
    %2226 = vmatpush1.msra.mxu0 0.0
    %2227 = vmatprep.subr.mxu0 0.0
    %2228 = vmatpush1.msra.mxu0 0.0
    %2229 = vmatprep.subr.mxu0 0.0
    %2230 = vmatpush1.msra.mxu0 0.0
    %2231 = vmatprep.subr.mxu0 0.0
    %2232 = vmatpush1.msra.mxu0 0.0
    %2233 = vmatprep.subr.mxu0 0.0
    %2234 = vmatpush1.msra.mxu0 0.0
    %2235 = vmatprep.subr.mxu0 0.0
    %2236 = vmatpush1.msra.mxu0 0.0
    %2237 = vmatprep.subr.mxu0 0.0
    %2238 = vmatpush1.msra.mxu0 0.0
    %2239 = vmatprep.subr.mxu0 0.0
    %2240 = vmatpush1.msra.mxu0 0.0
    %2241 = vmatprep.subr.mxu0 0.0
    %2242 = vmatpush1.msra.mxu0 0.0
    %2243 = vmatprep.subr.mxu0 0.0
    %2244 = vmatpush1.msra.mxu0 0.0
    %2245 = vmatprep.subr.mxu0 0.0
    %2246 = vmatpush1.msra.mxu0 0.0
    %2247 = vmatprep.subr.mxu0 0.0
    %2248 = vmatpush1.msra.mxu0 0.0
    %2249 = vmatprep.subr.mxu0 0.0
    %2250 = vmatpush1.msra.mxu0 %v213
    %2251 = vmatprep.subr.mxu0 0.0
    %2252 = vmatpush2.msra.mxu0 0.0
    %2253 = vmatprep.subr.mxu0 0.0
    %2254 = vmatpush2.msra.mxu0 0.0
    %2255 = vmatprep.subr.mxu0 0.0
    %2256 = vmatpush2.msra.mxu0 0.0
    %2257 = vmatprep.subr.mxu0 0.0
    %2258 = vmatpush2.msra.mxu0 0.0
    %2259 = vmatprep.subr.mxu0 0.0
    %2260 = vmatpush2.msra.mxu0 0.0
    %2261 = vmatprep.subr.mxu0 0.0
    %2262 = vmatpush2.msra.mxu0 0.0
    %2263 = vmatprep.subr.mxu0 0.0
    %2264 = vmatpush2.msra.mxu0 0.0
    %2265 = vmatprep.subr.mxu0 0.0
    %2266 = vmatpush2.msra.mxu0 0.0
    %2267 = vmatprep.subr.mxu0 0.0
    %2268 = vmatpush2.msra.mxu0 0.0
    %2269 = vmatprep.subr.mxu0 0.0
    %2270 = vmatpush2.msra.mxu0 0.0
    %2271 = vmatprep.subr.mxu0 0.0
    %2272 = vmatpush2.msra.mxu0 0.0
    %2273 = vmatprep.subr.mxu0 0.0
    %2274 = vmatpush2.msra.mxu0 0.0
    %2275 = vmatprep.subr.mxu0 0.0
    %2276 = vmatpush2.msra.mxu0 0.0
    %2277 = vmatprep.subr.mxu0 0.0
    %2278 = vmatpush2.msra.mxu0 0.0
    %2279 = vmatprep.subr.mxu0 0.0
    %2280 = vmatpush2.msra.mxu0 0.0
    %2281 = vmatprep.subr.mxu0 0.0
    %2282 = vmatpush2.msra.mxu0 0.0
    %2283 = vmatprep.mubr.f32.mxu0 0.0
    %2284 = vmatmul.mubr.f32.gmra.mxu0 %v2217
    %v2285 = vpop.f32.mrf.mxu0
    %v2286 = vadd.f32 0.0, %v2285
    %v2287 = vpop.f32.mrf.mxu0
    %2288 = vdwg.mxu0
    %v2290 = vsel %vm1528, %v1690, 0
    %2292 = vmatprep.subr.mxu0 0.0
    %2293 = vmatpush1.msra.mxu0 0.0
    %2294 = vmatprep.subr.mxu0 0.0
    %2295 = vmatpush1.msra.mxu0 0.0
    %2296 = vmatprep.subr.mxu0 0.0
    %2297 = vmatpush1.msra.mxu0 0.0
    %2298 = vmatprep.subr.mxu0 0.0
    %2299 = vmatpush1.msra.mxu0 0.0
    %2300 = vmatprep.subr.mxu0 0.0
    %2301 = vmatpush1.msra.mxu0 0.0
    %2302 = vmatprep.subr.mxu0 0.0
    %2303 = vmatpush1.msra.mxu0 0.0
    %2304 = vmatprep.subr.mxu0 0.0
    %2305 = vmatpush1.msra.mxu0 0.0
    %2306 = vmatprep.subr.mxu0 0.0
    %2307 = vmatpush1.msra.mxu0 0.0
    %2308 = vmatprep.subr.mxu0 0.0
    %2309 = vmatpush1.msra.mxu0 0.0
    %2310 = vmatprep.subr.mxu0 0.0
    %2311 = vmatpush1.msra.mxu0 0.0
    %2312 = vmatprep.subr.mxu0 0.0
    %2313 = vmatpush1.msra.mxu0 0.0
    %2314 = vmatprep.subr.mxu0 0.0
    %2315 = vmatpush1.msra.mxu0 0.0
    %2316 = vmatprep.subr.mxu0 0.0
    %2317 = vmatpush1.msra.mxu0 0.0
    %2318 = vmatprep.subr.mxu0 0.0
    %2319 = vmatpush1.msra.mxu0 0.0
    %2320 = vmatprep.subr.mxu0 0.0
    %2321 = vmatpush1.msra.mxu0 0.0
    %2322 = vmatprep.subr.mxu0 0.0
    %2323 = vmatpush1.msra.mxu0 %v219
    %2324 = vmatprep.subr.mxu0 0.0
    %2325 = vmatpush2.msra.mxu0 0.0
    %2326 = vmatprep.subr.mxu0 0.0
    %2327 = vmatpush2.msra.mxu0 0.0
    %2328 = vmatprep.subr.mxu0 0.0
    %2329 = vmatpush2.msra.mxu0 0.0
    %2330 = vmatprep.subr.mxu0 0.0
    %2331 = vmatpush2.msra.mxu0 0.0
    %2332 = vmatprep.subr.mxu0 0.0
    %2333 = vmatpush2.msra.mxu0 0.0
    %2334 = vmatprep.subr.mxu0 0.0
    %2335 = vmatpush2.msra.mxu0 0.0
    %2336 = vmatprep.subr.mxu0 0.0
    %2337 = vmatpush2.msra.mxu0 0.0
    %2338 = vmatprep.subr.mxu0 0.0
    %2339 = vmatpush2.msra.mxu0 0.0
    %2340 = vmatprep.subr.mxu0 0.0
    %2341 = vmatpush2.msra.mxu0 0.0
    %2342 = vmatprep.subr.mxu0 0.0
    %2343 = vmatpush2.msra.mxu0 0.0
    %2344 = vmatprep.subr.mxu0 0.0
    %2345 = vmatpush2.msra.mxu0 0.0
    %2346 = vmatprep.subr.mxu0 0.0
    %2347 = vmatpush2.msra.mxu0 0.0
    %2348 = vmatprep.subr.mxu0 0.0
    %2349 = vmatpush2.msra.mxu0 0.0
    %2350 = vmatprep.subr.mxu0 0.0
    %2351 = vmatpush2.msra.mxu0 0.0
    %2352 = vmatprep.subr.mxu0 0.0
    %2353 = vmatpush2.msra.mxu0 0.0
    %2354 = vmatprep.subr.mxu0 0.0
    %2355 = vmatpush2.msra.mxu0 0.0
    %2356 = vmatprep.mubr.f32.mxu0 0.0
    %2357 = vmatmul.mubr.f32.gmra.mxu0 %v2290
    %v2358 = vpop.f32.mrf.mxu0
    %v2359 = vadd.f32 0.0, %v2358
    %v2360 = vpop.f32.mrf.mxu0
    %2361 = vdwg.mxu0
    %v2363 = vsel %vm1528, %v1692, 0
    %2365 = vmatprep.subr.mxu0 0.0
    %2366 = vmatpush1.msra.mxu0 0.0
    %2367 = vmatprep.subr.mxu0 0.0
    %2368 = vmatpush1.msra.mxu0 0.0
    %2369 = vmatprep.subr.mxu0 0.0
    %2370 = vmatpush1.msra.mxu0 0.0
    %2371 = vmatprep.subr.mxu0 0.0
    %2372 = vmatpush1.msra.mxu0 0.0
    %2373 = vmatprep.subr.mxu0 0.0
    %2374 = vmatpush1.msra.mxu0 0.0
    %2375 = vmatprep.subr.mxu0 0.0
    %2376 = vmatpush1.msra.mxu0 0.0
    %2377 = vmatprep.subr.mxu0 0.0
    %2378 = vmatpush1.msra.mxu0 0.0
    %2379 = vmatprep.subr.mxu0 0.0
    %2380 = vmatpush1.msra.mxu0 0.0
    %2381 = vmatprep.subr.mxu0 0.0
    %2382 = vmatpush1.msra.mxu0 0.0
    %2383 = vmatprep.subr.mxu0 0.0
    %2384 = vmatpush1.msra.mxu0 0.0
    %2385 = vmatprep.subr.mxu0 0.0
    %2386 = vmatpush1.msra.mxu0 0.0
    %2387 = vmatprep.subr.mxu0 0.0
    %2388 = vmatpush1.msra.mxu0 0.0
    %2389 = vmatprep.subr.mxu0 0.0
    %2390 = vmatpush1.msra.mxu0 0.0
    %2391 = vmatprep.subr.mxu0 0.0
    %2392 = vmatpush1.msra.mxu0 0.0
    %2393 = vmatprep.subr.mxu0 0.0
    %2394 = vmatpush1.msra.mxu0 0.0
    %2395 = vmatprep.subr.mxu0 0.0
    %2396 = vmatpush1.msra.mxu0 %v225
    %2397 = vmatprep.subr.mxu0 0.0
    %2398 = vmatpush2.msra.mxu0 0.0
    %2399 = vmatprep.subr.mxu0 0.0
    %2400 = vmatpush2.msra.mxu0 0.0
    %2401 = vmatprep.subr.mxu0 0.0
    %2402 = vmatpush2.msra.mxu0 0.0
    %2403 = vmatprep.subr.mxu0 0.0
    %2404 = vmatpush2.msra.mxu0 0.0
    %2405 = vmatprep.subr.mxu0 0.0
    %2406 = vmatpush2.msra.mxu0 0.0
    %2407 = vmatprep.subr.mxu0 0.0
    %2408 = vmatpush2.msra.mxu0 0.0
    %2409 = vmatprep.subr.mxu0 0.0
    %2410 = vmatpush2.msra.mxu0 0.0
    %2411 = vmatprep.subr.mxu0 0.0
    %2412 = vmatpush2.msra.mxu0 0.0
    %2413 = vmatprep.subr.mxu0 0.0
    %2414 = vmatpush2.msra.mxu0 0.0
    %2415 = vmatprep.subr.mxu0 0.0
    %2416 = vmatpush2.msra.mxu0 0.0
    %2417 = vmatprep.subr.mxu0 0.0
    %2418 = vmatpush2.msra.mxu0 0.0
    %2419 = vmatprep.subr.mxu0 0.0
    %2420 = vmatpush2.msra.mxu0 0.0
    %2421 = vmatprep.subr.mxu0 0.0
    %2422 = vmatpush2.msra.mxu0 0.0
    %2423 = vmatprep.subr.mxu0 0.0
    %2424 = vmatpush2.msra.mxu0 0.0
    %2425 = vmatprep.subr.mxu0 0.0
    %2426 = vmatpush2.msra.mxu0 0.0
    %2427 = vmatprep.subr.mxu0 0.0
    %2428 = vmatpush2.msra.mxu0 0.0
    %2429 = vmatprep.mubr.f32.mxu0 0.0
    %2430 = vmatmul.mubr.f32.gmra.mxu0 %v2363
    %v2431 = vpop.f32.mrf.mxu0
    %v2432 = vadd.f32 0.0, %v2431
    %v2433 = vpop.f32.mrf.mxu0
    %2434 = vdwg.mxu0
    %v2436 = vsel %vm1528, %v1694, 0
    %2438 = vmatprep.subr.mxu0 0.0
    %2439 = vmatpush1.msra.mxu0 0.0
    %2440 = vmatprep.subr.mxu0 0.0
    %2441 = vmatpush1.msra.mxu0 0.0
    %2442 = vmatprep.subr.mxu0 0.0
    %2443 = vmatpush1.msra.mxu0 0.0
    %2444 = vmatprep.subr.mxu0 0.0
    %2445 = vmatpush1.msra.mxu0 0.0
    %2446 = vmatprep.subr.mxu0 0.0
    %2447 = vmatpush1.msra.mxu0 0.0
    %2448 = vmatprep.subr.mxu0 0.0
    %2449 = vmatpush1.msra.mxu0 0.0
    %2450 = vmatprep.subr.mxu0 0.0
    %2451 = vmatpush1.msra.mxu0 0.0
    %2452 = vmatprep.subr.mxu0 0.0
    %2453 = vmatpush1.msra.mxu0 0.0
    %2454 = vmatprep.subr.mxu0 0.0
    %2455 = vmatpush1.msra.mxu0 0.0
    %2456 = vmatprep.subr.mxu0 0.0
    %2457 = vmatpush1.msra.mxu0 0.0
    %2458 = vmatprep.subr.mxu0 0.0
    %2459 = vmatpush1.msra.mxu0 0.0
    %2460 = vmatprep.subr.mxu0 0.0
    %2461 = vmatpush1.msra.mxu0 0.0
    %2462 = vmatprep.subr.mxu0 0.0
    %2463 = vmatpush1.msra.mxu0 0.0
    %2464 = vmatprep.subr.mxu0 0.0
    %2465 = vmatpush1.msra.mxu0 0.0
    %2466 = vmatprep.subr.mxu0 0.0
    %2467 = vmatpush1.msra.mxu0 0.0
    %2468 = vmatprep.subr.mxu0 0.0
    %2469 = vmatpush1.msra.mxu0 %v231
    %2470 = vmatprep.subr.mxu0 0.0
    %2471 = vmatpush2.msra.mxu0 0.0
    %2472 = vmatprep.subr.mxu0 0.0
    %2473 = vmatpush2.msra.mxu0 0.0
    %2474 = vmatprep.subr.mxu0 0.0
    %2475 = vmatpush2.msra.mxu0 0.0
    %2476 = vmatprep.subr.mxu0 0.0
    %2477 = vmatpush2.msra.mxu0 0.0
    %2478 = vmatprep.subr.mxu0 0.0
    %2479 = vmatpush2.msra.mxu0 0.0
    %2480 = vmatprep.subr.mxu0 0.0
    %2481 = vmatpush2.msra.mxu0 0.0
    %2482 = vmatprep.subr.mxu0 0.0
    %2483 = vmatpush2.msra.mxu0 0.0
    %2484 = vmatprep.subr.mxu0 0.0
    %2485 = vmatpush2.msra.mxu0 0.0
    %2486 = vmatprep.subr.mxu0 0.0
    %2487 = vmatpush2.msra.mxu0 0.0
    %2488 = vmatprep.subr.mxu0 0.0
    %2489 = vmatpush2.msra.mxu0 0.0
    %2490 = vmatprep.subr.mxu0 0.0
    %2491 = vmatpush2.msra.mxu0 0.0
    %2492 = vmatprep.subr.mxu0 0.0
    %2493 = vmatpush2.msra.mxu0 0.0
    %2494 = vmatprep.subr.mxu0 0.0
    %2495 = vmatpush2.msra.mxu0 0.0
    %2496 = vmatprep.subr.mxu0 0.0
    %2497 = vmatpush2.msra.mxu0 0.0
    %2498 = vmatprep.subr.mxu0 0.0
    %2499 = vmatpush2.msra.mxu0 0.0
    %2500 = vmatprep.subr.mxu0 0.0
    %2501 = vmatpush2.msra.mxu0 0.0
    %2502 = vmatprep.mubr.f32.mxu0 0.0
    %2503 = vmatmul.mubr.f32.gmra.mxu0 %v2436
    %v2504 = vpop.f32.mrf.mxu0
    %v2505 = vadd.f32 0.0, %v2504
    %v2506 = vpop.f32.mrf.mxu0
    %2507 = vdwg.mxu0
    %v2509 = vsel %vm1528, %v1696, 0
    %2511 = vmatprep.subr.mxu0 0.0
    %2512 = vmatpush1.msra.mxu0 0.0
    %2513 = vmatprep.subr.mxu0 0.0
    %2514 = vmatpush1.msra.mxu0 0.0
    %2515 = vmatprep.subr.mxu0 0.0
    %2516 = vmatpush1.msra.mxu0 0.0
    %2517 = vmatprep.subr.mxu0 0.0
    %2518 = vmatpush1.msra.mxu0 0.0
    %2519 = vmatprep.subr.mxu0 0.0
    %2520 = vmatpush1.msra.mxu0 0.0
    %2521 = vmatprep.subr.mxu0 0.0
    %2522 = vmatpush1.msra.mxu0 0.0
    %2523 = vmatprep.subr.mxu0 0.0
    %2524 = vmatpush1.msra.mxu0 0.0
    %2525 = vmatprep.subr.mxu0 0.0
    %2526 = vmatpush1.msra.mxu0 0.0
    %2527 = vmatprep.subr.mxu0 0.0
    %2528 = vmatpush1.msra.mxu0 0.0
    %2529 = vmatprep.subr.mxu0 0.0
    %2530 = vmatpush1.msra.mxu0 0.0
    %2531 = vmatprep.subr.mxu0 0.0
    %2532 = vmatpush1.msra.mxu0 0.0
    %2533 = vmatprep.subr.mxu0 0.0
    %2534 = vmatpush1.msra.mxu0 0.0
    %2535 = vmatprep.subr.mxu0 0.0
    %2536 = vmatpush1.msra.mxu0 0.0
    %2537 = vmatprep.subr.mxu0 0.0
    %2538 = vmatpush1.msra.mxu0 0.0
    %2539 = vmatprep.subr.mxu0 0.0
    %2540 = vmatpush1.msra.mxu0 0.0
    %2541 = vmatprep.subr.mxu0 0.0
    %2542 = vmatpush1.msra.mxu0 %v237
    %2543 = vmatprep.subr.mxu0 0.0
    %2544 = vmatpush2.msra.mxu0 0.0
    %2545 = vmatprep.subr.mxu0 0.0
    %2546 = vmatpush2.msra.mxu0 0.0
    %2547 = vmatprep.subr.mxu0 0.0
    %2548 = vmatpush2.msra.mxu0 0.0
    %2549 = vmatprep.subr.mxu0 0.0
    %2550 = vmatpush2.msra.mxu0 0.0
    %2551 = vmatprep.subr.mxu0 0.0
    %2552 = vmatpush2.msra.mxu0 0.0
    %2553 = vmatprep.subr.mxu0 0.0
    %2554 = vmatpush2.msra.mxu0 0.0
    %2555 = vmatprep.subr.mxu0 0.0
    %2556 = vmatpush2.msra.mxu0 0.0
    %2557 = vmatprep.subr.mxu0 0.0
    %2558 = vmatpush2.msra.mxu0 0.0
    %2559 = vmatprep.subr.mxu0 0.0
    %2560 = vmatpush2.msra.mxu0 0.0
    %2561 = vmatprep.subr.mxu0 0.0
    %2562 = vmatpush2.msra.mxu0 0.0
    %2563 = vmatprep.subr.mxu0 0.0
    %2564 = vmatpush2.msra.mxu0 0.0
    %2565 = vmatprep.subr.mxu0 0.0
    %2566 = vmatpush2.msra.mxu0 0.0
    %2567 = vmatprep.subr.mxu0 0.0
    %2568 = vmatpush2.msra.mxu0 0.0
    %2569 = vmatprep.subr.mxu0 0.0
    %2570 = vmatpush2.msra.mxu0 0.0
    %2571 = vmatprep.subr.mxu0 0.0
    %2572 = vmatpush2.msra.mxu0 0.0
    %2573 = vmatprep.subr.mxu0 0.0
    %2574 = vmatpush2.msra.mxu0 0.0
    %2575 = vmatprep.mubr.f32.mxu0 0.0
    %2576 = vmatmul.mubr.f32.gmra.mxu0 %v2509
    %v2577 = vpop.f32.mrf.mxu0
    %v2578 = vadd.f32 0.0, %v2577
    %v2579 = vpop.f32.mrf.mxu0
    %2580 = vdwg.mxu0
    %v2582 = vsel %vm1528, %v1698, 0
    %2584 = vmatprep.subr.mxu0 0.0
    %2585 = vmatpush1.msra.mxu0 0.0
    %2586 = vmatprep.subr.mxu0 0.0
    %2587 = vmatpush1.msra.mxu0 0.0
    %2588 = vmatprep.subr.mxu0 0.0
    %2589 = vmatpush1.msra.mxu0 0.0
    %2590 = vmatprep.subr.mxu0 0.0
    %2591 = vmatpush1.msra.mxu0 0.0
    %2592 = vmatprep.subr.mxu0 0.0
    %2593 = vmatpush1.msra.mxu0 0.0
    %2594 = vmatprep.subr.mxu0 0.0
    %2595 = vmatpush1.msra.mxu0 0.0
    %2596 = vmatprep.subr.mxu0 0.0
    %2597 = vmatpush1.msra.mxu0 0.0
    %2598 = vmatprep.subr.mxu0 0.0
    %2599 = vmatpush1.msra.mxu0 0.0
    %2600 = vmatprep.subr.mxu0 0.0
    %2601 = vmatpush1.msra.mxu0 0.0
    %2602 = vmatprep.subr.mxu0 0.0
    %2603 = vmatpush1.msra.mxu0 0.0
    %2604 = vmatprep.subr.mxu0 0.0
    %2605 = vmatpush1.msra.mxu0 0.0
    %2606 = vmatprep.subr.mxu0 0.0
    %2607 = vmatpush1.msra.mxu0 0.0
    %2608 = vmatprep.subr.mxu0 0.0
    %2609 = vmatpush1.msra.mxu0 0.0
    %2610 = vmatprep.subr.mxu0 0.0
    %2611 = vmatpush1.msra.mxu0 0.0
    %2612 = vmatprep.subr.mxu0 0.0
    %2613 = vmatpush1.msra.mxu0 0.0
    %2614 = vmatprep.subr.mxu0 0.0
    %2615 = vmatpush1.msra.mxu0 %v243
    %2616 = vmatprep.subr.mxu0 0.0
    %2617 = vmatpush2.msra.mxu0 0.0
    %2618 = vmatprep.subr.mxu0 0.0
    %2619 = vmatpush2.msra.mxu0 0.0
    %2620 = vmatprep.subr.mxu0 0.0
    %2621 = vmatpush2.msra.mxu0 0.0
    %2622 = vmatprep.subr.mxu0 0.0
    %2623 = vmatpush2.msra.mxu0 0.0
    %2624 = vmatprep.subr.mxu0 0.0
    %2625 = vmatpush2.msra.mxu0 0.0
    %2626 = vmatprep.subr.mxu0 0.0
    %2627 = vmatpush2.msra.mxu0 0.0
    %2628 = vmatprep.subr.mxu0 0.0
    %2629 = vmatpush2.msra.mxu0 0.0
    %2630 = vmatprep.subr.mxu0 0.0
    %2631 = vmatpush2.msra.mxu0 0.0
    %2632 = vmatprep.subr.mxu0 0.0
    %2633 = vmatpush2.msra.mxu0 0.0
    %2634 = vmatprep.subr.mxu0 0.0
    %2635 = vmatpush2.msra.mxu0 0.0
    %2636 = vmatprep.subr.mxu0 0.0
    %2637 = vmatpush2.msra.mxu0 0.0
    %2638 = vmatprep.subr.mxu0 0.0
    %2639 = vmatpush2.msra.mxu0 0.0
    %2640 = vmatprep.subr.mxu0 0.0
    %2641 = vmatpush2.msra.mxu0 0.0
    %2642 = vmatprep.subr.mxu0 0.0
    %2643 = vmatpush2.msra.mxu0 0.0
    %2644 = vmatprep.subr.mxu0 0.0
    %2645 = vmatpush2.msra.mxu0 0.0
    %2646 = vmatprep.subr.mxu0 0.0
    %2647 = vmatpush2.msra.mxu0 0.0
    %2648 = vmatprep.mubr.f32.mxu0 0.0
    %2649 = vmatmul.mubr.f32.gmra.mxu0 %v2582
    %v2650 = vpop.f32.mrf.mxu0
    %v2651 = vadd.f32 0.0, %v2650
    %v2652 = vpop.f32.mrf.mxu0
    %2653 = vdwg.mxu0
    %v2655 = vsel %vm1528, %v1700, 0
    %2657 = vmatprep.subr.mxu0 0.0
    %2658 = vmatpush1.msra.mxu0 0.0
    %2659 = vmatprep.subr.mxu0 0.0
    %2660 = vmatpush1.msra.mxu0 0.0
    %2661 = vmatprep.subr.mxu0 0.0
    %2662 = vmatpush1.msra.mxu0 0.0
    %2663 = vmatprep.subr.mxu0 0.0
    %2664 = vmatpush1.msra.mxu0 0.0
    %2665 = vmatprep.subr.mxu0 0.0
    %2666 = vmatpush1.msra.mxu0 0.0
    %2667 = vmatprep.subr.mxu0 0.0
    %2668 = vmatpush1.msra.mxu0 0.0
    %2669 = vmatprep.subr.mxu0 0.0
    %2670 = vmatpush1.msra.mxu0 0.0
    %2671 = vmatprep.subr.mxu0 0.0
    %2672 = vmatpush1.msra.mxu0 0.0
    %2673 = vmatprep.subr.mxu0 0.0
    %2674 = vmatpush1.msra.mxu0 0.0
    %2675 = vmatprep.subr.mxu0 0.0
    %2676 = vmatpush1.msra.mxu0 0.0
    %2677 = vmatprep.subr.mxu0 0.0
    %2678 = vmatpush1.msra.mxu0 0.0
    %2679 = vmatprep.subr.mxu0 0.0
    %2680 = vmatpush1.msra.mxu0 0.0
    %2681 = vmatprep.subr.mxu0 0.0
    %2682 = vmatpush1.msra.mxu0 0.0
    %2683 = vmatprep.subr.mxu0 0.0
    %2684 = vmatpush1.msra.mxu0 0.0
    %2685 = vmatprep.subr.mxu0 0.0
    %2686 = vmatpush1.msra.mxu0 0.0
    %2687 = vmatprep.subr.mxu0 0.0
    %2688 = vmatpush1.msra.mxu0 %v249
    %2689 = vmatprep.subr.mxu0 0.0
    %2690 = vmatpush2.msra.mxu0 0.0
    %2691 = vmatprep.subr.mxu0 0.0
    %2692 = vmatpush2.msra.mxu0 0.0
    %2693 = vmatprep.subr.mxu0 0.0
    %2694 = vmatpush2.msra.mxu0 0.0
    %2695 = vmatprep.subr.mxu0 0.0
    %2696 = vmatpush2.msra.mxu0 0.0
    %2697 = vmatprep.subr.mxu0 0.0
    %2698 = vmatpush2.msra.mxu0 0.0
    %2699 = vmatprep.subr.mxu0 0.0
    %2700 = vmatpush2.msra.mxu0 0.0
    %2701 = vmatprep.subr.mxu0 0.0
    %2702 = vmatpush2.msra.mxu0 0.0
    %2703 = vmatprep.subr.mxu0 0.0
    %2704 = vmatpush2.msra.mxu0 0.0
    %2705 = vmatprep.subr.mxu0 0.0
    %2706 = vmatpush2.msra.mxu0 0.0
    %2707 = vmatprep.subr.mxu0 0.0
    %2708 = vmatpush2.msra.mxu0 0.0
    %2709 = vmatprep.subr.mxu0 0.0
    %2710 = vmatpush2.msra.mxu0 0.0
    %2711 = vmatprep.subr.mxu0 0.0
    %2712 = vmatpush2.msra.mxu0 0.0
    %2713 = vmatprep.subr.mxu0 0.0
    %2714 = vmatpush2.msra.mxu0 0.0
    %2715 = vmatprep.subr.mxu0 0.0
    %2716 = vmatpush2.msra.mxu0 0.0
    %2717 = vmatprep.subr.mxu0 0.0
    %2718 = vmatpush2.msra.mxu0 0.0
    %2719 = vmatprep.subr.mxu0 0.0
    %2720 = vmatpush2.msra.mxu0 0.0
    %2721 = vmatprep.mubr.f32.mxu0 0.0
    %2722 = vmatmul.mubr.f32.gmra.mxu0 %v2655
    %v2723 = vpop.f32.mrf.mxu0
    %v2724 = vadd.f32 0.0, %v2723
    %v2725 = vpop.f32.mrf.mxu0
    %2726 = vdwg.mxu0
    %v2728 = vsel %vm1528, %v1702, 0
    %2730 = vmatprep.subr.mxu0 0.0
    %2731 = vmatpush1.msra.mxu0 0.0
    %2732 = vmatprep.subr.mxu0 0.0
    %2733 = vmatpush1.msra.mxu0 0.0
    %2734 = vmatprep.subr.mxu0 0.0
    %2735 = vmatpush1.msra.mxu0 0.0
    %2736 = vmatprep.subr.mxu0 0.0
    %2737 = vmatpush1.msra.mxu0 0.0
    %2738 = vmatprep.subr.mxu0 0.0
    %2739 = vmatpush1.msra.mxu0 0.0
    %2740 = vmatprep.subr.mxu0 0.0
    %2741 = vmatpush1.msra.mxu0 0.0
    %2742 = vmatprep.subr.mxu0 0.0
    %2743 = vmatpush1.msra.mxu0 0.0
    %2744 = vmatprep.subr.mxu0 0.0
    %2745 = vmatpush1.msra.mxu0 0.0
    %2746 = vmatprep.subr.mxu0 0.0
    %2747 = vmatpush1.msra.mxu0 0.0
    %2748 = vmatprep.subr.mxu0 0.0
    %2749 = vmatpush1.msra.mxu0 0.0
    %2750 = vmatprep.subr.mxu0 0.0
    %2751 = vmatpush1.msra.mxu0 0.0
    %2752 = vmatprep.subr.mxu0 0.0
    %2753 = vmatpush1.msra.mxu0 0.0
    %2754 = vmatprep.subr.mxu0 0.0
    %2755 = vmatpush1.msra.mxu0 0.0
    %2756 = vmatprep.subr.mxu0 0.0
    %2757 = vmatpush1.msra.mxu0 0.0
    %2758 = vmatprep.subr.mxu0 0.0
    %2759 = vmatpush1.msra.mxu0 0.0
    %2760 = vmatprep.subr.mxu0 0.0
    %2761 = vmatpush1.msra.mxu0 %v255
    %2762 = vmatprep.subr.mxu0 0.0
    %2763 = vmatpush2.msra.mxu0 0.0
    %2764 = vmatprep.subr.mxu0 0.0
    %2765 = vmatpush2.msra.mxu0 0.0
    %2766 = vmatprep.subr.mxu0 0.0
    %2767 = vmatpush2.msra.mxu0 0.0
    %2768 = vmatprep.subr.mxu0 0.0
    %2769 = vmatpush2.msra.mxu0 0.0
    %2770 = vmatprep.subr.mxu0 0.0
    %2771 = vmatpush2.msra.mxu0 0.0
    %2772 = vmatprep.subr.mxu0 0.0
    %2773 = vmatpush2.msra.mxu0 0.0
    %2774 = vmatprep.subr.mxu0 0.0
    %2775 = vmatpush2.msra.mxu0 0.0
    %2776 = vmatprep.subr.mxu0 0.0
    %2777 = vmatpush2.msra.mxu0 0.0
    %2778 = vmatprep.subr.mxu0 0.0
    %2779 = vmatpush2.msra.mxu0 0.0
    %2780 = vmatprep.subr.mxu0 0.0
    %2781 = vmatpush2.msra.mxu0 0.0
    %2782 = vmatprep.subr.mxu0 0.0
    %2783 = vmatpush2.msra.mxu0 0.0
    %2784 = vmatprep.subr.mxu0 0.0
    %2785 = vmatpush2.msra.mxu0 0.0
    %2786 = vmatprep.subr.mxu0 0.0
    %2787 = vmatpush2.msra.mxu0 0.0
    %2788 = vmatprep.subr.mxu0 0.0
    %2789 = vmatpush2.msra.mxu0 0.0
    %2790 = vmatprep.subr.mxu0 0.0
    %2791 = vmatpush2.msra.mxu0 0.0
    %2792 = vmatprep.subr.mxu0 0.0
    %2793 = vmatpush2.msra.mxu0 0.0
    %2794 = vmatprep.mubr.f32.mxu0 0.0
    %2795 = vmatmul.mubr.f32.gmra.mxu0 %v2728
    %v2796 = vpop.f32.mrf.mxu0
    %v2797 = vadd.f32 0.0, %v2796
    %v2798 = vpop.f32.mrf.mxu0
    %2799 = vdwg.mxu0
    %v2801 = vsel %vm1528, %v1704, 0
    %2803 = vmatprep.subr.mxu0 0.0
    %2804 = vmatpush1.msra.mxu0 0.0
    %2805 = vmatprep.subr.mxu0 0.0
    %2806 = vmatpush1.msra.mxu0 0.0
    %2807 = vmatprep.subr.mxu0 0.0
    %2808 = vmatpush1.msra.mxu0 0.0
    %2809 = vmatprep.subr.mxu0 0.0
    %2810 = vmatpush1.msra.mxu0 0.0
    %2811 = vmatprep.subr.mxu0 0.0
    %2812 = vmatpush1.msra.mxu0 0.0
    %2813 = vmatprep.subr.mxu0 0.0
    %2814 = vmatpush1.msra.mxu0 0.0
    %2815 = vmatprep.subr.mxu0 0.0
    %2816 = vmatpush1.msra.mxu0 0.0
    %2817 = vmatprep.subr.mxu0 0.0
    %2818 = vmatpush1.msra.mxu0 0.0
    %2819 = vmatprep.subr.mxu0 0.0
    %2820 = vmatpush1.msra.mxu0 0.0
    %2821 = vmatprep.subr.mxu0 0.0
    %2822 = vmatpush1.msra.mxu0 0.0
    %2823 = vmatprep.subr.mxu0 0.0
    %2824 = vmatpush1.msra.mxu0 0.0
    %2825 = vmatprep.subr.mxu0 0.0
    %2826 = vmatpush1.msra.mxu0 0.0
    %2827 = vmatprep.subr.mxu0 0.0
    %2828 = vmatpush1.msra.mxu0 0.0
    %2829 = vmatprep.subr.mxu0 0.0
    %2830 = vmatpush1.msra.mxu0 0.0
    %2831 = vmatprep.subr.mxu0 0.0
    %2832 = vmatpush1.msra.mxu0 0.0
    %2833 = vmatprep.subr.mxu0 0.0
    %2834 = vmatpush1.msra.mxu0 %v261
    %2835 = vmatprep.subr.mxu0 0.0
    %2836 = vmatpush2.msra.mxu0 0.0
    %2837 = vmatprep.subr.mxu0 0.0
    %2838 = vmatpush2.msra.mxu0 0.0
    %2839 = vmatprep.subr.mxu0 0.0
    %2840 = vmatpush2.msra.mxu0 0.0
    %2841 = vmatprep.subr.mxu0 0.0
    %2842 = vmatpush2.msra.mxu0 0.0
    %2843 = vmatprep.subr.mxu0 0.0
    %2844 = vmatpush2.msra.mxu0 0.0
    %2845 = vmatprep.subr.mxu0 0.0
    %2846 = vmatpush2.msra.mxu0 0.0
    %2847 = vmatprep.subr.mxu0 0.0
    %2848 = vmatpush2.msra.mxu0 0.0
    %2849 = vmatprep.subr.mxu0 0.0
    %2850 = vmatpush2.msra.mxu0 0.0
    %2851 = vmatprep.subr.mxu0 0.0
    %2852 = vmatpush2.msra.mxu0 0.0
    %2853 = vmatprep.subr.mxu0 0.0
    %2854 = vmatpush2.msra.mxu0 0.0
    %2855 = vmatprep.subr.mxu0 0.0
    %2856 = vmatpush2.msra.mxu0 0.0
    %2857 = vmatprep.subr.mxu0 0.0
    %2858 = vmatpush2.msra.mxu0 0.0
    %2859 = vmatprep.subr.mxu0 0.0
    %2860 = vmatpush2.msra.mxu0 0.0
    %2861 = vmatprep.subr.mxu0 0.0
    %2862 = vmatpush2.msra.mxu0 0.0
    %2863 = vmatprep.subr.mxu0 0.0
    %2864 = vmatpush2.msra.mxu0 0.0
    %2865 = vmatprep.subr.mxu0 0.0
    %2866 = vmatpush2.msra.mxu0 0.0
    %2867 = vmatprep.mubr.f32.mxu0 0.0
    %2868 = vmatmul.mubr.f32.gmra.mxu0 %v2801
    %v2869 = vpop.f32.mrf.mxu0
    %v2870 = vadd.f32 0.0, %v2869
    %v2871 = vpop.f32.mrf.mxu0
    %2872 = vdwg.mxu0
    %2873 = vrot.lane.b32.xlu0 %v263, 112
    %v2874 = vpop.permute.xlu0 %2873
    %2875 = vrot.lane.b32.xlu0 %v169, 48
    %v2876 = vpop.permute.xlu0 %2875
    %v2877 = vsel %vm282, %v2874, 0
    %v2879 = vsel %vm282, %v2876, 0
    %2881 = vmatprep.subr.mxu0 0.0
    %2882 = vmatpush1.xpose.msra.mxu0 0.0
    %2883 = vmatprep.subr.mxu0 0.0
    %2884 = vmatpush1.xpose.msra.mxu0 0.0
    %2885 = vmatprep.subr.mxu0 0.0
    %2886 = vmatpush1.xpose.msra.mxu0 0.0
    %2887 = vmatprep.subr.mxu0 0.0
    %2888 = vmatpush1.xpose.msra.mxu0 0.0
    %2889 = vmatprep.subr.mxu0 0.0
    %2890 = vmatpush1.xpose.msra.mxu0 0.0
    %2891 = vmatprep.subr.mxu0 0.0
    %2892 = vmatpush1.xpose.msra.mxu0 0.0
    %2893 = vmatprep.subr.mxu0 0.0
    %2894 = vmatpush1.xpose.msra.mxu0 0.0
    %2895 = vmatprep.subr.mxu0 0.0
    %2896 = vmatpush1.xpose.msra.mxu0 0.0
    %2897 = vmatprep.subr.mxu0 0.0
    %2898 = vmatpush1.xpose.msra.mxu0 0.0
    %2899 = vmatprep.subr.mxu0 0.0
    %2900 = vmatpush1.xpose.msra.mxu0 0.0
    %2901 = vmatprep.subr.mxu0 0.0
    %2902 = vmatpush1.xpose.msra.mxu0 0.0
    %2903 = vmatprep.subr.mxu0 0.0
    %2904 = vmatpush1.xpose.msra.mxu0 0.0
    %2905 = vmatprep.subr.mxu0 0.0
    %2906 = vmatpush1.xpose.msra.mxu0 0.0
    %2907 = vmatprep.subr.mxu0 0.0
    %2908 = vmatpush1.xpose.msra.mxu0 0.0
    %2909 = vmatprep.subr.mxu0 0.0
    %2910 = vmatpush1.xpose.msra.mxu0 0.0
    %2911 = vmatprep.subr.mxu0 0.0
    %2912 = vmatpush1.xpose.msra.mxu0 %v2879
    %2913 = vmatprep.subr.mxu0 0.0
    %2914 = vmatpush2.xpose.msra.mxu0 0.0
    %2915 = vmatprep.subr.mxu0 0.0
    %2916 = vmatpush2.xpose.msra.mxu0 0.0
    %2917 = vmatprep.subr.mxu0 0.0
    %2918 = vmatpush2.xpose.msra.mxu0 0.0
    %2919 = vmatprep.subr.mxu0 0.0
    %2920 = vmatpush2.xpose.msra.mxu0 0.0
    %2921 = vmatprep.subr.mxu0 0.0
    %2922 = vmatpush2.xpose.msra.mxu0 0.0
    %2923 = vmatprep.subr.mxu0 0.0
    %2924 = vmatpush2.xpose.msra.mxu0 0.0
    %2925 = vmatprep.subr.mxu0 0.0
    %2926 = vmatpush2.xpose.msra.mxu0 0.0
    %2927 = vmatprep.subr.mxu0 0.0
    %2928 = vmatpush2.xpose.msra.mxu0 0.0
    %2929 = vmatprep.subr.mxu0 0.0
    %2930 = vmatpush2.xpose.msra.mxu0 0.0
    %2931 = vmatprep.subr.mxu0 0.0
    %2932 = vmatpush2.xpose.msra.mxu0 0.0
    %2933 = vmatprep.subr.mxu0 0.0
    %2934 = vmatpush2.xpose.msra.mxu0 0.0
    %2935 = vmatprep.subr.mxu0 0.0
    %2936 = vmatpush2.xpose.msra.mxu0 0.0
    %2937 = vmatprep.subr.mxu0 0.0
    %2938 = vmatpush2.xpose.msra.mxu0 0.0
    %2939 = vmatprep.subr.mxu0 0.0
    %2940 = vmatpush2.xpose.msra.mxu0 0.0
    %2941 = vmatprep.subr.mxu0 0.0
    %2942 = vmatpush2.xpose.msra.mxu0 0.0
    %2943 = vmatprep.subr.mxu0 0.0
    %2944 = vmatpush2.xpose.msra.mxu0 0.0
    %2945 = vmatprep.mubr.f32.mxu0 0.0
    %2946 = vmatmul.mubr.f32.gmra.mxu0 %v2877
    %v2947 = vpop.f32.mrf.mxu0
    %v2948 = vadd.f32 0.0, %v2947
    %v2949 = vpop.f32.mrf.mxu0
    %2950 = vdwg.mxu0
    %2951 = vrot.lane.b32.xlu0 %v264, 112
    %v2952 = vpop.permute.xlu0 %2951
    %2953 = vrot.lane.b32.xlu0 %v175, 48
    %v2954 = vpop.permute.xlu0 %2953
    %v2955 = vsel %vm282, %v2952, 0
    %v2957 = vsel %vm282, %v2954, 0
    %2959 = vmatprep.subr.mxu0 0.0
    %2960 = vmatpush1.xpose.msra.mxu0 0.0
    %2961 = vmatprep.subr.mxu0 0.0
    %2962 = vmatpush1.xpose.msra.mxu0 0.0
    %2963 = vmatprep.subr.mxu0 0.0
    %2964 = vmatpush1.xpose.msra.mxu0 0.0
    %2965 = vmatprep.subr.mxu0 0.0
    %2966 = vmatpush1.xpose.msra.mxu0 0.0
    %2967 = vmatprep.subr.mxu0 0.0
    %2968 = vmatpush1.xpose.msra.mxu0 0.0
    %2969 = vmatprep.subr.mxu0 0.0
    %2970 = vmatpush1.xpose.msra.mxu0 0.0
    %2971 = vmatprep.subr.mxu0 0.0
    %2972 = vmatpush1.xpose.msra.mxu0 0.0
    %2973 = vmatprep.subr.mxu0 0.0
    %2974 = vmatpush1.xpose.msra.mxu0 0.0
    %2975 = vmatprep.subr.mxu0 0.0
    %2976 = vmatpush1.xpose.msra.mxu0 0.0
    %2977 = vmatprep.subr.mxu0 0.0
    %2978 = vmatpush1.xpose.msra.mxu0 0.0
    %2979 = vmatprep.subr.mxu0 0.0
    %2980 = vmatpush1.xpose.msra.mxu0 0.0
    %2981 = vmatprep.subr.mxu0 0.0
    %2982 = vmatpush1.xpose.msra.mxu0 0.0
    %2983 = vmatprep.subr.mxu0 0.0
    %2984 = vmatpush1.xpose.msra.mxu0 0.0
    %2985 = vmatprep.subr.mxu0 0.0
    %2986 = vmatpush1.xpose.msra.mxu0 0.0
    %2987 = vmatprep.subr.mxu0 0.0
    %2988 = vmatpush1.xpose.msra.mxu0 0.0
    %2989 = vmatprep.subr.mxu0 0.0
    %2990 = vmatpush1.xpose.msra.mxu0 %v2957
    %2991 = vmatprep.subr.mxu0 0.0
    %2992 = vmatpush2.xpose.msra.mxu0 0.0
    %2993 = vmatprep.subr.mxu0 0.0
    %2994 = vmatpush2.xpose.msra.mxu0 0.0
    %2995 = vmatprep.subr.mxu0 0.0
    %2996 = vmatpush2.xpose.msra.mxu0 0.0
    %2997 = vmatprep.subr.mxu0 0.0
    %2998 = vmatpush2.xpose.msra.mxu0 0.0
    %2999 = vmatprep.subr.mxu0 0.0
    %3000 = vmatpush2.xpose.msra.mxu0 0.0
    %3001 = vmatprep.subr.mxu0 0.0
    %3002 = vmatpush2.xpose.msra.mxu0 0.0
    %3003 = vmatprep.subr.mxu0 0.0
    %3004 = vmatpush2.xpose.msra.mxu0 0.0
    %3005 = vmatprep.subr.mxu0 0.0
    %3006 = vmatpush2.xpose.msra.mxu0 0.0
    %3007 = vmatprep.subr.mxu0 0.0
    %3008 = vmatpush2.xpose.msra.mxu0 0.0
    %3009 = vmatprep.subr.mxu0 0.0
    %3010 = vmatpush2.xpose.msra.mxu0 0.0
    %3011 = vmatprep.subr.mxu0 0.0
    %3012 = vmatpush2.xpose.msra.mxu0 0.0
    %3013 = vmatprep.subr.mxu0 0.0
    %3014 = vmatpush2.xpose.msra.mxu0 0.0
    %3015 = vmatprep.subr.mxu0 0.0
    %3016 = vmatpush2.xpose.msra.mxu0 0.0
    %3017 = vmatprep.subr.mxu0 0.0
    %3018 = vmatpush2.xpose.msra.mxu0 0.0
    %3019 = vmatprep.subr.mxu0 0.0
    %3020 = vmatpush2.xpose.msra.mxu0 0.0
    %3021 = vmatprep.subr.mxu0 0.0
    %3022 = vmatpush2.xpose.msra.mxu0 0.0
    %3023 = vmatprep.mubr.f32.mxu0 0.0
    %3024 = vmatmul.mubr.f32.gmra.mxu0 %v2955
    %v3025 = vpop.f32.mrf.mxu0
    %v3026 = vadd.f32 0.0, %v3025
    %v3027 = vpop.f32.mrf.mxu0
    %3028 = vdwg.mxu0
    %3029 = vrot.lane.b32.xlu0 %v265, 112
    %v3030 = vpop.permute.xlu0 %3029
    %3031 = vrot.lane.b32.xlu0 %v181, 48
    %v3032 = vpop.permute.xlu0 %3031
    %v3033 = vsel %vm282, %v3030, 0
    %v3035 = vsel %vm282, %v3032, 0
    %3037 = vmatprep.subr.mxu0 0.0
    %3038 = vmatpush1.xpose.msra.mxu0 0.0
    %3039 = vmatprep.subr.mxu0 0.0
    %3040 = vmatpush1.xpose.msra.mxu0 0.0
    %3041 = vmatprep.subr.mxu0 0.0
    %3042 = vmatpush1.xpose.msra.mxu0 0.0
    %3043 = vmatprep.subr.mxu0 0.0
    %3044 = vmatpush1.xpose.msra.mxu0 0.0
    %3045 = vmatprep.subr.mxu0 0.0
    %3046 = vmatpush1.xpose.msra.mxu0 0.0
    %3047 = vmatprep.subr.mxu0 0.0
    %3048 = vmatpush1.xpose.msra.mxu0 0.0
    %3049 = vmatprep.subr.mxu0 0.0
    %3050 = vmatpush1.xpose.msra.mxu0 0.0
    %3051 = vmatprep.subr.mxu0 0.0
    %3052 = vmatpush1.xpose.msra.mxu0 0.0
    %3053 = vmatprep.subr.mxu0 0.0
    %3054 = vmatpush1.xpose.msra.mxu0 0.0
    %3055 = vmatprep.subr.mxu0 0.0
    %3056 = vmatpush1.xpose.msra.mxu0 0.0
    %3057 = vmatprep.subr.mxu0 0.0
    %3058 = vmatpush1.xpose.msra.mxu0 0.0
    %3059 = vmatprep.subr.mxu0 0.0
    %3060 = vmatpush1.xpose.msra.mxu0 0.0
    %3061 = vmatprep.subr.mxu0 0.0
    %3062 = vmatpush1.xpose.msra.mxu0 0.0
    %3063 = vmatprep.subr.mxu0 0.0
    %3064 = vmatpush1.xpose.msra.mxu0 0.0
    %3065 = vmatprep.subr.mxu0 0.0
    %3066 = vmatpush1.xpose.msra.mxu0 0.0
    %3067 = vmatprep.subr.mxu0 0.0
    %3068 = vmatpush1.xpose.msra.mxu0 %v3035
    %3069 = vmatprep.subr.mxu0 0.0
    %3070 = vmatpush2.xpose.msra.mxu0 0.0
    %3071 = vmatprep.subr.mxu0 0.0
    %3072 = vmatpush2.xpose.msra.mxu0 0.0
    %3073 = vmatprep.subr.mxu0 0.0
    %3074 = vmatpush2.xpose.msra.mxu0 0.0
    %3075 = vmatprep.subr.mxu0 0.0
    %3076 = vmatpush2.xpose.msra.mxu0 0.0
    %3077 = vmatprep.subr.mxu0 0.0
    %3078 = vmatpush2.xpose.msra.mxu0 0.0
    %3079 = vmatprep.subr.mxu0 0.0
    %3080 = vmatpush2.xpose.msra.mxu0 0.0
    %3081 = vmatprep.subr.mxu0 0.0
    %3082 = vmatpush2.xpose.msra.mxu0 0.0
    %3083 = vmatprep.subr.mxu0 0.0
    %3084 = vmatpush2.xpose.msra.mxu0 0.0
    %3085 = vmatprep.subr.mxu0 0.0
    %3086 = vmatpush2.xpose.msra.mxu0 0.0
    %3087 = vmatprep.subr.mxu0 0.0
    %3088 = vmatpush2.xpose.msra.mxu0 0.0
    %3089 = vmatprep.subr.mxu0 0.0
    %3090 = vmatpush2.xpose.msra.mxu0 0.0
    %3091 = vmatprep.subr.mxu0 0.0
    %3092 = vmatpush2.xpose.msra.mxu0 0.0
    %3093 = vmatprep.subr.mxu0 0.0
    %3094 = vmatpush2.xpose.msra.mxu0 0.0
    %3095 = vmatprep.subr.mxu0 0.0
    %3096 = vmatpush2.xpose.msra.mxu0 0.0
    %3097 = vmatprep.subr.mxu0 0.0
    %3098 = vmatpush2.xpose.msra.mxu0 0.0
    %3099 = vmatprep.subr.mxu0 0.0
    %3100 = vmatpush2.xpose.msra.mxu0 0.0
    %3101 = vmatprep.mubr.f32.mxu0 0.0
    %3102 = vmatmul.mubr.f32.gmra.mxu0 %v3033
    %v3103 = vpop.f32.mrf.mxu0
    %v3104 = vadd.f32 0.0, %v3103
    %v3105 = vpop.f32.mrf.mxu0
    %3106 = vdwg.mxu0
    %3107 = vrot.lane.b32.xlu0 %v266, 112
    %v3108 = vpop.permute.xlu0 %3107
    %3109 = vrot.lane.b32.xlu0 %v187, 48
    %v3110 = vpop.permute.xlu0 %3109
    %v3111 = vsel %vm282, %v3108, 0
    %v3113 = vsel %vm282, %v3110, 0
    %3115 = vmatprep.subr.mxu0 0.0
    %3116 = vmatpush1.xpose.msra.mxu0 0.0
    %3117 = vmatprep.subr.mxu0 0.0
    %3118 = vmatpush1.xpose.msra.mxu0 0.0
    %3119 = vmatprep.subr.mxu0 0.0
    %3120 = vmatpush1.xpose.msra.mxu0 0.0
    %3121 = vmatprep.subr.mxu0 0.0
    %3122 = vmatpush1.xpose.msra.mxu0 0.0
    %3123 = vmatprep.subr.mxu0 0.0
    %3124 = vmatpush1.xpose.msra.mxu0 0.0
    %3125 = vmatprep.subr.mxu0 0.0
    %3126 = vmatpush1.xpose.msra.mxu0 0.0
    %3127 = vmatprep.subr.mxu0 0.0
    %3128 = vmatpush1.xpose.msra.mxu0 0.0
    %3129 = vmatprep.subr.mxu0 0.0
    %3130 = vmatpush1.xpose.msra.mxu0 0.0
    %3131 = vmatprep.subr.mxu0 0.0
    %3132 = vmatpush1.xpose.msra.mxu0 0.0
    %3133 = vmatprep.subr.mxu0 0.0
    %3134 = vmatpush1.xpose.msra.mxu0 0.0
    %3135 = vmatprep.subr.mxu0 0.0
    %3136 = vmatpush1.xpose.msra.mxu0 0.0
    %3137 = vmatprep.subr.mxu0 0.0
    %3138 = vmatpush1.xpose.msra.mxu0 0.0
    %3139 = vmatprep.subr.mxu0 0.0
    %3140 = vmatpush1.xpose.msra.mxu0 0.0
    %3141 = vmatprep.subr.mxu0 0.0
    %3142 = vmatpush1.xpose.msra.mxu0 0.0
    %3143 = vmatprep.subr.mxu0 0.0
    %3144 = vmatpush1.xpose.msra.mxu0 0.0
    %3145 = vmatprep.subr.mxu0 0.0
    %3146 = vmatpush1.xpose.msra.mxu0 %v3113
    %3147 = vmatprep.subr.mxu0 0.0
    %3148 = vmatpush2.xpose.msra.mxu0 0.0
    %3149 = vmatprep.subr.mxu0 0.0
    %3150 = vmatpush2.xpose.msra.mxu0 0.0
    %3151 = vmatprep.subr.mxu0 0.0
    %3152 = vmatpush2.xpose.msra.mxu0 0.0
    %3153 = vmatprep.subr.mxu0 0.0
    %3154 = vmatpush2.xpose.msra.mxu0 0.0
    %3155 = vmatprep.subr.mxu0 0.0
    %3156 = vmatpush2.xpose.msra.mxu0 0.0
    %3157 = vmatprep.subr.mxu0 0.0
    %3158 = vmatpush2.xpose.msra.mxu0 0.0
    %3159 = vmatprep.subr.mxu0 0.0
    %3160 = vmatpush2.xpose.msra.mxu0 0.0
    %3161 = vmatprep.subr.mxu0 0.0
    %3162 = vmatpush2.xpose.msra.mxu0 0.0
    %3163 = vmatprep.subr.mxu0 0.0
    %3164 = vmatpush2.xpose.msra.mxu0 0.0
    %3165 = vmatprep.subr.mxu0 0.0
    %3166 = vmatpush2.xpose.msra.mxu0 0.0
    %3167 = vmatprep.subr.mxu0 0.0
    %3168 = vmatpush2.xpose.msra.mxu0 0.0
    %3169 = vmatprep.subr.mxu0 0.0
    %3170 = vmatpush2.xpose.msra.mxu0 0.0
    %3171 = vmatprep.subr.mxu0 0.0
    %3172 = vmatpush2.xpose.msra.mxu0 0.0
    %3173 = vmatprep.subr.mxu0 0.0
    %3174 = vmatpush2.xpose.msra.mxu0 0.0
    %3175 = vmatprep.subr.mxu0 0.0
    %3176 = vmatpush2.xpose.msra.mxu0 0.0
    %3177 = vmatprep.subr.mxu0 0.0
    %3178 = vmatpush2.xpose.msra.mxu0 0.0
    %3179 = vmatprep.mubr.f32.mxu0 0.0
    %3180 = vmatmul.mubr.f32.gmra.mxu0 %v3111
    %v3181 = vpop.f32.mrf.mxu0
    %v3182 = vadd.f32 0.0, %v3181
    %v3183 = vpop.f32.mrf.mxu0
    %3184 = vdwg.mxu0
    %3185 = vrot.lane.b32.xlu0 %v267, 112
    %v3186 = vpop.permute.xlu0 %3185
    %3187 = vrot.lane.b32.xlu0 %v193, 48
    %v3188 = vpop.permute.xlu0 %3187
    %v3189 = vsel %vm282, %v3186, 0
    %v3191 = vsel %vm282, %v3188, 0
    %3193 = vmatprep.subr.mxu0 0.0
    %3194 = vmatpush1.xpose.msra.mxu0 0.0
    %3195 = vmatprep.subr.mxu0 0.0
    %3196 = vmatpush1.xpose.msra.mxu0 0.0
    %3197 = vmatprep.subr.mxu0 0.0
    %3198 = vmatpush1.xpose.msra.mxu0 0.0
    %3199 = vmatprep.subr.mxu0 0.0
    %3200 = vmatpush1.xpose.msra.mxu0 0.0
    %3201 = vmatprep.subr.mxu0 0.0
    %3202 = vmatpush1.xpose.msra.mxu0 0.0
    %3203 = vmatprep.subr.mxu0 0.0
    %3204 = vmatpush1.xpose.msra.mxu0 0.0
    %3205 = vmatprep.subr.mxu0 0.0
    %3206 = vmatpush1.xpose.msra.mxu0 0.0
    %3207 = vmatprep.subr.mxu0 0.0
    %3208 = vmatpush1.xpose.msra.mxu0 0.0
    %3209 = vmatprep.subr.mxu0 0.0
    %3210 = vmatpush1.xpose.msra.mxu0 0.0
    %3211 = vmatprep.subr.mxu0 0.0
    %3212 = vmatpush1.xpose.msra.mxu0 0.0
    %3213 = vmatprep.subr.mxu0 0.0
    %3214 = vmatpush1.xpose.msra.mxu0 0.0
    %3215 = vmatprep.subr.mxu0 0.0
    %3216 = vmatpush1.xpose.msra.mxu0 0.0
    %3217 = vmatprep.subr.mxu0 0.0
    %3218 = vmatpush1.xpose.msra.mxu0 0.0
    %3219 = vmatprep.subr.mxu0 0.0
    %3220 = vmatpush1.xpose.msra.mxu0 0.0
    %3221 = vmatprep.subr.mxu0 0.0
    %3222 = vmatpush1.xpose.msra.mxu0 0.0
    %3223 = vmatprep.subr.mxu0 0.0
    %3224 = vmatpush1.xpose.msra.mxu0 %v3191
    %3225 = vmatprep.subr.mxu0 0.0
    %3226 = vmatpush2.xpose.msra.mxu0 0.0
    %3227 = vmatprep.subr.mxu0 0.0
    %3228 = vmatpush2.xpose.msra.mxu0 0.0
    %3229 = vmatprep.subr.mxu0 0.0
    %3230 = vmatpush2.xpose.msra.mxu0 0.0
    %3231 = vmatprep.subr.mxu0 0.0
    %3232 = vmatpush2.xpose.msra.mxu0 0.0
    %3233 = vmatprep.subr.mxu0 0.0
    %3234 = vmatpush2.xpose.msra.mxu0 0.0
    %3235 = vmatprep.subr.mxu0 0.0
    %3236 = vmatpush2.xpose.msra.mxu0 0.0
    %3237 = vmatprep.subr.mxu0 0.0
    %3238 = vmatpush2.xpose.msra.mxu0 0.0
    %3239 = vmatprep.subr.mxu0 0.0
    %3240 = vmatpush2.xpose.msra.mxu0 0.0
    %3241 = vmatprep.subr.mxu0 0.0
    %3242 = vmatpush2.xpose.msra.mxu0 0.0
    %3243 = vmatprep.subr.mxu0 0.0
    %3244 = vmatpush2.xpose.msra.mxu0 0.0
    %3245 = vmatprep.subr.mxu0 0.0
    %3246 = vmatpush2.xpose.msra.mxu0 0.0
    %3247 = vmatprep.subr.mxu0 0.0
    %3248 = vmatpush2.xpose.msra.mxu0 0.0
    %3249 = vmatprep.subr.mxu0 0.0
    %3250 = vmatpush2.xpose.msra.mxu0 0.0
    %3251 = vmatprep.subr.mxu0 0.0
    %3252 = vmatpush2.xpose.msra.mxu0 0.0
    %3253 = vmatprep.subr.mxu0 0.0
    %3254 = vmatpush2.xpose.msra.mxu0 0.0
    %3255 = vmatprep.subr.mxu0 0.0
    %3256 = vmatpush2.xpose.msra.mxu0 0.0
    %3257 = vmatprep.mubr.f32.mxu0 0.0
    %3258 = vmatmul.mubr.f32.gmra.mxu0 %v3189
    %v3259 = vpop.f32.mrf.mxu0
    %v3260 = vadd.f32 0.0, %v3259
    %v3261 = vpop.f32.mrf.mxu0
    %3262 = vdwg.mxu0
    %3263 = vrot.lane.b32.xlu0 %v268, 112
    %v3264 = vpop.permute.xlu0 %3263
    %3265 = vrot.lane.b32.xlu0 %v199, 48
    %v3266 = vpop.permute.xlu0 %3265
    %v3267 = vsel %vm282, %v3264, 0
    %v3269 = vsel %vm282, %v3266, 0
    %3271 = vmatprep.subr.mxu0 0.0
    %3272 = vmatpush1.xpose.msra.mxu0 0.0
    %3273 = vmatprep.subr.mxu0 0.0
    %3274 = vmatpush1.xpose.msra.mxu0 0.0
    %3275 = vmatprep.subr.mxu0 0.0
    %3276 = vmatpush1.xpose.msra.mxu0 0.0
    %3277 = vmatprep.subr.mxu0 0.0
    %3278 = vmatpush1.xpose.msra.mxu0 0.0
    %3279 = vmatprep.subr.mxu0 0.0
    %3280 = vmatpush1.xpose.msra.mxu0 0.0
    %3281 = vmatprep.subr.mxu0 0.0
    %3282 = vmatpush1.xpose.msra.mxu0 0.0
    %3283 = vmatprep.subr.mxu0 0.0
    %3284 = vmatpush1.xpose.msra.mxu0 0.0
    %3285 = vmatprep.subr.mxu0 0.0
    %3286 = vmatpush1.xpose.msra.mxu0 0.0
    %3287 = vmatprep.subr.mxu0 0.0
    %3288 = vmatpush1.xpose.msra.mxu0 0.0
    %3289 = vmatprep.subr.mxu0 0.0
    %3290 = vmatpush1.xpose.msra.mxu0 0.0
    %3291 = vmatprep.subr.mxu0 0.0
    %3292 = vmatpush1.xpose.msra.mxu0 0.0
    %3293 = vmatprep.subr.mxu0 0.0
    %3294 = vmatpush1.xpose.msra.mxu0 0.0
    %3295 = vmatprep.subr.mxu0 0.0
    %3296 = vmatpush1.xpose.msra.mxu0 0.0
    %3297 = vmatprep.subr.mxu0 0.0
    %3298 = vmatpush1.xpose.msra.mxu0 0.0
    %3299 = vmatprep.subr.mxu0 0.0
    %3300 = vmatpush1.xpose.msra.mxu0 0.0
    %3301 = vmatprep.subr.mxu0 0.0
    %3302 = vmatpush1.xpose.msra.mxu0 %v3269
    %3303 = vmatprep.subr.mxu0 0.0
    %3304 = vmatpush2.xpose.msra.mxu0 0.0
    %3305 = vmatprep.subr.mxu0 0.0
    %3306 = vmatpush2.xpose.msra.mxu0 0.0
    %3307 = vmatprep.subr.mxu0 0.0
    %3308 = vmatpush2.xpose.msra.mxu0 0.0
    %3309 = vmatprep.subr.mxu0 0.0
    %3310 = vmatpush2.xpose.msra.mxu0 0.0
    %3311 = vmatprep.subr.mxu0 0.0
    %3312 = vmatpush2.xpose.msra.mxu0 0.0
    %3313 = vmatprep.subr.mxu0 0.0
    %3314 = vmatpush2.xpose.msra.mxu0 0.0
    %3315 = vmatprep.subr.mxu0 0.0
    %3316 = vmatpush2.xpose.msra.mxu0 0.0
    %3317 = vmatprep.subr.mxu0 0.0
    %3318 = vmatpush2.xpose.msra.mxu0 0.0
    %3319 = vmatprep.subr.mxu0 0.0
    %3320 = vmatpush2.xpose.msra.mxu0 0.0
    %3321 = vmatprep.subr.mxu0 0.0
    %3322 = vmatpush2.xpose.msra.mxu0 0.0
    %3323 = vmatprep.subr.mxu0 0.0
    %3324 = vmatpush2.xpose.msra.mxu0 0.0
    %3325 = vmatprep.subr.mxu0 0.0
    %3326 = vmatpush2.xpose.msra.mxu0 0.0
    %3327 = vmatprep.subr.mxu0 0.0
    %3328 = vmatpush2.xpose.msra.mxu0 0.0
    %3329 = vmatprep.subr.mxu0 0.0
    %3330 = vmatpush2.xpose.msra.mxu0 0.0
    %3331 = vmatprep.subr.mxu0 0.0
    %3332 = vmatpush2.xpose.msra.mxu0 0.0
    %3333 = vmatprep.subr.mxu0 0.0
    %3334 = vmatpush2.xpose.msra.mxu0 0.0
    %3335 = vmatprep.mubr.f32.mxu0 0.0
    %3336 = vmatmul.mubr.f32.gmra.mxu0 %v3267
    %v3337 = vpop.f32.mrf.mxu0
    %v3338 = vadd.f32 0.0, %v3337
    %v3339 = vpop.f32.mrf.mxu0
    %3340 = vdwg.mxu0
    %3341 = vrot.lane.b32.xlu0 %v269, 112
    %v3342 = vpop.permute.xlu0 %3341
    %3343 = vrot.lane.b32.xlu0 %v205, 48
    %v3344 = vpop.permute.xlu0 %3343
    %v3345 = vsel %vm282, %v3342, 0
    %v3347 = vsel %vm282, %v3344, 0
    %3349 = vmatprep.subr.mxu0 0.0
    %3350 = vmatpush1.xpose.msra.mxu0 0.0
    %3351 = vmatprep.subr.mxu0 0.0
    %3352 = vmatpush1.xpose.msra.mxu0 0.0
    %3353 = vmatprep.subr.mxu0 0.0
    %3354 = vmatpush1.xpose.msra.mxu0 0.0
    %3355 = vmatprep.subr.mxu0 0.0
    %3356 = vmatpush1.xpose.msra.mxu0 0.0
    %3357 = vmatprep.subr.mxu0 0.0
    %3358 = vmatpush1.xpose.msra.mxu0 0.0
    %3359 = vmatprep.subr.mxu0 0.0
    %3360 = vmatpush1.xpose.msra.mxu0 0.0
    %3361 = vmatprep.subr.mxu0 0.0
    %3362 = vmatpush1.xpose.msra.mxu0 0.0
    %3363 = vmatprep.subr.mxu0 0.0
    %3364 = vmatpush1.xpose.msra.mxu0 0.0
    %3365 = vmatprep.subr.mxu0 0.0
    %3366 = vmatpush1.xpose.msra.mxu0 0.0
    %3367 = vmatprep.subr.mxu0 0.0
    %3368 = vmatpush1.xpose.msra.mxu0 0.0
    %3369 = vmatprep.subr.mxu0 0.0
    %3370 = vmatpush1.xpose.msra.mxu0 0.0
    %3371 = vmatprep.subr.mxu0 0.0
    %3372 = vmatpush1.xpose.msra.mxu0 0.0
    %3373 = vmatprep.subr.mxu0 0.0
    %3374 = vmatpush1.xpose.msra.mxu0 0.0
    %3375 = vmatprep.subr.mxu0 0.0
    %3376 = vmatpush1.xpose.msra.mxu0 0.0
    %3377 = vmatprep.subr.mxu0 0.0
    %3378 = vmatpush1.xpose.msra.mxu0 0.0
    %3379 = vmatprep.subr.mxu0 0.0
    %3380 = vmatpush1.xpose.msra.mxu0 %v3347
    %3381 = vmatprep.subr.mxu0 0.0
    %3382 = vmatpush2.xpose.msra.mxu0 0.0
    %3383 = vmatprep.subr.mxu0 0.0
    %3384 = vmatpush2.xpose.msra.mxu0 0.0
    %3385 = vmatprep.subr.mxu0 0.0
    %3386 = vmatpush2.xpose.msra.mxu0 0.0
    %3387 = vmatprep.subr.mxu0 0.0
    %3388 = vmatpush2.xpose.msra.mxu0 0.0
    %3389 = vmatprep.subr.mxu0 0.0
    %3390 = vmatpush2.xpose.msra.mxu0 0.0
    %3391 = vmatprep.subr.mxu0 0.0
    %3392 = vmatpush2.xpose.msra.mxu0 0.0
    %3393 = vmatprep.subr.mxu0 0.0
    %3394 = vmatpush2.xpose.msra.mxu0 0.0
    %3395 = vmatprep.subr.mxu0 0.0
    %3396 = vmatpush2.xpose.msra.mxu0 0.0
    %3397 = vmatprep.subr.mxu0 0.0
    %3398 = vmatpush2.xpose.msra.mxu0 0.0
    %3399 = vmatprep.subr.mxu0 0.0
    %3400 = vmatpush2.xpose.msra.mxu0 0.0
    %3401 = vmatprep.subr.mxu0 0.0
    %3402 = vmatpush2.xpose.msra.mxu0 0.0
    %3403 = vmatprep.subr.mxu0 0.0
    %3404 = vmatpush2.xpose.msra.mxu0 0.0
    %3405 = vmatprep.subr.mxu0 0.0
    %3406 = vmatpush2.xpose.msra.mxu0 0.0
    %3407 = vmatprep.subr.mxu0 0.0
    %3408 = vmatpush2.xpose.msra.mxu0 0.0
    %3409 = vmatprep.subr.mxu0 0.0
    %3410 = vmatpush2.xpose.msra.mxu0 0.0
    %3411 = vmatprep.subr.mxu0 0.0
    %3412 = vmatpush2.xpose.msra.mxu0 0.0
    %3413 = vmatprep.mubr.f32.mxu0 0.0
    %3414 = vmatmul.mubr.f32.gmra.mxu0 %v3345
    %v3415 = vpop.f32.mrf.mxu0
    %v3416 = vadd.f32 0.0, %v3415
    %v3417 = vpop.f32.mrf.mxu0
    %3418 = vdwg.mxu0
    %3419 = vrot.lane.b32.xlu0 %v270, 112
    %v3420 = vpop.permute.xlu0 %3419
    %3421 = vrot.lane.b32.xlu0 %v211, 48
    %v3422 = vpop.permute.xlu0 %3421
    %v3423 = vsel %vm282, %v3420, 0
    %v3425 = vsel %vm282, %v3422, 0
    %3427 = vmatprep.subr.mxu0 0.0
    %3428 = vmatpush1.xpose.msra.mxu0 0.0
    %3429 = vmatprep.subr.mxu0 0.0
    %3430 = vmatpush1.xpose.msra.mxu0 0.0
    %3431 = vmatprep.subr.mxu0 0.0
    %3432 = vmatpush1.xpose.msra.mxu0 0.0
    %3433 = vmatprep.subr.mxu0 0.0
    %3434 = vmatpush1.xpose.msra.mxu0 0.0
    %3435 = vmatprep.subr.mxu0 0.0
    %3436 = vmatpush1.xpose.msra.mxu0 0.0
    %3437 = vmatprep.subr.mxu0 0.0
    %3438 = vmatpush1.xpose.msra.mxu0 0.0
    %3439 = vmatprep.subr.mxu0 0.0
    %3440 = vmatpush1.xpose.msra.mxu0 0.0
    %3441 = vmatprep.subr.mxu0 0.0
    %3442 = vmatpush1.xpose.msra.mxu0 0.0
    %3443 = vmatprep.subr.mxu0 0.0
    %3444 = vmatpush1.xpose.msra.mxu0 0.0
    %3445 = vmatprep.subr.mxu0 0.0
    %3446 = vmatpush1.xpose.msra.mxu0 0.0
    %3447 = vmatprep.subr.mxu0 0.0
    %3448 = vmatpush1.xpose.msra.mxu0 0.0
    %3449 = vmatprep.subr.mxu0 0.0
    %3450 = vmatpush1.xpose.msra.mxu0 0.0
    %3451 = vmatprep.subr.mxu0 0.0
    %3452 = vmatpush1.xpose.msra.mxu0 0.0
    %3453 = vmatprep.subr.mxu0 0.0
    %3454 = vmatpush1.xpose.msra.mxu0 0.0
    %3455 = vmatprep.subr.mxu0 0.0
    %3456 = vmatpush1.xpose.msra.mxu0 0.0
    %3457 = vmatprep.subr.mxu0 0.0
    %3458 = vmatpush1.xpose.msra.mxu0 %v3425
    %3459 = vmatprep.subr.mxu0 0.0
    %3460 = vmatpush2.xpose.msra.mxu0 0.0
    %3461 = vmatprep.subr.mxu0 0.0
    %3462 = vmatpush2.xpose.msra.mxu0 0.0
    %3463 = vmatprep.subr.mxu0 0.0
    %3464 = vmatpush2.xpose.msra.mxu0 0.0
    %3465 = vmatprep.subr.mxu0 0.0
    %3466 = vmatpush2.xpose.msra.mxu0 0.0
    %3467 = vmatprep.subr.mxu0 0.0
    %3468 = vmatpush2.xpose.msra.mxu0 0.0
    %3469 = vmatprep.subr.mxu0 0.0
    %3470 = vmatpush2.xpose.msra.mxu0 0.0
    %3471 = vmatprep.subr.mxu0 0.0
    %3472 = vmatpush2.xpose.msra.mxu0 0.0
    %3473 = vmatprep.subr.mxu0 0.0
    %3474 = vmatpush2.xpose.msra.mxu0 0.0
    %3475 = vmatprep.subr.mxu0 0.0
    %3476 = vmatpush2.xpose.msra.mxu0 0.0
    %3477 = vmatprep.subr.mxu0 0.0
    %3478 = vmatpush2.xpose.msra.mxu0 0.0
    %3479 = vmatprep.subr.mxu0 0.0
    %3480 = vmatpush2.xpose.msra.mxu0 0.0
    %3481 = vmatprep.subr.mxu0 0.0
    %3482 = vmatpush2.xpose.msra.mxu0 0.0
    %3483 = vmatprep.subr.mxu0 0.0
    %3484 = vmatpush2.xpose.msra.mxu0 0.0
    %3485 = vmatprep.subr.mxu0 0.0
    %3486 = vmatpush2.xpose.msra.mxu0 0.0
    %3487 = vmatprep.subr.mxu0 0.0
    %3488 = vmatpush2.xpose.msra.mxu0 0.0
    %3489 = vmatprep.subr.mxu0 0.0
    %3490 = vmatpush2.xpose.msra.mxu0 0.0
    %3491 = vmatprep.mubr.f32.mxu0 0.0
    %3492 = vmatmul.mubr.f32.gmra.mxu0 %v3423
    %v3493 = vpop.f32.mrf.mxu0
    %v3494 = vadd.f32 0.0, %v3493
    %v3495 = vpop.f32.mrf.mxu0
    %3496 = vdwg.mxu0
    %3497 = vrot.lane.b32.xlu0 %v271, 112
    %v3498 = vpop.permute.xlu0 %3497
    %3499 = vrot.lane.b32.xlu0 %v217, 48
    %v3500 = vpop.permute.xlu0 %3499
    %v3501 = vsel %vm282, %v3498, 0
    %v3503 = vsel %vm282, %v3500, 0
    %3505 = vmatprep.subr.mxu0 0.0
    %3506 = vmatpush1.xpose.msra.mxu0 0.0
    %3507 = vmatprep.subr.mxu0 0.0
    %3508 = vmatpush1.xpose.msra.mxu0 0.0
    %3509 = vmatprep.subr.mxu0 0.0
    %3510 = vmatpush1.xpose.msra.mxu0 0.0
    %3511 = vmatprep.subr.mxu0 0.0
    %3512 = vmatpush1.xpose.msra.mxu0 0.0
    %3513 = vmatprep.subr.mxu0 0.0
    %3514 = vmatpush1.xpose.msra.mxu0 0.0
    %3515 = vmatprep.subr.mxu0 0.0
    %3516 = vmatpush1.xpose.msra.mxu0 0.0
    %3517 = vmatprep.subr.mxu0 0.0
    %3518 = vmatpush1.xpose.msra.mxu0 0.0
    %3519 = vmatprep.subr.mxu0 0.0
    %3520 = vmatpush1.xpose.msra.mxu0 0.0
    %3521 = vmatprep.subr.mxu0 0.0
    %3522 = vmatpush1.xpose.msra.mxu0 0.0
    %3523 = vmatprep.subr.mxu0 0.0
    %3524 = vmatpush1.xpose.msra.mxu0 0.0
    %3525 = vmatprep.subr.mxu0 0.0
    %3526 = vmatpush1.xpose.msra.mxu0 0.0
    %3527 = vmatprep.subr.mxu0 0.0
    %3528 = vmatpush1.xpose.msra.mxu0 0.0
    %3529 = vmatprep.subr.mxu0 0.0
    %3530 = vmatpush1.xpose.msra.mxu0 0.0
    %3531 = vmatprep.subr.mxu0 0.0
    %3532 = vmatpush1.xpose.msra.mxu0 0.0
    %3533 = vmatprep.subr.mxu0 0.0
    %3534 = vmatpush1.xpose.msra.mxu0 0.0
    %3535 = vmatprep.subr.mxu0 0.0
    %3536 = vmatpush1.xpose.msra.mxu0 %v3503
    %3537 = vmatprep.subr.mxu0 0.0
    %3538 = vmatpush2.xpose.msra.mxu0 0.0
    %3539 = vmatprep.subr.mxu0 0.0
    %3540 = vmatpush2.xpose.msra.mxu0 0.0
    %3541 = vmatprep.subr.mxu0 0.0
    %3542 = vmatpush2.xpose.msra.mxu0 0.0
    %3543 = vmatprep.subr.mxu0 0.0
    %3544 = vmatpush2.xpose.msra.mxu0 0.0
    %3545 = vmatprep.subr.mxu0 0.0
    %3546 = vmatpush2.xpose.msra.mxu0 0.0
    %3547 = vmatprep.subr.mxu0 0.0
    %3548 = vmatpush2.xpose.msra.mxu0 0.0
    %3549 = vmatprep.subr.mxu0 0.0
    %3550 = vmatpush2.xpose.msra.mxu0 0.0
    %3551 = vmatprep.subr.mxu0 0.0
    %3552 = vmatpush2.xpose.msra.mxu0 0.0
    %3553 = vmatprep.subr.mxu0 0.0
    %3554 = vmatpush2.xpose.msra.mxu0 0.0
    %3555 = vmatprep.subr.mxu0 0.0
    %3556 = vmatpush2.xpose.msra.mxu0 0.0
    %3557 = vmatprep.subr.mxu0 0.0
    %3558 = vmatpush2.xpose.msra.mxu0 0.0
    %3559 = vmatprep.subr.mxu0 0.0
    %3560 = vmatpush2.xpose.msra.mxu0 0.0
    %3561 = vmatprep.subr.mxu0 0.0
    %3562 = vmatpush2.xpose.msra.mxu0 0.0
    %3563 = vmatprep.subr.mxu0 0.0
    %3564 = vmatpush2.xpose.msra.mxu0 0.0
    %3565 = vmatprep.subr.mxu0 0.0
    %3566 = vmatpush2.xpose.msra.mxu0 0.0
    %3567 = vmatprep.subr.mxu0 0.0
    %3568 = vmatpush2.xpose.msra.mxu0 0.0
    %3569 = vmatprep.mubr.f32.mxu0 0.0
    %3570 = vmatmul.mubr.f32.gmra.mxu0 %v3501
    %v3571 = vpop.f32.mrf.mxu0
    %v3572 = vadd.f32 0.0, %v3571
    %v3573 = vpop.f32.mrf.mxu0
    %3574 = vdwg.mxu0
    %3575 = vrot.lane.b32.xlu0 %v272, 112
    %v3576 = vpop.permute.xlu0 %3575
    %3577 = vrot.lane.b32.xlu0 %v223, 48
    %v3578 = vpop.permute.xlu0 %3577
    %v3579 = vsel %vm282, %v3576, 0
    %v3581 = vsel %vm282, %v3578, 0
    %3583 = vmatprep.subr.mxu0 0.0
    %3584 = vmatpush1.xpose.msra.mxu0 0.0
    %3585 = vmatprep.subr.mxu0 0.0
    %3586 = vmatpush1.xpose.msra.mxu0 0.0
    %3587 = vmatprep.subr.mxu0 0.0
    %3588 = vmatpush1.xpose.msra.mxu0 0.0
    %3589 = vmatprep.subr.mxu0 0.0
    %3590 = vmatpush1.xpose.msra.mxu0 0.0
    %3591 = vmatprep.subr.mxu0 0.0
    %3592 = vmatpush1.xpose.msra.mxu0 0.0
    %3593 = vmatprep.subr.mxu0 0.0
    %3594 = vmatpush1.xpose.msra.mxu0 0.0
    %3595 = vmatprep.subr.mxu0 0.0
    %3596 = vmatpush1.xpose.msra.mxu0 0.0
    %3597 = vmatprep.subr.mxu0 0.0
    %3598 = vmatpush1.xpose.msra.mxu0 0.0
    %3599 = vmatprep.subr.mxu0 0.0
    %3600 = vmatpush1.xpose.msra.mxu0 0.0
    %3601 = vmatprep.subr.mxu0 0.0
    %3602 = vmatpush1.xpose.msra.mxu0 0.0
    %3603 = vmatprep.subr.mxu0 0.0
    %3604 = vmatpush1.xpose.msra.mxu0 0.0
    %3605 = vmatprep.subr.mxu0 0.0
    %3606 = vmatpush1.xpose.msra.mxu0 0.0
    %3607 = vmatprep.subr.mxu0 0.0
    %3608 = vmatpush1.xpose.msra.mxu0 0.0
    %3609 = vmatprep.subr.mxu0 0.0
    %3610 = vmatpush1.xpose.msra.mxu0 0.0
    %3611 = vmatprep.subr.mxu0 0.0
    %3612 = vmatpush1.xpose.msra.mxu0 0.0
    %3613 = vmatprep.subr.mxu0 0.0
    %3614 = vmatpush1.xpose.msra.mxu0 %v3581
    %3615 = vmatprep.subr.mxu0 0.0
    %3616 = vmatpush2.xpose.msra.mxu0 0.0
    %3617 = vmatprep.subr.mxu0 0.0
    %3618 = vmatpush2.xpose.msra.mxu0 0.0
    %3619 = vmatprep.subr.mxu0 0.0
    %3620 = vmatpush2.xpose.msra.mxu0 0.0
    %3621 = vmatprep.subr.mxu0 0.0
    %3622 = vmatpush2.xpose.msra.mxu0 0.0
    %3623 = vmatprep.subr.mxu0 0.0
    %3624 = vmatpush2.xpose.msra.mxu0 0.0
    %3625 = vmatprep.subr.mxu0 0.0
    %3626 = vmatpush2.xpose.msra.mxu0 0.0
    %3627 = vmatprep.subr.mxu0 0.0
    %3628 = vmatpush2.xpose.msra.mxu0 0.0
    %3629 = vmatprep.subr.mxu0 0.0
    %3630 = vmatpush2.xpose.msra.mxu0 0.0
    %3631 = vmatprep.subr.mxu0 0.0
    %3632 = vmatpush2.xpose.msra.mxu0 0.0
    %3633 = vmatprep.subr.mxu0 0.0
    %3634 = vmatpush2.xpose.msra.mxu0 0.0
    %3635 = vmatprep.subr.mxu0 0.0
    %3636 = vmatpush2.xpose.msra.mxu0 0.0
    %3637 = vmatprep.subr.mxu0 0.0
    %3638 = vmatpush2.xpose.msra.mxu0 0.0
    %3639 = vmatprep.subr.mxu0 0.0
    %3640 = vmatpush2.xpose.msra.mxu0 0.0
    %3641 = vmatprep.subr.mxu0 0.0
    %3642 = vmatpush2.xpose.msra.mxu0 0.0
    %3643 = vmatprep.subr.mxu0 0.0
    %3644 = vmatpush2.xpose.msra.mxu0 0.0
    %3645 = vmatprep.subr.mxu0 0.0
    %3646 = vmatpush2.xpose.msra.mxu0 0.0
    %3647 = vmatprep.mubr.f32.mxu0 0.0
    %3648 = vmatmul.mubr.f32.gmra.mxu0 %v3579
    %v3649 = vpop.f32.mrf.mxu0
    %v3650 = vadd.f32 0.0, %v3649
    %v3651 = vpop.f32.mrf.mxu0
    %3652 = vdwg.mxu0
    %3653 = vrot.lane.b32.xlu0 %v273, 112
    %v3654 = vpop.permute.xlu0 %3653
    %3655 = vrot.lane.b32.xlu0 %v229, 48
    %v3656 = vpop.permute.xlu0 %3655
    %v3657 = vsel %vm282, %v3654, 0
    %v3659 = vsel %vm282, %v3656, 0
    %3661 = vmatprep.subr.mxu0 0.0
    %3662 = vmatpush1.xpose.msra.mxu0 0.0
    %3663 = vmatprep.subr.mxu0 0.0
    %3664 = vmatpush1.xpose.msra.mxu0 0.0
    %3665 = vmatprep.subr.mxu0 0.0
    %3666 = vmatpush1.xpose.msra.mxu0 0.0
    %3667 = vmatprep.subr.mxu0 0.0
    %3668 = vmatpush1.xpose.msra.mxu0 0.0
    %3669 = vmatprep.subr.mxu0 0.0
    %3670 = vmatpush1.xpose.msra.mxu0 0.0
    %3671 = vmatprep.subr.mxu0 0.0
    %3672 = vmatpush1.xpose.msra.mxu0 0.0
    %3673 = vmatprep.subr.mxu0 0.0
    %3674 = vmatpush1.xpose.msra.mxu0 0.0
    %3675 = vmatprep.subr.mxu0 0.0
    %3676 = vmatpush1.xpose.msra.mxu0 0.0
    %3677 = vmatprep.subr.mxu0 0.0
    %3678 = vmatpush1.xpose.msra.mxu0 0.0
    %3679 = vmatprep.subr.mxu0 0.0
    %3680 = vmatpush1.xpose.msra.mxu0 0.0
    %3681 = vmatprep.subr.mxu0 0.0
    %3682 = vmatpush1.xpose.msra.mxu0 0.0
    %3683 = vmatprep.subr.mxu0 0.0
    %3684 = vmatpush1.xpose.msra.mxu0 0.0
    %3685 = vmatprep.subr.mxu0 0.0
    %3686 = vmatpush1.xpose.msra.mxu0 0.0
    %3687 = vmatprep.subr.mxu0 0.0
    %3688 = vmatpush1.xpose.msra.mxu0 0.0
    %3689 = vmatprep.subr.mxu0 0.0
    %3690 = vmatpush1.xpose.msra.mxu0 0.0
    %3691 = vmatprep.subr.mxu0 0.0
    %3692 = vmatpush1.xpose.msra.mxu0 %v3659
    %3693 = vmatprep.subr.mxu0 0.0
    %3694 = vmatpush2.xpose.msra.mxu0 0.0
    %3695 = vmatprep.subr.mxu0 0.0
    %3696 = vmatpush2.xpose.msra.mxu0 0.0
    %3697 = vmatprep.subr.mxu0 0.0
    %3698 = vmatpush2.xpose.msra.mxu0 0.0
    %3699 = vmatprep.subr.mxu0 0.0
    %3700 = vmatpush2.xpose.msra.mxu0 0.0
    %3701 = vmatprep.subr.mxu0 0.0
    %3702 = vmatpush2.xpose.msra.mxu0 0.0
    %3703 = vmatprep.subr.mxu0 0.0
    %3704 = vmatpush2.xpose.msra.mxu0 0.0
    %3705 = vmatprep.subr.mxu0 0.0
    %3706 = vmatpush2.xpose.msra.mxu0 0.0
    %3707 = vmatprep.subr.mxu0 0.0
    %3708 = vmatpush2.xpose.msra.mxu0 0.0
    %3709 = vmatprep.subr.mxu0 0.0
    %3710 = vmatpush2.xpose.msra.mxu0 0.0
    %3711 = vmatprep.subr.mxu0 0.0
    %3712 = vmatpush2.xpose.msra.mxu0 0.0
    %3713 = vmatprep.subr.mxu0 0.0
    %3714 = vmatpush2.xpose.msra.mxu0 0.0
    %3715 = vmatprep.subr.mxu0 0.0
    %3716 = vmatpush2.xpose.msra.mxu0 0.0
    %3717 = vmatprep.subr.mxu0 0.0
    %3718 = vmatpush2.xpose.msra.mxu0 0.0
    %3719 = vmatprep.subr.mxu0 0.0
    %3720 = vmatpush2.xpose.msra.mxu0 0.0
    %3721 = vmatprep.subr.mxu0 0.0
    %3722 = vmatpush2.xpose.msra.mxu0 0.0
    %3723 = vmatprep.subr.mxu0 0.0
    %3724 = vmatpush2.xpose.msra.mxu0 0.0
    %3725 = vmatprep.mubr.f32.mxu0 0.0
    %3726 = vmatmul.mubr.f32.gmra.mxu0 %v3657
    %v3727 = vpop.f32.mrf.mxu0
    %v3728 = vadd.f32 0.0, %v3727
    %v3729 = vpop.f32.mrf.mxu0
    %3730 = vdwg.mxu0
    %3731 = vrot.lane.b32.xlu0 %v274, 112
    %v3732 = vpop.permute.xlu0 %3731
    %3733 = vrot.lane.b32.xlu0 %v235, 48
    %v3734 = vpop.permute.xlu0 %3733
    %v3735 = vsel %vm282, %v3732, 0
    %v3737 = vsel %vm282, %v3734, 0
    %3739 = vmatprep.subr.mxu0 0.0
    %3740 = vmatpush1.xpose.msra.mxu0 0.0
    %3741 = vmatprep.subr.mxu0 0.0
    %3742 = vmatpush1.xpose.msra.mxu0 0.0
    %3743 = vmatprep.subr.mxu0 0.0
    %3744 = vmatpush1.xpose.msra.mxu0 0.0
    %3745 = vmatprep.subr.mxu0 0.0
    %3746 = vmatpush1.xpose.msra.mxu0 0.0
    %3747 = vmatprep.subr.mxu0 0.0
    %3748 = vmatpush1.xpose.msra.mxu0 0.0
    %3749 = vmatprep.subr.mxu0 0.0
    %3750 = vmatpush1.xpose.msra.mxu0 0.0
    %3751 = vmatprep.subr.mxu0 0.0
    %3752 = vmatpush1.xpose.msra.mxu0 0.0
    %3753 = vmatprep.subr.mxu0 0.0
    %3754 = vmatpush1.xpose.msra.mxu0 0.0
    %3755 = vmatprep.subr.mxu0 0.0
    %3756 = vmatpush1.xpose.msra.mxu0 0.0
    %3757 = vmatprep.subr.mxu0 0.0
    %3758 = vmatpush1.xpose.msra.mxu0 0.0
    %3759 = vmatprep.subr.mxu0 0.0
    %3760 = vmatpush1.xpose.msra.mxu0 0.0
    %3761 = vmatprep.subr.mxu0 0.0
    %3762 = vmatpush1.xpose.msra.mxu0 0.0
    %3763 = vmatprep.subr.mxu0 0.0
    %3764 = vmatpush1.xpose.msra.mxu0 0.0
    %3765 = vmatprep.subr.mxu0 0.0
    %3766 = vmatpush1.xpose.msra.mxu0 0.0
    %3767 = vmatprep.subr.mxu0 0.0
    %3768 = vmatpush1.xpose.msra.mxu0 0.0
    %3769 = vmatprep.subr.mxu0 0.0
    %3770 = vmatpush1.xpose.msra.mxu0 %v3737
    %3771 = vmatprep.subr.mxu0 0.0
    %3772 = vmatpush2.xpose.msra.mxu0 0.0
    %3773 = vmatprep.subr.mxu0 0.0
    %3774 = vmatpush2.xpose.msra.mxu0 0.0
    %3775 = vmatprep.subr.mxu0 0.0
    %3776 = vmatpush2.xpose.msra.mxu0 0.0
    %3777 = vmatprep.subr.mxu0 0.0
    %3778 = vmatpush2.xpose.msra.mxu0 0.0
    %3779 = vmatprep.subr.mxu0 0.0
    %3780 = vmatpush2.xpose.msra.mxu0 0.0
    %3781 = vmatprep.subr.mxu0 0.0
    %3782 = vmatpush2.xpose.msra.mxu0 0.0
    %3783 = vmatprep.subr.mxu0 0.0
    %3784 = vmatpush2.xpose.msra.mxu0 0.0
    %3785 = vmatprep.subr.mxu0 0.0
    %3786 = vmatpush2.xpose.msra.mxu0 0.0
    %3787 = vmatprep.subr.mxu0 0.0
    %3788 = vmatpush2.xpose.msra.mxu0 0.0
    %3789 = vmatprep.subr.mxu0 0.0
    %3790 = vmatpush2.xpose.msra.mxu0 0.0
    %3791 = vmatprep.subr.mxu0 0.0
    %3792 = vmatpush2.xpose.msra.mxu0 0.0
    %3793 = vmatprep.subr.mxu0 0.0
    %3794 = vmatpush2.xpose.msra.mxu0 0.0
    %3795 = vmatprep.subr.mxu0 0.0
    %3796 = vmatpush2.xpose.msra.mxu0 0.0
    %3797 = vmatprep.subr.mxu0 0.0
    %3798 = vmatpush2.xpose.msra.mxu0 0.0
    %3799 = vmatprep.subr.mxu0 0.0
    %3800 = vmatpush2.xpose.msra.mxu0 0.0
    %3801 = vmatprep.subr.mxu0 0.0
    %3802 = vmatpush2.xpose.msra.mxu0 0.0
    %3803 = vmatprep.mubr.f32.mxu0 0.0
    %3804 = vmatmul.mubr.f32.gmra.mxu0 %v3735
    %v3805 = vpop.f32.mrf.mxu0
    %v3806 = vadd.f32 0.0, %v3805
    %v3807 = vpop.f32.mrf.mxu0
    %3808 = vdwg.mxu0
    %3809 = vrot.lane.b32.xlu0 %v275, 112
    %v3810 = vpop.permute.xlu0 %3809
    %3811 = vrot.lane.b32.xlu0 %v241, 48
    %v3812 = vpop.permute.xlu0 %3811
    %v3813 = vsel %vm282, %v3810, 0
    %v3815 = vsel %vm282, %v3812, 0
    %3817 = vmatprep.subr.mxu0 0.0
    %3818 = vmatpush1.xpose.msra.mxu0 0.0
    %3819 = vmatprep.subr.mxu0 0.0
    %3820 = vmatpush1.xpose.msra.mxu0 0.0
    %3821 = vmatprep.subr.mxu0 0.0
    %3822 = vmatpush1.xpose.msra.mxu0 0.0
    %3823 = vmatprep.subr.mxu0 0.0
    %3824 = vmatpush1.xpose.msra.mxu0 0.0
    %3825 = vmatprep.subr.mxu0 0.0
    %3826 = vmatpush1.xpose.msra.mxu0 0.0
    %3827 = vmatprep.subr.mxu0 0.0
    %3828 = vmatpush1.xpose.msra.mxu0 0.0
    %3829 = vmatprep.subr.mxu0 0.0
    %3830 = vmatpush1.xpose.msra.mxu0 0.0
    %3831 = vmatprep.subr.mxu0 0.0
    %3832 = vmatpush1.xpose.msra.mxu0 0.0
    %3833 = vmatprep.subr.mxu0 0.0
    %3834 = vmatpush1.xpose.msra.mxu0 0.0
    %3835 = vmatprep.subr.mxu0 0.0
    %3836 = vmatpush1.xpose.msra.mxu0 0.0
    %3837 = vmatprep.subr.mxu0 0.0
    %3838 = vmatpush1.xpose.msra.mxu0 0.0
    %3839 = vmatprep.subr.mxu0 0.0
    %3840 = vmatpush1.xpose.msra.mxu0 0.0
    %3841 = vmatprep.subr.mxu0 0.0
    %3842 = vmatpush1.xpose.msra.mxu0 0.0
    %3843 = vmatprep.subr.mxu0 0.0
    %3844 = vmatpush1.xpose.msra.mxu0 0.0
    %3845 = vmatprep.subr.mxu0 0.0
    %3846 = vmatpush1.xpose.msra.mxu0 0.0
    %3847 = vmatprep.subr.mxu0 0.0
    %3848 = vmatpush1.xpose.msra.mxu0 %v3815
    %3849 = vmatprep.subr.mxu0 0.0
    %3850 = vmatpush2.xpose.msra.mxu0 0.0
    %3851 = vmatprep.subr.mxu0 0.0
    %3852 = vmatpush2.xpose.msra.mxu0 0.0
    %3853 = vmatprep.subr.mxu0 0.0
    %3854 = vmatpush2.xpose.msra.mxu0 0.0
    %3855 = vmatprep.subr.mxu0 0.0
    %3856 = vmatpush2.xpose.msra.mxu0 0.0
    %3857 = vmatprep.subr.mxu0 0.0
    %3858 = vmatpush2.xpose.msra.mxu0 0.0
    %3859 = vmatprep.subr.mxu0 0.0
    %3860 = vmatpush2.xpose.msra.mxu0 0.0
    %3861 = vmatprep.subr.mxu0 0.0
    %3862 = vmatpush2.xpose.msra.mxu0 0.0
    %3863 = vmatprep.subr.mxu0 0.0
    %3864 = vmatpush2.xpose.msra.mxu0 0.0
    %3865 = vmatprep.subr.mxu0 0.0
    %3866 = vmatpush2.xpose.msra.mxu0 0.0
    %3867 = vmatprep.subr.mxu0 0.0
    %3868 = vmatpush2.xpose.msra.mxu0 0.0
    %3869 = vmatprep.subr.mxu0 0.0
    %3870 = vmatpush2.xpose.msra.mxu0 0.0
    %3871 = vmatprep.subr.mxu0 0.0
    %3872 = vmatpush2.xpose.msra.mxu0 0.0
    %3873 = vmatprep.subr.mxu0 0.0
    %3874 = vmatpush2.xpose.msra.mxu0 0.0
    %3875 = vmatprep.subr.mxu0 0.0
    %3876 = vmatpush2.xpose.msra.mxu0 0.0
    %3877 = vmatprep.subr.mxu0 0.0
    %3878 = vmatpush2.xpose.msra.mxu0 0.0
    %3879 = vmatprep.subr.mxu0 0.0
    %3880 = vmatpush2.xpose.msra.mxu0 0.0
    %3881 = vmatprep.mubr.f32.mxu0 0.0
    %3882 = vmatmul.mubr.f32.gmra.mxu0 %v3813
    %v3883 = vpop.f32.mrf.mxu0
    %v3884 = vadd.f32 0.0, %v3883
    %v3885 = vpop.f32.mrf.mxu0
    %3886 = vdwg.mxu0
    %3887 = vrot.lane.b32.xlu0 %v276, 112
    %v3888 = vpop.permute.xlu0 %3887
    %3889 = vrot.lane.b32.xlu0 %v247, 48
    %v3890 = vpop.permute.xlu0 %3889
    %v3891 = vsel %vm282, %v3888, 0
    %v3893 = vsel %vm282, %v3890, 0
    %3895 = vmatprep.subr.mxu0 0.0
    %3896 = vmatpush1.xpose.msra.mxu0 0.0
    %3897 = vmatprep.subr.mxu0 0.0
    %3898 = vmatpush1.xpose.msra.mxu0 0.0
    %3899 = vmatprep.subr.mxu0 0.0
    %3900 = vmatpush1.xpose.msra.mxu0 0.0
    %3901 = vmatprep.subr.mxu0 0.0
    %3902 = vmatpush1.xpose.msra.mxu0 0.0
    %3903 = vmatprep.subr.mxu0 0.0
    %3904 = vmatpush1.xpose.msra.mxu0 0.0
    %3905 = vmatprep.subr.mxu0 0.0
    %3906 = vmatpush1.xpose.msra.mxu0 0.0
    %3907 = vmatprep.subr.mxu0 0.0
    %3908 = vmatpush1.xpose.msra.mxu0 0.0
    %3909 = vmatprep.subr.mxu0 0.0
    %3910 = vmatpush1.xpose.msra.mxu0 0.0
    %3911 = vmatprep.subr.mxu0 0.0
    %3912 = vmatpush1.xpose.msra.mxu0 0.0
    %3913 = vmatprep.subr.mxu0 0.0
    %3914 = vmatpush1.xpose.msra.mxu0 0.0
    %3915 = vmatprep.subr.mxu0 0.0
    %3916 = vmatpush1.xpose.msra.mxu0 0.0
    %3917 = vmatprep.subr.mxu0 0.0
    %3918 = vmatpush1.xpose.msra.mxu0 0.0
    %3919 = vmatprep.subr.mxu0 0.0
    %3920 = vmatpush1.xpose.msra.mxu0 0.0
    %3921 = vmatprep.subr.mxu0 0.0
    %3922 = vmatpush1.xpose.msra.mxu0 0.0
    %3923 = vmatprep.subr.mxu0 0.0
    %3924 = vmatpush1.xpose.msra.mxu0 0.0
    %3925 = vmatprep.subr.mxu0 0.0
    %3926 = vmatpush1.xpose.msra.mxu0 %v3893
    %3927 = vmatprep.subr.mxu0 0.0
    %3928 = vmatpush2.xpose.msra.mxu0 0.0
    %3929 = vmatprep.subr.mxu0 0.0
    %3930 = vmatpush2.xpose.msra.mxu0 0.0
    %3931 = vmatprep.subr.mxu0 0.0
    %3932 = vmatpush2.xpose.msra.mxu0 0.0
    %3933 = vmatprep.subr.mxu0 0.0
    %3934 = vmatpush2.xpose.msra.mxu0 0.0
    %3935 = vmatprep.subr.mxu0 0.0
    %3936 = vmatpush2.xpose.msra.mxu0 0.0
    %3937 = vmatprep.subr.mxu0 0.0
    %3938 = vmatpush2.xpose.msra.mxu0 0.0
    %3939 = vmatprep.subr.mxu0 0.0
    %3940 = vmatpush2.xpose.msra.mxu0 0.0
    %3941 = vmatprep.subr.mxu0 0.0
    %3942 = vmatpush2.xpose.msra.mxu0 0.0
    %3943 = vmatprep.subr.mxu0 0.0
    %3944 = vmatpush2.xpose.msra.mxu0 0.0
    %3945 = vmatprep.subr.mxu0 0.0
    %3946 = vmatpush2.xpose.msra.mxu0 0.0
    %3947 = vmatprep.subr.mxu0 0.0
    %3948 = vmatpush2.xpose.msra.mxu0 0.0
    %3949 = vmatprep.subr.mxu0 0.0
    %3950 = vmatpush2.xpose.msra.mxu0 0.0
    %3951 = vmatprep.subr.mxu0 0.0
    %3952 = vmatpush2.xpose.msra.mxu0 0.0
    %3953 = vmatprep.subr.mxu0 0.0
    %3954 = vmatpush2.xpose.msra.mxu0 0.0
    %3955 = vmatprep.subr.mxu0 0.0
    %3956 = vmatpush2.xpose.msra.mxu0 0.0
    %3957 = vmatprep.subr.mxu0 0.0
    %3958 = vmatpush2.xpose.msra.mxu0 0.0
    %3959 = vmatprep.mubr.f32.mxu0 0.0
    %3960 = vmatmul.mubr.f32.gmra.mxu0 %v3891
    %v3961 = vpop.f32.mrf.mxu0
    %v3962 = vadd.f32 0.0, %v3961
    %v3963 = vpop.f32.mrf.mxu0
    %3964 = vdwg.mxu0
    %3965 = vrot.lane.b32.xlu0 %v277, 112
    %v3966 = vpop.permute.xlu0 %3965
    %3967 = vrot.lane.b32.xlu0 %v253, 48
    %v3968 = vpop.permute.xlu0 %3967
    %v3969 = vsel %vm282, %v3966, 0
    %v3971 = vsel %vm282, %v3968, 0
    %3973 = vmatprep.subr.mxu0 0.0
    %3974 = vmatpush1.xpose.msra.mxu0 0.0
    %3975 = vmatprep.subr.mxu0 0.0
    %3976 = vmatpush1.xpose.msra.mxu0 0.0
    %3977 = vmatprep.subr.mxu0 0.0
    %3978 = vmatpush1.xpose.msra.mxu0 0.0
    %3979 = vmatprep.subr.mxu0 0.0
    %3980 = vmatpush1.xpose.msra.mxu0 0.0
    %3981 = vmatprep.subr.mxu0 0.0
    %3982 = vmatpush1.xpose.msra.mxu0 0.0
    %3983 = vmatprep.subr.mxu0 0.0
    %3984 = vmatpush1.xpose.msra.mxu0 0.0
    %3985 = vmatprep.subr.mxu0 0.0
    %3986 = vmatpush1.xpose.msra.mxu0 0.0
    %3987 = vmatprep.subr.mxu0 0.0
    %3988 = vmatpush1.xpose.msra.mxu0 0.0
    %3989 = vmatprep.subr.mxu0 0.0
    %3990 = vmatpush1.xpose.msra.mxu0 0.0
    %3991 = vmatprep.subr.mxu0 0.0
    %3992 = vmatpush1.xpose.msra.mxu0 0.0
    %3993 = vmatprep.subr.mxu0 0.0
    %3994 = vmatpush1.xpose.msra.mxu0 0.0
    %3995 = vmatprep.subr.mxu0 0.0
    %3996 = vmatpush1.xpose.msra.mxu0 0.0
    %3997 = vmatprep.subr.mxu0 0.0
    %3998 = vmatpush1.xpose.msra.mxu0 0.0
    %3999 = vmatprep.subr.mxu0 0.0
    %4000 = vmatpush1.xpose.msra.mxu0 0.0
    %4001 = vmatprep.subr.mxu0 0.0
    %4002 = vmatpush1.xpose.msra.mxu0 0.0
    %4003 = vmatprep.subr.mxu0 0.0
    %4004 = vmatpush1.xpose.msra.mxu0 %v3971
    %4005 = vmatprep.subr.mxu0 0.0
    %4006 = vmatpush2.xpose.msra.mxu0 0.0
    %4007 = vmatprep.subr.mxu0 0.0
    %4008 = vmatpush2.xpose.msra.mxu0 0.0
    %4009 = vmatprep.subr.mxu0 0.0
    %4010 = vmatpush2.xpose.msra.mxu0 0.0
    %4011 = vmatprep.subr.mxu0 0.0
    %4012 = vmatpush2.xpose.msra.mxu0 0.0
    %4013 = vmatprep.subr.mxu0 0.0
    %4014 = vmatpush2.xpose.msra.mxu0 0.0
    %4015 = vmatprep.subr.mxu0 0.0
    %4016 = vmatpush2.xpose.msra.mxu0 0.0
    %4017 = vmatprep.subr.mxu0 0.0
    %4018 = vmatpush2.xpose.msra.mxu0 0.0
    %4019 = vmatprep.subr.mxu0 0.0
    %4020 = vmatpush2.xpose.msra.mxu0 0.0
    %4021 = vmatprep.subr.mxu0 0.0
    %4022 = vmatpush2.xpose.msra.mxu0 0.0
    %4023 = vmatprep.subr.mxu0 0.0
    %4024 = vmatpush2.xpose.msra.mxu0 0.0
    %4025 = vmatprep.subr.mxu0 0.0
    %4026 = vmatpush2.xpose.msra.mxu0 0.0
    %4027 = vmatprep.subr.mxu0 0.0
    %4028 = vmatpush2.xpose.msra.mxu0 0.0
    %4029 = vmatprep.subr.mxu0 0.0
    %4030 = vmatpush2.xpose.msra.mxu0 0.0
    %4031 = vmatprep.subr.mxu0 0.0
    %4032 = vmatpush2.xpose.msra.mxu0 0.0
    %4033 = vmatprep.subr.mxu0 0.0
    %4034 = vmatpush2.xpose.msra.mxu0 0.0
    %4035 = vmatprep.subr.mxu0 0.0
    %4036 = vmatpush2.xpose.msra.mxu0 0.0
    %4037 = vmatprep.mubr.f32.mxu0 0.0
    %4038 = vmatmul.mubr.f32.gmra.mxu0 %v3969
    %v4039 = vpop.f32.mrf.mxu0
    %v4040 = vadd.f32 0.0, %v4039
    %v4041 = vpop.f32.mrf.mxu0
    %4042 = vdwg.mxu0
    %4043 = vrot.lane.b32.xlu0 %v278, 112
    %v4044 = vpop.permute.xlu0 %4043
    %4045 = vrot.lane.b32.xlu0 %v259, 48
    %v4046 = vpop.permute.xlu0 %4045
    %v4047 = vsel %vm282, %v4044, 0
    %v4049 = vsel %vm282, %v4046, 0
    %4051 = vmatprep.subr.mxu0 0.0
    %4052 = vmatpush1.xpose.msra.mxu0 0.0
    %4053 = vmatprep.subr.mxu0 0.0
    %4054 = vmatpush1.xpose.msra.mxu0 0.0
    %4055 = vmatprep.subr.mxu0 0.0
    %4056 = vmatpush1.xpose.msra.mxu0 0.0
    %4057 = vmatprep.subr.mxu0 0.0
    %4058 = vmatpush1.xpose.msra.mxu0 0.0
    %4059 = vmatprep.subr.mxu0 0.0
    %4060 = vmatpush1.xpose.msra.mxu0 0.0
    %4061 = vmatprep.subr.mxu0 0.0
    %4062 = vmatpush1.xpose.msra.mxu0 0.0
    %4063 = vmatprep.subr.mxu0 0.0
    %4064 = vmatpush1.xpose.msra.mxu0 0.0
    %4065 = vmatprep.subr.mxu0 0.0
    %4066 = vmatpush1.xpose.msra.mxu0 0.0
    %4067 = vmatprep.subr.mxu0 0.0
    %4068 = vmatpush1.xpose.msra.mxu0 0.0
    %4069 = vmatprep.subr.mxu0 0.0
    %4070 = vmatpush1.xpose.msra.mxu0 0.0
    %4071 = vmatprep.subr.mxu0 0.0
    %4072 = vmatpush1.xpose.msra.mxu0 0.0
    %4073 = vmatprep.subr.mxu0 0.0
    %4074 = vmatpush1.xpose.msra.mxu0 0.0
    %4075 = vmatprep.subr.mxu0 0.0
    %4076 = vmatpush1.xpose.msra.mxu0 0.0
    %4077 = vmatprep.subr.mxu0 0.0
    %4078 = vmatpush1.xpose.msra.mxu0 0.0
    %4079 = vmatprep.subr.mxu0 0.0
    %4080 = vmatpush1.xpose.msra.mxu0 0.0
    %4081 = vmatprep.subr.mxu0 0.0
    %4082 = vmatpush1.xpose.msra.mxu0 %v4049
    %4083 = vmatprep.subr.mxu0 0.0
    %4084 = vmatpush2.xpose.msra.mxu0 0.0
    %4085 = vmatprep.subr.mxu0 0.0
    %4086 = vmatpush2.xpose.msra.mxu0 0.0
    %4087 = vmatprep.subr.mxu0 0.0
    %4088 = vmatpush2.xpose.msra.mxu0 0.0
    %4089 = vmatprep.subr.mxu0 0.0
    %4090 = vmatpush2.xpose.msra.mxu0 0.0
    %4091 = vmatprep.subr.mxu0 0.0
    %4092 = vmatpush2.xpose.msra.mxu0 0.0
    %4093 = vmatprep.subr.mxu0 0.0
    %4094 = vmatpush2.xpose.msra.mxu0 0.0
    %4095 = vmatprep.subr.mxu0 0.0
    %4096 = vmatpush2.xpose.msra.mxu0 0.0
    %4097 = vmatprep.subr.mxu0 0.0
    %4098 = vmatpush2.xpose.msra.mxu0 0.0
    %4099 = vmatprep.subr.mxu0 0.0
    %4100 = vmatpush2.xpose.msra.mxu0 0.0
    %4101 = vmatprep.subr.mxu0 0.0
    %4102 = vmatpush2.xpose.msra.mxu0 0.0
    %4103 = vmatprep.subr.mxu0 0.0
    %4104 = vmatpush2.xpose.msra.mxu0 0.0
    %4105 = vmatprep.subr.mxu0 0.0
    %4106 = vmatpush2.xpose.msra.mxu0 0.0
    %4107 = vmatprep.subr.mxu0 0.0
    %4108 = vmatpush2.xpose.msra.mxu0 0.0
    %4109 = vmatprep.subr.mxu0 0.0
    %4110 = vmatpush2.xpose.msra.mxu0 0.0
    %4111 = vmatprep.subr.mxu0 0.0
    %4112 = vmatpush2.xpose.msra.mxu0 0.0
    %4113 = vmatprep.subr.mxu0 0.0
    %4114 = vmatpush2.xpose.msra.mxu0 0.0
    %4115 = vmatprep.mubr.f32.mxu0 0.0
    %4116 = vmatmul.mubr.f32.gmra.mxu0 %v4047
    %v4117 = vpop.f32.mrf.mxu0
    %v4118 = vadd.f32 0.0, %v4117
    %v4119 = vpop.f32.mrf.mxu0
    %4120 = vdwg.mxu0
    %v4121 = vsel %vm1528, %v2948, -inf
    %4122 = vmax.xlane.f32.xlu0 %v4121
    %v4123 = vpop.xlane.xlu0 %4122
    %v4124 = vsel %vm1528, %v3026, -inf
    %4125 = vmax.xlane.f32.xlu0 %v4124
    %v4126 = vpop.xlane.xlu0 %4125
    %v4127 = vsel %vm1528, %v3104, -inf
    %4128 = vmax.xlane.f32.xlu0 %v4127
    %v4129 = vpop.xlane.xlu0 %4128
    %v4130 = vsel %vm1528, %v3182, -inf
    %4131 = vmax.xlane.f32.xlu0 %v4130
    %v4132 = vpop.xlane.xlu0 %4131
    %v4133 = vsel %vm1528, %v3260, -inf
    %4134 = vmax.xlane.f32.xlu0 %v4133
    %v4135 = vpop.xlane.xlu0 %4134
    %v4136 = vsel %vm1528, %v3338, -inf
    %4137 = vmax.xlane.f32.xlu0 %v4136
    %v4138 = vpop.xlane.xlu0 %4137
    %v4139 = vsel %vm1528, %v3416, -inf
    %4140 = vmax.xlane.f32.xlu0 %v4139
    %v4141 = vpop.xlane.xlu0 %4140
    %v4142 = vsel %vm1528, %v3494, -inf
    %4143 = vmax.xlane.f32.xlu0 %v4142
    %v4144 = vpop.xlane.xlu0 %4143
    %v4145 = vsel %vm1528, %v3572, -inf
    %4146 = vmax.xlane.f32.xlu0 %v4145
    %v4147 = vpop.xlane.xlu0 %4146
    %v4148 = vsel %vm1528, %v3650, -inf
    %4149 = vmax.xlane.f32.xlu0 %v4148
    %v4150 = vpop.xlane.xlu0 %4149
    %v4151 = vsel %vm1528, %v3728, -inf
    %4152 = vmax.xlane.f32.xlu0 %v4151
    %v4153 = vpop.xlane.xlu0 %4152
    %v4154 = vsel %vm1528, %v3806, -inf
    %4155 = vmax.xlane.f32.xlu0 %v4154
    %v4156 = vpop.xlane.xlu0 %4155
    %v4157 = vsel %vm1528, %v3884, -inf
    %4158 = vmax.xlane.f32.xlu0 %v4157
    %v4159 = vpop.xlane.xlu0 %4158
    %v4160 = vsel %vm1528, %v3962, -inf
    %4161 = vmax.xlane.f32.xlu0 %v4160
    %v4162 = vpop.xlane.xlu0 %4161
    %v4163 = vsel %vm1528, %v4040, -inf
    %4164 = vmax.xlane.f32.xlu0 %v4163
    %v4165 = vpop.xlane.xlu0 %4164
    %v4166 = vsel %vm1528, %v4118, -inf
    %4167 = vmax.xlane.f32.xlu0 %v4166
    %v4168 = vpop.xlane.xlu0 %4167
    %v4169 = vsub.f32 %v2948, %v4123
    %v4170 = vsub.f32 %v3026, %v4126
    %v4171 = vsub.f32 %v3104, %v4129
    %v4172 = vsub.f32 %v3182, %v4132
    %v4173 = vsub.f32 %v3260, %v4135
    %v4174 = vsub.f32 %v3338, %v4138
    %v4175 = vsub.f32 %v3416, %v4141
    %v4176 = vsub.f32 %v3494, %v4144
    %v4177 = vsub.f32 %v3572, %v4147
    %v4178 = vsub.f32 %v3650, %v4150
    %v4179 = vsub.f32 %v3728, %v4153
    %v4180 = vsub.f32 %v3806, %v4156
    %v4181 = vsub.f32 %v3884, %v4159
    %v4182 = vsub.f32 %v3962, %v4162
    %v4183 = vsub.f32 %v4040, %v4165
    %v4184 = vsub.f32 %v4118, %v4168
    %v4185 = vmul.f32 %v4169, 1.442695
    %v4186 = vpow.pop %v4185
    %v4187 = vmul.f32 %v4170, 1.442695
    %v4188 = vpow.pop %v4187
    %v4189 = vmul.f32 %v4171, 1.442695
    %v4190 = vpow.pop %v4189
    %v4191 = vmul.f32 %v4172, 1.442695
    %v4192 = vpow.pop %v4191
    %v4193 = vmul.f32 %v4173, 1.442695
    %v4194 = vpow.pop %v4193
    %v4195 = vmul.f32 %v4174, 1.442695
    %v4196 = vpow.pop %v4195
    %v4197 = vmul.f32 %v4175, 1.442695
    %v4198 = vpow.pop %v4197
    %v4199 = vmul.f32 %v4176, 1.442695
    %v4200 = vpow.pop %v4199
    %v4201 = vmul.f32 %v4177, 1.442695
    %v4202 = vpow.pop %v4201
    %v4203 = vmul.f32 %v4178, 1.442695
    %v4204 = vpow.pop %v4203
    %v4205 = vmul.f32 %v4179, 1.442695
    %v4206 = vpow.pop %v4205
    %v4207 = vmul.f32 %v4180, 1.442695
    %v4208 = vpow.pop %v4207
    %v4209 = vmul.f32 %v4181, 1.442695
    %v4210 = vpow.pop %v4209
    %v4211 = vmul.f32 %v4182, 1.442695
    %v4212 = vpow.pop %v4211
    %v4213 = vmul.f32 %v4183, 1.442695
    %v4214 = vpow.pop %v4213
    %v4215 = vmul.f32 %v4184, 1.442695
    %v4216 = vpow.pop %v4215
    %v4217 = vsel %vm1528, %v4186, 0.0
    %4218 = vadd.xlane.f32.xlu0 %v4217
    %v4219 = vpop.xlane.xlu0 %4218
    %v4220 = vsel %vm1528, %v4188, 0.0
    %4221 = vadd.xlane.f32.xlu0 %v4220
    %v4222 = vpop.xlane.xlu0 %4221
    %v4223 = vsel %vm1528, %v4190, 0.0
    %4224 = vadd.xlane.f32.xlu0 %v4223
    %v4225 = vpop.xlane.xlu0 %4224
    %v4226 = vsel %vm1528, %v4192, 0.0
    %4227 = vadd.xlane.f32.xlu0 %v4226
    %v4228 = vpop.xlane.xlu0 %4227
    %v4229 = vsel %vm1528, %v4194, 0.0
    %4230 = vadd.xlane.f32.xlu0 %v4229
    %v4231 = vpop.xlane.xlu0 %4230
    %v4232 = vsel %vm1528, %v4196, 0.0
    %4233 = vadd.xlane.f32.xlu0 %v4232
    %v4234 = vpop.xlane.xlu0 %4233
    %v4235 = vsel %vm1528, %v4198, 0.0
    %4236 = vadd.xlane.f32.xlu0 %v4235
    %v4237 = vpop.xlane.xlu0 %4236
    %v4238 = vsel %vm1528, %v4200, 0.0
    %4239 = vadd.xlane.f32.xlu0 %v4238
    %v4240 = vpop.xlane.xlu0 %4239
    %v4241 = vsel %vm1528, %v4202, 0.0
    %4242 = vadd.xlane.f32.xlu0 %v4241
    %v4243 = vpop.xlane.xlu0 %4242
    %v4244 = vsel %vm1528, %v4204, 0.0
    %4245 = vadd.xlane.f32.xlu0 %v4244
    %v4246 = vpop.xlane.xlu0 %4245
    %v4247 = vsel %vm1528, %v4206, 0.0
    %4248 = vadd.xlane.f32.xlu0 %v4247
    %v4249 = vpop.xlane.xlu0 %4248
    %v4250 = vsel %vm1528, %v4208, 0.0
    %4251 = vadd.xlane.f32.xlu0 %v4250
    %v4252 = vpop.xlane.xlu0 %4251
    %v4253 = vsel %vm1528, %v4210, 0.0
    %4254 = vadd.xlane.f32.xlu0 %v4253
    %v4255 = vpop.xlane.xlu0 %4254
    %v4256 = vsel %vm1528, %v4212, 0.0
    %4257 = vadd.xlane.f32.xlu0 %v4256
    %v4258 = vpop.xlane.xlu0 %4257
    %v4259 = vsel %vm1528, %v4214, 0.0
    %4260 = vadd.xlane.f32.xlu0 %v4259
    %v4261 = vpop.xlane.xlu0 %4260
    %v4262 = vsel %vm1528, %v4216, 0.0
    %4263 = vadd.xlane.f32.xlu0 %v4262
    %v4264 = vpop.xlane.xlu0 %4263
    %v4265 = vrcp.pop %v4219
    %v4266 = vmul.f32 %v4186, %v4265
    %v4267 = vrcp.pop %v4222
    %v4268 = vmul.f32 %v4188, %v4267
    %v4269 = vrcp.pop %v4225
    %v4270 = vmul.f32 %v4190, %v4269
    %v4271 = vrcp.pop %v4228
    %v4272 = vmul.f32 %v4192, %v4271
    %v4273 = vrcp.pop %v4231
    %v4274 = vmul.f32 %v4194, %v4273
    %v4275 = vrcp.pop %v4234
    %v4276 = vmul.f32 %v4196, %v4275
    %v4277 = vrcp.pop %v4237
    %v4278 = vmul.f32 %v4198, %v4277
    %v4279 = vrcp.pop %v4240
    %v4280 = vmul.f32 %v4200, %v4279
    %v4281 = vrcp.pop %v4243
    %v4282 = vmul.f32 %v4202, %v4281
    %v4283 = vrcp.pop %v4246
    %v4284 = vmul.f32 %v4204, %v4283
    %v4285 = vrcp.pop %v4249
    %v4286 = vmul.f32 %v4206, %v4285
    %v4287 = vrcp.pop %v4252
    %v4288 = vmul.f32 %v4208, %v4287
    %v4289 = vrcp.pop %v4255
    %v4290 = vmul.f32 %v4210, %v4289
    %v4291 = vrcp.pop %v4258
    %v4292 = vmul.f32 %v4212, %v4291
    %v4293 = vrcp.pop %v4261
    %v4294 = vmul.f32 %v4214, %v4293
    %v4295 = vrcp.pop %v4264
    %v4296 = vmul.f32 %v4216, %v4295
    %4298 = vrot.lane.b32.xlu0 %v171, 112
    %v4299 = vpop.permute.xlu0 %4298
    %v4302 = vsel %vm1528, %v4266, 0
    %4304 = vmatprep.subr.mxu0 0.0
    %4305 = vmatpush1.msra.mxu0 0.0
    %4306 = vmatprep.subr.mxu0 0.0
    %4307 = vmatpush1.msra.mxu0 0.0
    %4308 = vmatprep.subr.mxu0 0.0
    %4309 = vmatpush1.msra.mxu0 0.0
    %4310 = vmatprep.subr.mxu0 0.0
    %4311 = vmatpush1.msra.mxu0 0.0
    %4312 = vmatprep.subr.mxu0 0.0
    %4313 = vmatpush1.msra.mxu0 0.0
    %4314 = vmatprep.subr.mxu0 0.0
    %4315 = vmatpush1.msra.mxu0 0.0
    %4316 = vmatprep.subr.mxu0 0.0
    %4317 = vmatpush1.msra.mxu0 0.0
    %4318 = vmatprep.subr.mxu0 0.0
    %4319 = vmatpush1.msra.mxu0 0.0
    %4320 = vmatprep.subr.mxu0 0.0
    %4321 = vmatpush1.msra.mxu0 0.0
    %4322 = vmatprep.subr.mxu0 0.0
    %4323 = vmatpush1.msra.mxu0 0.0
    %4324 = vmatprep.subr.mxu0 0.0
    %4325 = vmatpush1.msra.mxu0 0.0
    %4326 = vmatprep.subr.mxu0 0.0
    %4327 = vmatpush1.msra.mxu0 0.0
    %4328 = vmatprep.subr.mxu0 0.0
    %4329 = vmatpush1.msra.mxu0 0.0
    %4330 = vmatprep.subr.mxu0 0.0
    %4331 = vmatpush1.msra.mxu0 0.0
    %4332 = vmatprep.subr.mxu0 0.0
    %4333 = vmatpush1.msra.mxu0 0.0
    %4334 = vmatprep.subr.mxu0 0.0
    %4335 = vmatpush1.msra.mxu0 %v4299
    %4336 = vmatprep.subr.mxu0 0.0
    %4337 = vmatpush2.msra.mxu0 0.0
    %4338 = vmatprep.subr.mxu0 0.0
    %4339 = vmatpush2.msra.mxu0 0.0
    %4340 = vmatprep.subr.mxu0 0.0
    %4341 = vmatpush2.msra.mxu0 0.0
    %4342 = vmatprep.subr.mxu0 0.0
    %4343 = vmatpush2.msra.mxu0 0.0
    %4344 = vmatprep.subr.mxu0 0.0
    %4345 = vmatpush2.msra.mxu0 0.0
    %4346 = vmatprep.subr.mxu0 0.0
    %4347 = vmatpush2.msra.mxu0 0.0
    %4348 = vmatprep.subr.mxu0 0.0
    %4349 = vmatpush2.msra.mxu0 0.0
    %4350 = vmatprep.subr.mxu0 0.0
    %4351 = vmatpush2.msra.mxu0 0.0
    %4352 = vmatprep.subr.mxu0 0.0
    %4353 = vmatpush2.msra.mxu0 0.0
    %4354 = vmatprep.subr.mxu0 0.0
    %4355 = vmatpush2.msra.mxu0 0.0
    %4356 = vmatprep.subr.mxu0 0.0
    %4357 = vmatpush2.msra.mxu0 0.0
    %4358 = vmatprep.subr.mxu0 0.0
    %4359 = vmatpush2.msra.mxu0 0.0
    %4360 = vmatprep.subr.mxu0 0.0
    %4361 = vmatpush2.msra.mxu0 0.0
    %4362 = vmatprep.subr.mxu0 0.0
    %4363 = vmatpush2.msra.mxu0 0.0
    %4364 = vmatprep.subr.mxu0 0.0
    %4365 = vmatpush2.msra.mxu0 0.0
    %4366 = vmatprep.subr.mxu0 0.0
    %4367 = vmatpush2.msra.mxu0 0.0
    %4368 = vmatprep.mubr.f32.mxu0 0.0
    %4369 = vmatmul.mubr.f32.gmra.mxu0 %v4302
    %v4370 = vpop.f32.mrf.mxu0
    %v4371 = vadd.f32 0.0, %v4370
    %v4372 = vpop.f32.mrf.mxu0
    %4373 = vdwg.mxu0
    %4375 = vrot.lane.b32.xlu0 %v177, 112
    %v4376 = vpop.permute.xlu0 %4375
    %v4379 = vsel %vm1528, %v4268, 0
    %4381 = vmatprep.subr.mxu0 0.0
    %4382 = vmatpush1.msra.mxu0 0.0
    %4383 = vmatprep.subr.mxu0 0.0
    %4384 = vmatpush1.msra.mxu0 0.0
    %4385 = vmatprep.subr.mxu0 0.0
    %4386 = vmatpush1.msra.mxu0 0.0
    %4387 = vmatprep.subr.mxu0 0.0
    %4388 = vmatpush1.msra.mxu0 0.0
    %4389 = vmatprep.subr.mxu0 0.0
    %4390 = vmatpush1.msra.mxu0 0.0
    %4391 = vmatprep.subr.mxu0 0.0
    %4392 = vmatpush1.msra.mxu0 0.0
    %4393 = vmatprep.subr.mxu0 0.0
    %4394 = vmatpush1.msra.mxu0 0.0
    %4395 = vmatprep.subr.mxu0 0.0
    %4396 = vmatpush1.msra.mxu0 0.0
    %4397 = vmatprep.subr.mxu0 0.0
    %4398 = vmatpush1.msra.mxu0 0.0
    %4399 = vmatprep.subr.mxu0 0.0
    %4400 = vmatpush1.msra.mxu0 0.0
    %4401 = vmatprep.subr.mxu0 0.0
    %4402 = vmatpush1.msra.mxu0 0.0
    %4403 = vmatprep.subr.mxu0 0.0
    %4404 = vmatpush1.msra.mxu0 0.0
    %4405 = vmatprep.subr.mxu0 0.0
    %4406 = vmatpush1.msra.mxu0 0.0
    %4407 = vmatprep.subr.mxu0 0.0
    %4408 = vmatpush1.msra.mxu0 0.0
    %4409 = vmatprep.subr.mxu0 0.0
    %4410 = vmatpush1.msra.mxu0 0.0
    %4411 = vmatprep.subr.mxu0 0.0
    %4412 = vmatpush1.msra.mxu0 %v4376
    %4413 = vmatprep.subr.mxu0 0.0
    %4414 = vmatpush2.msra.mxu0 0.0
    %4415 = vmatprep.subr.mxu0 0.0
    %4416 = vmatpush2.msra.mxu0 0.0
    %4417 = vmatprep.subr.mxu0 0.0
    %4418 = vmatpush2.msra.mxu0 0.0
    %4419 = vmatprep.subr.mxu0 0.0
    %4420 = vmatpush2.msra.mxu0 0.0
    %4421 = vmatprep.subr.mxu0 0.0
    %4422 = vmatpush2.msra.mxu0 0.0
    %4423 = vmatprep.subr.mxu0 0.0
    %4424 = vmatpush2.msra.mxu0 0.0
    %4425 = vmatprep.subr.mxu0 0.0
    %4426 = vmatpush2.msra.mxu0 0.0
    %4427 = vmatprep.subr.mxu0 0.0
    %4428 = vmatpush2.msra.mxu0 0.0
    %4429 = vmatprep.subr.mxu0 0.0
    %4430 = vmatpush2.msra.mxu0 0.0
    %4431 = vmatprep.subr.mxu0 0.0
    %4432 = vmatpush2.msra.mxu0 0.0
    %4433 = vmatprep.subr.mxu0 0.0
    %4434 = vmatpush2.msra.mxu0 0.0
    %4435 = vmatprep.subr.mxu0 0.0
    %4436 = vmatpush2.msra.mxu0 0.0
    %4437 = vmatprep.subr.mxu0 0.0
    %4438 = vmatpush2.msra.mxu0 0.0
    %4439 = vmatprep.subr.mxu0 0.0
    %4440 = vmatpush2.msra.mxu0 0.0
    %4441 = vmatprep.subr.mxu0 0.0
    %4442 = vmatpush2.msra.mxu0 0.0
    %4443 = vmatprep.subr.mxu0 0.0
    %4444 = vmatpush2.msra.mxu0 0.0
    %4445 = vmatprep.mubr.f32.mxu0 0.0
    %4446 = vmatmul.mubr.f32.gmra.mxu0 %v4379
    %v4447 = vpop.f32.mrf.mxu0
    %v4448 = vadd.f32 0.0, %v4447
    %v4449 = vpop.f32.mrf.mxu0
    %4450 = vdwg.mxu0
    %4452 = vrot.lane.b32.xlu0 %v183, 112
    %v4453 = vpop.permute.xlu0 %4452
    %v4456 = vsel %vm1528, %v4270, 0
    %4458 = vmatprep.subr.mxu0 0.0
    %4459 = vmatpush1.msra.mxu0 0.0
    %4460 = vmatprep.subr.mxu0 0.0
    %4461 = vmatpush1.msra.mxu0 0.0
    %4462 = vmatprep.subr.mxu0 0.0
    %4463 = vmatpush1.msra.mxu0 0.0
    %4464 = vmatprep.subr.mxu0 0.0
    %4465 = vmatpush1.msra.mxu0 0.0
    %4466 = vmatprep.subr.mxu0 0.0
    %4467 = vmatpush1.msra.mxu0 0.0
    %4468 = vmatprep.subr.mxu0 0.0
    %4469 = vmatpush1.msra.mxu0 0.0
    %4470 = vmatprep.subr.mxu0 0.0
    %4471 = vmatpush1.msra.mxu0 0.0
    %4472 = vmatprep.subr.mxu0 0.0
    %4473 = vmatpush1.msra.mxu0 0.0
    %4474 = vmatprep.subr.mxu0 0.0
    %4475 = vmatpush1.msra.mxu0 0.0
    %4476 = vmatprep.subr.mxu0 0.0
    %4477 = vmatpush1.msra.mxu0 0.0
    %4478 = vmatprep.subr.mxu0 0.0
    %4479 = vmatpush1.msra.mxu0 0.0
    %4480 = vmatprep.subr.mxu0 0.0
    %4481 = vmatpush1.msra.mxu0 0.0
    %4482 = vmatprep.subr.mxu0 0.0
    %4483 = vmatpush1.msra.mxu0 0.0
    %4484 = vmatprep.subr.mxu0 0.0
    %4485 = vmatpush1.msra.mxu0 0.0
    %4486 = vmatprep.subr.mxu0 0.0
    %4487 = vmatpush1.msra.mxu0 0.0
    %4488 = vmatprep.subr.mxu0 0.0
    %4489 = vmatpush1.msra.mxu0 %v4453
    %4490 = vmatprep.subr.mxu0 0.0
    %4491 = vmatpush2.msra.mxu0 0.0
    %4492 = vmatprep.subr.mxu0 0.0
    %4493 = vmatpush2.msra.mxu0 0.0
    %4494 = vmatprep.subr.mxu0 0.0
    %4495 = vmatpush2.msra.mxu0 0.0
    %4496 = vmatprep.subr.mxu0 0.0
    %4497 = vmatpush2.msra.mxu0 0.0
    %4498 = vmatprep.subr.mxu0 0.0
    %4499 = vmatpush2.msra.mxu0 0.0
    %4500 = vmatprep.subr.mxu0 0.0
    %4501 = vmatpush2.msra.mxu0 0.0
    %4502 = vmatprep.subr.mxu0 0.0
    %4503 = vmatpush2.msra.mxu0 0.0
    %4504 = vmatprep.subr.mxu0 0.0
    %4505 = vmatpush2.msra.mxu0 0.0
    %4506 = vmatprep.subr.mxu0 0.0
    %4507 = vmatpush2.msra.mxu0 0.0
    %4508 = vmatprep.subr.mxu0 0.0
    %4509 = vmatpush2.msra.mxu0 0.0
    %4510 = vmatprep.subr.mxu0 0.0
    %4511 = vmatpush2.msra.mxu0 0.0
    %4512 = vmatprep.subr.mxu0 0.0
    %4513 = vmatpush2.msra.mxu0 0.0
    %4514 = vmatprep.subr.mxu0 0.0
    %4515 = vmatpush2.msra.mxu0 0.0
    %4516 = vmatprep.subr.mxu0 0.0
    %4517 = vmatpush2.msra.mxu0 0.0
    %4518 = vmatprep.subr.mxu0 0.0
    %4519 = vmatpush2.msra.mxu0 0.0
    %4520 = vmatprep.subr.mxu0 0.0
    %4521 = vmatpush2.msra.mxu0 0.0
    %4522 = vmatprep.mubr.f32.mxu0 0.0
    %4523 = vmatmul.mubr.f32.gmra.mxu0 %v4456
    %v4524 = vpop.f32.mrf.mxu0
    %v4525 = vadd.f32 0.0, %v4524
    %v4526 = vpop.f32.mrf.mxu0
    %4527 = vdwg.mxu0
    %4529 = vrot.lane.b32.xlu0 %v189, 112
    %v4530 = vpop.permute.xlu0 %4529
    %v4533 = vsel %vm1528, %v4272, 0
    %4535 = vmatprep.subr.mxu0 0.0
    %4536 = vmatpush1.msra.mxu0 0.0
    %4537 = vmatprep.subr.mxu0 0.0
    %4538 = vmatpush1.msra.mxu0 0.0
    %4539 = vmatprep.subr.mxu0 0.0
    %4540 = vmatpush1.msra.mxu0 0.0
    %4541 = vmatprep.subr.mxu0 0.0
    %4542 = vmatpush1.msra.mxu0 0.0
    %4543 = vmatprep.subr.mxu0 0.0
    %4544 = vmatpush1.msra.mxu0 0.0
    %4545 = vmatprep.subr.mxu0 0.0
    %4546 = vmatpush1.msra.mxu0 0.0
    %4547 = vmatprep.subr.mxu0 0.0
    %4548 = vmatpush1.msra.mxu0 0.0
    %4549 = vmatprep.subr.mxu0 0.0
    %4550 = vmatpush1.msra.mxu0 0.0
    %4551 = vmatprep.subr.mxu0 0.0
    %4552 = vmatpush1.msra.mxu0 0.0
    %4553 = vmatprep.subr.mxu0 0.0
    %4554 = vmatpush1.msra.mxu0 0.0
    %4555 = vmatprep.subr.mxu0 0.0
    %4556 = vmatpush1.msra.mxu0 0.0
    %4557 = vmatprep.subr.mxu0 0.0
    %4558 = vmatpush1.msra.mxu0 0.0
    %4559 = vmatprep.subr.mxu0 0.0
    %4560 = vmatpush1.msra.mxu0 0.0
    %4561 = vmatprep.subr.mxu0 0.0
    %4562 = vmatpush1.msra.mxu0 0.0
    %4563 = vmatprep.subr.mxu0 0.0
    %4564 = vmatpush1.msra.mxu0 0.0
    %4565 = vmatprep.subr.mxu0 0.0
    %4566 = vmatpush1.msra.mxu0 %v4530
    %4567 = vmatprep.subr.mxu0 0.0
    %4568 = vmatpush2.msra.mxu0 0.0
    %4569 = vmatprep.subr.mxu0 0.0
    %4570 = vmatpush2.msra.mxu0 0.0
    %4571 = vmatprep.subr.mxu0 0.0
    %4572 = vmatpush2.msra.mxu0 0.0
    %4573 = vmatprep.subr.mxu0 0.0
    %4574 = vmatpush2.msra.mxu0 0.0
    %4575 = vmatprep.subr.mxu0 0.0
    %4576 = vmatpush2.msra.mxu0 0.0
    %4577 = vmatprep.subr.mxu0 0.0
    %4578 = vmatpush2.msra.mxu0 0.0
    %4579 = vmatprep.subr.mxu0 0.0
    %4580 = vmatpush2.msra.mxu0 0.0
    %4581 = vmatprep.subr.mxu0 0.0
    %4582 = vmatpush2.msra.mxu0 0.0
    %4583 = vmatprep.subr.mxu0 0.0
    %4584 = vmatpush2.msra.mxu0 0.0
    %4585 = vmatprep.subr.mxu0 0.0
    %4586 = vmatpush2.msra.mxu0 0.0
    %4587 = vmatprep.subr.mxu0 0.0
    %4588 = vmatpush2.msra.mxu0 0.0
    %4589 = vmatprep.subr.mxu0 0.0
    %4590 = vmatpush2.msra.mxu0 0.0
    %4591 = vmatprep.subr.mxu0 0.0
    %4592 = vmatpush2.msra.mxu0 0.0
    %4593 = vmatprep.subr.mxu0 0.0
    %4594 = vmatpush2.msra.mxu0 0.0
    %4595 = vmatprep.subr.mxu0 0.0
    %4596 = vmatpush2.msra.mxu0 0.0
    %4597 = vmatprep.subr.mxu0 0.0
    %4598 = vmatpush2.msra.mxu0 0.0
    %4599 = vmatprep.mubr.f32.mxu0 0.0
    %4600 = vmatmul.mubr.f32.gmra.mxu0 %v4533
    %v4601 = vpop.f32.mrf.mxu0
    %v4602 = vadd.f32 0.0, %v4601
    %v4603 = vpop.f32.mrf.mxu0
    %4604 = vdwg.mxu0
    %4606 = vrot.lane.b32.xlu0 %v195, 112
    %v4607 = vpop.permute.xlu0 %4606
    %v4610 = vsel %vm1528, %v4274, 0
    %4612 = vmatprep.subr.mxu0 0.0
    %4613 = vmatpush1.msra.mxu0 0.0
    %4614 = vmatprep.subr.mxu0 0.0
    %4615 = vmatpush1.msra.mxu0 0.0
    %4616 = vmatprep.subr.mxu0 0.0
    %4617 = vmatpush1.msra.mxu0 0.0
    %4618 = vmatprep.subr.mxu0 0.0
    %4619 = vmatpush1.msra.mxu0 0.0
    %4620 = vmatprep.subr.mxu0 0.0
    %4621 = vmatpush1.msra.mxu0 0.0
    %4622 = vmatprep.subr.mxu0 0.0
    %4623 = vmatpush1.msra.mxu0 0.0
    %4624 = vmatprep.subr.mxu0 0.0
    %4625 = vmatpush1.msra.mxu0 0.0
    %4626 = vmatprep.subr.mxu0 0.0
    %4627 = vmatpush1.msra.mxu0 0.0
    %4628 = vmatprep.subr.mxu0 0.0
    %4629 = vmatpush1.msra.mxu0 0.0
    %4630 = vmatprep.subr.mxu0 0.0
    %4631 = vmatpush1.msra.mxu0 0.0
    %4632 = vmatprep.subr.mxu0 0.0
    %4633 = vmatpush1.msra.mxu0 0.0
    %4634 = vmatprep.subr.mxu0 0.0
    %4635 = vmatpush1.msra.mxu0 0.0
    %4636 = vmatprep.subr.mxu0 0.0
    %4637 = vmatpush1.msra.mxu0 0.0
    %4638 = vmatprep.subr.mxu0 0.0
    %4639 = vmatpush1.msra.mxu0 0.0
    %4640 = vmatprep.subr.mxu0 0.0
    %4641 = vmatpush1.msra.mxu0 0.0
    %4642 = vmatprep.subr.mxu0 0.0
    %4643 = vmatpush1.msra.mxu0 %v4607
    %4644 = vmatprep.subr.mxu0 0.0
    %4645 = vmatpush2.msra.mxu0 0.0
    %4646 = vmatprep.subr.mxu0 0.0
    %4647 = vmatpush2.msra.mxu0 0.0
    %4648 = vmatprep.subr.mxu0 0.0
    %4649 = vmatpush2.msra.mxu0 0.0
    %4650 = vmatprep.subr.mxu0 0.0
    %4651 = vmatpush2.msra.mxu0 0.0
    %4652 = vmatprep.subr.mxu0 0.0
    %4653 = vmatpush2.msra.mxu0 0.0
    %4654 = vmatprep.subr.mxu0 0.0
    %4655 = vmatpush2.msra.mxu0 0.0
    %4656 = vmatprep.subr.mxu0 0.0
    %4657 = vmatpush2.msra.mxu0 0.0
    %4658 = vmatprep.subr.mxu0 0.0
    %4659 = vmatpush2.msra.mxu0 0.0
    %4660 = vmatprep.subr.mxu0 0.0
    %4661 = vmatpush2.msra.mxu0 0.0
    %4662 = vmatprep.subr.mxu0 0.0
    %4663 = vmatpush2.msra.mxu0 0.0
    %4664 = vmatprep.subr.mxu0 0.0
    %4665 = vmatpush2.msra.mxu0 0.0
    %4666 = vmatprep.subr.mxu0 0.0
    %4667 = vmatpush2.msra.mxu0 0.0
    %4668 = vmatprep.subr.mxu0 0.0
    %4669 = vmatpush2.msra.mxu0 0.0
    %4670 = vmatprep.subr.mxu0 0.0
    %4671 = vmatpush2.msra.mxu0 0.0
    %4672 = vmatprep.subr.mxu0 0.0
    %4673 = vmatpush2.msra.mxu0 0.0
    %4674 = vmatprep.subr.mxu0 0.0
    %4675 = vmatpush2.msra.mxu0 0.0
    %4676 = vmatprep.mubr.f32.mxu0 0.0
    %4677 = vmatmul.mubr.f32.gmra.mxu0 %v4610
    %v4678 = vpop.f32.mrf.mxu0
    %v4679 = vadd.f32 0.0, %v4678
    %v4680 = vpop.f32.mrf.mxu0
    %4681 = vdwg.mxu0
    %4683 = vrot.lane.b32.xlu0 %v201, 112
    %v4684 = vpop.permute.xlu0 %4683
    %v4687 = vsel %vm1528, %v4276, 0
    %4689 = vmatprep.subr.mxu0 0.0
    %4690 = vmatpush1.msra.mxu0 0.0
    %4691 = vmatprep.subr.mxu0 0.0
    %4692 = vmatpush1.msra.mxu0 0.0
    %4693 = vmatprep.subr.mxu0 0.0
    %4694 = vmatpush1.msra.mxu0 0.0
    %4695 = vmatprep.subr.mxu0 0.0
    %4696 = vmatpush1.msra.mxu0 0.0
    %4697 = vmatprep.subr.mxu0 0.0
    %4698 = vmatpush1.msra.mxu0 0.0
    %4699 = vmatprep.subr.mxu0 0.0
    %4700 = vmatpush1.msra.mxu0 0.0
    %4701 = vmatprep.subr.mxu0 0.0
    %4702 = vmatpush1.msra.mxu0 0.0
    %4703 = vmatprep.subr.mxu0 0.0
    %4704 = vmatpush1.msra.mxu0 0.0
    %4705 = vmatprep.subr.mxu0 0.0
    %4706 = vmatpush1.msra.mxu0 0.0
    %4707 = vmatprep.subr.mxu0 0.0
    %4708 = vmatpush1.msra.mxu0 0.0
    %4709 = vmatprep.subr.mxu0 0.0
    %4710 = vmatpush1.msra.mxu0 0.0
    %4711 = vmatprep.subr.mxu0 0.0
    %4712 = vmatpush1.msra.mxu0 0.0
    %4713 = vmatprep.subr.mxu0 0.0
    %4714 = vmatpush1.msra.mxu0 0.0
    %4715 = vmatprep.subr.mxu0 0.0
    %4716 = vmatpush1.msra.mxu0 0.0
    %4717 = vmatprep.subr.mxu0 0.0
    %4718 = vmatpush1.msra.mxu0 0.0
    %4719 = vmatprep.subr.mxu0 0.0
    %4720 = vmatpush1.msra.mxu0 %v4684
    %4721 = vmatprep.subr.mxu0 0.0
    %4722 = vmatpush2.msra.mxu0 0.0
    %4723 = vmatprep.subr.mxu0 0.0
    %4724 = vmatpush2.msra.mxu0 0.0
    %4725 = vmatprep.subr.mxu0 0.0
    %4726 = vmatpush2.msra.mxu0 0.0
    %4727 = vmatprep.subr.mxu0 0.0
    %4728 = vmatpush2.msra.mxu0 0.0
    %4729 = vmatprep.subr.mxu0 0.0
    %4730 = vmatpush2.msra.mxu0 0.0
    %4731 = vmatprep.subr.mxu0 0.0
    %4732 = vmatpush2.msra.mxu0 0.0
    %4733 = vmatprep.subr.mxu0 0.0
    %4734 = vmatpush2.msra.mxu0 0.0
    %4735 = vmatprep.subr.mxu0 0.0
    %4736 = vmatpush2.msra.mxu0 0.0
    %4737 = vmatprep.subr.mxu0 0.0
    %4738 = vmatpush2.msra.mxu0 0.0
    %4739 = vmatprep.subr.mxu0 0.0
    %4740 = vmatpush2.msra.mxu0 0.0
    %4741 = vmatprep.subr.mxu0 0.0
    %4742 = vmatpush2.msra.mxu0 0.0
    %4743 = vmatprep.subr.mxu0 0.0
    %4744 = vmatpush2.msra.mxu0 0.0
    %4745 = vmatprep.subr.mxu0 0.0
    %4746 = vmatpush2.msra.mxu0 0.0
    %4747 = vmatprep.subr.mxu0 0.0
    %4748 = vmatpush2.msra.mxu0 0.0
    %4749 = vmatprep.subr.mxu0 0.0
    %4750 = vmatpush2.msra.mxu0 0.0
    %4751 = vmatprep.subr.mxu0 0.0
    %4752 = vmatpush2.msra.mxu0 0.0
    %4753 = vmatprep.mubr.f32.mxu0 0.0
    %4754 = vmatmul.mubr.f32.gmra.mxu0 %v4687
    %v4755 = vpop.f32.mrf.mxu0
    %v4756 = vadd.f32 0.0, %v4755
    %v4757 = vpop.f32.mrf.mxu0
    %4758 = vdwg.mxu0
    %4760 = vrot.lane.b32.xlu0 %v207, 112
    %v4761 = vpop.permute.xlu0 %4760
    %v4764 = vsel %vm1528, %v4278, 0
    %4766 = vmatprep.subr.mxu0 0.0
    %4767 = vmatpush1.msra.mxu0 0.0
    %4768 = vmatprep.subr.mxu0 0.0
    %4769 = vmatpush1.msra.mxu0 0.0
    %4770 = vmatprep.subr.mxu0 0.0
    %4771 = vmatpush1.msra.mxu0 0.0
    %4772 = vmatprep.subr.mxu0 0.0
    %4773 = vmatpush1.msra.mxu0 0.0
    %4774 = vmatprep.subr.mxu0 0.0
    %4775 = vmatpush1.msra.mxu0 0.0
    %4776 = vmatprep.subr.mxu0 0.0
    %4777 = vmatpush1.msra.mxu0 0.0
    %4778 = vmatprep.subr.mxu0 0.0
    %4779 = vmatpush1.msra.mxu0 0.0
    %4780 = vmatprep.subr.mxu0 0.0
    %4781 = vmatpush1.msra.mxu0 0.0
    %4782 = vmatprep.subr.mxu0 0.0
    %4783 = vmatpush1.msra.mxu0 0.0
    %4784 = vmatprep.subr.mxu0 0.0
    %4785 = vmatpush1.msra.mxu0 0.0
    %4786 = vmatprep.subr.mxu0 0.0
    %4787 = vmatpush1.msra.mxu0 0.0
    %4788 = vmatprep.subr.mxu0 0.0
    %4789 = vmatpush1.msra.mxu0 0.0
    %4790 = vmatprep.subr.mxu0 0.0
    %4791 = vmatpush1.msra.mxu0 0.0
    %4792 = vmatprep.subr.mxu0 0.0
    %4793 = vmatpush1.msra.mxu0 0.0
    %4794 = vmatprep.subr.mxu0 0.0
    %4795 = vmatpush1.msra.mxu0 0.0
    %4796 = vmatprep.subr.mxu0 0.0
    %4797 = vmatpush1.msra.mxu0 %v4761
    %4798 = vmatprep.subr.mxu0 0.0
    %4799 = vmatpush2.msra.mxu0 0.0
    %4800 = vmatprep.subr.mxu0 0.0
    %4801 = vmatpush2.msra.mxu0 0.0
    %4802 = vmatprep.subr.mxu0 0.0
    %4803 = vmatpush2.msra.mxu0 0.0
    %4804 = vmatprep.subr.mxu0 0.0
    %4805 = vmatpush2.msra.mxu0 0.0
    %4806 = vmatprep.subr.mxu0 0.0
    %4807 = vmatpush2.msra.mxu0 0.0
    %4808 = vmatprep.subr.mxu0 0.0
    %4809 = vmatpush2.msra.mxu0 0.0
    %4810 = vmatprep.subr.mxu0 0.0
    %4811 = vmatpush2.msra.mxu0 0.0
    %4812 = vmatprep.subr.mxu0 0.0
    %4813 = vmatpush2.msra.mxu0 0.0
    %4814 = vmatprep.subr.mxu0 0.0
    %4815 = vmatpush2.msra.mxu0 0.0
    %4816 = vmatprep.subr.mxu0 0.0
    %4817 = vmatpush2.msra.mxu0 0.0
    %4818 = vmatprep.subr.mxu0 0.0
    %4819 = vmatpush2.msra.mxu0 0.0
    %4820 = vmatprep.subr.mxu0 0.0
    %4821 = vmatpush2.msra.mxu0 0.0
    %4822 = vmatprep.subr.mxu0 0.0
    %4823 = vmatpush2.msra.mxu0 0.0
    %4824 = vmatprep.subr.mxu0 0.0
    %4825 = vmatpush2.msra.mxu0 0.0
    %4826 = vmatprep.subr.mxu0 0.0
    %4827 = vmatpush2.msra.mxu0 0.0
    %4828 = vmatprep.subr.mxu0 0.0
    %4829 = vmatpush2.msra.mxu0 0.0
    %4830 = vmatprep.mubr.f32.mxu0 0.0
    %4831 = vmatmul.mubr.f32.gmra.mxu0 %v4764
    %v4832 = vpop.f32.mrf.mxu0
    %v4833 = vadd.f32 0.0, %v4832
    %v4834 = vpop.f32.mrf.mxu0
    %4835 = vdwg.mxu0
    %4837 = vrot.lane.b32.xlu0 %v213, 112
    %v4838 = vpop.permute.xlu0 %4837
    %v4841 = vsel %vm1528, %v4280, 0
    %4843 = vmatprep.subr.mxu0 0.0
    %4844 = vmatpush1.msra.mxu0 0.0
    %4845 = vmatprep.subr.mxu0 0.0
    %4846 = vmatpush1.msra.mxu0 0.0
    %4847 = vmatprep.subr.mxu0 0.0
    %4848 = vmatpush1.msra.mxu0 0.0
    %4849 = vmatprep.subr.mxu0 0.0
    %4850 = vmatpush1.msra.mxu0 0.0
    %4851 = vmatprep.subr.mxu0 0.0
    %4852 = vmatpush1.msra.mxu0 0.0
    %4853 = vmatprep.subr.mxu0 0.0
    %4854 = vmatpush1.msra.mxu0 0.0
    %4855 = vmatprep.subr.mxu0 0.0
    %4856 = vmatpush1.msra.mxu0 0.0
    %4857 = vmatprep.subr.mxu0 0.0
    %4858 = vmatpush1.msra.mxu0 0.0
    %4859 = vmatprep.subr.mxu0 0.0
    %4860 = vmatpush1.msra.mxu0 0.0
    %4861 = vmatprep.subr.mxu0 0.0
    %4862 = vmatpush1.msra.mxu0 0.0
    %4863 = vmatprep.subr.mxu0 0.0
    %4864 = vmatpush1.msra.mxu0 0.0
    %4865 = vmatprep.subr.mxu0 0.0
    %4866 = vmatpush1.msra.mxu0 0.0
    %4867 = vmatprep.subr.mxu0 0.0
    %4868 = vmatpush1.msra.mxu0 0.0
    %4869 = vmatprep.subr.mxu0 0.0
    %4870 = vmatpush1.msra.mxu0 0.0
    %4871 = vmatprep.subr.mxu0 0.0
    %4872 = vmatpush1.msra.mxu0 0.0
    %4873 = vmatprep.subr.mxu0 0.0
    %4874 = vmatpush1.msra.mxu0 %v4838
    %4875 = vmatprep.subr.mxu0 0.0
    %4876 = vmatpush2.msra.mxu0 0.0
    %4877 = vmatprep.subr.mxu0 0.0
    %4878 = vmatpush2.msra.mxu0 0.0
    %4879 = vmatprep.subr.mxu0 0.0
    %4880 = vmatpush2.msra.mxu0 0.0
    %4881 = vmatprep.subr.mxu0 0.0
    %4882 = vmatpush2.msra.mxu0 0.0
    %4883 = vmatprep.subr.mxu0 0.0
    %4884 = vmatpush2.msra.mxu0 0.0
    %4885 = vmatprep.subr.mxu0 0.0
    %4886 = vmatpush2.msra.mxu0 0.0
    %4887 = vmatprep.subr.mxu0 0.0
    %4888 = vmatpush2.msra.mxu0 0.0
    %4889 = vmatprep.subr.mxu0 0.0
    %4890 = vmatpush2.msra.mxu0 0.0
    %4891 = vmatprep.subr.mxu0 0.0
    %4892 = vmatpush2.msra.mxu0 0.0
    %4893 = vmatprep.subr.mxu0 0.0
    %4894 = vmatpush2.msra.mxu0 0.0
    %4895 = vmatprep.subr.mxu0 0.0
    %4896 = vmatpush2.msra.mxu0 0.0
    %4897 = vmatprep.subr.mxu0 0.0
    %4898 = vmatpush2.msra.mxu0 0.0
    %4899 = vmatprep.subr.mxu0 0.0
    %4900 = vmatpush2.msra.mxu0 0.0
    %4901 = vmatprep.subr.mxu0 0.0
    %4902 = vmatpush2.msra.mxu0 0.0
    %4903 = vmatprep.subr.mxu0 0.0
    %4904 = vmatpush2.msra.mxu0 0.0
    %4905 = vmatprep.subr.mxu0 0.0
    %4906 = vmatpush2.msra.mxu0 0.0
    %4907 = vmatprep.mubr.f32.mxu0 0.0
    %4908 = vmatmul.mubr.f32.gmra.mxu0 %v4841
    %v4909 = vpop.f32.mrf.mxu0
    %v4910 = vadd.f32 0.0, %v4909
    %v4911 = vpop.f32.mrf.mxu0
    %4912 = vdwg.mxu0
    %4914 = vrot.lane.b32.xlu0 %v219, 112
    %v4915 = vpop.permute.xlu0 %4914
    %v4918 = vsel %vm1528, %v4282, 0
    %4920 = vmatprep.subr.mxu0 0.0
    %4921 = vmatpush1.msra.mxu0 0.0
    %4922 = vmatprep.subr.mxu0 0.0
    %4923 = vmatpush1.msra.mxu0 0.0
    %4924 = vmatprep.subr.mxu0 0.0
    %4925 = vmatpush1.msra.mxu0 0.0
    %4926 = vmatprep.subr.mxu0 0.0
    %4927 = vmatpush1.msra.mxu0 0.0
    %4928 = vmatprep.subr.mxu0 0.0
    %4929 = vmatpush1.msra.mxu0 0.0
    %4930 = vmatprep.subr.mxu0 0.0
    %4931 = vmatpush1.msra.mxu0 0.0
    %4932 = vmatprep.subr.mxu0 0.0
    %4933 = vmatpush1.msra.mxu0 0.0
    %4934 = vmatprep.subr.mxu0 0.0
    %4935 = vmatpush1.msra.mxu0 0.0
    %4936 = vmatprep.subr.mxu0 0.0
    %4937 = vmatpush1.msra.mxu0 0.0
    %4938 = vmatprep.subr.mxu0 0.0
    %4939 = vmatpush1.msra.mxu0 0.0
    %4940 = vmatprep.subr.mxu0 0.0
    %4941 = vmatpush1.msra.mxu0 0.0
    %4942 = vmatprep.subr.mxu0 0.0
    %4943 = vmatpush1.msra.mxu0 0.0
    %4944 = vmatprep.subr.mxu0 0.0
    %4945 = vmatpush1.msra.mxu0 0.0
    %4946 = vmatprep.subr.mxu0 0.0
    %4947 = vmatpush1.msra.mxu0 0.0
    %4948 = vmatprep.subr.mxu0 0.0
    %4949 = vmatpush1.msra.mxu0 0.0
    %4950 = vmatprep.subr.mxu0 0.0
    %4951 = vmatpush1.msra.mxu0 %v4915
    %4952 = vmatprep.subr.mxu0 0.0
    %4953 = vmatpush2.msra.mxu0 0.0
    %4954 = vmatprep.subr.mxu0 0.0
    %4955 = vmatpush2.msra.mxu0 0.0
    %4956 = vmatprep.subr.mxu0 0.0
    %4957 = vmatpush2.msra.mxu0 0.0
    %4958 = vmatprep.subr.mxu0 0.0
    %4959 = vmatpush2.msra.mxu0 0.0
    %4960 = vmatprep.subr.mxu0 0.0
    %4961 = vmatpush2.msra.mxu0 0.0
    %4962 = vmatprep.subr.mxu0 0.0
    %4963 = vmatpush2.msra.mxu0 0.0
    %4964 = vmatprep.subr.mxu0 0.0
    %4965 = vmatpush2.msra.mxu0 0.0
    %4966 = vmatprep.subr.mxu0 0.0
    %4967 = vmatpush2.msra.mxu0 0.0
    %4968 = vmatprep.subr.mxu0 0.0
    %4969 = vmatpush2.msra.mxu0 0.0
    %4970 = vmatprep.subr.mxu0 0.0
    %4971 = vmatpush2.msra.mxu0 0.0
    %4972 = vmatprep.subr.mxu0 0.0
    %4973 = vmatpush2.msra.mxu0 0.0
    %4974 = vmatprep.subr.mxu0 0.0
    %4975 = vmatpush2.msra.mxu0 0.0
    %4976 = vmatprep.subr.mxu0 0.0
    %4977 = vmatpush2.msra.mxu0 0.0
    %4978 = vmatprep.subr.mxu0 0.0
    %4979 = vmatpush2.msra.mxu0 0.0
    %4980 = vmatprep.subr.mxu0 0.0
    %4981 = vmatpush2.msra.mxu0 0.0
    %4982 = vmatprep.subr.mxu0 0.0
    %4983 = vmatpush2.msra.mxu0 0.0
    %4984 = vmatprep.mubr.f32.mxu0 0.0
    %4985 = vmatmul.mubr.f32.gmra.mxu0 %v4918
    %v4986 = vpop.f32.mrf.mxu0
    %v4987 = vadd.f32 0.0, %v4986
    %v4988 = vpop.f32.mrf.mxu0
    %4989 = vdwg.mxu0
    %4991 = vrot.lane.b32.xlu0 %v225, 112
    %v4992 = vpop.permute.xlu0 %4991
    %v4995 = vsel %vm1528, %v4284, 0
    %4997 = vmatprep.subr.mxu0 0.0
    %4998 = vmatpush1.msra.mxu0 0.0
    %4999 = vmatprep.subr.mxu0 0.0
    %5000 = vmatpush1.msra.mxu0 0.0
    %5001 = vmatprep.subr.mxu0 0.0
    %5002 = vmatpush1.msra.mxu0 0.0
    %5003 = vmatprep.subr.mxu0 0.0
    %5004 = vmatpush1.msra.mxu0 0.0
    %5005 = vmatprep.subr.mxu0 0.0
    %5006 = vmatpush1.msra.mxu0 0.0
    %5007 = vmatprep.subr.mxu0 0.0
    %5008 = vmatpush1.msra.mxu0 0.0
    %5009 = vmatprep.subr.mxu0 0.0
    %5010 = vmatpush1.msra.mxu0 0.0
    %5011 = vmatprep.subr.mxu0 0.0
    %5012 = vmatpush1.msra.mxu0 0.0
    %5013 = vmatprep.subr.mxu0 0.0
    %5014 = vmatpush1.msra.mxu0 0.0
    %5015 = vmatprep.subr.mxu0 0.0
    %5016 = vmatpush1.msra.mxu0 0.0
    %5017 = vmatprep.subr.mxu0 0.0
    %5018 = vmatpush1.msra.mxu0 0.0
    %5019 = vmatprep.subr.mxu0 0.0
    %5020 = vmatpush1.msra.mxu0 0.0
    %5021 = vmatprep.subr.mxu0 0.0
    %5022 = vmatpush1.msra.mxu0 0.0
    %5023 = vmatprep.subr.mxu0 0.0
    %5024 = vmatpush1.msra.mxu0 0.0
    %5025 = vmatprep.subr.mxu0 0.0
    %5026 = vmatpush1.msra.mxu0 0.0
    %5027 = vmatprep.subr.mxu0 0.0
    %5028 = vmatpush1.msra.mxu0 %v4992
    %5029 = vmatprep.subr.mxu0 0.0
    %5030 = vmatpush2.msra.mxu0 0.0
    %5031 = vmatprep.subr.mxu0 0.0
    %5032 = vmatpush2.msra.mxu0 0.0
    %5033 = vmatprep.subr.mxu0 0.0
    %5034 = vmatpush2.msra.mxu0 0.0
    %5035 = vmatprep.subr.mxu0 0.0
    %5036 = vmatpush2.msra.mxu0 0.0
    %5037 = vmatprep.subr.mxu0 0.0
    %5038 = vmatpush2.msra.mxu0 0.0
    %5039 = vmatprep.subr.mxu0 0.0
    %5040 = vmatpush2.msra.mxu0 0.0
    %5041 = vmatprep.subr.mxu0 0.0
    %5042 = vmatpush2.msra.mxu0 0.0
    %5043 = vmatprep.subr.mxu0 0.0
    %5044 = vmatpush2.msra.mxu0 0.0
    %5045 = vmatprep.subr.mxu0 0.0
    %5046 = vmatpush2.msra.mxu0 0.0
    %5047 = vmatprep.subr.mxu0 0.0
    %5048 = vmatpush2.msra.mxu0 0.0
    %5049 = vmatprep.subr.mxu0 0.0
    %5050 = vmatpush2.msra.mxu0 0.0
    %5051 = vmatprep.subr.mxu0 0.0
    %5052 = vmatpush2.msra.mxu0 0.0
    %5053 = vmatprep.subr.mxu0 0.0
    %5054 = vmatpush2.msra.mxu0 0.0
    %5055 = vmatprep.subr.mxu0 0.0
    %5056 = vmatpush2.msra.mxu0 0.0
    %5057 = vmatprep.subr.mxu0 0.0
    %5058 = vmatpush2.msra.mxu0 0.0
    %5059 = vmatprep.subr.mxu0 0.0
    %5060 = vmatpush2.msra.mxu0 0.0
    %5061 = vmatprep.mubr.f32.mxu0 0.0
    %5062 = vmatmul.mubr.f32.gmra.mxu0 %v4995
    %v5063 = vpop.f32.mrf.mxu0
    %v5064 = vadd.f32 0.0, %v5063
    %v5065 = vpop.f32.mrf.mxu0
    %5066 = vdwg.mxu0
    %5068 = vrot.lane.b32.xlu0 %v231, 112
    %v5069 = vpop.permute.xlu0 %5068
    %v5072 = vsel %vm1528, %v4286, 0
    %5074 = vmatprep.subr.mxu0 0.0
    %5075 = vmatpush1.msra.mxu0 0.0
    %5076 = vmatprep.subr.mxu0 0.0
    %5077 = vmatpush1.msra.mxu0 0.0
    %5078 = vmatprep.subr.mxu0 0.0
    %5079 = vmatpush1.msra.mxu0 0.0
    %5080 = vmatprep.subr.mxu0 0.0
    %5081 = vmatpush1.msra.mxu0 0.0
    %5082 = vmatprep.subr.mxu0 0.0
    %5083 = vmatpush1.msra.mxu0 0.0
    %5084 = vmatprep.subr.mxu0 0.0
    %5085 = vmatpush1.msra.mxu0 0.0
    %5086 = vmatprep.subr.mxu0 0.0
    %5087 = vmatpush1.msra.mxu0 0.0
    %5088 = vmatprep.subr.mxu0 0.0
    %5089 = vmatpush1.msra.mxu0 0.0
    %5090 = vmatprep.subr.mxu0 0.0
    %5091 = vmatpush1.msra.mxu0 0.0
    %5092 = vmatprep.subr.mxu0 0.0
    %5093 = vmatpush1.msra.mxu0 0.0
    %5094 = vmatprep.subr.mxu0 0.0
    %5095 = vmatpush1.msra.mxu0 0.0
    %5096 = vmatprep.subr.mxu0 0.0
    %5097 = vmatpush1.msra.mxu0 0.0
    %5098 = vmatprep.subr.mxu0 0.0
    %5099 = vmatpush1.msra.mxu0 0.0
    %5100 = vmatprep.subr.mxu0 0.0
    %5101 = vmatpush1.msra.mxu0 0.0
    %5102 = vmatprep.subr.mxu0 0.0
    %5103 = vmatpush1.msra.mxu0 0.0
    %5104 = vmatprep.subr.mxu0 0.0
    %5105 = vmatpush1.msra.mxu0 %v5069
    %5106 = vmatprep.subr.mxu0 0.0
    %5107 = vmatpush2.msra.mxu0 0.0
    %5108 = vmatprep.subr.mxu0 0.0
    %5109 = vmatpush2.msra.mxu0 0.0
    %5110 = vmatprep.subr.mxu0 0.0
    %5111 = vmatpush2.msra.mxu0 0.0
    %5112 = vmatprep.subr.mxu0 0.0
    %5113 = vmatpush2.msra.mxu0 0.0
    %5114 = vmatprep.subr.mxu0 0.0
    %5115 = vmatpush2.msra.mxu0 0.0
    %5116 = vmatprep.subr.mxu0 0.0
    %5117 = vmatpush2.msra.mxu0 0.0
    %5118 = vmatprep.subr.mxu0 0.0
    %5119 = vmatpush2.msra.mxu0 0.0
    %5120 = vmatprep.subr.mxu0 0.0
    %5121 = vmatpush2.msra.mxu0 0.0
    %5122 = vmatprep.subr.mxu0 0.0
    %5123 = vmatpush2.msra.mxu0 0.0
    %5124 = vmatprep.subr.mxu0 0.0
    %5125 = vmatpush2.msra.mxu0 0.0
    %5126 = vmatprep.subr.mxu0 0.0
    %5127 = vmatpush2.msra.mxu0 0.0
    %5128 = vmatprep.subr.mxu0 0.0
    %5129 = vmatpush2.msra.mxu0 0.0
    %5130 = vmatprep.subr.mxu0 0.0
    %5131 = vmatpush2.msra.mxu0 0.0
    %5132 = vmatprep.subr.mxu0 0.0
    %5133 = vmatpush2.msra.mxu0 0.0
    %5134 = vmatprep.subr.mxu0 0.0
    %5135 = vmatpush2.msra.mxu0 0.0
    %5136 = vmatprep.subr.mxu0 0.0
    %5137 = vmatpush2.msra.mxu0 0.0
    %5138 = vmatprep.mubr.f32.mxu0 0.0
    %5139 = vmatmul.mubr.f32.gmra.mxu0 %v5072
    %v5140 = vpop.f32.mrf.mxu0
    %v5141 = vadd.f32 0.0, %v5140
    %v5142 = vpop.f32.mrf.mxu0
    %5143 = vdwg.mxu0
    %5145 = vrot.lane.b32.xlu0 %v237, 112
    %v5146 = vpop.permute.xlu0 %5145
    %v5149 = vsel %vm1528, %v4288, 0
    %5151 = vmatprep.subr.mxu0 0.0
    %5152 = vmatpush1.msra.mxu0 0.0
    %5153 = vmatprep.subr.mxu0 0.0
    %5154 = vmatpush1.msra.mxu0 0.0
    %5155 = vmatprep.subr.mxu0 0.0
    %5156 = vmatpush1.msra.mxu0 0.0
    %5157 = vmatprep.subr.mxu0 0.0
    %5158 = vmatpush1.msra.mxu0 0.0
    %5159 = vmatprep.subr.mxu0 0.0
    %5160 = vmatpush1.msra.mxu0 0.0
    %5161 = vmatprep.subr.mxu0 0.0
    %5162 = vmatpush1.msra.mxu0 0.0
    %5163 = vmatprep.subr.mxu0 0.0
    %5164 = vmatpush1.msra.mxu0 0.0
    %5165 = vmatprep.subr.mxu0 0.0
    %5166 = vmatpush1.msra.mxu0 0.0
    %5167 = vmatprep.subr.mxu0 0.0
    %5168 = vmatpush1.msra.mxu0 0.0
    %5169 = vmatprep.subr.mxu0 0.0
    %5170 = vmatpush1.msra.mxu0 0.0
    %5171 = vmatprep.subr.mxu0 0.0
    %5172 = vmatpush1.msra.mxu0 0.0
    %5173 = vmatprep.subr.mxu0 0.0
    %5174 = vmatpush1.msra.mxu0 0.0
    %5175 = vmatprep.subr.mxu0 0.0
    %5176 = vmatpush1.msra.mxu0 0.0
    %5177 = vmatprep.subr.mxu0 0.0
    %5178 = vmatpush1.msra.mxu0 0.0
    %5179 = vmatprep.subr.mxu0 0.0
    %5180 = vmatpush1.msra.mxu0 0.0
    %5181 = vmatprep.subr.mxu0 0.0
    %5182 = vmatpush1.msra.mxu0 %v5146
    %5183 = vmatprep.subr.mxu0 0.0
    %5184 = vmatpush2.msra.mxu0 0.0
    %5185 = vmatprep.subr.mxu0 0.0
    %5186 = vmatpush2.msra.mxu0 0.0
    %5187 = vmatprep.subr.mxu0 0.0
    %5188 = vmatpush2.msra.mxu0 0.0
    %5189 = vmatprep.subr.mxu0 0.0
    %5190 = vmatpush2.msra.mxu0 0.0
    %5191 = vmatprep.subr.mxu0 0.0
    %5192 = vmatpush2.msra.mxu0 0.0
    %5193 = vmatprep.subr.mxu0 0.0
    %5194 = vmatpush2.msra.mxu0 0.0
    %5195 = vmatprep.subr.mxu0 0.0
    %5196 = vmatpush2.msra.mxu0 0.0
    %5197 = vmatprep.subr.mxu0 0.0
    %5198 = vmatpush2.msra.mxu0 0.0
    %5199 = vmatprep.subr.mxu0 0.0
    %5200 = vmatpush2.msra.mxu0 0.0
    %5201 = vmatprep.subr.mxu0 0.0
    %5202 = vmatpush2.msra.mxu0 0.0
    %5203 = vmatprep.subr.mxu0 0.0
    %5204 = vmatpush2.msra.mxu0 0.0
    %5205 = vmatprep.subr.mxu0 0.0
    %5206 = vmatpush2.msra.mxu0 0.0
    %5207 = vmatprep.subr.mxu0 0.0
    %5208 = vmatpush2.msra.mxu0 0.0
    %5209 = vmatprep.subr.mxu0 0.0
    %5210 = vmatpush2.msra.mxu0 0.0
    %5211 = vmatprep.subr.mxu0 0.0
    %5212 = vmatpush2.msra.mxu0 0.0
    %5213 = vmatprep.subr.mxu0 0.0
    %5214 = vmatpush2.msra.mxu0 0.0
    %5215 = vmatprep.mubr.f32.mxu0 0.0
    %5216 = vmatmul.mubr.f32.gmra.mxu0 %v5149
    %v5217 = vpop.f32.mrf.mxu0
    %v5218 = vadd.f32 0.0, %v5217
    %v5219 = vpop.f32.mrf.mxu0
    %5220 = vdwg.mxu0
    %5222 = vrot.lane.b32.xlu0 %v243, 112
    %v5223 = vpop.permute.xlu0 %5222
    %v5226 = vsel %vm1528, %v4290, 0
    %5228 = vmatprep.subr.mxu0 0.0
    %5229 = vmatpush1.msra.mxu0 0.0
    %5230 = vmatprep.subr.mxu0 0.0
    %5231 = vmatpush1.msra.mxu0 0.0
    %5232 = vmatprep.subr.mxu0 0.0
    %5233 = vmatpush1.msra.mxu0 0.0
    %5234 = vmatprep.subr.mxu0 0.0
    %5235 = vmatpush1.msra.mxu0 0.0
    %5236 = vmatprep.subr.mxu0 0.0
    %5237 = vmatpush1.msra.mxu0 0.0
    %5238 = vmatprep.subr.mxu0 0.0
    %5239 = vmatpush1.msra.mxu0 0.0
    %5240 = vmatprep.subr.mxu0 0.0
    %5241 = vmatpush1.msra.mxu0 0.0
    %5242 = vmatprep.subr.mxu0 0.0
    %5243 = vmatpush1.msra.mxu0 0.0
    %5244 = vmatprep.subr.mxu0 0.0
    %5245 = vmatpush1.msra.mxu0 0.0
    %5246 = vmatprep.subr.mxu0 0.0
    %5247 = vmatpush1.msra.mxu0 0.0
    %5248 = vmatprep.subr.mxu0 0.0
    %5249 = vmatpush1.msra.mxu0 0.0
    %5250 = vmatprep.subr.mxu0 0.0
    %5251 = vmatpush1.msra.mxu0 0.0
    %5252 = vmatprep.subr.mxu0 0.0
    %5253 = vmatpush1.msra.mxu0 0.0
    %5254 = vmatprep.subr.mxu0 0.0
    %5255 = vmatpush1.msra.mxu0 0.0
    %5256 = vmatprep.subr.mxu0 0.0
    %5257 = vmatpush1.msra.mxu0 0.0
    %5258 = vmatprep.subr.mxu0 0.0
    %5259 = vmatpush1.msra.mxu0 %v5223
    %5260 = vmatprep.subr.mxu0 0.0
    %5261 = vmatpush2.msra.mxu0 0.0
    %5262 = vmatprep.subr.mxu0 0.0
    %5263 = vmatpush2.msra.mxu0 0.0
    %5264 = vmatprep.subr.mxu0 0.0
    %5265 = vmatpush2.msra.mxu0 0.0
    %5266 = vmatprep.subr.mxu0 0.0
    %5267 = vmatpush2.msra.mxu0 0.0
    %5268 = vmatprep.subr.mxu0 0.0
    %5269 = vmatpush2.msra.mxu0 0.0
    %5270 = vmatprep.subr.mxu0 0.0
    %5271 = vmatpush2.msra.mxu0 0.0
    %5272 = vmatprep.subr.mxu0 0.0
    %5273 = vmatpush2.msra.mxu0 0.0
    %5274 = vmatprep.subr.mxu0 0.0
    %5275 = vmatpush2.msra.mxu0 0.0
    %5276 = vmatprep.subr.mxu0 0.0
    %5277 = vmatpush2.msra.mxu0 0.0
    %5278 = vmatprep.subr.mxu0 0.0
    %5279 = vmatpush2.msra.mxu0 0.0
    %5280 = vmatprep.subr.mxu0 0.0
    %5281 = vmatpush2.msra.mxu0 0.0
    %5282 = vmatprep.subr.mxu0 0.0
    %5283 = vmatpush2.msra.mxu0 0.0
    %5284 = vmatprep.subr.mxu0 0.0
    %5285 = vmatpush2.msra.mxu0 0.0
    %5286 = vmatprep.subr.mxu0 0.0
    %5287 = vmatpush2.msra.mxu0 0.0
    %5288 = vmatprep.subr.mxu0 0.0
    %5289 = vmatpush2.msra.mxu0 0.0
    %5290 = vmatprep.subr.mxu0 0.0
    %5291 = vmatpush2.msra.mxu0 0.0
    %5292 = vmatprep.mubr.f32.mxu0 0.0
    %5293 = vmatmul.mubr.f32.gmra.mxu0 %v5226
    %v5294 = vpop.f32.mrf.mxu0
    %v5295 = vadd.f32 0.0, %v5294
    %v5296 = vpop.f32.mrf.mxu0
    %5297 = vdwg.mxu0
    %5299 = vrot.lane.b32.xlu0 %v249, 112
    %v5300 = vpop.permute.xlu0 %5299
    %v5303 = vsel %vm1528, %v4292, 0
    %5305 = vmatprep.subr.mxu0 0.0
    %5306 = vmatpush1.msra.mxu0 0.0
    %5307 = vmatprep.subr.mxu0 0.0
    %5308 = vmatpush1.msra.mxu0 0.0
    %5309 = vmatprep.subr.mxu0 0.0
    %5310 = vmatpush1.msra.mxu0 0.0
    %5311 = vmatprep.subr.mxu0 0.0
    %5312 = vmatpush1.msra.mxu0 0.0
    %5313 = vmatprep.subr.mxu0 0.0
    %5314 = vmatpush1.msra.mxu0 0.0
    %5315 = vmatprep.subr.mxu0 0.0
    %5316 = vmatpush1.msra.mxu0 0.0
    %5317 = vmatprep.subr.mxu0 0.0
    %5318 = vmatpush1.msra.mxu0 0.0
    %5319 = vmatprep.subr.mxu0 0.0
    %5320 = vmatpush1.msra.mxu0 0.0
    %5321 = vmatprep.subr.mxu0 0.0
    %5322 = vmatpush1.msra.mxu0 0.0
    %5323 = vmatprep.subr.mxu0 0.0
    %5324 = vmatpush1.msra.mxu0 0.0
    %5325 = vmatprep.subr.mxu0 0.0
    %5326 = vmatpush1.msra.mxu0 0.0
    %5327 = vmatprep.subr.mxu0 0.0
    %5328 = vmatpush1.msra.mxu0 0.0
    %5329 = vmatprep.subr.mxu0 0.0
    %5330 = vmatpush1.msra.mxu0 0.0
    %5331 = vmatprep.subr.mxu0 0.0
    %5332 = vmatpush1.msra.mxu0 0.0
    %5333 = vmatprep.subr.mxu0 0.0
    %5334 = vmatpush1.msra.mxu0 0.0
    %5335 = vmatprep.subr.mxu0 0.0
    %5336 = vmatpush1.msra.mxu0 %v5300
    %5337 = vmatprep.subr.mxu0 0.0
    %5338 = vmatpush2.msra.mxu0 0.0
    %5339 = vmatprep.subr.mxu0 0.0
    %5340 = vmatpush2.msra.mxu0 0.0
    %5341 = vmatprep.subr.mxu0 0.0
    %5342 = vmatpush2.msra.mxu0 0.0
    %5343 = vmatprep.subr.mxu0 0.0
    %5344 = vmatpush2.msra.mxu0 0.0
    %5345 = vmatprep.subr.mxu0 0.0
    %5346 = vmatpush2.msra.mxu0 0.0
    %5347 = vmatprep.subr.mxu0 0.0
    %5348 = vmatpush2.msra.mxu0 0.0
    %5349 = vmatprep.subr.mxu0 0.0
    %5350 = vmatpush2.msra.mxu0 0.0
    %5351 = vmatprep.subr.mxu0 0.0
    %5352 = vmatpush2.msra.mxu0 0.0
    %5353 = vmatprep.subr.mxu0 0.0
    %5354 = vmatpush2.msra.mxu0 0.0
    %5355 = vmatprep.subr.mxu0 0.0
    %5356 = vmatpush2.msra.mxu0 0.0
    %5357 = vmatprep.subr.mxu0 0.0
    %5358 = vmatpush2.msra.mxu0 0.0
    %5359 = vmatprep.subr.mxu0 0.0
    %5360 = vmatpush2.msra.mxu0 0.0
    %5361 = vmatprep.subr.mxu0 0.0
    %5362 = vmatpush2.msra.mxu0 0.0
    %5363 = vmatprep.subr.mxu0 0.0
    %5364 = vmatpush2.msra.mxu0 0.0
    %5365 = vmatprep.subr.mxu0 0.0
    %5366 = vmatpush2.msra.mxu0 0.0
    %5367 = vmatprep.subr.mxu0 0.0
    %5368 = vmatpush2.msra.mxu0 0.0
    %5369 = vmatprep.mubr.f32.mxu0 0.0
    %5370 = vmatmul.mubr.f32.gmra.mxu0 %v5303
    %v5371 = vpop.f32.mrf.mxu0
    %v5372 = vadd.f32 0.0, %v5371
    %v5373 = vpop.f32.mrf.mxu0
    %5374 = vdwg.mxu0
    %5376 = vrot.lane.b32.xlu0 %v255, 112
    %v5377 = vpop.permute.xlu0 %5376
    %v5380 = vsel %vm1528, %v4294, 0
    %5382 = vmatprep.subr.mxu0 0.0
    %5383 = vmatpush1.msra.mxu0 0.0
    %5384 = vmatprep.subr.mxu0 0.0
    %5385 = vmatpush1.msra.mxu0 0.0
    %5386 = vmatprep.subr.mxu0 0.0
    %5387 = vmatpush1.msra.mxu0 0.0
    %5388 = vmatprep.subr.mxu0 0.0
    %5389 = vmatpush1.msra.mxu0 0.0
    %5390 = vmatprep.subr.mxu0 0.0
    %5391 = vmatpush1.msra.mxu0 0.0
    %5392 = vmatprep.subr.mxu0 0.0
    %5393 = vmatpush1.msra.mxu0 0.0
    %5394 = vmatprep.subr.mxu0 0.0
    %5395 = vmatpush1.msra.mxu0 0.0
    %5396 = vmatprep.subr.mxu0 0.0
    %5397 = vmatpush1.msra.mxu0 0.0
    %5398 = vmatprep.subr.mxu0 0.0
    %5399 = vmatpush1.msra.mxu0 0.0
    %5400 = vmatprep.subr.mxu0 0.0
    %5401 = vmatpush1.msra.mxu0 0.0
    %5402 = vmatprep.subr.mxu0 0.0
    %5403 = vmatpush1.msra.mxu0 0.0
    %5404 = vmatprep.subr.mxu0 0.0
    %5405 = vmatpush1.msra.mxu0 0.0
    %5406 = vmatprep.subr.mxu0 0.0
    %5407 = vmatpush1.msra.mxu0 0.0
    %5408 = vmatprep.subr.mxu0 0.0
    %5409 = vmatpush1.msra.mxu0 0.0
    %5410 = vmatprep.subr.mxu0 0.0
    %5411 = vmatpush1.msra.mxu0 0.0
    %5412 = vmatprep.subr.mxu0 0.0
    %5413 = vmatpush1.msra.mxu0 %v5377
    %5414 = vmatprep.subr.mxu0 0.0
    %5415 = vmatpush2.msra.mxu0 0.0
    %5416 = vmatprep.subr.mxu0 0.0
    %5417 = vmatpush2.msra.mxu0 0.0
    %5418 = vmatprep.subr.mxu0 0.0
    %5419 = vmatpush2.msra.mxu0 0.0
    %5420 = vmatprep.subr.mxu0 0.0
    %5421 = vmatpush2.msra.mxu0 0.0
    %5422 = vmatprep.subr.mxu0 0.0
    %5423 = vmatpush2.msra.mxu0 0.0
    %5424 = vmatprep.subr.mxu0 0.0
    %5425 = vmatpush2.msra.mxu0 0.0
    %5426 = vmatprep.subr.mxu0 0.0
    %5427 = vmatpush2.msra.mxu0 0.0
    %5428 = vmatprep.subr.mxu0 0.0
    %5429 = vmatpush2.msra.mxu0 0.0
    %5430 = vmatprep.subr.mxu0 0.0
    %5431 = vmatpush2.msra.mxu0 0.0
    %5432 = vmatprep.subr.mxu0 0.0
    %5433 = vmatpush2.msra.mxu0 0.0
    %5434 = vmatprep.subr.mxu0 0.0
    %5435 = vmatpush2.msra.mxu0 0.0
    %5436 = vmatprep.subr.mxu0 0.0
    %5437 = vmatpush2.msra.mxu0 0.0
    %5438 = vmatprep.subr.mxu0 0.0
    %5439 = vmatpush2.msra.mxu0 0.0
    %5440 = vmatprep.subr.mxu0 0.0
    %5441 = vmatpush2.msra.mxu0 0.0
    %5442 = vmatprep.subr.mxu0 0.0
    %5443 = vmatpush2.msra.mxu0 0.0
    %5444 = vmatprep.subr.mxu0 0.0
    %5445 = vmatpush2.msra.mxu0 0.0
    %5446 = vmatprep.mubr.f32.mxu0 0.0
    %5447 = vmatmul.mubr.f32.gmra.mxu0 %v5380
    %v5448 = vpop.f32.mrf.mxu0
    %v5449 = vadd.f32 0.0, %v5448
    %v5450 = vpop.f32.mrf.mxu0
    %5451 = vdwg.mxu0
    %5453 = vrot.lane.b32.xlu0 %v261, 112
    %v5454 = vpop.permute.xlu0 %5453
    %v5457 = vsel %vm1528, %v4296, 0
    %5459 = vmatprep.subr.mxu0 0.0
    %5460 = vmatpush1.msra.mxu0 0.0
    %5461 = vmatprep.subr.mxu0 0.0
    %5462 = vmatpush1.msra.mxu0 0.0
    %5463 = vmatprep.subr.mxu0 0.0
    %5464 = vmatpush1.msra.mxu0 0.0
    %5465 = vmatprep.subr.mxu0 0.0
    %5466 = vmatpush1.msra.mxu0 0.0
    %5467 = vmatprep.subr.mxu0 0.0
    %5468 = vmatpush1.msra.mxu0 0.0
    %5469 = vmatprep.subr.mxu0 0.0
    %5470 = vmatpush1.msra.mxu0 0.0
    %5471 = vmatprep.subr.mxu0 0.0
    %5472 = vmatpush1.msra.mxu0 0.0
    %5473 = vmatprep.subr.mxu0 0.0
    %5474 = vmatpush1.msra.mxu0 0.0
    %5475 = vmatprep.subr.mxu0 0.0
    %5476 = vmatpush1.msra.mxu0 0.0
    %5477 = vmatprep.subr.mxu0 0.0
    %5478 = vmatpush1.msra.mxu0 0.0
    %5479 = vmatprep.subr.mxu0 0.0
    %5480 = vmatpush1.msra.mxu0 0.0
    %5481 = vmatprep.subr.mxu0 0.0
    %5482 = vmatpush1.msra.mxu0 0.0
    %5483 = vmatprep.subr.mxu0 0.0
    %5484 = vmatpush1.msra.mxu0 0.0
    %5485 = vmatprep.subr.mxu0 0.0
    %5486 = vmatpush1.msra.mxu0 0.0
    %5487 = vmatprep.subr.mxu0 0.0
    %5488 = vmatpush1.msra.mxu0 0.0
    %5489 = vmatprep.subr.mxu0 0.0
    %5490 = vmatpush1.msra.mxu0 %v5454
    %5491 = vmatprep.subr.mxu0 0.0
    %5492 = vmatpush2.msra.mxu0 0.0
    %5493 = vmatprep.subr.mxu0 0.0
    %5494 = vmatpush2.msra.mxu0 0.0
    %5495 = vmatprep.subr.mxu0 0.0
    %5496 = vmatpush2.msra.mxu0 0.0
    %5497 = vmatprep.subr.mxu0 0.0
    %5498 = vmatpush2.msra.mxu0 0.0
    %5499 = vmatprep.subr.mxu0 0.0
    %5500 = vmatpush2.msra.mxu0 0.0
    %5501 = vmatprep.subr.mxu0 0.0
    %5502 = vmatpush2.msra.mxu0 0.0
    %5503 = vmatprep.subr.mxu0 0.0
    %5504 = vmatpush2.msra.mxu0 0.0
    %5505 = vmatprep.subr.mxu0 0.0
    %5506 = vmatpush2.msra.mxu0 0.0
    %5507 = vmatprep.subr.mxu0 0.0
    %5508 = vmatpush2.msra.mxu0 0.0
    %5509 = vmatprep.subr.mxu0 0.0
    %5510 = vmatpush2.msra.mxu0 0.0
    %5511 = vmatprep.subr.mxu0 0.0
    %5512 = vmatpush2.msra.mxu0 0.0
    %5513 = vmatprep.subr.mxu0 0.0
    %5514 = vmatpush2.msra.mxu0 0.0
    %5515 = vmatprep.subr.mxu0 0.0
    %5516 = vmatpush2.msra.mxu0 0.0
    %5517 = vmatprep.subr.mxu0 0.0
    %5518 = vmatpush2.msra.mxu0 0.0
    %5519 = vmatprep.subr.mxu0 0.0
    %5520 = vmatpush2.msra.mxu0 0.0
    %5521 = vmatprep.subr.mxu0 0.0
    %5522 = vmatpush2.msra.mxu0 0.0
    %5523 = vmatprep.mubr.f32.mxu0 0.0
    %5524 = vmatmul.mubr.f32.gmra.mxu0 %v5457
    %v5525 = vpop.f32.mrf.mxu0
    %v5526 = vadd.f32 0.0, %v5525
    %v5527 = vpop.f32.mrf.mxu0
    %5528 = vdwg.mxu0
    %5529 = vrot.lane.b32.xlu0 %v263, 96
    %v5530 = vpop.permute.xlu0 %5529
    %5531 = vrot.lane.b32.xlu0 %v169, 32
    %v5532 = vpop.permute.xlu0 %5531
    %v5533 = vsel %vm282, %v5530, 0
    %v5535 = vsel %vm282, %v5532, 0
    %5537 = vmatprep.subr.mxu0 0.0
    %5538 = vmatpush1.xpose.msra.mxu0 0.0
    %5539 = vmatprep.subr.mxu0 0.0
    %5540 = vmatpush1.xpose.msra.mxu0 0.0
    %5541 = vmatprep.subr.mxu0 0.0
    %5542 = vmatpush1.xpose.msra.mxu0 0.0
    %5543 = vmatprep.subr.mxu0 0.0
    %5544 = vmatpush1.xpose.msra.mxu0 0.0
    %5545 = vmatprep.subr.mxu0 0.0
    %5546 = vmatpush1.xpose.msra.mxu0 0.0
    %5547 = vmatprep.subr.mxu0 0.0
    %5548 = vmatpush1.xpose.msra.mxu0 0.0
    %5549 = vmatprep.subr.mxu0 0.0
    %5550 = vmatpush1.xpose.msra.mxu0 0.0
    %5551 = vmatprep.subr.mxu0 0.0
    %5552 = vmatpush1.xpose.msra.mxu0 0.0
    %5553 = vmatprep.subr.mxu0 0.0
    %5554 = vmatpush1.xpose.msra.mxu0 0.0
    %5555 = vmatprep.subr.mxu0 0.0
    %5556 = vmatpush1.xpose.msra.mxu0 0.0
    %5557 = vmatprep.subr.mxu0 0.0
    %5558 = vmatpush1.xpose.msra.mxu0 0.0
    %5559 = vmatprep.subr.mxu0 0.0
    %5560 = vmatpush1.xpose.msra.mxu0 0.0
    %5561 = vmatprep.subr.mxu0 0.0
    %5562 = vmatpush1.xpose.msra.mxu0 0.0
    %5563 = vmatprep.subr.mxu0 0.0
    %5564 = vmatpush1.xpose.msra.mxu0 0.0
    %5565 = vmatprep.subr.mxu0 0.0
    %5566 = vmatpush1.xpose.msra.mxu0 0.0
    %5567 = vmatprep.subr.mxu0 0.0
    %5568 = vmatpush1.xpose.msra.mxu0 %v5535
    %5569 = vmatprep.subr.mxu0 0.0
    %5570 = vmatpush2.xpose.msra.mxu0 0.0
    %5571 = vmatprep.subr.mxu0 0.0
    %5572 = vmatpush2.xpose.msra.mxu0 0.0
    %5573 = vmatprep.subr.mxu0 0.0
    %5574 = vmatpush2.xpose.msra.mxu0 0.0
    %5575 = vmatprep.subr.mxu0 0.0
    %5576 = vmatpush2.xpose.msra.mxu0 0.0
    %5577 = vmatprep.subr.mxu0 0.0
    %5578 = vmatpush2.xpose.msra.mxu0 0.0
    %5579 = vmatprep.subr.mxu0 0.0
    %5580 = vmatpush2.xpose.msra.mxu0 0.0
    %5581 = vmatprep.subr.mxu0 0.0
    %5582 = vmatpush2.xpose.msra.mxu0 0.0
    %5583 = vmatprep.subr.mxu0 0.0
    %5584 = vmatpush2.xpose.msra.mxu0 0.0
    %5585 = vmatprep.subr.mxu0 0.0
    %5586 = vmatpush2.xpose.msra.mxu0 0.0
    %5587 = vmatprep.subr.mxu0 0.0
    %5588 = vmatpush2.xpose.msra.mxu0 0.0
    %5589 = vmatprep.subr.mxu0 0.0
    %5590 = vmatpush2.xpose.msra.mxu0 0.0
    %5591 = vmatprep.subr.mxu0 0.0
    %5592 = vmatpush2.xpose.msra.mxu0 0.0
    %5593 = vmatprep.subr.mxu0 0.0
    %5594 = vmatpush2.xpose.msra.mxu0 0.0
    %5595 = vmatprep.subr.mxu0 0.0
    %5596 = vmatpush2.xpose.msra.mxu0 0.0
    %5597 = vmatprep.subr.mxu0 0.0
    %5598 = vmatpush2.xpose.msra.mxu0 0.0
    %5599 = vmatprep.subr.mxu0 0.0
    %5600 = vmatpush2.xpose.msra.mxu0 0.0
    %5601 = vmatprep.mubr.f32.mxu0 0.0
    %5602 = vmatmul.mubr.f32.gmra.mxu0 %v5533
    %v5603 = vpop.f32.mrf.mxu0
    %v5604 = vadd.f32 0.0, %v5603
    %v5605 = vpop.f32.mrf.mxu0
    %5606 = vdwg.mxu0
    %5607 = vrot.lane.b32.xlu0 %v264, 96
    %v5608 = vpop.permute.xlu0 %5607
    %5609 = vrot.lane.b32.xlu0 %v175, 32
    %v5610 = vpop.permute.xlu0 %5609
    %v5611 = vsel %vm282, %v5608, 0
    %v5613 = vsel %vm282, %v5610, 0
    %5615 = vmatprep.subr.mxu0 0.0
    %5616 = vmatpush1.xpose.msra.mxu0 0.0
    %5617 = vmatprep.subr.mxu0 0.0
    %5618 = vmatpush1.xpose.msra.mxu0 0.0
    %5619 = vmatprep.subr.mxu0 0.0
    %5620 = vmatpush1.xpose.msra.mxu0 0.0
    %5621 = vmatprep.subr.mxu0 0.0
    %5622 = vmatpush1.xpose.msra.mxu0 0.0
    %5623 = vmatprep.subr.mxu0 0.0
    %5624 = vmatpush1.xpose.msra.mxu0 0.0
    %5625 = vmatprep.subr.mxu0 0.0
    %5626 = vmatpush1.xpose.msra.mxu0 0.0
    %5627 = vmatprep.subr.mxu0 0.0
    %5628 = vmatpush1.xpose.msra.mxu0 0.0
    %5629 = vmatprep.subr.mxu0 0.0
    %5630 = vmatpush1.xpose.msra.mxu0 0.0
    %5631 = vmatprep.subr.mxu0 0.0
    %5632 = vmatpush1.xpose.msra.mxu0 0.0
    %5633 = vmatprep.subr.mxu0 0.0
    %5634 = vmatpush1.xpose.msra.mxu0 0.0
    %5635 = vmatprep.subr.mxu0 0.0
    %5636 = vmatpush1.xpose.msra.mxu0 0.0
    %5637 = vmatprep.subr.mxu0 0.0
    %5638 = vmatpush1.xpose.msra.mxu0 0.0
    %5639 = vmatprep.subr.mxu0 0.0
    %5640 = vmatpush1.xpose.msra.mxu0 0.0
    %5641 = vmatprep.subr.mxu0 0.0
    %5642 = vmatpush1.xpose.msra.mxu0 0.0
    %5643 = vmatprep.subr.mxu0 0.0
    %5644 = vmatpush1.xpose.msra.mxu0 0.0
    %5645 = vmatprep.subr.mxu0 0.0
    %5646 = vmatpush1.xpose.msra.mxu0 %v5613
    %5647 = vmatprep.subr.mxu0 0.0
    %5648 = vmatpush2.xpose.msra.mxu0 0.0
    %5649 = vmatprep.subr.mxu0 0.0
    %5650 = vmatpush2.xpose.msra.mxu0 0.0
    %5651 = vmatprep.subr.mxu0 0.0
    %5652 = vmatpush2.xpose.msra.mxu0 0.0
    %5653 = vmatprep.subr.mxu0 0.0
    %5654 = vmatpush2.xpose.msra.mxu0 0.0
    %5655 = vmatprep.subr.mxu0 0.0
    %5656 = vmatpush2.xpose.msra.mxu0 0.0
    %5657 = vmatprep.subr.mxu0 0.0
    %5658 = vmatpush2.xpose.msra.mxu0 0.0
    %5659 = vmatprep.subr.mxu0 0.0
    %5660 = vmatpush2.xpose.msra.mxu0 0.0
    %5661 = vmatprep.subr.mxu0 0.0
    %5662 = vmatpush2.xpose.msra.mxu0 0.0
    %5663 = vmatprep.subr.mxu0 0.0
    %5664 = vmatpush2.xpose.msra.mxu0 0.0
    %5665 = vmatprep.subr.mxu0 0.0
    %5666 = vmatpush2.xpose.msra.mxu0 0.0
    %5667 = vmatprep.subr.mxu0 0.0
    %5668 = vmatpush2.xpose.msra.mxu0 0.0
    %5669 = vmatprep.subr.mxu0 0.0
    %5670 = vmatpush2.xpose.msra.mxu0 0.0
    %5671 = vmatprep.subr.mxu0 0.0
    %5672 = vmatpush2.xpose.msra.mxu0 0.0
    %5673 = vmatprep.subr.mxu0 0.0
    %5674 = vmatpush2.xpose.msra.mxu0 0.0
    %5675 = vmatprep.subr.mxu0 0.0
    %5676 = vmatpush2.xpose.msra.mxu0 0.0
    %5677 = vmatprep.subr.mxu0 0.0
    %5678 = vmatpush2.xpose.msra.mxu0 0.0
    %5679 = vmatprep.mubr.f32.mxu0 0.0
    %5680 = vmatmul.mubr.f32.gmra.mxu0 %v5611
    %v5681 = vpop.f32.mrf.mxu0
    %v5682 = vadd.f32 0.0, %v5681
    %v5683 = vpop.f32.mrf.mxu0
    %5684 = vdwg.mxu0
    %5685 = vrot.lane.b32.xlu0 %v265, 96
    %v5686 = vpop.permute.xlu0 %5685
    %5687 = vrot.lane.b32.xlu0 %v181, 32
    %v5688 = vpop.permute.xlu0 %5687
    %v5689 = vsel %vm282, %v5686, 0
    %v5691 = vsel %vm282, %v5688, 0
    %5693 = vmatprep.subr.mxu0 0.0
    %5694 = vmatpush1.xpose.msra.mxu0 0.0
    %5695 = vmatprep.subr.mxu0 0.0
    %5696 = vmatpush1.xpose.msra.mxu0 0.0
    %5697 = vmatprep.subr.mxu0 0.0
    %5698 = vmatpush1.xpose.msra.mxu0 0.0
    %5699 = vmatprep.subr.mxu0 0.0
    %5700 = vmatpush1.xpose.msra.mxu0 0.0
    %5701 = vmatprep.subr.mxu0 0.0
    %5702 = vmatpush1.xpose.msra.mxu0 0.0
    %5703 = vmatprep.subr.mxu0 0.0
    %5704 = vmatpush1.xpose.msra.mxu0 0.0
    %5705 = vmatprep.subr.mxu0 0.0
    %5706 = vmatpush1.xpose.msra.mxu0 0.0
    %5707 = vmatprep.subr.mxu0 0.0
    %5708 = vmatpush1.xpose.msra.mxu0 0.0
    %5709 = vmatprep.subr.mxu0 0.0
    %5710 = vmatpush1.xpose.msra.mxu0 0.0
    %5711 = vmatprep.subr.mxu0 0.0
    %5712 = vmatpush1.xpose.msra.mxu0 0.0
    %5713 = vmatprep.subr.mxu0 0.0
    %5714 = vmatpush1.xpose.msra.mxu0 0.0
    %5715 = vmatprep.subr.mxu0 0.0
    %5716 = vmatpush1.xpose.msra.mxu0 0.0
    %5717 = vmatprep.subr.mxu0 0.0
    %5718 = vmatpush1.xpose.msra.mxu0 0.0
    %5719 = vmatprep.subr.mxu0 0.0
    %5720 = vmatpush1.xpose.msra.mxu0 0.0
    %5721 = vmatprep.subr.mxu0 0.0
    %5722 = vmatpush1.xpose.msra.mxu0 0.0
    %5723 = vmatprep.subr.mxu0 0.0
    %5724 = vmatpush1.xpose.msra.mxu0 %v5691
    %5725 = vmatprep.subr.mxu0 0.0
    %5726 = vmatpush2.xpose.msra.mxu0 0.0
    %5727 = vmatprep.subr.mxu0 0.0
    %5728 = vmatpush2.xpose.msra.mxu0 0.0
    %5729 = vmatprep.subr.mxu0 0.0
    %5730 = vmatpush2.xpose.msra.mxu0 0.0
    %5731 = vmatprep.subr.mxu0 0.0
    %5732 = vmatpush2.xpose.msra.mxu0 0.0
    %5733 = vmatprep.subr.mxu0 0.0
    %5734 = vmatpush2.xpose.msra.mxu0 0.0
    %5735 = vmatprep.subr.mxu0 0.0
    %5736 = vmatpush2.xpose.msra.mxu0 0.0
    %5737 = vmatprep.subr.mxu0 0.0
    %5738 = vmatpush2.xpose.msra.mxu0 0.0
    %5739 = vmatprep.subr.mxu0 0.0
    %5740 = vmatpush2.xpose.msra.mxu0 0.0
    %5741 = vmatprep.subr.mxu0 0.0
    %5742 = vmatpush2.xpose.msra.mxu0 0.0
    %5743 = vmatprep.subr.mxu0 0.0
    %5744 = vmatpush2.xpose.msra.mxu0 0.0
    %5745 = vmatprep.subr.mxu0 0.0
    %5746 = vmatpush2.xpose.msra.mxu0 0.0
    %5747 = vmatprep.subr.mxu0 0.0
    %5748 = vmatpush2.xpose.msra.mxu0 0.0
    %5749 = vmatprep.subr.mxu0 0.0
    %5750 = vmatpush2.xpose.msra.mxu0 0.0
    %5751 = vmatprep.subr.mxu0 0.0
    %5752 = vmatpush2.xpose.msra.mxu0 0.0
    %5753 = vmatprep.subr.mxu0 0.0
    %5754 = vmatpush2.xpose.msra.mxu0 0.0
    %5755 = vmatprep.subr.mxu0 0.0
    %5756 = vmatpush2.xpose.msra.mxu0 0.0
    %5757 = vmatprep.mubr.f32.mxu0 0.0
    %5758 = vmatmul.mubr.f32.gmra.mxu0 %v5689
    %v5759 = vpop.f32.mrf.mxu0
    %v5760 = vadd.f32 0.0, %v5759
    %v5761 = vpop.f32.mrf.mxu0
    %5762 = vdwg.mxu0
    %5763 = vrot.lane.b32.xlu0 %v266, 96
    %v5764 = vpop.permute.xlu0 %5763
    %5765 = vrot.lane.b32.xlu0 %v187, 32
    %v5766 = vpop.permute.xlu0 %5765
    %v5767 = vsel %vm282, %v5764, 0
    %v5769 = vsel %vm282, %v5766, 0
    %5771 = vmatprep.subr.mxu0 0.0
    %5772 = vmatpush1.xpose.msra.mxu0 0.0
    %5773 = vmatprep.subr.mxu0 0.0
    %5774 = vmatpush1.xpose.msra.mxu0 0.0
    %5775 = vmatprep.subr.mxu0 0.0
    %5776 = vmatpush1.xpose.msra.mxu0 0.0
    %5777 = vmatprep.subr.mxu0 0.0
    %5778 = vmatpush1.xpose.msra.mxu0 0.0
    %5779 = vmatprep.subr.mxu0 0.0
    %5780 = vmatpush1.xpose.msra.mxu0 0.0
    %5781 = vmatprep.subr.mxu0 0.0
    %5782 = vmatpush1.xpose.msra.mxu0 0.0
    %5783 = vmatprep.subr.mxu0 0.0
    %5784 = vmatpush1.xpose.msra.mxu0 0.0
    %5785 = vmatprep.subr.mxu0 0.0
    %5786 = vmatpush1.xpose.msra.mxu0 0.0
    %5787 = vmatprep.subr.mxu0 0.0
    %5788 = vmatpush1.xpose.msra.mxu0 0.0
    %5789 = vmatprep.subr.mxu0 0.0
    %5790 = vmatpush1.xpose.msra.mxu0 0.0
    %5791 = vmatprep.subr.mxu0 0.0
    %5792 = vmatpush1.xpose.msra.mxu0 0.0
    %5793 = vmatprep.subr.mxu0 0.0
    %5794 = vmatpush1.xpose.msra.mxu0 0.0
    %5795 = vmatprep.subr.mxu0 0.0
    %5796 = vmatpush1.xpose.msra.mxu0 0.0
    %5797 = vmatprep.subr.mxu0 0.0
    %5798 = vmatpush1.xpose.msra.mxu0 0.0
    %5799 = vmatprep.subr.mxu0 0.0
    %5800 = vmatpush1.xpose.msra.mxu0 0.0
    %5801 = vmatprep.subr.mxu0 0.0
    %5802 = vmatpush1.xpose.msra.mxu0 %v5769
    %5803 = vmatprep.subr.mxu0 0.0
    %5804 = vmatpush2.xpose.msra.mxu0 0.0
    %5805 = vmatprep.subr.mxu0 0.0
    %5806 = vmatpush2.xpose.msra.mxu0 0.0
    %5807 = vmatprep.subr.mxu0 0.0
    %5808 = vmatpush2.xpose.msra.mxu0 0.0
    %5809 = vmatprep.subr.mxu0 0.0
    %5810 = vmatpush2.xpose.msra.mxu0 0.0
    %5811 = vmatprep.subr.mxu0 0.0
    %5812 = vmatpush2.xpose.msra.mxu0 0.0
    %5813 = vmatprep.subr.mxu0 0.0
    %5814 = vmatpush2.xpose.msra.mxu0 0.0
    %5815 = vmatprep.subr.mxu0 0.0
    %5816 = vmatpush2.xpose.msra.mxu0 0.0
    %5817 = vmatprep.subr.mxu0 0.0
    %5818 = vmatpush2.xpose.msra.mxu0 0.0
    %5819 = vmatprep.subr.mxu0 0.0
    %5820 = vmatpush2.xpose.msra.mxu0 0.0
    %5821 = vmatprep.subr.mxu0 0.0
    %5822 = vmatpush2.xpose.msra.mxu0 0.0
    %5823 = vmatprep.subr.mxu0 0.0
    %5824 = vmatpush2.xpose.msra.mxu0 0.0
    %5825 = vmatprep.subr.mxu0 0.0
    %5826 = vmatpush2.xpose.msra.mxu0 0.0
    %5827 = vmatprep.subr.mxu0 0.0
    %5828 = vmatpush2.xpose.msra.mxu0 0.0
    %5829 = vmatprep.subr.mxu0 0.0
    %5830 = vmatpush2.xpose.msra.mxu0 0.0
    %5831 = vmatprep.subr.mxu0 0.0
    %5832 = vmatpush2.xpose.msra.mxu0 0.0
    %5833 = vmatprep.subr.mxu0 0.0
    %5834 = vmatpush2.xpose.msra.mxu0 0.0
    %5835 = vmatprep.mubr.f32.mxu0 0.0
    %5836 = vmatmul.mubr.f32.gmra.mxu0 %v5767
    %v5837 = vpop.f32.mrf.mxu0
    %v5838 = vadd.f32 0.0, %v5837
    %v5839 = vpop.f32.mrf.mxu0
    %5840 = vdwg.mxu0
    %5841 = vrot.lane.b32.xlu0 %v267, 96
    %v5842 = vpop.permute.xlu0 %5841
    %5843 = vrot.lane.b32.xlu0 %v193, 32
    %v5844 = vpop.permute.xlu0 %5843
    %v5845 = vsel %vm282, %v5842, 0
    %v5847 = vsel %vm282, %v5844, 0
    %5849 = vmatprep.subr.mxu0 0.0
    %5850 = vmatpush1.xpose.msra.mxu0 0.0
    %5851 = vmatprep.subr.mxu0 0.0
    %5852 = vmatpush1.xpose.msra.mxu0 0.0
    %5853 = vmatprep.subr.mxu0 0.0
    %5854 = vmatpush1.xpose.msra.mxu0 0.0
    %5855 = vmatprep.subr.mxu0 0.0
    %5856 = vmatpush1.xpose.msra.mxu0 0.0
    %5857 = vmatprep.subr.mxu0 0.0
    %5858 = vmatpush1.xpose.msra.mxu0 0.0
    %5859 = vmatprep.subr.mxu0 0.0
    %5860 = vmatpush1.xpose.msra.mxu0 0.0
    %5861 = vmatprep.subr.mxu0 0.0
    %5862 = vmatpush1.xpose.msra.mxu0 0.0
    %5863 = vmatprep.subr.mxu0 0.0
    %5864 = vmatpush1.xpose.msra.mxu0 0.0
    %5865 = vmatprep.subr.mxu0 0.0
    %5866 = vmatpush1.xpose.msra.mxu0 0.0
    %5867 = vmatprep.subr.mxu0 0.0
    %5868 = vmatpush1.xpose.msra.mxu0 0.0
    %5869 = vmatprep.subr.mxu0 0.0
    %5870 = vmatpush1.xpose.msra.mxu0 0.0
    %5871 = vmatprep.subr.mxu0 0.0
    %5872 = vmatpush1.xpose.msra.mxu0 0.0
    %5873 = vmatprep.subr.mxu0 0.0
    %5874 = vmatpush1.xpose.msra.mxu0 0.0
    %5875 = vmatprep.subr.mxu0 0.0
    %5876 = vmatpush1.xpose.msra.mxu0 0.0
    %5877 = vmatprep.subr.mxu0 0.0
    %5878 = vmatpush1.xpose.msra.mxu0 0.0
    %5879 = vmatprep.subr.mxu0 0.0
    %5880 = vmatpush1.xpose.msra.mxu0 %v5847
    %5881 = vmatprep.subr.mxu0 0.0
    %5882 = vmatpush2.xpose.msra.mxu0 0.0
    %5883 = vmatprep.subr.mxu0 0.0
    %5884 = vmatpush2.xpose.msra.mxu0 0.0
    %5885 = vmatprep.subr.mxu0 0.0
    %5886 = vmatpush2.xpose.msra.mxu0 0.0
    %5887 = vmatprep.subr.mxu0 0.0
    %5888 = vmatpush2.xpose.msra.mxu0 0.0
    %5889 = vmatprep.subr.mxu0 0.0
    %5890 = vmatpush2.xpose.msra.mxu0 0.0
    %5891 = vmatprep.subr.mxu0 0.0
    %5892 = vmatpush2.xpose.msra.mxu0 0.0
    %5893 = vmatprep.subr.mxu0 0.0
    %5894 = vmatpush2.xpose.msra.mxu0 0.0
    %5895 = vmatprep.subr.mxu0 0.0
    %5896 = vmatpush2.xpose.msra.mxu0 0.0
    %5897 = vmatprep.subr.mxu0 0.0
    %5898 = vmatpush2.xpose.msra.mxu0 0.0
    %5899 = vmatprep.subr.mxu0 0.0
    %5900 = vmatpush2.xpose.msra.mxu0 0.0
    %5901 = vmatprep.subr.mxu0 0.0
    %5902 = vmatpush2.xpose.msra.mxu0 0.0
    %5903 = vmatprep.subr.mxu0 0.0
    %5904 = vmatpush2.xpose.msra.mxu0 0.0
    %5905 = vmatprep.subr.mxu0 0.0
    %5906 = vmatpush2.xpose.msra.mxu0 0.0
    %5907 = vmatprep.subr.mxu0 0.0
    %5908 = vmatpush2.xpose.msra.mxu0 0.0
    %5909 = vmatprep.subr.mxu0 0.0
    %5910 = vmatpush2.xpose.msra.mxu0 0.0
    %5911 = vmatprep.subr.mxu0 0.0
    %5912 = vmatpush2.xpose.msra.mxu0 0.0
    %5913 = vmatprep.mubr.f32.mxu0 0.0
    %5914 = vmatmul.mubr.f32.gmra.mxu0 %v5845
    %v5915 = vpop.f32.mrf.mxu0
    %v5916 = vadd.f32 0.0, %v5915
    %v5917 = vpop.f32.mrf.mxu0
    %5918 = vdwg.mxu0
    %5919 = vrot.lane.b32.xlu0 %v268, 96
    %v5920 = vpop.permute.xlu0 %5919
    %5921 = vrot.lane.b32.xlu0 %v199, 32
    %v5922 = vpop.permute.xlu0 %5921
    %v5923 = vsel %vm282, %v5920, 0
    %v5925 = vsel %vm282, %v5922, 0
    %5927 = vmatprep.subr.mxu0 0.0
    %5928 = vmatpush1.xpose.msra.mxu0 0.0
    %5929 = vmatprep.subr.mxu0 0.0
    %5930 = vmatpush1.xpose.msra.mxu0 0.0
    %5931 = vmatprep.subr.mxu0 0.0
    %5932 = vmatpush1.xpose.msra.mxu0 0.0
    %5933 = vmatprep.subr.mxu0 0.0
    %5934 = vmatpush1.xpose.msra.mxu0 0.0
    %5935 = vmatprep.subr.mxu0 0.0
    %5936 = vmatpush1.xpose.msra.mxu0 0.0
    %5937 = vmatprep.subr.mxu0 0.0
    %5938 = vmatpush1.xpose.msra.mxu0 0.0
    %5939 = vmatprep.subr.mxu0 0.0
    %5940 = vmatpush1.xpose.msra.mxu0 0.0
    %5941 = vmatprep.subr.mxu0 0.0
    %5942 = vmatpush1.xpose.msra.mxu0 0.0
    %5943 = vmatprep.subr.mxu0 0.0
    %5944 = vmatpush1.xpose.msra.mxu0 0.0
    %5945 = vmatprep.subr.mxu0 0.0
    %5946 = vmatpush1.xpose.msra.mxu0 0.0
    %5947 = vmatprep.subr.mxu0 0.0
    %5948 = vmatpush1.xpose.msra.mxu0 0.0
    %5949 = vmatprep.subr.mxu0 0.0
    %5950 = vmatpush1.xpose.msra.mxu0 0.0
    %5951 = vmatprep.subr.mxu0 0.0
    %5952 = vmatpush1.xpose.msra.mxu0 0.0
    %5953 = vmatprep.subr.mxu0 0.0
    %5954 = vmatpush1.xpose.msra.mxu0 0.0
    %5955 = vmatprep.subr.mxu0 0.0
    %5956 = vmatpush1.xpose.msra.mxu0 0.0
    %5957 = vmatprep.subr.mxu0 0.0
    %5958 = vmatpush1.xpose.msra.mxu0 %v5925
    %5959 = vmatprep.subr.mxu0 0.0
    %5960 = vmatpush2.xpose.msra.mxu0 0.0
    %5961 = vmatprep.subr.mxu0 0.0
    %5962 = vmatpush2.xpose.msra.mxu0 0.0
    %5963 = vmatprep.subr.mxu0 0.0
    %5964 = vmatpush2.xpose.msra.mxu0 0.0
    %5965 = vmatprep.subr.mxu0 0.0
    %5966 = vmatpush2.xpose.msra.mxu0 0.0
    %5967 = vmatprep.subr.mxu0 0.0
    %5968 = vmatpush2.xpose.msra.mxu0 0.0
    %5969 = vmatprep.subr.mxu0 0.0
    %5970 = vmatpush2.xpose.msra.mxu0 0.0
    %5971 = vmatprep.subr.mxu0 0.0
    %5972 = vmatpush2.xpose.msra.mxu0 0.0
    %5973 = vmatprep.subr.mxu0 0.0
    %5974 = vmatpush2.xpose.msra.mxu0 0.0
    %5975 = vmatprep.subr.mxu0 0.0
    %5976 = vmatpush2.xpose.msra.mxu0 0.0
    %5977 = vmatprep.subr.mxu0 0.0
    %5978 = vmatpush2.xpose.msra.mxu0 0.0
    %5979 = vmatprep.subr.mxu0 0.0
    %5980 = vmatpush2.xpose.msra.mxu0 0.0
    %5981 = vmatprep.subr.mxu0 0.0
    %5982 = vmatpush2.xpose.msra.mxu0 0.0
    %5983 = vmatprep.subr.mxu0 0.0
    %5984 = vmatpush2.xpose.msra.mxu0 0.0
    %5985 = vmatprep.subr.mxu0 0.0
    %5986 = vmatpush2.xpose.msra.mxu0 0.0
    %5987 = vmatprep.subr.mxu0 0.0
    %5988 = vmatpush2.xpose.msra.mxu0 0.0
    %5989 = vmatprep.subr.mxu0 0.0
    %5990 = vmatpush2.xpose.msra.mxu0 0.0
    %5991 = vmatprep.mubr.f32.mxu0 0.0
    %5992 = vmatmul.mubr.f32.gmra.mxu0 %v5923
    %v5993 = vpop.f32.mrf.mxu0
    %v5994 = vadd.f32 0.0, %v5993
    %v5995 = vpop.f32.mrf.mxu0
    %5996 = vdwg.mxu0
    %5997 = vrot.lane.b32.xlu0 %v269, 96
    %v5998 = vpop.permute.xlu0 %5997
    %5999 = vrot.lane.b32.xlu0 %v205, 32
    %v6000 = vpop.permute.xlu0 %5999
    %v6001 = vsel %vm282, %v5998, 0
    %v6003 = vsel %vm282, %v6000, 0
    %6005 = vmatprep.subr.mxu0 0.0
    %6006 = vmatpush1.xpose.msra.mxu0 0.0
    %6007 = vmatprep.subr.mxu0 0.0
    %6008 = vmatpush1.xpose.msra.mxu0 0.0
    %6009 = vmatprep.subr.mxu0 0.0
    %6010 = vmatpush1.xpose.msra.mxu0 0.0
    %6011 = vmatprep.subr.mxu0 0.0
    %6012 = vmatpush1.xpose.msra.mxu0 0.0
    %6013 = vmatprep.subr.mxu0 0.0
    %6014 = vmatpush1.xpose.msra.mxu0 0.0
    %6015 = vmatprep.subr.mxu0 0.0
    %6016 = vmatpush1.xpose.msra.mxu0 0.0
    %6017 = vmatprep.subr.mxu0 0.0
    %6018 = vmatpush1.xpose.msra.mxu0 0.0
    %6019 = vmatprep.subr.mxu0 0.0
    %6020 = vmatpush1.xpose.msra.mxu0 0.0
    %6021 = vmatprep.subr.mxu0 0.0
    %6022 = vmatpush1.xpose.msra.mxu0 0.0
    %6023 = vmatprep.subr.mxu0 0.0
    %6024 = vmatpush1.xpose.msra.mxu0 0.0
    %6025 = vmatprep.subr.mxu0 0.0
    %6026 = vmatpush1.xpose.msra.mxu0 0.0
    %6027 = vmatprep.subr.mxu0 0.0
    %6028 = vmatpush1.xpose.msra.mxu0 0.0
    %6029 = vmatprep.subr.mxu0 0.0
    %6030 = vmatpush1.xpose.msra.mxu0 0.0
    %6031 = vmatprep.subr.mxu0 0.0
    %6032 = vmatpush1.xpose.msra.mxu0 0.0
    %6033 = vmatprep.subr.mxu0 0.0
    %6034 = vmatpush1.xpose.msra.mxu0 0.0
    %6035 = vmatprep.subr.mxu0 0.0
    %6036 = vmatpush1.xpose.msra.mxu0 %v6003
    %6037 = vmatprep.subr.mxu0 0.0
    %6038 = vmatpush2.xpose.msra.mxu0 0.0
    %6039 = vmatprep.subr.mxu0 0.0
    %6040 = vmatpush2.xpose.msra.mxu0 0.0
    %6041 = vmatprep.subr.mxu0 0.0
    %6042 = vmatpush2.xpose.msra.mxu0 0.0
    %6043 = vmatprep.subr.mxu0 0.0
    %6044 = vmatpush2.xpose.msra.mxu0 0.0
    %6045 = vmatprep.subr.mxu0 0.0
    %6046 = vmatpush2.xpose.msra.mxu0 0.0
    %6047 = vmatprep.subr.mxu0 0.0
    %6048 = vmatpush2.xpose.msra.mxu0 0.0
    %6049 = vmatprep.subr.mxu0 0.0
    %6050 = vmatpush2.xpose.msra.mxu0 0.0
    %6051 = vmatprep.subr.mxu0 0.0
    %6052 = vmatpush2.xpose.msra.mxu0 0.0
    %6053 = vmatprep.subr.mxu0 0.0
    %6054 = vmatpush2.xpose.msra.mxu0 0.0
    %6055 = vmatprep.subr.mxu0 0.0
    %6056 = vmatpush2.xpose.msra.mxu0 0.0
    %6057 = vmatprep.subr.mxu0 0.0
    %6058 = vmatpush2.xpose.msra.mxu0 0.0
    %6059 = vmatprep.subr.mxu0 0.0
    %6060 = vmatpush2.xpose.msra.mxu0 0.0
    %6061 = vmatprep.subr.mxu0 0.0
    %6062 = vmatpush2.xpose.msra.mxu0 0.0
    %6063 = vmatprep.subr.mxu0 0.0
    %6064 = vmatpush2.xpose.msra.mxu0 0.0
    %6065 = vmatprep.subr.mxu0 0.0
    %6066 = vmatpush2.xpose.msra.mxu0 0.0
    %6067 = vmatprep.subr.mxu0 0.0
    %6068 = vmatpush2.xpose.msra.mxu0 0.0
    %6069 = vmatprep.mubr.f32.mxu0 0.0
    %6070 = vmatmul.mubr.f32.gmra.mxu0 %v6001
    %v6071 = vpop.f32.mrf.mxu0
    %v6072 = vadd.f32 0.0, %v6071
    %v6073 = vpop.f32.mrf.mxu0
    %6074 = vdwg.mxu0
    %6075 = vrot.lane.b32.xlu0 %v270, 96
    %v6076 = vpop.permute.xlu0 %6075
    %6077 = vrot.lane.b32.xlu0 %v211, 32
    %v6078 = vpop.permute.xlu0 %6077
    %v6079 = vsel %vm282, %v6076, 0
    %v6081 = vsel %vm282, %v6078, 0
    %6083 = vmatprep.subr.mxu0 0.0
    %6084 = vmatpush1.xpose.msra.mxu0 0.0
    %6085 = vmatprep.subr.mxu0 0.0
    %6086 = vmatpush1.xpose.msra.mxu0 0.0
    %6087 = vmatprep.subr.mxu0 0.0
    %6088 = vmatpush1.xpose.msra.mxu0 0.0
    %6089 = vmatprep.subr.mxu0 0.0
    %6090 = vmatpush1.xpose.msra.mxu0 0.0
    %6091 = vmatprep.subr.mxu0 0.0
    %6092 = vmatpush1.xpose.msra.mxu0 0.0
    %6093 = vmatprep.subr.mxu0 0.0
    %6094 = vmatpush1.xpose.msra.mxu0 0.0
    %6095 = vmatprep.subr.mxu0 0.0
    %6096 = vmatpush1.xpose.msra.mxu0 0.0
    %6097 = vmatprep.subr.mxu0 0.0
    %6098 = vmatpush1.xpose.msra.mxu0 0.0
    %6099 = vmatprep.subr.mxu0 0.0
    %6100 = vmatpush1.xpose.msra.mxu0 0.0
    %6101 = vmatprep.subr.mxu0 0.0
    %6102 = vmatpush1.xpose.msra.mxu0 0.0
    %6103 = vmatprep.subr.mxu0 0.0
    %6104 = vmatpush1.xpose.msra.mxu0 0.0
    %6105 = vmatprep.subr.mxu0 0.0
    %6106 = vmatpush1.xpose.msra.mxu0 0.0
    %6107 = vmatprep.subr.mxu0 0.0
    %6108 = vmatpush1.xpose.msra.mxu0 0.0
    %6109 = vmatprep.subr.mxu0 0.0
    %6110 = vmatpush1.xpose.msra.mxu0 0.0
    %6111 = vmatprep.subr.mxu0 0.0
    %6112 = vmatpush1.xpose.msra.mxu0 0.0
    %6113 = vmatprep.subr.mxu0 0.0
    %6114 = vmatpush1.xpose.msra.mxu0 %v6081
    %6115 = vmatprep.subr.mxu0 0.0
    %6116 = vmatpush2.xpose.msra.mxu0 0.0
    %6117 = vmatprep.subr.mxu0 0.0
    %6118 = vmatpush2.xpose.msra.mxu0 0.0
    %6119 = vmatprep.subr.mxu0 0.0
    %6120 = vmatpush2.xpose.msra.mxu0 0.0
    %6121 = vmatprep.subr.mxu0 0.0
    %6122 = vmatpush2.xpose.msra.mxu0 0.0
    %6123 = vmatprep.subr.mxu0 0.0
    %6124 = vmatpush2.xpose.msra.mxu0 0.0
    %6125 = vmatprep.subr.mxu0 0.0
    %6126 = vmatpush2.xpose.msra.mxu0 0.0
    %6127 = vmatprep.subr.mxu0 0.0
    %6128 = vmatpush2.xpose.msra.mxu0 0.0
    %6129 = vmatprep.subr.mxu0 0.0
    %6130 = vmatpush2.xpose.msra.mxu0 0.0
    %6131 = vmatprep.subr.mxu0 0.0
    %6132 = vmatpush2.xpose.msra.mxu0 0.0
    %6133 = vmatprep.subr.mxu0 0.0
    %6134 = vmatpush2.xpose.msra.mxu0 0.0
    %6135 = vmatprep.subr.mxu0 0.0
    %6136 = vmatpush2.xpose.msra.mxu0 0.0
    %6137 = vmatprep.subr.mxu0 0.0
    %6138 = vmatpush2.xpose.msra.mxu0 0.0
    %6139 = vmatprep.subr.mxu0 0.0
    %6140 = vmatpush2.xpose.msra.mxu0 0.0
    %6141 = vmatprep.subr.mxu0 0.0
    %6142 = vmatpush2.xpose.msra.mxu0 0.0
    %6143 = vmatprep.subr.mxu0 0.0
    %6144 = vmatpush2.xpose.msra.mxu0 0.0
    %6145 = vmatprep.subr.mxu0 0.0
    %6146 = vmatpush2.xpose.msra.mxu0 0.0
    %6147 = vmatprep.mubr.f32.mxu0 0.0
    %6148 = vmatmul.mubr.f32.gmra.mxu0 %v6079
    %v6149 = vpop.f32.mrf.mxu0
    %v6150 = vadd.f32 0.0, %v6149
    %v6151 = vpop.f32.mrf.mxu0
    %6152 = vdwg.mxu0
    %6153 = vrot.lane.b32.xlu0 %v271, 96
    %v6154 = vpop.permute.xlu0 %6153
    %6155 = vrot.lane.b32.xlu0 %v217, 32
    %v6156 = vpop.permute.xlu0 %6155
    %v6157 = vsel %vm282, %v6154, 0
    %v6159 = vsel %vm282, %v6156, 0
    %6161 = vmatprep.subr.mxu0 0.0
    %6162 = vmatpush1.xpose.msra.mxu0 0.0
    %6163 = vmatprep.subr.mxu0 0.0
    %6164 = vmatpush1.xpose.msra.mxu0 0.0
    %6165 = vmatprep.subr.mxu0 0.0
    %6166 = vmatpush1.xpose.msra.mxu0 0.0
    %6167 = vmatprep.subr.mxu0 0.0
    %6168 = vmatpush1.xpose.msra.mxu0 0.0
    %6169 = vmatprep.subr.mxu0 0.0
    %6170 = vmatpush1.xpose.msra.mxu0 0.0
    %6171 = vmatprep.subr.mxu0 0.0
    %6172 = vmatpush1.xpose.msra.mxu0 0.0
    %6173 = vmatprep.subr.mxu0 0.0
    %6174 = vmatpush1.xpose.msra.mxu0 0.0
    %6175 = vmatprep.subr.mxu0 0.0
    %6176 = vmatpush1.xpose.msra.mxu0 0.0
    %6177 = vmatprep.subr.mxu0 0.0
    %6178 = vmatpush1.xpose.msra.mxu0 0.0
    %6179 = vmatprep.subr.mxu0 0.0
    %6180 = vmatpush1.xpose.msra.mxu0 0.0
    %6181 = vmatprep.subr.mxu0 0.0
    %6182 = vmatpush1.xpose.msra.mxu0 0.0
    %6183 = vmatprep.subr.mxu0 0.0
    %6184 = vmatpush1.xpose.msra.mxu0 0.0
    %6185 = vmatprep.subr.mxu0 0.0
    %6186 = vmatpush1.xpose.msra.mxu0 0.0
    %6187 = vmatprep.subr.mxu0 0.0
    %6188 = vmatpush1.xpose.msra.mxu0 0.0
    %6189 = vmatprep.subr.mxu0 0.0
    %6190 = vmatpush1.xpose.msra.mxu0 0.0
    %6191 = vmatprep.subr.mxu0 0.0
    %6192 = vmatpush1.xpose.msra.mxu0 %v6159
    %6193 = vmatprep.subr.mxu0 0.0
    %6194 = vmatpush2.xpose.msra.mxu0 0.0
    %6195 = vmatprep.subr.mxu0 0.0
    %6196 = vmatpush2.xpose.msra.mxu0 0.0
    %6197 = vmatprep.subr.mxu0 0.0
    %6198 = vmatpush2.xpose.msra.mxu0 0.0
    %6199 = vmatprep.subr.mxu0 0.0
    %6200 = vmatpush2.xpose.msra.mxu0 0.0
    %6201 = vmatprep.subr.mxu0 0.0
    %6202 = vmatpush2.xpose.msra.mxu0 0.0
    %6203 = vmatprep.subr.mxu0 0.0
    %6204 = vmatpush2.xpose.msra.mxu0 0.0
    %6205 = vmatprep.subr.mxu0 0.0
    %6206 = vmatpush2.xpose.msra.mxu0 0.0
    %6207 = vmatprep.subr.mxu0 0.0
    %6208 = vmatpush2.xpose.msra.mxu0 0.0
    %6209 = vmatprep.subr.mxu0 0.0
    %6210 = vmatpush2.xpose.msra.mxu0 0.0
    %6211 = vmatprep.subr.mxu0 0.0
    %6212 = vmatpush2.xpose.msra.mxu0 0.0
    %6213 = vmatprep.subr.mxu0 0.0
    %6214 = vmatpush2.xpose.msra.mxu0 0.0
    %6215 = vmatprep.subr.mxu0 0.0
    %6216 = vmatpush2.xpose.msra.mxu0 0.0
    %6217 = vmatprep.subr.mxu0 0.0
    %6218 = vmatpush2.xpose.msra.mxu0 0.0
    %6219 = vmatprep.subr.mxu0 0.0
    %6220 = vmatpush2.xpose.msra.mxu0 0.0
    %6221 = vmatprep.subr.mxu0 0.0
    %6222 = vmatpush2.xpose.msra.mxu0 0.0
    %6223 = vmatprep.subr.mxu0 0.0
    %6224 = vmatpush2.xpose.msra.mxu0 0.0
    %6225 = vmatprep.mubr.f32.mxu0 0.0
    %6226 = vmatmul.mubr.f32.gmra.mxu0 %v6157
    %v6227 = vpop.f32.mrf.mxu0
    %v6228 = vadd.f32 0.0, %v6227
    %v6229 = vpop.f32.mrf.mxu0
    %6230 = vdwg.mxu0
    %6231 = vrot.lane.b32.xlu0 %v272, 96
    %v6232 = vpop.permute.xlu0 %6231
    %6233 = vrot.lane.b32.xlu0 %v223, 32
    %v6234 = vpop.permute.xlu0 %6233
    %v6235 = vsel %vm282, %v6232, 0
    %v6237 = vsel %vm282, %v6234, 0
    %6239 = vmatprep.subr.mxu0 0.0
    %6240 = vmatpush1.xpose.msra.mxu0 0.0
    %6241 = vmatprep.subr.mxu0 0.0
    %6242 = vmatpush1.xpose.msra.mxu0 0.0
    %6243 = vmatprep.subr.mxu0 0.0
    %6244 = vmatpush1.xpose.msra.mxu0 0.0
    %6245 = vmatprep.subr.mxu0 0.0
    %6246 = vmatpush1.xpose.msra.mxu0 0.0
    %6247 = vmatprep.subr.mxu0 0.0
    %6248 = vmatpush1.xpose.msra.mxu0 0.0
    %6249 = vmatprep.subr.mxu0 0.0
    %6250 = vmatpush1.xpose.msra.mxu0 0.0
    %6251 = vmatprep.subr.mxu0 0.0
    %6252 = vmatpush1.xpose.msra.mxu0 0.0
    %6253 = vmatprep.subr.mxu0 0.0
    %6254 = vmatpush1.xpose.msra.mxu0 0.0
    %6255 = vmatprep.subr.mxu0 0.0
    %6256 = vmatpush1.xpose.msra.mxu0 0.0
    %6257 = vmatprep.subr.mxu0 0.0
    %6258 = vmatpush1.xpose.msra.mxu0 0.0
    %6259 = vmatprep.subr.mxu0 0.0
    %6260 = vmatpush1.xpose.msra.mxu0 0.0
    %6261 = vmatprep.subr.mxu0 0.0
    %6262 = vmatpush1.xpose.msra.mxu0 0.0
    %6263 = vmatprep.subr.mxu0 0.0
    %6264 = vmatpush1.xpose.msra.mxu0 0.0
    %6265 = vmatprep.subr.mxu0 0.0
    %6266 = vmatpush1.xpose.msra.mxu0 0.0
    %6267 = vmatprep.subr.mxu0 0.0
    %6268 = vmatpush1.xpose.msra.mxu0 0.0
    %6269 = vmatprep.subr.mxu0 0.0
    %6270 = vmatpush1.xpose.msra.mxu0 %v6237
    %6271 = vmatprep.subr.mxu0 0.0
    %6272 = vmatpush2.xpose.msra.mxu0 0.0
    %6273 = vmatprep.subr.mxu0 0.0
    %6274 = vmatpush2.xpose.msra.mxu0 0.0
    %6275 = vmatprep.subr.mxu0 0.0
    %6276 = vmatpush2.xpose.msra.mxu0 0.0
    %6277 = vmatprep.subr.mxu0 0.0
    %6278 = vmatpush2.xpose.msra.mxu0 0.0
    %6279 = vmatprep.subr.mxu0 0.0
    %6280 = vmatpush2.xpose.msra.mxu0 0.0
    %6281 = vmatprep.subr.mxu0 0.0
    %6282 = vmatpush2.xpose.msra.mxu0 0.0
    %6283 = vmatprep.subr.mxu0 0.0
    %6284 = vmatpush2.xpose.msra.mxu0 0.0
    %6285 = vmatprep.subr.mxu0 0.0
    %6286 = vmatpush2.xpose.msra.mxu0 0.0
    %6287 = vmatprep.subr.mxu0 0.0
    %6288 = vmatpush2.xpose.msra.mxu0 0.0
    %6289 = vmatprep.subr.mxu0 0.0
    %6290 = vmatpush2.xpose.msra.mxu0 0.0
    %6291 = vmatprep.subr.mxu0 0.0
    %6292 = vmatpush2.xpose.msra.mxu0 0.0
    %6293 = vmatprep.subr.mxu0 0.0
    %6294 = vmatpush2.xpose.msra.mxu0 0.0
    %6295 = vmatprep.subr.mxu0 0.0
    %6296 = vmatpush2.xpose.msra.mxu0 0.0
    %6297 = vmatprep.subr.mxu0 0.0
    %6298 = vmatpush2.xpose.msra.mxu0 0.0
    %6299 = vmatprep.subr.mxu0 0.0
    %6300 = vmatpush2.xpose.msra.mxu0 0.0
    %6301 = vmatprep.subr.mxu0 0.0
    %6302 = vmatpush2.xpose.msra.mxu0 0.0
    %6303 = vmatprep.mubr.f32.mxu0 0.0
    %6304 = vmatmul.mubr.f32.gmra.mxu0 %v6235
    %v6305 = vpop.f32.mrf.mxu0
    %v6306 = vadd.f32 0.0, %v6305
    %v6307 = vpop.f32.mrf.mxu0
    %6308 = vdwg.mxu0
    %6309 = vrot.lane.b32.xlu0 %v273, 96
    %v6310 = vpop.permute.xlu0 %6309
    %6311 = vrot.lane.b32.xlu0 %v229, 32
    %v6312 = vpop.permute.xlu0 %6311
    %v6313 = vsel %vm282, %v6310, 0
    %v6315 = vsel %vm282, %v6312, 0
    %6317 = vmatprep.subr.mxu0 0.0
    %6318 = vmatpush1.xpose.msra.mxu0 0.0
    %6319 = vmatprep.subr.mxu0 0.0
    %6320 = vmatpush1.xpose.msra.mxu0 0.0
    %6321 = vmatprep.subr.mxu0 0.0
    %6322 = vmatpush1.xpose.msra.mxu0 0.0
    %6323 = vmatprep.subr.mxu0 0.0
    %6324 = vmatpush1.xpose.msra.mxu0 0.0
    %6325 = vmatprep.subr.mxu0 0.0
    %6326 = vmatpush1.xpose.msra.mxu0 0.0
    %6327 = vmatprep.subr.mxu0 0.0
    %6328 = vmatpush1.xpose.msra.mxu0 0.0
    %6329 = vmatprep.subr.mxu0 0.0
    %6330 = vmatpush1.xpose.msra.mxu0 0.0
    %6331 = vmatprep.subr.mxu0 0.0
    %6332 = vmatpush1.xpose.msra.mxu0 0.0
    %6333 = vmatprep.subr.mxu0 0.0
    %6334 = vmatpush1.xpose.msra.mxu0 0.0
    %6335 = vmatprep.subr.mxu0 0.0
    %6336 = vmatpush1.xpose.msra.mxu0 0.0
    %6337 = vmatprep.subr.mxu0 0.0
    %6338 = vmatpush1.xpose.msra.mxu0 0.0
    %6339 = vmatprep.subr.mxu0 0.0
    %6340 = vmatpush1.xpose.msra.mxu0 0.0
    %6341 = vmatprep.subr.mxu0 0.0
    %6342 = vmatpush1.xpose.msra.mxu0 0.0
    %6343 = vmatprep.subr.mxu0 0.0
    %6344 = vmatpush1.xpose.msra.mxu0 0.0
    %6345 = vmatprep.subr.mxu0 0.0
    %6346 = vmatpush1.xpose.msra.mxu0 0.0
    %6347 = vmatprep.subr.mxu0 0.0
    %6348 = vmatpush1.xpose.msra.mxu0 %v6315
    %6349 = vmatprep.subr.mxu0 0.0
    %6350 = vmatpush2.xpose.msra.mxu0 0.0
    %6351 = vmatprep.subr.mxu0 0.0
    %6352 = vmatpush2.xpose.msra.mxu0 0.0
    %6353 = vmatprep.subr.mxu0 0.0
    %6354 = vmatpush2.xpose.msra.mxu0 0.0
    %6355 = vmatprep.subr.mxu0 0.0
    %6356 = vmatpush2.xpose.msra.mxu0 0.0
    %6357 = vmatprep.subr.mxu0 0.0
    %6358 = vmatpush2.xpose.msra.mxu0 0.0
    %6359 = vmatprep.subr.mxu0 0.0
    %6360 = vmatpush2.xpose.msra.mxu0 0.0
    %6361 = vmatprep.subr.mxu0 0.0
    %6362 = vmatpush2.xpose.msra.mxu0 0.0
    %6363 = vmatprep.subr.mxu0 0.0
    %6364 = vmatpush2.xpose.msra.mxu0 0.0
    %6365 = vmatprep.subr.mxu0 0.0
    %6366 = vmatpush2.xpose.msra.mxu0 0.0
    %6367 = vmatprep.subr.mxu0 0.0
    %6368 = vmatpush2.xpose.msra.mxu0 0.0
    %6369 = vmatprep.subr.mxu0 0.0
    %6370 = vmatpush2.xpose.msra.mxu0 0.0
    %6371 = vmatprep.subr.mxu0 0.0
    %6372 = vmatpush2.xpose.msra.mxu0 0.0
    %6373 = vmatprep.subr.mxu0 0.0
    %6374 = vmatpush2.xpose.msra.mxu0 0.0
    %6375 = vmatprep.subr.mxu0 0.0
    %6376 = vmatpush2.xpose.msra.mxu0 0.0
    %6377 = vmatprep.subr.mxu0 0.0
    %6378 = vmatpush2.xpose.msra.mxu0 0.0
    %6379 = vmatprep.subr.mxu0 0.0
    %6380 = vmatpush2.xpose.msra.mxu0 0.0
    %6381 = vmatprep.mubr.f32.mxu0 0.0
    %6382 = vmatmul.mubr.f32.gmra.mxu0 %v6313
    %v6383 = vpop.f32.mrf.mxu0
    %v6384 = vadd.f32 0.0, %v6383
    %v6385 = vpop.f32.mrf.mxu0
    %6386 = vdwg.mxu0
    %6387 = vrot.lane.b32.xlu0 %v274, 96
    %v6388 = vpop.permute.xlu0 %6387
    %6389 = vrot.lane.b32.xlu0 %v235, 32
    %v6390 = vpop.permute.xlu0 %6389
    %v6391 = vsel %vm282, %v6388, 0
    %v6393 = vsel %vm282, %v6390, 0
    %6395 = vmatprep.subr.mxu0 0.0
    %6396 = vmatpush1.xpose.msra.mxu0 0.0
    %6397 = vmatprep.subr.mxu0 0.0
    %6398 = vmatpush1.xpose.msra.mxu0 0.0
    %6399 = vmatprep.subr.mxu0 0.0
    %6400 = vmatpush1.xpose.msra.mxu0 0.0
    %6401 = vmatprep.subr.mxu0 0.0
    %6402 = vmatpush1.xpose.msra.mxu0 0.0
    %6403 = vmatprep.subr.mxu0 0.0
    %6404 = vmatpush1.xpose.msra.mxu0 0.0
    %6405 = vmatprep.subr.mxu0 0.0
    %6406 = vmatpush1.xpose.msra.mxu0 0.0
    %6407 = vmatprep.subr.mxu0 0.0
    %6408 = vmatpush1.xpose.msra.mxu0 0.0
    %6409 = vmatprep.subr.mxu0 0.0
    %6410 = vmatpush1.xpose.msra.mxu0 0.0
    %6411 = vmatprep.subr.mxu0 0.0
    %6412 = vmatpush1.xpose.msra.mxu0 0.0
    %6413 = vmatprep.subr.mxu0 0.0
    %6414 = vmatpush1.xpose.msra.mxu0 0.0
    %6415 = vmatprep.subr.mxu0 0.0
    %6416 = vmatpush1.xpose.msra.mxu0 0.0
    %6417 = vmatprep.subr.mxu0 0.0
    %6418 = vmatpush1.xpose.msra.mxu0 0.0
    %6419 = vmatprep.subr.mxu0 0.0
    %6420 = vmatpush1.xpose.msra.mxu0 0.0
    %6421 = vmatprep.subr.mxu0 0.0
    %6422 = vmatpush1.xpose.msra.mxu0 0.0
    %6423 = vmatprep.subr.mxu0 0.0
    %6424 = vmatpush1.xpose.msra.mxu0 0.0
    %6425 = vmatprep.subr.mxu0 0.0
    %6426 = vmatpush1.xpose.msra.mxu0 %v6393
    %6427 = vmatprep.subr.mxu0 0.0
    %6428 = vmatpush2.xpose.msra.mxu0 0.0
    %6429 = vmatprep.subr.mxu0 0.0
    %6430 = vmatpush2.xpose.msra.mxu0 0.0
    %6431 = vmatprep.subr.mxu0 0.0
    %6432 = vmatpush2.xpose.msra.mxu0 0.0
    %6433 = vmatprep.subr.mxu0 0.0
    %6434 = vmatpush2.xpose.msra.mxu0 0.0
    %6435 = vmatprep.subr.mxu0 0.0
    %6436 = vmatpush2.xpose.msra.mxu0 0.0
    %6437 = vmatprep.subr.mxu0 0.0
    %6438 = vmatpush2.xpose.msra.mxu0 0.0
    %6439 = vmatprep.subr.mxu0 0.0
    %6440 = vmatpush2.xpose.msra.mxu0 0.0
    %6441 = vmatprep.subr.mxu0 0.0
    %6442 = vmatpush2.xpose.msra.mxu0 0.0
    %6443 = vmatprep.subr.mxu0 0.0
    %6444 = vmatpush2.xpose.msra.mxu0 0.0
    %6445 = vmatprep.subr.mxu0 0.0
    %6446 = vmatpush2.xpose.msra.mxu0 0.0
    %6447 = vmatprep.subr.mxu0 0.0
    %6448 = vmatpush2.xpose.msra.mxu0 0.0
    %6449 = vmatprep.subr.mxu0 0.0
    %6450 = vmatpush2.xpose.msra.mxu0 0.0
    %6451 = vmatprep.subr.mxu0 0.0
    %6452 = vmatpush2.xpose.msra.mxu0 0.0
    %6453 = vmatprep.subr.mxu0 0.0
    %6454 = vmatpush2.xpose.msra.mxu0 0.0
    %6455 = vmatprep.subr.mxu0 0.0
    %6456 = vmatpush2.xpose.msra.mxu0 0.0
    %6457 = vmatprep.subr.mxu0 0.0
    %6458 = vmatpush2.xpose.msra.mxu0 0.0
    %6459 = vmatprep.mubr.f32.mxu0 0.0
    %6460 = vmatmul.mubr.f32.gmra.mxu0 %v6391
    %v6461 = vpop.f32.mrf.mxu0
    %v6462 = vadd.f32 0.0, %v6461
    %v6463 = vpop.f32.mrf.mxu0
    %6464 = vdwg.mxu0
    %6465 = vrot.lane.b32.xlu0 %v275, 96
    %v6466 = vpop.permute.xlu0 %6465
    %6467 = vrot.lane.b32.xlu0 %v241, 32
    %v6468 = vpop.permute.xlu0 %6467
    %v6469 = vsel %vm282, %v6466, 0
    %v6471 = vsel %vm282, %v6468, 0
    %6473 = vmatprep.subr.mxu0 0.0
    %6474 = vmatpush1.xpose.msra.mxu0 0.0
    %6475 = vmatprep.subr.mxu0 0.0
    %6476 = vmatpush1.xpose.msra.mxu0 0.0
    %6477 = vmatprep.subr.mxu0 0.0
    %6478 = vmatpush1.xpose.msra.mxu0 0.0
    %6479 = vmatprep.subr.mxu0 0.0
    %6480 = vmatpush1.xpose.msra.mxu0 0.0
    %6481 = vmatprep.subr.mxu0 0.0
    %6482 = vmatpush1.xpose.msra.mxu0 0.0
    %6483 = vmatprep.subr.mxu0 0.0
    %6484 = vmatpush1.xpose.msra.mxu0 0.0
    %6485 = vmatprep.subr.mxu0 0.0
    %6486 = vmatpush1.xpose.msra.mxu0 0.0
    %6487 = vmatprep.subr.mxu0 0.0
    %6488 = vmatpush1.xpose.msra.mxu0 0.0
    %6489 = vmatprep.subr.mxu0 0.0
    %6490 = vmatpush1.xpose.msra.mxu0 0.0
    %6491 = vmatprep.subr.mxu0 0.0
    %6492 = vmatpush1.xpose.msra.mxu0 0.0
    %6493 = vmatprep.subr.mxu0 0.0
    %6494 = vmatpush1.xpose.msra.mxu0 0.0
    %6495 = vmatprep.subr.mxu0 0.0
    %6496 = vmatpush1.xpose.msra.mxu0 0.0
    %6497 = vmatprep.subr.mxu0 0.0
    %6498 = vmatpush1.xpose.msra.mxu0 0.0
    %6499 = vmatprep.subr.mxu0 0.0
    %6500 = vmatpush1.xpose.msra.mxu0 0.0
    %6501 = vmatprep.subr.mxu0 0.0
    %6502 = vmatpush1.xpose.msra.mxu0 0.0
    %6503 = vmatprep.subr.mxu0 0.0
    %6504 = vmatpush1.xpose.msra.mxu0 %v6471
    %6505 = vmatprep.subr.mxu0 0.0
    %6506 = vmatpush2.xpose.msra.mxu0 0.0
    %6507 = vmatprep.subr.mxu0 0.0
    %6508 = vmatpush2.xpose.msra.mxu0 0.0
    %6509 = vmatprep.subr.mxu0 0.0
    %6510 = vmatpush2.xpose.msra.mxu0 0.0
    %6511 = vmatprep.subr.mxu0 0.0
    %6512 = vmatpush2.xpose.msra.mxu0 0.0
    %6513 = vmatprep.subr.mxu0 0.0
    %6514 = vmatpush2.xpose.msra.mxu0 0.0
    %6515 = vmatprep.subr.mxu0 0.0
    %6516 = vmatpush2.xpose.msra.mxu0 0.0
    %6517 = vmatprep.subr.mxu0 0.0
    %6518 = vmatpush2.xpose.msra.mxu0 0.0
    %6519 = vmatprep.subr.mxu0 0.0
    %6520 = vmatpush2.xpose.msra.mxu0 0.0
    %6521 = vmatprep.subr.mxu0 0.0
    %6522 = vmatpush2.xpose.msra.mxu0 0.0
    %6523 = vmatprep.subr.mxu0 0.0
    %6524 = vmatpush2.xpose.msra.mxu0 0.0
    %6525 = vmatprep.subr.mxu0 0.0
    %6526 = vmatpush2.xpose.msra.mxu0 0.0
    %6527 = vmatprep.subr.mxu0 0.0
    %6528 = vmatpush2.xpose.msra.mxu0 0.0
    %6529 = vmatprep.subr.mxu0 0.0
    %6530 = vmatpush2.xpose.msra.mxu0 0.0
    %6531 = vmatprep.subr.mxu0 0.0
    %6532 = vmatpush2.xpose.msra.mxu0 0.0
    %6533 = vmatprep.subr.mxu0 0.0
    %6534 = vmatpush2.xpose.msra.mxu0 0.0
    %6535 = vmatprep.subr.mxu0 0.0
    %6536 = vmatpush2.xpose.msra.mxu0 0.0
    %6537 = vmatprep.mubr.f32.mxu0 0.0
    %6538 = vmatmul.mubr.f32.gmra.mxu0 %v6469
    %v6539 = vpop.f32.mrf.mxu0
    %v6540 = vadd.f32 0.0, %v6539
    %v6541 = vpop.f32.mrf.mxu0
    %6542 = vdwg.mxu0
    %6543 = vrot.lane.b32.xlu0 %v276, 96
    %v6544 = vpop.permute.xlu0 %6543
    %6545 = vrot.lane.b32.xlu0 %v247, 32
    %v6546 = vpop.permute.xlu0 %6545
    %v6547 = vsel %vm282, %v6544, 0
    %v6549 = vsel %vm282, %v6546, 0
    %6551 = vmatprep.subr.mxu0 0.0
    %6552 = vmatpush1.xpose.msra.mxu0 0.0
    %6553 = vmatprep.subr.mxu0 0.0
    %6554 = vmatpush1.xpose.msra.mxu0 0.0
    %6555 = vmatprep.subr.mxu0 0.0
    %6556 = vmatpush1.xpose.msra.mxu0 0.0
    %6557 = vmatprep.subr.mxu0 0.0
    %6558 = vmatpush1.xpose.msra.mxu0 0.0
    %6559 = vmatprep.subr.mxu0 0.0
    %6560 = vmatpush1.xpose.msra.mxu0 0.0
    %6561 = vmatprep.subr.mxu0 0.0
    %6562 = vmatpush1.xpose.msra.mxu0 0.0
    %6563 = vmatprep.subr.mxu0 0.0
    %6564 = vmatpush1.xpose.msra.mxu0 0.0
    %6565 = vmatprep.subr.mxu0 0.0
    %6566 = vmatpush1.xpose.msra.mxu0 0.0
    %6567 = vmatprep.subr.mxu0 0.0
    %6568 = vmatpush1.xpose.msra.mxu0 0.0
    %6569 = vmatprep.subr.mxu0 0.0
    %6570 = vmatpush1.xpose.msra.mxu0 0.0
    %6571 = vmatprep.subr.mxu0 0.0
    %6572 = vmatpush1.xpose.msra.mxu0 0.0
    %6573 = vmatprep.subr.mxu0 0.0
    %6574 = vmatpush1.xpose.msra.mxu0 0.0
    %6575 = vmatprep.subr.mxu0 0.0
    %6576 = vmatpush1.xpose.msra.mxu0 0.0
    %6577 = vmatprep.subr.mxu0 0.0
    %6578 = vmatpush1.xpose.msra.mxu0 0.0
    %6579 = vmatprep.subr.mxu0 0.0
    %6580 = vmatpush1.xpose.msra.mxu0 0.0
    %6581 = vmatprep.subr.mxu0 0.0
    %6582 = vmatpush1.xpose.msra.mxu0 %v6549
    %6583 = vmatprep.subr.mxu0 0.0
    %6584 = vmatpush2.xpose.msra.mxu0 0.0
    %6585 = vmatprep.subr.mxu0 0.0
    %6586 = vmatpush2.xpose.msra.mxu0 0.0
    %6587 = vmatprep.subr.mxu0 0.0
    %6588 = vmatpush2.xpose.msra.mxu0 0.0
    %6589 = vmatprep.subr.mxu0 0.0
    %6590 = vmatpush2.xpose.msra.mxu0 0.0
    %6591 = vmatprep.subr.mxu0 0.0
    %6592 = vmatpush2.xpose.msra.mxu0 0.0
    %6593 = vmatprep.subr.mxu0 0.0
    %6594 = vmatpush2.xpose.msra.mxu0 0.0
    %6595 = vmatprep.subr.mxu0 0.0
    %6596 = vmatpush2.xpose.msra.mxu0 0.0
    %6597 = vmatprep.subr.mxu0 0.0
    %6598 = vmatpush2.xpose.msra.mxu0 0.0
    %6599 = vmatprep.subr.mxu0 0.0
    %6600 = vmatpush2.xpose.msra.mxu0 0.0
    %6601 = vmatprep.subr.mxu0 0.0
    %6602 = vmatpush2.xpose.msra.mxu0 0.0
    %6603 = vmatprep.subr.mxu0 0.0
    %6604 = vmatpush2.xpose.msra.mxu0 0.0
    %6605 = vmatprep.subr.mxu0 0.0
    %6606 = vmatpush2.xpose.msra.mxu0 0.0
    %6607 = vmatprep.subr.mxu0 0.0
    %6608 = vmatpush2.xpose.msra.mxu0 0.0
    %6609 = vmatprep.subr.mxu0 0.0
    %6610 = vmatpush2.xpose.msra.mxu0 0.0
    %6611 = vmatprep.subr.mxu0 0.0
    %6612 = vmatpush2.xpose.msra.mxu0 0.0
    %6613 = vmatprep.subr.mxu0 0.0
    %6614 = vmatpush2.xpose.msra.mxu0 0.0
    %6615 = vmatprep.mubr.f32.mxu0 0.0
    %6616 = vmatmul.mubr.f32.gmra.mxu0 %v6547
    %v6617 = vpop.f32.mrf.mxu0
    %v6618 = vadd.f32 0.0, %v6617
    %v6619 = vpop.f32.mrf.mxu0
    %6620 = vdwg.mxu0
    %6621 = vrot.lane.b32.xlu0 %v277, 96
    %v6622 = vpop.permute.xlu0 %6621
    %6623 = vrot.lane.b32.xlu0 %v253, 32
    %v6624 = vpop.permute.xlu0 %6623
    %v6625 = vsel %vm282, %v6622, 0
    %v6627 = vsel %vm282, %v6624, 0
    %6629 = vmatprep.subr.mxu0 0.0
    %6630 = vmatpush1.xpose.msra.mxu0 0.0
    %6631 = vmatprep.subr.mxu0 0.0
    %6632 = vmatpush1.xpose.msra.mxu0 0.0
    %6633 = vmatprep.subr.mxu0 0.0
    %6634 = vmatpush1.xpose.msra.mxu0 0.0
    %6635 = vmatprep.subr.mxu0 0.0
    %6636 = vmatpush1.xpose.msra.mxu0 0.0
    %6637 = vmatprep.subr.mxu0 0.0
    %6638 = vmatpush1.xpose.msra.mxu0 0.0
    %6639 = vmatprep.subr.mxu0 0.0
    %6640 = vmatpush1.xpose.msra.mxu0 0.0
    %6641 = vmatprep.subr.mxu0 0.0
    %6642 = vmatpush1.xpose.msra.mxu0 0.0
    %6643 = vmatprep.subr.mxu0 0.0
    %6644 = vmatpush1.xpose.msra.mxu0 0.0
    %6645 = vmatprep.subr.mxu0 0.0
    %6646 = vmatpush1.xpose.msra.mxu0 0.0
    %6647 = vmatprep.subr.mxu0 0.0
    %6648 = vmatpush1.xpose.msra.mxu0 0.0
    %6649 = vmatprep.subr.mxu0 0.0
    %6650 = vmatpush1.xpose.msra.mxu0 0.0
    %6651 = vmatprep.subr.mxu0 0.0
    %6652 = vmatpush1.xpose.msra.mxu0 0.0
    %6653 = vmatprep.subr.mxu0 0.0
    %6654 = vmatpush1.xpose.msra.mxu0 0.0
    %6655 = vmatprep.subr.mxu0 0.0
    %6656 = vmatpush1.xpose.msra.mxu0 0.0
    %6657 = vmatprep.subr.mxu0 0.0
    %6658 = vmatpush1.xpose.msra.mxu0 0.0
    %6659 = vmatprep.subr.mxu0 0.0
    %6660 = vmatpush1.xpose.msra.mxu0 %v6627
    %6661 = vmatprep.subr.mxu0 0.0
    %6662 = vmatpush2.xpose.msra.mxu0 0.0
    %6663 = vmatprep.subr.mxu0 0.0
    %6664 = vmatpush2.xpose.msra.mxu0 0.0
    %6665 = vmatprep.subr.mxu0 0.0
    %6666 = vmatpush2.xpose.msra.mxu0 0.0
    %6667 = vmatprep.subr.mxu0 0.0
    %6668 = vmatpush2.xpose.msra.mxu0 0.0
    %6669 = vmatprep.subr.mxu0 0.0
    %6670 = vmatpush2.xpose.msra.mxu0 0.0
    %6671 = vmatprep.subr.mxu0 0.0
    %6672 = vmatpush2.xpose.msra.mxu0 0.0
    %6673 = vmatprep.subr.mxu0 0.0
    %6674 = vmatpush2.xpose.msra.mxu0 0.0
    %6675 = vmatprep.subr.mxu0 0.0
    %6676 = vmatpush2.xpose.msra.mxu0 0.0
    %6677 = vmatprep.subr.mxu0 0.0
    %6678 = vmatpush2.xpose.msra.mxu0 0.0
    %6679 = vmatprep.subr.mxu0 0.0
    %6680 = vmatpush2.xpose.msra.mxu0 0.0
    %6681 = vmatprep.subr.mxu0 0.0
    %6682 = vmatpush2.xpose.msra.mxu0 0.0
    %6683 = vmatprep.subr.mxu0 0.0
    %6684 = vmatpush2.xpose.msra.mxu0 0.0
    %6685 = vmatprep.subr.mxu0 0.0
    %6686 = vmatpush2.xpose.msra.mxu0 0.0
    %6687 = vmatprep.subr.mxu0 0.0
    %6688 = vmatpush2.xpose.msra.mxu0 0.0
    %6689 = vmatprep.subr.mxu0 0.0
    %6690 = vmatpush2.xpose.msra.mxu0 0.0
    %6691 = vmatprep.subr.mxu0 0.0
    %6692 = vmatpush2.xpose.msra.mxu0 0.0
    %6693 = vmatprep.mubr.f32.mxu0 0.0
    %6694 = vmatmul.mubr.f32.gmra.mxu0 %v6625
    %v6695 = vpop.f32.mrf.mxu0
    %v6696 = vadd.f32 0.0, %v6695
    %v6697 = vpop.f32.mrf.mxu0
    %6698 = vdwg.mxu0
    %6699 = vrot.lane.b32.xlu0 %v278, 96
    %v6700 = vpop.permute.xlu0 %6699
    %6701 = vrot.lane.b32.xlu0 %v259, 32
    %v6702 = vpop.permute.xlu0 %6701
    %v6703 = vsel %vm282, %v6700, 0
    %v6705 = vsel %vm282, %v6702, 0
    %6707 = vmatprep.subr.mxu0 0.0
    %6708 = vmatpush1.xpose.msra.mxu0 0.0
    %6709 = vmatprep.subr.mxu0 0.0
    %6710 = vmatpush1.xpose.msra.mxu0 0.0
    %6711 = vmatprep.subr.mxu0 0.0
    %6712 = vmatpush1.xpose.msra.mxu0 0.0
    %6713 = vmatprep.subr.mxu0 0.0
    %6714 = vmatpush1.xpose.msra.mxu0 0.0
    %6715 = vmatprep.subr.mxu0 0.0
    %6716 = vmatpush1.xpose.msra.mxu0 0.0
    %6717 = vmatprep.subr.mxu0 0.0
    %6718 = vmatpush1.xpose.msra.mxu0 0.0
    %6719 = vmatprep.subr.mxu0 0.0
    %6720 = vmatpush1.xpose.msra.mxu0 0.0
    %6721 = vmatprep.subr.mxu0 0.0
    %6722 = vmatpush1.xpose.msra.mxu0 0.0
    %6723 = vmatprep.subr.mxu0 0.0
    %6724 = vmatpush1.xpose.msra.mxu0 0.0
    %6725 = vmatprep.subr.mxu0 0.0
    %6726 = vmatpush1.xpose.msra.mxu0 0.0
    %6727 = vmatprep.subr.mxu0 0.0
    %6728 = vmatpush1.xpose.msra.mxu0 0.0
    %6729 = vmatprep.subr.mxu0 0.0
    %6730 = vmatpush1.xpose.msra.mxu0 0.0
    %6731 = vmatprep.subr.mxu0 0.0
    %6732 = vmatpush1.xpose.msra.mxu0 0.0
    %6733 = vmatprep.subr.mxu0 0.0
    %6734 = vmatpush1.xpose.msra.mxu0 0.0
    %6735 = vmatprep.subr.mxu0 0.0
    %6736 = vmatpush1.xpose.msra.mxu0 0.0
    %6737 = vmatprep.subr.mxu0 0.0
    %6738 = vmatpush1.xpose.msra.mxu0 %v6705
    %6739 = vmatprep.subr.mxu0 0.0
    %6740 = vmatpush2.xpose.msra.mxu0 0.0
    %6741 = vmatprep.subr.mxu0 0.0
    %6742 = vmatpush2.xpose.msra.mxu0 0.0
    %6743 = vmatprep.subr.mxu0 0.0
    %6744 = vmatpush2.xpose.msra.mxu0 0.0
    %6745 = vmatprep.subr.mxu0 0.0
    %6746 = vmatpush2.xpose.msra.mxu0 0.0
    %6747 = vmatprep.subr.mxu0 0.0
    %6748 = vmatpush2.xpose.msra.mxu0 0.0
    %6749 = vmatprep.subr.mxu0 0.0
    %6750 = vmatpush2.xpose.msra.mxu0 0.0
    %6751 = vmatprep.subr.mxu0 0.0
    %6752 = vmatpush2.xpose.msra.mxu0 0.0
    %6753 = vmatprep.subr.mxu0 0.0
    %6754 = vmatpush2.xpose.msra.mxu0 0.0
    %6755 = vmatprep.subr.mxu0 0.0
    %6756 = vmatpush2.xpose.msra.mxu0 0.0
    %6757 = vmatprep.subr.mxu0 0.0
    %6758 = vmatpush2.xpose.msra.mxu0 0.0
    %6759 = vmatprep.subr.mxu0 0.0
    %6760 = vmatpush2.xpose.msra.mxu0 0.0
    %6761 = vmatprep.subr.mxu0 0.0
    %6762 = vmatpush2.xpose.msra.mxu0 0.0
    %6763 = vmatprep.subr.mxu0 0.0
    %6764 = vmatpush2.xpose.msra.mxu0 0.0
    %6765 = vmatprep.subr.mxu0 0.0
    %6766 = vmatpush2.xpose.msra.mxu0 0.0
    %6767 = vmatprep.subr.mxu0 0.0
    %6768 = vmatpush2.xpose.msra.mxu0 0.0
    %6769 = vmatprep.subr.mxu0 0.0
    %6770 = vmatpush2.xpose.msra.mxu0 0.0
    %6771 = vmatprep.mubr.f32.mxu0 0.0
    %6772 = vmatmul.mubr.f32.gmra.mxu0 %v6703
    %v6773 = vpop.f32.mrf.mxu0
    %v6774 = vadd.f32 0.0, %v6773
    %v6775 = vpop.f32.mrf.mxu0
    %6776 = vdwg.mxu0
    %v6777 = vsel %vm1528, %v5604, -inf
    %6778 = vmax.xlane.f32.xlu0 %v6777
    %v6779 = vpop.xlane.xlu0 %6778
    %v6780 = vsel %vm1528, %v5682, -inf
    %6781 = vmax.xlane.f32.xlu0 %v6780
    %v6782 = vpop.xlane.xlu0 %6781
    %v6783 = vsel %vm1528, %v5760, -inf
    %6784 = vmax.xlane.f32.xlu0 %v6783
    %v6785 = vpop.xlane.xlu0 %6784
    %v6786 = vsel %vm1528, %v5838, -inf
    %6787 = vmax.xlane.f32.xlu0 %v6786
    %v6788 = vpop.xlane.xlu0 %6787
    %v6789 = vsel %vm1528, %v5916, -inf
    %6790 = vmax.xlane.f32.xlu0 %v6789
    %v6791 = vpop.xlane.xlu0 %6790
    %v6792 = vsel %vm1528, %v5994, -inf
    %6793 = vmax.xlane.f32.xlu0 %v6792
    %v6794 = vpop.xlane.xlu0 %6793
    %v6795 = vsel %vm1528, %v6072, -inf
    %6796 = vmax.xlane.f32.xlu0 %v6795
    %v6797 = vpop.xlane.xlu0 %6796
    %v6798 = vsel %vm1528, %v6150, -inf
    %6799 = vmax.xlane.f32.xlu0 %v6798
    %v6800 = vpop.xlane.xlu0 %6799
    %v6801 = vsel %vm1528, %v6228, -inf
    %6802 = vmax.xlane.f32.xlu0 %v6801
    %v6803 = vpop.xlane.xlu0 %6802
    %v6804 = vsel %vm1528, %v6306, -inf
    %6805 = vmax.xlane.f32.xlu0 %v6804
    %v6806 = vpop.xlane.xlu0 %6805
    %v6807 = vsel %vm1528, %v6384, -inf
    %6808 = vmax.xlane.f32.xlu0 %v6807
    %v6809 = vpop.xlane.xlu0 %6808
    %v6810 = vsel %vm1528, %v6462, -inf
    %6811 = vmax.xlane.f32.xlu0 %v6810
    %v6812 = vpop.xlane.xlu0 %6811
    %v6813 = vsel %vm1528, %v6540, -inf
    %6814 = vmax.xlane.f32.xlu0 %v6813
    %v6815 = vpop.xlane.xlu0 %6814
    %v6816 = vsel %vm1528, %v6618, -inf
    %6817 = vmax.xlane.f32.xlu0 %v6816
    %v6818 = vpop.xlane.xlu0 %6817
    %v6819 = vsel %vm1528, %v6696, -inf
    %6820 = vmax.xlane.f32.xlu0 %v6819
    %v6821 = vpop.xlane.xlu0 %6820
    %v6822 = vsel %vm1528, %v6774, -inf
    %6823 = vmax.xlane.f32.xlu0 %v6822
    %v6824 = vpop.xlane.xlu0 %6823
    %v6825 = vsub.f32 %v5604, %v6779
    %v6826 = vsub.f32 %v5682, %v6782
    %v6827 = vsub.f32 %v5760, %v6785
    %v6828 = vsub.f32 %v5838, %v6788
    %v6829 = vsub.f32 %v5916, %v6791
    %v6830 = vsub.f32 %v5994, %v6794
    %v6831 = vsub.f32 %v6072, %v6797
    %v6832 = vsub.f32 %v6150, %v6800
    %v6833 = vsub.f32 %v6228, %v6803
    %v6834 = vsub.f32 %v6306, %v6806
    %v6835 = vsub.f32 %v6384, %v6809
    %v6836 = vsub.f32 %v6462, %v6812
    %v6837 = vsub.f32 %v6540, %v6815
    %v6838 = vsub.f32 %v6618, %v6818
    %v6839 = vsub.f32 %v6696, %v6821
    %v6840 = vsub.f32 %v6774, %v6824
    %v6841 = vmul.f32 %v6825, 1.442695
    %v6842 = vpow.pop %v6841
    %v6843 = vmul.f32 %v6826, 1.442695
    %v6844 = vpow.pop %v6843
    %v6845 = vmul.f32 %v6827, 1.442695
    %v6846 = vpow.pop %v6845
    %v6847 = vmul.f32 %v6828, 1.442695
    %v6848 = vpow.pop %v6847
    %v6849 = vmul.f32 %v6829, 1.442695
    %v6850 = vpow.pop %v6849
    %v6851 = vmul.f32 %v6830, 1.442695
    %v6852 = vpow.pop %v6851
    %v6853 = vmul.f32 %v6831, 1.442695
    %v6854 = vpow.pop %v6853
    %v6855 = vmul.f32 %v6832, 1.442695
    %v6856 = vpow.pop %v6855
    %v6857 = vmul.f32 %v6833, 1.442695
    %v6858 = vpow.pop %v6857
    %v6859 = vmul.f32 %v6834, 1.442695
    %v6860 = vpow.pop %v6859
    %v6861 = vmul.f32 %v6835, 1.442695
    %v6862 = vpow.pop %v6861
    %v6863 = vmul.f32 %v6836, 1.442695
    %v6864 = vpow.pop %v6863
    %v6865 = vmul.f32 %v6837, 1.442695
    %v6866 = vpow.pop %v6865
    %v6867 = vmul.f32 %v6838, 1.442695
    %v6868 = vpow.pop %v6867
    %v6869 = vmul.f32 %v6839, 1.442695
    %v6870 = vpow.pop %v6869
    %v6871 = vmul.f32 %v6840, 1.442695
    %v6872 = vpow.pop %v6871
    %v6873 = vsel %vm1528, %v6842, 0.0
    %6874 = vadd.xlane.f32.xlu0 %v6873
    %v6875 = vpop.xlane.xlu0 %6874
    %v6876 = vsel %vm1528, %v6844, 0.0
    %6877 = vadd.xlane.f32.xlu0 %v6876
    %v6878 = vpop.xlane.xlu0 %6877
    %v6879 = vsel %vm1528, %v6846, 0.0
    %6880 = vadd.xlane.f32.xlu0 %v6879
    %v6881 = vpop.xlane.xlu0 %6880
    %v6882 = vsel %vm1528, %v6848, 0.0
    %6883 = vadd.xlane.f32.xlu0 %v6882
    %v6884 = vpop.xlane.xlu0 %6883
    %v6885 = vsel %vm1528, %v6850, 0.0
    %6886 = vadd.xlane.f32.xlu0 %v6885
    %v6887 = vpop.xlane.xlu0 %6886
    %v6888 = vsel %vm1528, %v6852, 0.0
    %6889 = vadd.xlane.f32.xlu0 %v6888
    %v6890 = vpop.xlane.xlu0 %6889
    %v6891 = vsel %vm1528, %v6854, 0.0
    %6892 = vadd.xlane.f32.xlu0 %v6891
    %v6893 = vpop.xlane.xlu0 %6892
    %v6894 = vsel %vm1528, %v6856, 0.0
    %6895 = vadd.xlane.f32.xlu0 %v6894
    %v6896 = vpop.xlane.xlu0 %6895
    %v6897 = vsel %vm1528, %v6858, 0.0
    %6898 = vadd.xlane.f32.xlu0 %v6897
    %v6899 = vpop.xlane.xlu0 %6898
    %v6900 = vsel %vm1528, %v6860, 0.0
    %6901 = vadd.xlane.f32.xlu0 %v6900
    %v6902 = vpop.xlane.xlu0 %6901
    %v6903 = vsel %vm1528, %v6862, 0.0
    %6904 = vadd.xlane.f32.xlu0 %v6903
    %v6905 = vpop.xlane.xlu0 %6904
    %v6906 = vsel %vm1528, %v6864, 0.0
    %6907 = vadd.xlane.f32.xlu0 %v6906
    %v6908 = vpop.xlane.xlu0 %6907
    %v6909 = vsel %vm1528, %v6866, 0.0
    %6910 = vadd.xlane.f32.xlu0 %v6909
    %v6911 = vpop.xlane.xlu0 %6910
    %v6912 = vsel %vm1528, %v6868, 0.0
    %6913 = vadd.xlane.f32.xlu0 %v6912
    %v6914 = vpop.xlane.xlu0 %6913
    %v6915 = vsel %vm1528, %v6870, 0.0
    %6916 = vadd.xlane.f32.xlu0 %v6915
    %v6917 = vpop.xlane.xlu0 %6916
    %v6918 = vsel %vm1528, %v6872, 0.0
    %6919 = vadd.xlane.f32.xlu0 %v6918
    %v6920 = vpop.xlane.xlu0 %6919
    %v6921 = vrcp.pop %v6875
    %v6922 = vmul.f32 %v6842, %v6921
    %v6923 = vrcp.pop %v6878
    %v6924 = vmul.f32 %v6844, %v6923
    %v6925 = vrcp.pop %v6881
    %v6926 = vmul.f32 %v6846, %v6925
    %v6927 = vrcp.pop %v6884
    %v6928 = vmul.f32 %v6848, %v6927
    %v6929 = vrcp.pop %v6887
    %v6930 = vmul.f32 %v6850, %v6929
    %v6931 = vrcp.pop %v6890
    %v6932 = vmul.f32 %v6852, %v6931
    %v6933 = vrcp.pop %v6893
    %v6934 = vmul.f32 %v6854, %v6933
    %v6935 = vrcp.pop %v6896
    %v6936 = vmul.f32 %v6856, %v6935
    %v6937 = vrcp.pop %v6899
    %v6938 = vmul.f32 %v6858, %v6937
    %v6939 = vrcp.pop %v6902
    %v6940 = vmul.f32 %v6860, %v6939
    %v6941 = vrcp.pop %v6905
    %v6942 = vmul.f32 %v6862, %v6941
    %v6943 = vrcp.pop %v6908
    %v6944 = vmul.f32 %v6864, %v6943
    %v6945 = vrcp.pop %v6911
    %v6946 = vmul.f32 %v6866, %v6945
    %v6947 = vrcp.pop %v6914
    %v6948 = vmul.f32 %v6868, %v6947
    %v6949 = vrcp.pop %v6917
    %v6950 = vmul.f32 %v6870, %v6949
    %v6951 = vrcp.pop %v6920
    %v6952 = vmul.f32 %v6872, %v6951
    %6953 = vrot.lane.b32.xlu0 %v171, 96
    %v6954 = vpop.permute.xlu0 %6953
    %v6957 = vsel %vm1528, %v6922, 0
    %6959 = vmatprep.subr.mxu0 0.0
    %6960 = vmatpush1.msra.mxu0 0.0
    %6961 = vmatprep.subr.mxu0 0.0
    %6962 = vmatpush1.msra.mxu0 0.0
    %6963 = vmatprep.subr.mxu0 0.0
    %6964 = vmatpush1.msra.mxu0 0.0
    %6965 = vmatprep.subr.mxu0 0.0
    %6966 = vmatpush1.msra.mxu0 0.0
    %6967 = vmatprep.subr.mxu0 0.0
    %6968 = vmatpush1.msra.mxu0 0.0
    %6969 = vmatprep.subr.mxu0 0.0
    %6970 = vmatpush1.msra.mxu0 0.0
    %6971 = vmatprep.subr.mxu0 0.0
    %6972 = vmatpush1.msra.mxu0 0.0
    %6973 = vmatprep.subr.mxu0 0.0
    %6974 = vmatpush1.msra.mxu0 0.0
    %6975 = vmatprep.subr.mxu0 0.0
    %6976 = vmatpush1.msra.mxu0 0.0
    %6977 = vmatprep.subr.mxu0 0.0
    %6978 = vmatpush1.msra.mxu0 0.0
    %6979 = vmatprep.subr.mxu0 0.0
    %6980 = vmatpush1.msra.mxu0 0.0
    %6981 = vmatprep.subr.mxu0 0.0
    %6982 = vmatpush1.msra.mxu0 0.0
    %6983 = vmatprep.subr.mxu0 0.0
    %6984 = vmatpush1.msra.mxu0 0.0
    %6985 = vmatprep.subr.mxu0 0.0
    %6986 = vmatpush1.msra.mxu0 0.0
    %6987 = vmatprep.subr.mxu0 0.0
    %6988 = vmatpush1.msra.mxu0 0.0
    %6989 = vmatprep.subr.mxu0 0.0
    %6990 = vmatpush1.msra.mxu0 %v6954
    %6991 = vmatprep.subr.mxu0 0.0
    %6992 = vmatpush2.msra.mxu0 0.0
    %6993 = vmatprep.subr.mxu0 0.0
    %6994 = vmatpush2.msra.mxu0 0.0
    %6995 = vmatprep.subr.mxu0 0.0
    %6996 = vmatpush2.msra.mxu0 0.0
    %6997 = vmatprep.subr.mxu0 0.0
    %6998 = vmatpush2.msra.mxu0 0.0
    %6999 = vmatprep.subr.mxu0 0.0
    %7000 = vmatpush2.msra.mxu0 0.0
    %7001 = vmatprep.subr.mxu0 0.0
    %7002 = vmatpush2.msra.mxu0 0.0
    %7003 = vmatprep.subr.mxu0 0.0
    %7004 = vmatpush2.msra.mxu0 0.0
    %7005 = vmatprep.subr.mxu0 0.0
    %7006 = vmatpush2.msra.mxu0 0.0
    %7007 = vmatprep.subr.mxu0 0.0
    %7008 = vmatpush2.msra.mxu0 0.0
    %7009 = vmatprep.subr.mxu0 0.0
    %7010 = vmatpush2.msra.mxu0 0.0
    %7011 = vmatprep.subr.mxu0 0.0
    %7012 = vmatpush2.msra.mxu0 0.0
    %7013 = vmatprep.subr.mxu0 0.0
    %7014 = vmatpush2.msra.mxu0 0.0
    %7015 = vmatprep.subr.mxu0 0.0
    %7016 = vmatpush2.msra.mxu0 0.0
    %7017 = vmatprep.subr.mxu0 0.0
    %7018 = vmatpush2.msra.mxu0 0.0
    %7019 = vmatprep.subr.mxu0 0.0
    %7020 = vmatpush2.msra.mxu0 0.0
    %7021 = vmatprep.subr.mxu0 0.0
    %7022 = vmatpush2.msra.mxu0 0.0
    %7023 = vmatprep.mubr.f32.mxu0 0.0
    %7024 = vmatmul.mubr.f32.gmra.mxu0 %v6957
    %v7025 = vpop.f32.mrf.mxu0
    %v7026 = vadd.f32 0.0, %v7025
    %v7027 = vpop.f32.mrf.mxu0
    %7028 = vdwg.mxu0
    %7029 = vrot.lane.b32.xlu0 %v177, 96
    %v7030 = vpop.permute.xlu0 %7029
    %v7033 = vsel %vm1528, %v6924, 0
    %7035 = vmatprep.subr.mxu0 0.0
    %7036 = vmatpush1.msra.mxu0 0.0
    %7037 = vmatprep.subr.mxu0 0.0
    %7038 = vmatpush1.msra.mxu0 0.0
    %7039 = vmatprep.subr.mxu0 0.0
    %7040 = vmatpush1.msra.mxu0 0.0
    %7041 = vmatprep.subr.mxu0 0.0
    %7042 = vmatpush1.msra.mxu0 0.0
    %7043 = vmatprep.subr.mxu0 0.0
    %7044 = vmatpush1.msra.mxu0 0.0
    %7045 = vmatprep.subr.mxu0 0.0
    %7046 = vmatpush1.msra.mxu0 0.0
    %7047 = vmatprep.subr.mxu0 0.0
    %7048 = vmatpush1.msra.mxu0 0.0
    %7049 = vmatprep.subr.mxu0 0.0
    %7050 = vmatpush1.msra.mxu0 0.0
    %7051 = vmatprep.subr.mxu0 0.0
    %7052 = vmatpush1.msra.mxu0 0.0
    %7053 = vmatprep.subr.mxu0 0.0
    %7054 = vmatpush1.msra.mxu0 0.0
    %7055 = vmatprep.subr.mxu0 0.0
    %7056 = vmatpush1.msra.mxu0 0.0
    %7057 = vmatprep.subr.mxu0 0.0
    %7058 = vmatpush1.msra.mxu0 0.0
    %7059 = vmatprep.subr.mxu0 0.0
    %7060 = vmatpush1.msra.mxu0 0.0
    %7061 = vmatprep.subr.mxu0 0.0
    %7062 = vmatpush1.msra.mxu0 0.0
    %7063 = vmatprep.subr.mxu0 0.0
    %7064 = vmatpush1.msra.mxu0 0.0
    %7065 = vmatprep.subr.mxu0 0.0
    %7066 = vmatpush1.msra.mxu0 %v7030
    %7067 = vmatprep.subr.mxu0 0.0
    %7068 = vmatpush2.msra.mxu0 0.0
    %7069 = vmatprep.subr.mxu0 0.0
    %7070 = vmatpush2.msra.mxu0 0.0
    %7071 = vmatprep.subr.mxu0 0.0
    %7072 = vmatpush2.msra.mxu0 0.0
    %7073 = vmatprep.subr.mxu0 0.0
    %7074 = vmatpush2.msra.mxu0 0.0
    %7075 = vmatprep.subr.mxu0 0.0
    %7076 = vmatpush2.msra.mxu0 0.0
    %7077 = vmatprep.subr.mxu0 0.0
    %7078 = vmatpush2.msra.mxu0 0.0
    %7079 = vmatprep.subr.mxu0 0.0
    %7080 = vmatpush2.msra.mxu0 0.0
    %7081 = vmatprep.subr.mxu0 0.0
    %7082 = vmatpush2.msra.mxu0 0.0
    %7083 = vmatprep.subr.mxu0 0.0
    %7084 = vmatpush2.msra.mxu0 0.0
    %7085 = vmatprep.subr.mxu0 0.0
    %7086 = vmatpush2.msra.mxu0 0.0
    %7087 = vmatprep.subr.mxu0 0.0
    %7088 = vmatpush2.msra.mxu0 0.0
    %7089 = vmatprep.subr.mxu0 0.0
    %7090 = vmatpush2.msra.mxu0 0.0
    %7091 = vmatprep.subr.mxu0 0.0
    %7092 = vmatpush2.msra.mxu0 0.0
    %7093 = vmatprep.subr.mxu0 0.0
    %7094 = vmatpush2.msra.mxu0 0.0
    %7095 = vmatprep.subr.mxu0 0.0
    %7096 = vmatpush2.msra.mxu0 0.0
    %7097 = vmatprep.subr.mxu0 0.0
    %7098 = vmatpush2.msra.mxu0 0.0
    %7099 = vmatprep.mubr.f32.mxu0 0.0
    %7100 = vmatmul.mubr.f32.gmra.mxu0 %v7033
    %v7101 = vpop.f32.mrf.mxu0
    %v7102 = vadd.f32 0.0, %v7101
    %v7103 = vpop.f32.mrf.mxu0
    %7104 = vdwg.mxu0
    %7105 = vrot.lane.b32.xlu0 %v183, 96
    %v7106 = vpop.permute.xlu0 %7105
    %v7109 = vsel %vm1528, %v6926, 0
    %7111 = vmatprep.subr.mxu0 0.0
    %7112 = vmatpush1.msra.mxu0 0.0
    %7113 = vmatprep.subr.mxu0 0.0
    %7114 = vmatpush1.msra.mxu0 0.0
    %7115 = vmatprep.subr.mxu0 0.0
    %7116 = vmatpush1.msra.mxu0 0.0
    %7117 = vmatprep.subr.mxu0 0.0
    %7118 = vmatpush1.msra.mxu0 0.0
    %7119 = vmatprep.subr.mxu0 0.0
    %7120 = vmatpush1.msra.mxu0 0.0
    %7121 = vmatprep.subr.mxu0 0.0
    %7122 = vmatpush1.msra.mxu0 0.0
    %7123 = vmatprep.subr.mxu0 0.0
    %7124 = vmatpush1.msra.mxu0 0.0
    %7125 = vmatprep.subr.mxu0 0.0
    %7126 = vmatpush1.msra.mxu0 0.0
    %7127 = vmatprep.subr.mxu0 0.0
    %7128 = vmatpush1.msra.mxu0 0.0
    %7129 = vmatprep.subr.mxu0 0.0
    %7130 = vmatpush1.msra.mxu0 0.0
    %7131 = vmatprep.subr.mxu0 0.0
    %7132 = vmatpush1.msra.mxu0 0.0
    %7133 = vmatprep.subr.mxu0 0.0
    %7134 = vmatpush1.msra.mxu0 0.0
    %7135 = vmatprep.subr.mxu0 0.0
    %7136 = vmatpush1.msra.mxu0 0.0
    %7137 = vmatprep.subr.mxu0 0.0
    %7138 = vmatpush1.msra.mxu0 0.0
    %7139 = vmatprep.subr.mxu0 0.0
    %7140 = vmatpush1.msra.mxu0 0.0
    %7141 = vmatprep.subr.mxu0 0.0
    %7142 = vmatpush1.msra.mxu0 %v7106
    %7143 = vmatprep.subr.mxu0 0.0
    %7144 = vmatpush2.msra.mxu0 0.0
    %7145 = vmatprep.subr.mxu0 0.0
    %7146 = vmatpush2.msra.mxu0 0.0
    %7147 = vmatprep.subr.mxu0 0.0
    %7148 = vmatpush2.msra.mxu0 0.0
    %7149 = vmatprep.subr.mxu0 0.0
    %7150 = vmatpush2.msra.mxu0 0.0
    %7151 = vmatprep.subr.mxu0 0.0
    %7152 = vmatpush2.msra.mxu0 0.0
    %7153 = vmatprep.subr.mxu0 0.0
    %7154 = vmatpush2.msra.mxu0 0.0
    %7155 = vmatprep.subr.mxu0 0.0
    %7156 = vmatpush2.msra.mxu0 0.0
    %7157 = vmatprep.subr.mxu0 0.0
    %7158 = vmatpush2.msra.mxu0 0.0
    %7159 = vmatprep.subr.mxu0 0.0
    %7160 = vmatpush2.msra.mxu0 0.0
    %7161 = vmatprep.subr.mxu0 0.0
    %7162 = vmatpush2.msra.mxu0 0.0
    %7163 = vmatprep.subr.mxu0 0.0
    %7164 = vmatpush2.msra.mxu0 0.0
    %7165 = vmatprep.subr.mxu0 0.0
    %7166 = vmatpush2.msra.mxu0 0.0
    %7167 = vmatprep.subr.mxu0 0.0
    %7168 = vmatpush2.msra.mxu0 0.0
    %7169 = vmatprep.subr.mxu0 0.0
    %7170 = vmatpush2.msra.mxu0 0.0
    %7171 = vmatprep.subr.mxu0 0.0
    %7172 = vmatpush2.msra.mxu0 0.0
    %7173 = vmatprep.subr.mxu0 0.0
    %7174 = vmatpush2.msra.mxu0 0.0
    %7175 = vmatprep.mubr.f32.mxu0 0.0
    %7176 = vmatmul.mubr.f32.gmra.mxu0 %v7109
    %v7177 = vpop.f32.mrf.mxu0
    %v7178 = vadd.f32 0.0, %v7177
    %v7179 = vpop.f32.mrf.mxu0
    %7180 = vdwg.mxu0
    %7181 = vrot.lane.b32.xlu0 %v189, 96
    %v7182 = vpop.permute.xlu0 %7181
    %v7185 = vsel %vm1528, %v6928, 0
    %7187 = vmatprep.subr.mxu0 0.0
    %7188 = vmatpush1.msra.mxu0 0.0
    %7189 = vmatprep.subr.mxu0 0.0
    %7190 = vmatpush1.msra.mxu0 0.0
    %7191 = vmatprep.subr.mxu0 0.0
    %7192 = vmatpush1.msra.mxu0 0.0
    %7193 = vmatprep.subr.mxu0 0.0
    %7194 = vmatpush1.msra.mxu0 0.0
    %7195 = vmatprep.subr.mxu0 0.0
    %7196 = vmatpush1.msra.mxu0 0.0
    %7197 = vmatprep.subr.mxu0 0.0
    %7198 = vmatpush1.msra.mxu0 0.0
    %7199 = vmatprep.subr.mxu0 0.0
    %7200 = vmatpush1.msra.mxu0 0.0
    %7201 = vmatprep.subr.mxu0 0.0
    %7202 = vmatpush1.msra.mxu0 0.0
    %7203 = vmatprep.subr.mxu0 0.0
    %7204 = vmatpush1.msra.mxu0 0.0
    %7205 = vmatprep.subr.mxu0 0.0
    %7206 = vmatpush1.msra.mxu0 0.0
    %7207 = vmatprep.subr.mxu0 0.0
    %7208 = vmatpush1.msra.mxu0 0.0
    %7209 = vmatprep.subr.mxu0 0.0
    %7210 = vmatpush1.msra.mxu0 0.0
    %7211 = vmatprep.subr.mxu0 0.0
    %7212 = vmatpush1.msra.mxu0 0.0
    %7213 = vmatprep.subr.mxu0 0.0
    %7214 = vmatpush1.msra.mxu0 0.0
    %7215 = vmatprep.subr.mxu0 0.0
    %7216 = vmatpush1.msra.mxu0 0.0
    %7217 = vmatprep.subr.mxu0 0.0
    %7218 = vmatpush1.msra.mxu0 %v7182
    %7219 = vmatprep.subr.mxu0 0.0
    %7220 = vmatpush2.msra.mxu0 0.0
    %7221 = vmatprep.subr.mxu0 0.0
    %7222 = vmatpush2.msra.mxu0 0.0
    %7223 = vmatprep.subr.mxu0 0.0
    %7224 = vmatpush2.msra.mxu0 0.0
    %7225 = vmatprep.subr.mxu0 0.0
    %7226 = vmatpush2.msra.mxu0 0.0
    %7227 = vmatprep.subr.mxu0 0.0
    %7228 = vmatpush2.msra.mxu0 0.0
    %7229 = vmatprep.subr.mxu0 0.0
    %7230 = vmatpush2.msra.mxu0 0.0
    %7231 = vmatprep.subr.mxu0 0.0
    %7232 = vmatpush2.msra.mxu0 0.0
    %7233 = vmatprep.subr.mxu0 0.0
    %7234 = vmatpush2.msra.mxu0 0.0
    %7235 = vmatprep.subr.mxu0 0.0
    %7236 = vmatpush2.msra.mxu0 0.0
    %7237 = vmatprep.subr.mxu0 0.0
    %7238 = vmatpush2.msra.mxu0 0.0
    %7239 = vmatprep.subr.mxu0 0.0
    %7240 = vmatpush2.msra.mxu0 0.0
    %7241 = vmatprep.subr.mxu0 0.0
    %7242 = vmatpush2.msra.mxu0 0.0
    %7243 = vmatprep.subr.mxu0 0.0
    %7244 = vmatpush2.msra.mxu0 0.0
    %7245 = vmatprep.subr.mxu0 0.0
    %7246 = vmatpush2.msra.mxu0 0.0
    %7247 = vmatprep.subr.mxu0 0.0
    %7248 = vmatpush2.msra.mxu0 0.0
    %7249 = vmatprep.subr.mxu0 0.0
    %7250 = vmatpush2.msra.mxu0 0.0
    %7251 = vmatprep.mubr.f32.mxu0 0.0
    %7252 = vmatmul.mubr.f32.gmra.mxu0 %v7185
    %v7253 = vpop.f32.mrf.mxu0
    %v7254 = vadd.f32 0.0, %v7253
    %v7255 = vpop.f32.mrf.mxu0
    %7256 = vdwg.mxu0
    %7257 = vrot.lane.b32.xlu0 %v195, 96
    %v7258 = vpop.permute.xlu0 %7257
    %v7261 = vsel %vm1528, %v6930, 0
    %7263 = vmatprep.subr.mxu0 0.0
    %7264 = vmatpush1.msra.mxu0 0.0
    %7265 = vmatprep.subr.mxu0 0.0
    %7266 = vmatpush1.msra.mxu0 0.0
    %7267 = vmatprep.subr.mxu0 0.0
    %7268 = vmatpush1.msra.mxu0 0.0
    %7269 = vmatprep.subr.mxu0 0.0
    %7270 = vmatpush1.msra.mxu0 0.0
    %7271 = vmatprep.subr.mxu0 0.0
    %7272 = vmatpush1.msra.mxu0 0.0
    %7273 = vmatprep.subr.mxu0 0.0
    %7274 = vmatpush1.msra.mxu0 0.0
    %7275 = vmatprep.subr.mxu0 0.0
    %7276 = vmatpush1.msra.mxu0 0.0
    %7277 = vmatprep.subr.mxu0 0.0
    %7278 = vmatpush1.msra.mxu0 0.0
    %7279 = vmatprep.subr.mxu0 0.0
    %7280 = vmatpush1.msra.mxu0 0.0
    %7281 = vmatprep.subr.mxu0 0.0
    %7282 = vmatpush1.msra.mxu0 0.0
    %7283 = vmatprep.subr.mxu0 0.0
    %7284 = vmatpush1.msra.mxu0 0.0
    %7285 = vmatprep.subr.mxu0 0.0
    %7286 = vmatpush1.msra.mxu0 0.0
    %7287 = vmatprep.subr.mxu0 0.0
    %7288 = vmatpush1.msra.mxu0 0.0
    %7289 = vmatprep.subr.mxu0 0.0
    %7290 = vmatpush1.msra.mxu0 0.0
    %7291 = vmatprep.subr.mxu0 0.0
    %7292 = vmatpush1.msra.mxu0 0.0
    %7293 = vmatprep.subr.mxu0 0.0
    %7294 = vmatpush1.msra.mxu0 %v7258
    %7295 = vmatprep.subr.mxu0 0.0
    %7296 = vmatpush2.msra.mxu0 0.0
    %7297 = vmatprep.subr.mxu0 0.0
    %7298 = vmatpush2.msra.mxu0 0.0
    %7299 = vmatprep.subr.mxu0 0.0
    %7300 = vmatpush2.msra.mxu0 0.0
    %7301 = vmatprep.subr.mxu0 0.0
    %7302 = vmatpush2.msra.mxu0 0.0
    %7303 = vmatprep.subr.mxu0 0.0
    %7304 = vmatpush2.msra.mxu0 0.0
    %7305 = vmatprep.subr.mxu0 0.0
    %7306 = vmatpush2.msra.mxu0 0.0
    %7307 = vmatprep.subr.mxu0 0.0
    %7308 = vmatpush2.msra.mxu0 0.0
    %7309 = vmatprep.subr.mxu0 0.0
    %7310 = vmatpush2.msra.mxu0 0.0
    %7311 = vmatprep.subr.mxu0 0.0
    %7312 = vmatpush2.msra.mxu0 0.0
    %7313 = vmatprep.subr.mxu0 0.0
    %7314 = vmatpush2.msra.mxu0 0.0
    %7315 = vmatprep.subr.mxu0 0.0
    %7316 = vmatpush2.msra.mxu0 0.0
    %7317 = vmatprep.subr.mxu0 0.0
    %7318 = vmatpush2.msra.mxu0 0.0
    %7319 = vmatprep.subr.mxu0 0.0
    %7320 = vmatpush2.msra.mxu0 0.0
    %7321 = vmatprep.subr.mxu0 0.0
    %7322 = vmatpush2.msra.mxu0 0.0
    %7323 = vmatprep.subr.mxu0 0.0
    %7324 = vmatpush2.msra.mxu0 0.0
    %7325 = vmatprep.subr.mxu0 0.0
    %7326 = vmatpush2.msra.mxu0 0.0
    %7327 = vmatprep.mubr.f32.mxu0 0.0
    %7328 = vmatmul.mubr.f32.gmra.mxu0 %v7261
    %v7329 = vpop.f32.mrf.mxu0
    %v7330 = vadd.f32 0.0, %v7329
    %v7331 = vpop.f32.mrf.mxu0
    %7332 = vdwg.mxu0
    %7333 = vrot.lane.b32.xlu0 %v201, 96
    %v7334 = vpop.permute.xlu0 %7333
    %v7337 = vsel %vm1528, %v6932, 0
    %7339 = vmatprep.subr.mxu0 0.0
    %7340 = vmatpush1.msra.mxu0 0.0
    %7341 = vmatprep.subr.mxu0 0.0
    %7342 = vmatpush1.msra.mxu0 0.0
    %7343 = vmatprep.subr.mxu0 0.0
    %7344 = vmatpush1.msra.mxu0 0.0
    %7345 = vmatprep.subr.mxu0 0.0
    %7346 = vmatpush1.msra.mxu0 0.0
    %7347 = vmatprep.subr.mxu0 0.0
    %7348 = vmatpush1.msra.mxu0 0.0
    %7349 = vmatprep.subr.mxu0 0.0
    %7350 = vmatpush1.msra.mxu0 0.0
    %7351 = vmatprep.subr.mxu0 0.0
    %7352 = vmatpush1.msra.mxu0 0.0
    %7353 = vmatprep.subr.mxu0 0.0
    %7354 = vmatpush1.msra.mxu0 0.0
    %7355 = vmatprep.subr.mxu0 0.0
    %7356 = vmatpush1.msra.mxu0 0.0
    %7357 = vmatprep.subr.mxu0 0.0
    %7358 = vmatpush1.msra.mxu0 0.0
    %7359 = vmatprep.subr.mxu0 0.0
    %7360 = vmatpush1.msra.mxu0 0.0
    %7361 = vmatprep.subr.mxu0 0.0
    %7362 = vmatpush1.msra.mxu0 0.0
    %7363 = vmatprep.subr.mxu0 0.0
    %7364 = vmatpush1.msra.mxu0 0.0
    %7365 = vmatprep.subr.mxu0 0.0
    %7366 = vmatpush1.msra.mxu0 0.0
    %7367 = vmatprep.subr.mxu0 0.0
    %7368 = vmatpush1.msra.mxu0 0.0
    %7369 = vmatprep.subr.mxu0 0.0
    %7370 = vmatpush1.msra.mxu0 %v7334
    %7371 = vmatprep.subr.mxu0 0.0
    %7372 = vmatpush2.msra.mxu0 0.0
    %7373 = vmatprep.subr.mxu0 0.0
    %7374 = vmatpush2.msra.mxu0 0.0
    %7375 = vmatprep.subr.mxu0 0.0
    %7376 = vmatpush2.msra.mxu0 0.0
    %7377 = vmatprep.subr.mxu0 0.0
    %7378 = vmatpush2.msra.mxu0 0.0
    %7379 = vmatprep.subr.mxu0 0.0
    %7380 = vmatpush2.msra.mxu0 0.0
    %7381 = vmatprep.subr.mxu0 0.0
    %7382 = vmatpush2.msra.mxu0 0.0
    %7383 = vmatprep.subr.mxu0 0.0
    %7384 = vmatpush2.msra.mxu0 0.0
    %7385 = vmatprep.subr.mxu0 0.0
    %7386 = vmatpush2.msra.mxu0 0.0
    %7387 = vmatprep.subr.mxu0 0.0
    %7388 = vmatpush2.msra.mxu0 0.0
    %7389 = vmatprep.subr.mxu0 0.0
    %7390 = vmatpush2.msra.mxu0 0.0
    %7391 = vmatprep.subr.mxu0 0.0
    %7392 = vmatpush2.msra.mxu0 0.0
    %7393 = vmatprep.subr.mxu0 0.0
    %7394 = vmatpush2.msra.mxu0 0.0
    %7395 = vmatprep.subr.mxu0 0.0
    %7396 = vmatpush2.msra.mxu0 0.0
    %7397 = vmatprep.subr.mxu0 0.0
    %7398 = vmatpush2.msra.mxu0 0.0
    %7399 = vmatprep.subr.mxu0 0.0
    %7400 = vmatpush2.msra.mxu0 0.0
    %7401 = vmatprep.subr.mxu0 0.0
    %7402 = vmatpush2.msra.mxu0 0.0
    %7403 = vmatprep.mubr.f32.mxu0 0.0
    %7404 = vmatmul.mubr.f32.gmra.mxu0 %v7337
    %v7405 = vpop.f32.mrf.mxu0
    %v7406 = vadd.f32 0.0, %v7405
    %v7407 = vpop.f32.mrf.mxu0
    %7408 = vdwg.mxu0
    %7409 = vrot.lane.b32.xlu0 %v207, 96
    %v7410 = vpop.permute.xlu0 %7409
    %v7413 = vsel %vm1528, %v6934, 0
    %7415 = vmatprep.subr.mxu0 0.0
    %7416 = vmatpush1.msra.mxu0 0.0
    %7417 = vmatprep.subr.mxu0 0.0
    %7418 = vmatpush1.msra.mxu0 0.0
    %7419 = vmatprep.subr.mxu0 0.0
    %7420 = vmatpush1.msra.mxu0 0.0
    %7421 = vmatprep.subr.mxu0 0.0
    %7422 = vmatpush1.msra.mxu0 0.0
    %7423 = vmatprep.subr.mxu0 0.0
    %7424 = vmatpush1.msra.mxu0 0.0
    %7425 = vmatprep.subr.mxu0 0.0
    %7426 = vmatpush1.msra.mxu0 0.0
    %7427 = vmatprep.subr.mxu0 0.0
    %7428 = vmatpush1.msra.mxu0 0.0
    %7429 = vmatprep.subr.mxu0 0.0
    %7430 = vmatpush1.msra.mxu0 0.0
    %7431 = vmatprep.subr.mxu0 0.0
    %7432 = vmatpush1.msra.mxu0 0.0
    %7433 = vmatprep.subr.mxu0 0.0
    %7434 = vmatpush1.msra.mxu0 0.0
    %7435 = vmatprep.subr.mxu0 0.0
    %7436 = vmatpush1.msra.mxu0 0.0
    %7437 = vmatprep.subr.mxu0 0.0
    %7438 = vmatpush1.msra.mxu0 0.0
    %7439 = vmatprep.subr.mxu0 0.0
    %7440 = vmatpush1.msra.mxu0 0.0
    %7441 = vmatprep.subr.mxu0 0.0
    %7442 = vmatpush1.msra.mxu0 0.0
    %7443 = vmatprep.subr.mxu0 0.0
    %7444 = vmatpush1.msra.mxu0 0.0
    %7445 = vmatprep.subr.mxu0 0.0
    %7446 = vmatpush1.msra.mxu0 %v7410
    %7447 = vmatprep.subr.mxu0 0.0
    %7448 = vmatpush2.msra.mxu0 0.0
    %7449 = vmatprep.subr.mxu0 0.0
    %7450 = vmatpush2.msra.mxu0 0.0
    %7451 = vmatprep.subr.mxu0 0.0
    %7452 = vmatpush2.msra.mxu0 0.0
    %7453 = vmatprep.subr.mxu0 0.0
    %7454 = vmatpush2.msra.mxu0 0.0
    %7455 = vmatprep.subr.mxu0 0.0
    %7456 = vmatpush2.msra.mxu0 0.0
    %7457 = vmatprep.subr.mxu0 0.0
    %7458 = vmatpush2.msra.mxu0 0.0
    %7459 = vmatprep.subr.mxu0 0.0
    %7460 = vmatpush2.msra.mxu0 0.0
    %7461 = vmatprep.subr.mxu0 0.0
    %7462 = vmatpush2.msra.mxu0 0.0
    %7463 = vmatprep.subr.mxu0 0.0
    %7464 = vmatpush2.msra.mxu0 0.0
    %7465 = vmatprep.subr.mxu0 0.0
    %7466 = vmatpush2.msra.mxu0 0.0
    %7467 = vmatprep.subr.mxu0 0.0
    %7468 = vmatpush2.msra.mxu0 0.0
    %7469 = vmatprep.subr.mxu0 0.0
    %7470 = vmatpush2.msra.mxu0 0.0
    %7471 = vmatprep.subr.mxu0 0.0
    %7472 = vmatpush2.msra.mxu0 0.0
    %7473 = vmatprep.subr.mxu0 0.0
    %7474 = vmatpush2.msra.mxu0 0.0
    %7475 = vmatprep.subr.mxu0 0.0
    %7476 = vmatpush2.msra.mxu0 0.0
    %7477 = vmatprep.subr.mxu0 0.0
    %7478 = vmatpush2.msra.mxu0 0.0
    %7479 = vmatprep.mubr.f32.mxu0 0.0
    %7480 = vmatmul.mubr.f32.gmra.mxu0 %v7413
    %v7481 = vpop.f32.mrf.mxu0
    %v7482 = vadd.f32 0.0, %v7481
    %v7483 = vpop.f32.mrf.mxu0
    %7484 = vdwg.mxu0
    %7485 = vrot.lane.b32.xlu0 %v213, 96
    %v7486 = vpop.permute.xlu0 %7485
    %v7489 = vsel %vm1528, %v6936, 0
    %7491 = vmatprep.subr.mxu0 0.0
    %7492 = vmatpush1.msra.mxu0 0.0
    %7493 = vmatprep.subr.mxu0 0.0
    %7494 = vmatpush1.msra.mxu0 0.0
    %7495 = vmatprep.subr.mxu0 0.0
    %7496 = vmatpush1.msra.mxu0 0.0
    %7497 = vmatprep.subr.mxu0 0.0
    %7498 = vmatpush1.msra.mxu0 0.0
    %7499 = vmatprep.subr.mxu0 0.0
    %7500 = vmatpush1.msra.mxu0 0.0
    %7501 = vmatprep.subr.mxu0 0.0
    %7502 = vmatpush1.msra.mxu0 0.0
    %7503 = vmatprep.subr.mxu0 0.0
    %7504 = vmatpush1.msra.mxu0 0.0
    %7505 = vmatprep.subr.mxu0 0.0
    %7506 = vmatpush1.msra.mxu0 0.0
    %7507 = vmatprep.subr.mxu0 0.0
    %7508 = vmatpush1.msra.mxu0 0.0
    %7509 = vmatprep.subr.mxu0 0.0
    %7510 = vmatpush1.msra.mxu0 0.0
    %7511 = vmatprep.subr.mxu0 0.0
    %7512 = vmatpush1.msra.mxu0 0.0
    %7513 = vmatprep.subr.mxu0 0.0
    %7514 = vmatpush1.msra.mxu0 0.0
    %7515 = vmatprep.subr.mxu0 0.0
    %7516 = vmatpush1.msra.mxu0 0.0
    %7517 = vmatprep.subr.mxu0 0.0
    %7518 = vmatpush1.msra.mxu0 0.0
    %7519 = vmatprep.subr.mxu0 0.0
    %7520 = vmatpush1.msra.mxu0 0.0
    %7521 = vmatprep.subr.mxu0 0.0
    %7522 = vmatpush1.msra.mxu0 %v7486
    %7523 = vmatprep.subr.mxu0 0.0
    %7524 = vmatpush2.msra.mxu0 0.0
    %7525 = vmatprep.subr.mxu0 0.0
    %7526 = vmatpush2.msra.mxu0 0.0
    %7527 = vmatprep.subr.mxu0 0.0
    %7528 = vmatpush2.msra.mxu0 0.0
    %7529 = vmatprep.subr.mxu0 0.0
    %7530 = vmatpush2.msra.mxu0 0.0
    %7531 = vmatprep.subr.mxu0 0.0
    %7532 = vmatpush2.msra.mxu0 0.0
    %7533 = vmatprep.subr.mxu0 0.0
    %7534 = vmatpush2.msra.mxu0 0.0
    %7535 = vmatprep.subr.mxu0 0.0
    %7536 = vmatpush2.msra.mxu0 0.0
    %7537 = vmatprep.subr.mxu0 0.0
    %7538 = vmatpush2.msra.mxu0 0.0
    %7539 = vmatprep.subr.mxu0 0.0
    %7540 = vmatpush2.msra.mxu0 0.0
    %7541 = vmatprep.subr.mxu0 0.0
    %7542 = vmatpush2.msra.mxu0 0.0
    %7543 = vmatprep.subr.mxu0 0.0
    %7544 = vmatpush2.msra.mxu0 0.0
    %7545 = vmatprep.subr.mxu0 0.0
    %7546 = vmatpush2.msra.mxu0 0.0
    %7547 = vmatprep.subr.mxu0 0.0
    %7548 = vmatpush2.msra.mxu0 0.0
    %7549 = vmatprep.subr.mxu0 0.0
    %7550 = vmatpush2.msra.mxu0 0.0
    %7551 = vmatprep.subr.mxu0 0.0
    %7552 = vmatpush2.msra.mxu0 0.0
    %7553 = vmatprep.subr.mxu0 0.0
    %7554 = vmatpush2.msra.mxu0 0.0
    %7555 = vmatprep.mubr.f32.mxu0 0.0
    %7556 = vmatmul.mubr.f32.gmra.mxu0 %v7489
    %v7557 = vpop.f32.mrf.mxu0
    %v7558 = vadd.f32 0.0, %v7557
    %v7559 = vpop.f32.mrf.mxu0
    %7560 = vdwg.mxu0
    %7561 = vrot.lane.b32.xlu0 %v219, 96
    %v7562 = vpop.permute.xlu0 %7561
    %v7565 = vsel %vm1528, %v6938, 0
    %7567 = vmatprep.subr.mxu0 0.0
    %7568 = vmatpush1.msra.mxu0 0.0
    %7569 = vmatprep.subr.mxu0 0.0
    %7570 = vmatpush1.msra.mxu0 0.0
    %7571 = vmatprep.subr.mxu0 0.0
    %7572 = vmatpush1.msra.mxu0 0.0
    %7573 = vmatprep.subr.mxu0 0.0
    %7574 = vmatpush1.msra.mxu0 0.0
    %7575 = vmatprep.subr.mxu0 0.0
    %7576 = vmatpush1.msra.mxu0 0.0
    %7577 = vmatprep.subr.mxu0 0.0
    %7578 = vmatpush1.msra.mxu0 0.0
    %7579 = vmatprep.subr.mxu0 0.0
    %7580 = vmatpush1.msra.mxu0 0.0
    %7581 = vmatprep.subr.mxu0 0.0
    %7582 = vmatpush1.msra.mxu0 0.0
    %7583 = vmatprep.subr.mxu0 0.0
    %7584 = vmatpush1.msra.mxu0 0.0
    %7585 = vmatprep.subr.mxu0 0.0
    %7586 = vmatpush1.msra.mxu0 0.0
    %7587 = vmatprep.subr.mxu0 0.0
    %7588 = vmatpush1.msra.mxu0 0.0
    %7589 = vmatprep.subr.mxu0 0.0
    %7590 = vmatpush1.msra.mxu0 0.0
    %7591 = vmatprep.subr.mxu0 0.0
    %7592 = vmatpush1.msra.mxu0 0.0
    %7593 = vmatprep.subr.mxu0 0.0
    %7594 = vmatpush1.msra.mxu0 0.0
    %7595 = vmatprep.subr.mxu0 0.0
    %7596 = vmatpush1.msra.mxu0 0.0
    %7597 = vmatprep.subr.mxu0 0.0
    %7598 = vmatpush1.msra.mxu0 %v7562
    %7599 = vmatprep.subr.mxu0 0.0
    %7600 = vmatpush2.msra.mxu0 0.0
    %7601 = vmatprep.subr.mxu0 0.0
    %7602 = vmatpush2.msra.mxu0 0.0
    %7603 = vmatprep.subr.mxu0 0.0
    %7604 = vmatpush2.msra.mxu0 0.0
    %7605 = vmatprep.subr.mxu0 0.0
    %7606 = vmatpush2.msra.mxu0 0.0
    %7607 = vmatprep.subr.mxu0 0.0
    %7608 = vmatpush2.msra.mxu0 0.0
    %7609 = vmatprep.subr.mxu0 0.0
    %7610 = vmatpush2.msra.mxu0 0.0
    %7611 = vmatprep.subr.mxu0 0.0
    %7612 = vmatpush2.msra.mxu0 0.0
    %7613 = vmatprep.subr.mxu0 0.0
    %7614 = vmatpush2.msra.mxu0 0.0
    %7615 = vmatprep.subr.mxu0 0.0
    %7616 = vmatpush2.msra.mxu0 0.0
    %7617 = vmatprep.subr.mxu0 0.0
    %7618 = vmatpush2.msra.mxu0 0.0
    %7619 = vmatprep.subr.mxu0 0.0
    %7620 = vmatpush2.msra.mxu0 0.0
    %7621 = vmatprep.subr.mxu0 0.0
    %7622 = vmatpush2.msra.mxu0 0.0
    %7623 = vmatprep.subr.mxu0 0.0
    %7624 = vmatpush2.msra.mxu0 0.0
    %7625 = vmatprep.subr.mxu0 0.0
    %7626 = vmatpush2.msra.mxu0 0.0
    %7627 = vmatprep.subr.mxu0 0.0
    %7628 = vmatpush2.msra.mxu0 0.0
    %7629 = vmatprep.subr.mxu0 0.0
    %7630 = vmatpush2.msra.mxu0 0.0
    %7631 = vmatprep.mubr.f32.mxu0 0.0
    %7632 = vmatmul.mubr.f32.gmra.mxu0 %v7565
    %v7633 = vpop.f32.mrf.mxu0
    %v7634 = vadd.f32 0.0, %v7633
    %v7635 = vpop.f32.mrf.mxu0
    %7636 = vdwg.mxu0
    %7637 = vrot.lane.b32.xlu0 %v225, 96
    %v7638 = vpop.permute.xlu0 %7637
    %v7641 = vsel %vm1528, %v6940, 0
    %7643 = vmatprep.subr.mxu0 0.0
    %7644 = vmatpush1.msra.mxu0 0.0
    %7645 = vmatprep.subr.mxu0 0.0
    %7646 = vmatpush1.msra.mxu0 0.0
    %7647 = vmatprep.subr.mxu0 0.0
    %7648 = vmatpush1.msra.mxu0 0.0
    %7649 = vmatprep.subr.mxu0 0.0
    %7650 = vmatpush1.msra.mxu0 0.0
    %7651 = vmatprep.subr.mxu0 0.0
    %7652 = vmatpush1.msra.mxu0 0.0
    %7653 = vmatprep.subr.mxu0 0.0
    %7654 = vmatpush1.msra.mxu0 0.0
    %7655 = vmatprep.subr.mxu0 0.0
    %7656 = vmatpush1.msra.mxu0 0.0
    %7657 = vmatprep.subr.mxu0 0.0
    %7658 = vmatpush1.msra.mxu0 0.0
    %7659 = vmatprep.subr.mxu0 0.0
    %7660 = vmatpush1.msra.mxu0 0.0
    %7661 = vmatprep.subr.mxu0 0.0
    %7662 = vmatpush1.msra.mxu0 0.0
    %7663 = vmatprep.subr.mxu0 0.0
    %7664 = vmatpush1.msra.mxu0 0.0
    %7665 = vmatprep.subr.mxu0 0.0
    %7666 = vmatpush1.msra.mxu0 0.0
    %7667 = vmatprep.subr.mxu0 0.0
    %7668 = vmatpush1.msra.mxu0 0.0
    %7669 = vmatprep.subr.mxu0 0.0
    %7670 = vmatpush1.msra.mxu0 0.0
    %7671 = vmatprep.subr.mxu0 0.0
    %7672 = vmatpush1.msra.mxu0 0.0
    %7673 = vmatprep.subr.mxu0 0.0
    %7674 = vmatpush1.msra.mxu0 %v7638
    %7675 = vmatprep.subr.mxu0 0.0
    %7676 = vmatpush2.msra.mxu0 0.0
    %7677 = vmatprep.subr.mxu0 0.0
    %7678 = vmatpush2.msra.mxu0 0.0
    %7679 = vmatprep.subr.mxu0 0.0
    %7680 = vmatpush2.msra.mxu0 0.0
    %7681 = vmatprep.subr.mxu0 0.0
    %7682 = vmatpush2.msra.mxu0 0.0
    %7683 = vmatprep.subr.mxu0 0.0
    %7684 = vmatpush2.msra.mxu0 0.0
    %7685 = vmatprep.subr.mxu0 0.0
    %7686 = vmatpush2.msra.mxu0 0.0
    %7687 = vmatprep.subr.mxu0 0.0
    %7688 = vmatpush2.msra.mxu0 0.0
    %7689 = vmatprep.subr.mxu0 0.0
    %7690 = vmatpush2.msra.mxu0 0.0
    %7691 = vmatprep.subr.mxu0 0.0
    %7692 = vmatpush2.msra.mxu0 0.0
    %7693 = vmatprep.subr.mxu0 0.0
    %7694 = vmatpush2.msra.mxu0 0.0
    %7695 = vmatprep.subr.mxu0 0.0
    %7696 = vmatpush2.msra.mxu0 0.0
    %7697 = vmatprep.subr.mxu0 0.0
    %7698 = vmatpush2.msra.mxu0 0.0
    %7699 = vmatprep.subr.mxu0 0.0
    %7700 = vmatpush2.msra.mxu0 0.0
    %7701 = vmatprep.subr.mxu0 0.0
    %7702 = vmatpush2.msra.mxu0 0.0
    %7703 = vmatprep.subr.mxu0 0.0
    %7704 = vmatpush2.msra.mxu0 0.0
    %7705 = vmatprep.subr.mxu0 0.0
    %7706 = vmatpush2.msra.mxu0 0.0
    %7707 = vmatprep.mubr.f32.mxu0 0.0
    %7708 = vmatmul.mubr.f32.gmra.mxu0 %v7641
    %v7709 = vpop.f32.mrf.mxu0
    %v7710 = vadd.f32 0.0, %v7709
    %v7711 = vpop.f32.mrf.mxu0
    %7712 = vdwg.mxu0
    %7713 = vrot.lane.b32.xlu0 %v231, 96
    %v7714 = vpop.permute.xlu0 %7713
    %v7717 = vsel %vm1528, %v6942, 0
    %7719 = vmatprep.subr.mxu0 0.0
    %7720 = vmatpush1.msra.mxu0 0.0
    %7721 = vmatprep.subr.mxu0 0.0
    %7722 = vmatpush1.msra.mxu0 0.0
    %7723 = vmatprep.subr.mxu0 0.0
    %7724 = vmatpush1.msra.mxu0 0.0
    %7725 = vmatprep.subr.mxu0 0.0
    %7726 = vmatpush1.msra.mxu0 0.0
    %7727 = vmatprep.subr.mxu0 0.0
    %7728 = vmatpush1.msra.mxu0 0.0
    %7729 = vmatprep.subr.mxu0 0.0
    %7730 = vmatpush1.msra.mxu0 0.0
    %7731 = vmatprep.subr.mxu0 0.0
    %7732 = vmatpush1.msra.mxu0 0.0
    %7733 = vmatprep.subr.mxu0 0.0
    %7734 = vmatpush1.msra.mxu0 0.0
    %7735 = vmatprep.subr.mxu0 0.0
    %7736 = vmatpush1.msra.mxu0 0.0
    %7737 = vmatprep.subr.mxu0 0.0
    %7738 = vmatpush1.msra.mxu0 0.0
    %7739 = vmatprep.subr.mxu0 0.0
    %7740 = vmatpush1.msra.mxu0 0.0
    %7741 = vmatprep.subr.mxu0 0.0
    %7742 = vmatpush1.msra.mxu0 0.0
    %7743 = vmatprep.subr.mxu0 0.0
    %7744 = vmatpush1.msra.mxu0 0.0
    %7745 = vmatprep.subr.mxu0 0.0
    %7746 = vmatpush1.msra.mxu0 0.0
    %7747 = vmatprep.subr.mxu0 0.0
    %7748 = vmatpush1.msra.mxu0 0.0
    %7749 = vmatprep.subr.mxu0 0.0
    %7750 = vmatpush1.msra.mxu0 %v7714
    %7751 = vmatprep.subr.mxu0 0.0
    %7752 = vmatpush2.msra.mxu0 0.0
    %7753 = vmatprep.subr.mxu0 0.0
    %7754 = vmatpush2.msra.mxu0 0.0
    %7755 = vmatprep.subr.mxu0 0.0
    %7756 = vmatpush2.msra.mxu0 0.0
    %7757 = vmatprep.subr.mxu0 0.0
    %7758 = vmatpush2.msra.mxu0 0.0
    %7759 = vmatprep.subr.mxu0 0.0
    %7760 = vmatpush2.msra.mxu0 0.0
    %7761 = vmatprep.subr.mxu0 0.0
    %7762 = vmatpush2.msra.mxu0 0.0
    %7763 = vmatprep.subr.mxu0 0.0
    %7764 = vmatpush2.msra.mxu0 0.0
    %7765 = vmatprep.subr.mxu0 0.0
    %7766 = vmatpush2.msra.mxu0 0.0
    %7767 = vmatprep.subr.mxu0 0.0
    %7768 = vmatpush2.msra.mxu0 0.0
    %7769 = vmatprep.subr.mxu0 0.0
    %7770 = vmatpush2.msra.mxu0 0.0
    %7771 = vmatprep.subr.mxu0 0.0
    %7772 = vmatpush2.msra.mxu0 0.0
    %7773 = vmatprep.subr.mxu0 0.0
    %7774 = vmatpush2.msra.mxu0 0.0
    %7775 = vmatprep.subr.mxu0 0.0
    %7776 = vmatpush2.msra.mxu0 0.0
    %7777 = vmatprep.subr.mxu0 0.0
    %7778 = vmatpush2.msra.mxu0 0.0
    %7779 = vmatprep.subr.mxu0 0.0
    %7780 = vmatpush2.msra.mxu0 0.0
    %7781 = vmatprep.subr.mxu0 0.0
    %7782 = vmatpush2.msra.mxu0 0.0
    %7783 = vmatprep.mubr.f32.mxu0 0.0
    %7784 = vmatmul.mubr.f32.gmra.mxu0 %v7717
    %v7785 = vpop.f32.mrf.mxu0
    %v7786 = vadd.f32 0.0, %v7785
    %v7787 = vpop.f32.mrf.mxu0
    %7788 = vdwg.mxu0
    %7789 = vrot.lane.b32.xlu0 %v237, 96
    %v7790 = vpop.permute.xlu0 %7789
    %v7793 = vsel %vm1528, %v6944, 0
    %7795 = vmatprep.subr.mxu0 0.0
    %7796 = vmatpush1.msra.mxu0 0.0
    %7797 = vmatprep.subr.mxu0 0.0
    %7798 = vmatpush1.msra.mxu0 0.0
    %7799 = vmatprep.subr.mxu0 0.0
    %7800 = vmatpush1.msra.mxu0 0.0
    %7801 = vmatprep.subr.mxu0 0.0
    %7802 = vmatpush1.msra.mxu0 0.0
    %7803 = vmatprep.subr.mxu0 0.0
    %7804 = vmatpush1.msra.mxu0 0.0
    %7805 = vmatprep.subr.mxu0 0.0
    %7806 = vmatpush1.msra.mxu0 0.0
    %7807 = vmatprep.subr.mxu0 0.0
    %7808 = vmatpush1.msra.mxu0 0.0
    %7809 = vmatprep.subr.mxu0 0.0
    %7810 = vmatpush1.msra.mxu0 0.0
    %7811 = vmatprep.subr.mxu0 0.0
    %7812 = vmatpush1.msra.mxu0 0.0
    %7813 = vmatprep.subr.mxu0 0.0
    %7814 = vmatpush1.msra.mxu0 0.0
    %7815 = vmatprep.subr.mxu0 0.0
    %7816 = vmatpush1.msra.mxu0 0.0
    %7817 = vmatprep.subr.mxu0 0.0
    %7818 = vmatpush1.msra.mxu0 0.0
    %7819 = vmatprep.subr.mxu0 0.0
    %7820 = vmatpush1.msra.mxu0 0.0
    %7821 = vmatprep.subr.mxu0 0.0
    %7822 = vmatpush1.msra.mxu0 0.0
    %7823 = vmatprep.subr.mxu0 0.0
    %7824 = vmatpush1.msra.mxu0 0.0
    %7825 = vmatprep.subr.mxu0 0.0
    %7826 = vmatpush1.msra.mxu0 %v7790
    %7827 = vmatprep.subr.mxu0 0.0
    %7828 = vmatpush2.msra.mxu0 0.0
    %7829 = vmatprep.subr.mxu0 0.0
    %7830 = vmatpush2.msra.mxu0 0.0
    %7831 = vmatprep.subr.mxu0 0.0
    %7832 = vmatpush2.msra.mxu0 0.0
    %7833 = vmatprep.subr.mxu0 0.0
    %7834 = vmatpush2.msra.mxu0 0.0
    %7835 = vmatprep.subr.mxu0 0.0
    %7836 = vmatpush2.msra.mxu0 0.0
    %7837 = vmatprep.subr.mxu0 0.0
    %7838 = vmatpush2.msra.mxu0 0.0
    %7839 = vmatprep.subr.mxu0 0.0
    %7840 = vmatpush2.msra.mxu0 0.0
    %7841 = vmatprep.subr.mxu0 0.0
    %7842 = vmatpush2.msra.mxu0 0.0
    %7843 = vmatprep.subr.mxu0 0.0
    %7844 = vmatpush2.msra.mxu0 0.0
    %7845 = vmatprep.subr.mxu0 0.0
    %7846 = vmatpush2.msra.mxu0 0.0
    %7847 = vmatprep.subr.mxu0 0.0
    %7848 = vmatpush2.msra.mxu0 0.0
    %7849 = vmatprep.subr.mxu0 0.0
    %7850 = vmatpush2.msra.mxu0 0.0
    %7851 = vmatprep.subr.mxu0 0.0
    %7852 = vmatpush2.msra.mxu0 0.0
    %7853 = vmatprep.subr.mxu0 0.0
    %7854 = vmatpush2.msra.mxu0 0.0
    %7855 = vmatprep.subr.mxu0 0.0
    %7856 = vmatpush2.msra.mxu0 0.0
    %7857 = vmatprep.subr.mxu0 0.0
    %7858 = vmatpush2.msra.mxu0 0.0
    %7859 = vmatprep.mubr.f32.mxu0 0.0
    %7860 = vmatmul.mubr.f32.gmra.mxu0 %v7793
    %v7861 = vpop.f32.mrf.mxu0
    %v7862 = vadd.f32 0.0, %v7861
    %v7863 = vpop.f32.mrf.mxu0
    %7864 = vdwg.mxu0
    %7865 = vrot.lane.b32.xlu0 %v243, 96
    %v7866 = vpop.permute.xlu0 %7865
    %v7869 = vsel %vm1528, %v6946, 0
    %7871 = vmatprep.subr.mxu0 0.0
    %7872 = vmatpush1.msra.mxu0 0.0
    %7873 = vmatprep.subr.mxu0 0.0
    %7874 = vmatpush1.msra.mxu0 0.0
    %7875 = vmatprep.subr.mxu0 0.0
    %7876 = vmatpush1.msra.mxu0 0.0
    %7877 = vmatprep.subr.mxu0 0.0
    %7878 = vmatpush1.msra.mxu0 0.0
    %7879 = vmatprep.subr.mxu0 0.0
    %7880 = vmatpush1.msra.mxu0 0.0
    %7881 = vmatprep.subr.mxu0 0.0
    %7882 = vmatpush1.msra.mxu0 0.0
    %7883 = vmatprep.subr.mxu0 0.0
    %7884 = vmatpush1.msra.mxu0 0.0
    %7885 = vmatprep.subr.mxu0 0.0
    %7886 = vmatpush1.msra.mxu0 0.0
    %7887 = vmatprep.subr.mxu0 0.0
    %7888 = vmatpush1.msra.mxu0 0.0
    %7889 = vmatprep.subr.mxu0 0.0
    %7890 = vmatpush1.msra.mxu0 0.0
    %7891 = vmatprep.subr.mxu0 0.0
    %7892 = vmatpush1.msra.mxu0 0.0
    %7893 = vmatprep.subr.mxu0 0.0
    %7894 = vmatpush1.msra.mxu0 0.0
    %7895 = vmatprep.subr.mxu0 0.0
    %7896 = vmatpush1.msra.mxu0 0.0
    %7897 = vmatprep.subr.mxu0 0.0
    %7898 = vmatpush1.msra.mxu0 0.0
    %7899 = vmatprep.subr.mxu0 0.0
    %7900 = vmatpush1.msra.mxu0 0.0
    %7901 = vmatprep.subr.mxu0 0.0
    %7902 = vmatpush1.msra.mxu0 %v7866
    %7903 = vmatprep.subr.mxu0 0.0
    %7904 = vmatpush2.msra.mxu0 0.0
    %7905 = vmatprep.subr.mxu0 0.0
    %7906 = vmatpush2.msra.mxu0 0.0
    %7907 = vmatprep.subr.mxu0 0.0
    %7908 = vmatpush2.msra.mxu0 0.0
    %7909 = vmatprep.subr.mxu0 0.0
    %7910 = vmatpush2.msra.mxu0 0.0
    %7911 = vmatprep.subr.mxu0 0.0
    %7912 = vmatpush2.msra.mxu0 0.0
    %7913 = vmatprep.subr.mxu0 0.0
    %7914 = vmatpush2.msra.mxu0 0.0
    %7915 = vmatprep.subr.mxu0 0.0
    %7916 = vmatpush2.msra.mxu0 0.0
    %7917 = vmatprep.subr.mxu0 0.0
    %7918 = vmatpush2.msra.mxu0 0.0
    %7919 = vmatprep.subr.mxu0 0.0
    %7920 = vmatpush2.msra.mxu0 0.0
    %7921 = vmatprep.subr.mxu0 0.0
    %7922 = vmatpush2.msra.mxu0 0.0
    %7923 = vmatprep.subr.mxu0 0.0
    %7924 = vmatpush2.msra.mxu0 0.0
    %7925 = vmatprep.subr.mxu0 0.0
    %7926 = vmatpush2.msra.mxu0 0.0
    %7927 = vmatprep.subr.mxu0 0.0
    %7928 = vmatpush2.msra.mxu0 0.0
    %7929 = vmatprep.subr.mxu0 0.0
    %7930 = vmatpush2.msra.mxu0 0.0
    %7931 = vmatprep.subr.mxu0 0.0
    %7932 = vmatpush2.msra.mxu0 0.0
    %7933 = vmatprep.subr.mxu0 0.0
    %7934 = vmatpush2.msra.mxu0 0.0
    %7935 = vmatprep.mubr.f32.mxu0 0.0
    %7936 = vmatmul.mubr.f32.gmra.mxu0 %v7869
    %v7937 = vpop.f32.mrf.mxu0
    %v7938 = vadd.f32 0.0, %v7937
    %v7939 = vpop.f32.mrf.mxu0
    %7940 = vdwg.mxu0
    %7941 = vrot.lane.b32.xlu0 %v249, 96
    %v7942 = vpop.permute.xlu0 %7941
    %v7945 = vsel %vm1528, %v6948, 0
    %7947 = vmatprep.subr.mxu0 0.0
    %7948 = vmatpush1.msra.mxu0 0.0
    %7949 = vmatprep.subr.mxu0 0.0
    %7950 = vmatpush1.msra.mxu0 0.0
    %7951 = vmatprep.subr.mxu0 0.0
    %7952 = vmatpush1.msra.mxu0 0.0
    %7953 = vmatprep.subr.mxu0 0.0
    %7954 = vmatpush1.msra.mxu0 0.0
    %7955 = vmatprep.subr.mxu0 0.0
    %7956 = vmatpush1.msra.mxu0 0.0
    %7957 = vmatprep.subr.mxu0 0.0
    %7958 = vmatpush1.msra.mxu0 0.0
    %7959 = vmatprep.subr.mxu0 0.0
    %7960 = vmatpush1.msra.mxu0 0.0
    %7961 = vmatprep.subr.mxu0 0.0
    %7962 = vmatpush1.msra.mxu0 0.0
    %7963 = vmatprep.subr.mxu0 0.0
    %7964 = vmatpush1.msra.mxu0 0.0
    %7965 = vmatprep.subr.mxu0 0.0
    %7966 = vmatpush1.msra.mxu0 0.0
    %7967 = vmatprep.subr.mxu0 0.0
    %7968 = vmatpush1.msra.mxu0 0.0
    %7969 = vmatprep.subr.mxu0 0.0
    %7970 = vmatpush1.msra.mxu0 0.0
    %7971 = vmatprep.subr.mxu0 0.0
    %7972 = vmatpush1.msra.mxu0 0.0
    %7973 = vmatprep.subr.mxu0 0.0
    %7974 = vmatpush1.msra.mxu0 0.0
    %7975 = vmatprep.subr.mxu0 0.0
    %7976 = vmatpush1.msra.mxu0 0.0
    %7977 = vmatprep.subr.mxu0 0.0
    %7978 = vmatpush1.msra.mxu0 %v7942
    %7979 = vmatprep.subr.mxu0 0.0
    %7980 = vmatpush2.msra.mxu0 0.0
    %7981 = vmatprep.subr.mxu0 0.0
    %7982 = vmatpush2.msra.mxu0 0.0
    %7983 = vmatprep.subr.mxu0 0.0
    %7984 = vmatpush2.msra.mxu0 0.0
    %7985 = vmatprep.subr.mxu0 0.0
    %7986 = vmatpush2.msra.mxu0 0.0
    %7987 = vmatprep.subr.mxu0 0.0
    %7988 = vmatpush2.msra.mxu0 0.0
    %7989 = vmatprep.subr.mxu0 0.0
    %7990 = vmatpush2.msra.mxu0 0.0
    %7991 = vmatprep.subr.mxu0 0.0
    %7992 = vmatpush2.msra.mxu0 0.0
    %7993 = vmatprep.subr.mxu0 0.0
    %7994 = vmatpush2.msra.mxu0 0.0
    %7995 = vmatprep.subr.mxu0 0.0
    %7996 = vmatpush2.msra.mxu0 0.0
    %7997 = vmatprep.subr.mxu0 0.0
    %7998 = vmatpush2.msra.mxu0 0.0
    %7999 = vmatprep.subr.mxu0 0.0
    %8000 = vmatpush2.msra.mxu0 0.0
    %8001 = vmatprep.subr.mxu0 0.0
    %8002 = vmatpush2.msra.mxu0 0.0
    %8003 = vmatprep.subr.mxu0 0.0
    %8004 = vmatpush2.msra.mxu0 0.0
    %8005 = vmatprep.subr.mxu0 0.0
    %8006 = vmatpush2.msra.mxu0 0.0
    %8007 = vmatprep.subr.mxu0 0.0
    %8008 = vmatpush2.msra.mxu0 0.0
    %8009 = vmatprep.subr.mxu0 0.0
    %8010 = vmatpush2.msra.mxu0 0.0
    %8011 = vmatprep.mubr.f32.mxu0 0.0
    %8012 = vmatmul.mubr.f32.gmra.mxu0 %v7945
    %v8013 = vpop.f32.mrf.mxu0
    %v8014 = vadd.f32 0.0, %v8013
    %v8015 = vpop.f32.mrf.mxu0
    %8016 = vdwg.mxu0
    %8017 = vrot.lane.b32.xlu0 %v255, 96
    %v8018 = vpop.permute.xlu0 %8017
    %v8021 = vsel %vm1528, %v6950, 0
    %8023 = vmatprep.subr.mxu0 0.0
    %8024 = vmatpush1.msra.mxu0 0.0
    %8025 = vmatprep.subr.mxu0 0.0
    %8026 = vmatpush1.msra.mxu0 0.0
    %8027 = vmatprep.subr.mxu0 0.0
    %8028 = vmatpush1.msra.mxu0 0.0
    %8029 = vmatprep.subr.mxu0 0.0
    %8030 = vmatpush1.msra.mxu0 0.0
    %8031 = vmatprep.subr.mxu0 0.0
    %8032 = vmatpush1.msra.mxu0 0.0
    %8033 = vmatprep.subr.mxu0 0.0
    %8034 = vmatpush1.msra.mxu0 0.0
    %8035 = vmatprep.subr.mxu0 0.0
    %8036 = vmatpush1.msra.mxu0 0.0
    %8037 = vmatprep.subr.mxu0 0.0
    %8038 = vmatpush1.msra.mxu0 0.0
    %8039 = vmatprep.subr.mxu0 0.0
    %8040 = vmatpush1.msra.mxu0 0.0
    %8041 = vmatprep.subr.mxu0 0.0
    %8042 = vmatpush1.msra.mxu0 0.0
    %8043 = vmatprep.subr.mxu0 0.0
    %8044 = vmatpush1.msra.mxu0 0.0
    %8045 = vmatprep.subr.mxu0 0.0
    %8046 = vmatpush1.msra.mxu0 0.0
    %8047 = vmatprep.subr.mxu0 0.0
    %8048 = vmatpush1.msra.mxu0 0.0
    %8049 = vmatprep.subr.mxu0 0.0
    %8050 = vmatpush1.msra.mxu0 0.0
    %8051 = vmatprep.subr.mxu0 0.0
    %8052 = vmatpush1.msra.mxu0 0.0
    %8053 = vmatprep.subr.mxu0 0.0
    %8054 = vmatpush1.msra.mxu0 %v8018
    %8055 = vmatprep.subr.mxu0 0.0
    %8056 = vmatpush2.msra.mxu0 0.0
    %8057 = vmatprep.subr.mxu0 0.0
    %8058 = vmatpush2.msra.mxu0 0.0
    %8059 = vmatprep.subr.mxu0 0.0
    %8060 = vmatpush2.msra.mxu0 0.0
    %8061 = vmatprep.subr.mxu0 0.0
    %8062 = vmatpush2.msra.mxu0 0.0
    %8063 = vmatprep.subr.mxu0 0.0
    %8064 = vmatpush2.msra.mxu0 0.0
    %8065 = vmatprep.subr.mxu0 0.0
    %8066 = vmatpush2.msra.mxu0 0.0
    %8067 = vmatprep.subr.mxu0 0.0
    %8068 = vmatpush2.msra.mxu0 0.0
    %8069 = vmatprep.subr.mxu0 0.0
    %8070 = vmatpush2.msra.mxu0 0.0
    %8071 = vmatprep.subr.mxu0 0.0
    %8072 = vmatpush2.msra.mxu0 0.0
    %8073 = vmatprep.subr.mxu0 0.0
    %8074 = vmatpush2.msra.mxu0 0.0
    %8075 = vmatprep.subr.mxu0 0.0
    %8076 = vmatpush2.msra.mxu0 0.0
    %8077 = vmatprep.subr.mxu0 0.0
    %8078 = vmatpush2.msra.mxu0 0.0
    %8079 = vmatprep.subr.mxu0 0.0
    %8080 = vmatpush2.msra.mxu0 0.0
    %8081 = vmatprep.subr.mxu0 0.0
    %8082 = vmatpush2.msra.mxu0 0.0
    %8083 = vmatprep.subr.mxu0 0.0
    %8084 = vmatpush2.msra.mxu0 0.0
    %8085 = vmatprep.subr.mxu0 0.0
    %8086 = vmatpush2.msra.mxu0 0.0
    %8087 = vmatprep.mubr.f32.mxu0 0.0
    %8088 = vmatmul.mubr.f32.gmra.mxu0 %v8021
    %v8089 = vpop.f32.mrf.mxu0
    %v8090 = vadd.f32 0.0, %v8089
    %v8091 = vpop.f32.mrf.mxu0
    %8092 = vdwg.mxu0
    %8093 = vrot.lane.b32.xlu0 %v261, 96
    %v8094 = vpop.permute.xlu0 %8093
    %v8097 = vsel %vm1528, %v6952, 0
    %8099 = vmatprep.subr.mxu0 0.0
    %8100 = vmatpush1.msra.mxu0 0.0
    %8101 = vmatprep.subr.mxu0 0.0
    %8102 = vmatpush1.msra.mxu0 0.0
    %8103 = vmatprep.subr.mxu0 0.0
    %8104 = vmatpush1.msra.mxu0 0.0
    %8105 = vmatprep.subr.mxu0 0.0
    %8106 = vmatpush1.msra.mxu0 0.0
    %8107 = vmatprep.subr.mxu0 0.0
    %8108 = vmatpush1.msra.mxu0 0.0
    %8109 = vmatprep.subr.mxu0 0.0
    %8110 = vmatpush1.msra.mxu0 0.0
    %8111 = vmatprep.subr.mxu0 0.0
    %8112 = vmatpush1.msra.mxu0 0.0
    %8113 = vmatprep.subr.mxu0 0.0
    %8114 = vmatpush1.msra.mxu0 0.0
    %8115 = vmatprep.subr.mxu0 0.0
    %8116 = vmatpush1.msra.mxu0 0.0
    %8117 = vmatprep.subr.mxu0 0.0
    %8118 = vmatpush1.msra.mxu0 0.0
    %8119 = vmatprep.subr.mxu0 0.0
    %8120 = vmatpush1.msra.mxu0 0.0
    %8121 = vmatprep.subr.mxu0 0.0
    %8122 = vmatpush1.msra.mxu0 0.0
    %8123 = vmatprep.subr.mxu0 0.0
    %8124 = vmatpush1.msra.mxu0 0.0
    %8125 = vmatprep.subr.mxu0 0.0
    %8126 = vmatpush1.msra.mxu0 0.0
    %8127 = vmatprep.subr.mxu0 0.0
    %8128 = vmatpush1.msra.mxu0 0.0
    %8129 = vmatprep.subr.mxu0 0.0
    %8130 = vmatpush1.msra.mxu0 %v8094
    %8131 = vmatprep.subr.mxu0 0.0
    %8132 = vmatpush2.msra.mxu0 0.0
    %8133 = vmatprep.subr.mxu0 0.0
    %8134 = vmatpush2.msra.mxu0 0.0
    %8135 = vmatprep.subr.mxu0 0.0
    %8136 = vmatpush2.msra.mxu0 0.0
    %8137 = vmatprep.subr.mxu0 0.0
    %8138 = vmatpush2.msra.mxu0 0.0
    %8139 = vmatprep.subr.mxu0 0.0
    %8140 = vmatpush2.msra.mxu0 0.0
    %8141 = vmatprep.subr.mxu0 0.0
    %8142 = vmatpush2.msra.mxu0 0.0
    %8143 = vmatprep.subr.mxu0 0.0
    %8144 = vmatpush2.msra.mxu0 0.0
    %8145 = vmatprep.subr.mxu0 0.0
    %8146 = vmatpush2.msra.mxu0 0.0
    %8147 = vmatprep.subr.mxu0 0.0
    %8148 = vmatpush2.msra.mxu0 0.0
    %8149 = vmatprep.subr.mxu0 0.0
    %8150 = vmatpush2.msra.mxu0 0.0
    %8151 = vmatprep.subr.mxu0 0.0
    %8152 = vmatpush2.msra.mxu0 0.0
    %8153 = vmatprep.subr.mxu0 0.0
    %8154 = vmatpush2.msra.mxu0 0.0
    %8155 = vmatprep.subr.mxu0 0.0
    %8156 = vmatpush2.msra.mxu0 0.0
    %8157 = vmatprep.subr.mxu0 0.0
    %8158 = vmatpush2.msra.mxu0 0.0
    %8159 = vmatprep.subr.mxu0 0.0
    %8160 = vmatpush2.msra.mxu0 0.0
    %8161 = vmatprep.subr.mxu0 0.0
    %8162 = vmatpush2.msra.mxu0 0.0
    %8163 = vmatprep.mubr.f32.mxu0 0.0
    %8164 = vmatmul.mubr.f32.gmra.mxu0 %v8097
    %v8165 = vpop.f32.mrf.mxu0
    %v8166 = vadd.f32 0.0, %v8165
    %v8167 = vpop.f32.mrf.mxu0
    %8168 = vdwg.mxu0
    %8169 = vrot.lane.b32.xlu0 %v263, 80
    %v8170 = vpop.permute.xlu0 %8169
    %8171 = vrot.lane.b32.xlu0 %v169, 16
    %v8172 = vpop.permute.xlu0 %8171
    %v8173 = vsel %vm282, %v8170, 0
    %v8175 = vsel %vm282, %v8172, 0
    %8177 = vmatprep.subr.mxu0 0.0
    %8178 = vmatpush1.xpose.msra.mxu0 0.0
    %8179 = vmatprep.subr.mxu0 0.0
    %8180 = vmatpush1.xpose.msra.mxu0 0.0
    %8181 = vmatprep.subr.mxu0 0.0
    %8182 = vmatpush1.xpose.msra.mxu0 0.0
    %8183 = vmatprep.subr.mxu0 0.0
    %8184 = vmatpush1.xpose.msra.mxu0 0.0
    %8185 = vmatprep.subr.mxu0 0.0
    %8186 = vmatpush1.xpose.msra.mxu0 0.0
    %8187 = vmatprep.subr.mxu0 0.0
    %8188 = vmatpush1.xpose.msra.mxu0 0.0
    %8189 = vmatprep.subr.mxu0 0.0
    %8190 = vmatpush1.xpose.msra.mxu0 0.0
    %8191 = vmatprep.subr.mxu0 0.0
    %8192 = vmatpush1.xpose.msra.mxu0 0.0
    %8193 = vmatprep.subr.mxu0 0.0
    %8194 = vmatpush1.xpose.msra.mxu0 0.0
    %8195 = vmatprep.subr.mxu0 0.0
    %8196 = vmatpush1.xpose.msra.mxu0 0.0
    %8197 = vmatprep.subr.mxu0 0.0
    %8198 = vmatpush1.xpose.msra.mxu0 0.0
    %8199 = vmatprep.subr.mxu0 0.0
    %8200 = vmatpush1.xpose.msra.mxu0 0.0
    %8201 = vmatprep.subr.mxu0 0.0
    %8202 = vmatpush1.xpose.msra.mxu0 0.0
    %8203 = vmatprep.subr.mxu0 0.0
    %8204 = vmatpush1.xpose.msra.mxu0 0.0
    %8205 = vmatprep.subr.mxu0 0.0
    %8206 = vmatpush1.xpose.msra.mxu0 0.0
    %8207 = vmatprep.subr.mxu0 0.0
    %8208 = vmatpush1.xpose.msra.mxu0 %v8175
    %8209 = vmatprep.subr.mxu0 0.0
    %8210 = vmatpush2.xpose.msra.mxu0 0.0
    %8211 = vmatprep.subr.mxu0 0.0
    %8212 = vmatpush2.xpose.msra.mxu0 0.0
    %8213 = vmatprep.subr.mxu0 0.0
    %8214 = vmatpush2.xpose.msra.mxu0 0.0
    %8215 = vmatprep.subr.mxu0 0.0
    %8216 = vmatpush2.xpose.msra.mxu0 0.0
    %8217 = vmatprep.subr.mxu0 0.0
    %8218 = vmatpush2.xpose.msra.mxu0 0.0
    %8219 = vmatprep.subr.mxu0 0.0
    %8220 = vmatpush2.xpose.msra.mxu0 0.0
    %8221 = vmatprep.subr.mxu0 0.0
    %8222 = vmatpush2.xpose.msra.mxu0 0.0
    %8223 = vmatprep.subr.mxu0 0.0
    %8224 = vmatpush2.xpose.msra.mxu0 0.0
    %8225 = vmatprep.subr.mxu0 0.0
    %8226 = vmatpush2.xpose.msra.mxu0 0.0
    %8227 = vmatprep.subr.mxu0 0.0
    %8228 = vmatpush2.xpose.msra.mxu0 0.0
    %8229 = vmatprep.subr.mxu0 0.0
    %8230 = vmatpush2.xpose.msra.mxu0 0.0
    %8231 = vmatprep.subr.mxu0 0.0
    %8232 = vmatpush2.xpose.msra.mxu0 0.0
    %8233 = vmatprep.subr.mxu0 0.0
    %8234 = vmatpush2.xpose.msra.mxu0 0.0
    %8235 = vmatprep.subr.mxu0 0.0
    %8236 = vmatpush2.xpose.msra.mxu0 0.0
    %8237 = vmatprep.subr.mxu0 0.0
    %8238 = vmatpush2.xpose.msra.mxu0 0.0
    %8239 = vmatprep.subr.mxu0 0.0
    %8240 = vmatpush2.xpose.msra.mxu0 0.0
    %8241 = vmatprep.mubr.f32.mxu0 0.0
    %8242 = vmatmul.mubr.f32.gmra.mxu0 %v8173
    %v8243 = vpop.f32.mrf.mxu0
    %v8244 = vadd.f32 0.0, %v8243
    %v8245 = vpop.f32.mrf.mxu0
    %8246 = vdwg.mxu0
    %8247 = vrot.lane.b32.xlu0 %v264, 80
    %v8248 = vpop.permute.xlu0 %8247
    %8249 = vrot.lane.b32.xlu0 %v175, 16
    %v8250 = vpop.permute.xlu0 %8249
    %v8251 = vsel %vm282, %v8248, 0
    %v8253 = vsel %vm282, %v8250, 0
    %8255 = vmatprep.subr.mxu0 0.0
    %8256 = vmatpush1.xpose.msra.mxu0 0.0
    %8257 = vmatprep.subr.mxu0 0.0
    %8258 = vmatpush1.xpose.msra.mxu0 0.0
    %8259 = vmatprep.subr.mxu0 0.0
    %8260 = vmatpush1.xpose.msra.mxu0 0.0
    %8261 = vmatprep.subr.mxu0 0.0
    %8262 = vmatpush1.xpose.msra.mxu0 0.0
    %8263 = vmatprep.subr.mxu0 0.0
    %8264 = vmatpush1.xpose.msra.mxu0 0.0
    %8265 = vmatprep.subr.mxu0 0.0
    %8266 = vmatpush1.xpose.msra.mxu0 0.0
    %8267 = vmatprep.subr.mxu0 0.0
    %8268 = vmatpush1.xpose.msra.mxu0 0.0
    %8269 = vmatprep.subr.mxu0 0.0
    %8270 = vmatpush1.xpose.msra.mxu0 0.0
    %8271 = vmatprep.subr.mxu0 0.0
    %8272 = vmatpush1.xpose.msra.mxu0 0.0
    %8273 = vmatprep.subr.mxu0 0.0
    %8274 = vmatpush1.xpose.msra.mxu0 0.0
    %8275 = vmatprep.subr.mxu0 0.0
    %8276 = vmatpush1.xpose.msra.mxu0 0.0
    %8277 = vmatprep.subr.mxu0 0.0
    %8278 = vmatpush1.xpose.msra.mxu0 0.0
    %8279 = vmatprep.subr.mxu0 0.0
    %8280 = vmatpush1.xpose.msra.mxu0 0.0
    %8281 = vmatprep.subr.mxu0 0.0
    %8282 = vmatpush1.xpose.msra.mxu0 0.0
    %8283 = vmatprep.subr.mxu0 0.0
    %8284 = vmatpush1.xpose.msra.mxu0 0.0
    %8285 = vmatprep.subr.mxu0 0.0
    %8286 = vmatpush1.xpose.msra.mxu0 %v8253
    %8287 = vmatprep.subr.mxu0 0.0
    %8288 = vmatpush2.xpose.msra.mxu0 0.0
    %8289 = vmatprep.subr.mxu0 0.0
    %8290 = vmatpush2.xpose.msra.mxu0 0.0
    %8291 = vmatprep.subr.mxu0 0.0
    %8292 = vmatpush2.xpose.msra.mxu0 0.0
    %8293 = vmatprep.subr.mxu0 0.0
    %8294 = vmatpush2.xpose.msra.mxu0 0.0
    %8295 = vmatprep.subr.mxu0 0.0
    %8296 = vmatpush2.xpose.msra.mxu0 0.0
    %8297 = vmatprep.subr.mxu0 0.0
    %8298 = vmatpush2.xpose.msra.mxu0 0.0
    %8299 = vmatprep.subr.mxu0 0.0
    %8300 = vmatpush2.xpose.msra.mxu0 0.0
    %8301 = vmatprep.subr.mxu0 0.0
    %8302 = vmatpush2.xpose.msra.mxu0 0.0
    %8303 = vmatprep.subr.mxu0 0.0
    %8304 = vmatpush2.xpose.msra.mxu0 0.0
    %8305 = vmatprep.subr.mxu0 0.0
    %8306 = vmatpush2.xpose.msra.mxu0 0.0
    %8307 = vmatprep.subr.mxu0 0.0
    %8308 = vmatpush2.xpose.msra.mxu0 0.0
    %8309 = vmatprep.subr.mxu0 0.0
    %8310 = vmatpush2.xpose.msra.mxu0 0.0
    %8311 = vmatprep.subr.mxu0 0.0
    %8312 = vmatpush2.xpose.msra.mxu0 0.0
    %8313 = vmatprep.subr.mxu0 0.0
    %8314 = vmatpush2.xpose.msra.mxu0 0.0
    %8315 = vmatprep.subr.mxu0 0.0
    %8316 = vmatpush2.xpose.msra.mxu0 0.0
    %8317 = vmatprep.subr.mxu0 0.0
    %8318 = vmatpush2.xpose.msra.mxu0 0.0
    %8319 = vmatprep.mubr.f32.mxu0 0.0
    %8320 = vmatmul.mubr.f32.gmra.mxu0 %v8251
    %v8321 = vpop.f32.mrf.mxu0
    %v8322 = vadd.f32 0.0, %v8321
    %v8323 = vpop.f32.mrf.mxu0
    %8324 = vdwg.mxu0
    %8325 = vrot.lane.b32.xlu0 %v265, 80
    %v8326 = vpop.permute.xlu0 %8325
    %8327 = vrot.lane.b32.xlu0 %v181, 16
    %v8328 = vpop.permute.xlu0 %8327
    %v8329 = vsel %vm282, %v8326, 0
    %v8331 = vsel %vm282, %v8328, 0
    %8333 = vmatprep.subr.mxu0 0.0
    %8334 = vmatpush1.xpose.msra.mxu0 0.0
    %8335 = vmatprep.subr.mxu0 0.0
    %8336 = vmatpush1.xpose.msra.mxu0 0.0
    %8337 = vmatprep.subr.mxu0 0.0
    %8338 = vmatpush1.xpose.msra.mxu0 0.0
    %8339 = vmatprep.subr.mxu0 0.0
    %8340 = vmatpush1.xpose.msra.mxu0 0.0
    %8341 = vmatprep.subr.mxu0 0.0
    %8342 = vmatpush1.xpose.msra.mxu0 0.0
    %8343 = vmatprep.subr.mxu0 0.0
    %8344 = vmatpush1.xpose.msra.mxu0 0.0
    %8345 = vmatprep.subr.mxu0 0.0
    %8346 = vmatpush1.xpose.msra.mxu0 0.0
    %8347 = vmatprep.subr.mxu0 0.0
    %8348 = vmatpush1.xpose.msra.mxu0 0.0
    %8349 = vmatprep.subr.mxu0 0.0
    %8350 = vmatpush1.xpose.msra.mxu0 0.0
    %8351 = vmatprep.subr.mxu0 0.0
    %8352 = vmatpush1.xpose.msra.mxu0 0.0
    %8353 = vmatprep.subr.mxu0 0.0
    %8354 = vmatpush1.xpose.msra.mxu0 0.0
    %8355 = vmatprep.subr.mxu0 0.0
    %8356 = vmatpush1.xpose.msra.mxu0 0.0
    %8357 = vmatprep.subr.mxu0 0.0
    %8358 = vmatpush1.xpose.msra.mxu0 0.0
    %8359 = vmatprep.subr.mxu0 0.0
    %8360 = vmatpush1.xpose.msra.mxu0 0.0
    %8361 = vmatprep.subr.mxu0 0.0
    %8362 = vmatpush1.xpose.msra.mxu0 0.0
    %8363 = vmatprep.subr.mxu0 0.0
    %8364 = vmatpush1.xpose.msra.mxu0 %v8331
    %8365 = vmatprep.subr.mxu0 0.0
    %8366 = vmatpush2.xpose.msra.mxu0 0.0
    %8367 = vmatprep.subr.mxu0 0.0
    %8368 = vmatpush2.xpose.msra.mxu0 0.0
    %8369 = vmatprep.subr.mxu0 0.0
    %8370 = vmatpush2.xpose.msra.mxu0 0.0
    %8371 = vmatprep.subr.mxu0 0.0
    %8372 = vmatpush2.xpose.msra.mxu0 0.0
    %8373 = vmatprep.subr.mxu0 0.0
    %8374 = vmatpush2.xpose.msra.mxu0 0.0
    %8375 = vmatprep.subr.mxu0 0.0
    %8376 = vmatpush2.xpose.msra.mxu0 0.0
    %8377 = vmatprep.subr.mxu0 0.0
    %8378 = vmatpush2.xpose.msra.mxu0 0.0
    %8379 = vmatprep.subr.mxu0 0.0
    %8380 = vmatpush2.xpose.msra.mxu0 0.0
    %8381 = vmatprep.subr.mxu0 0.0
    %8382 = vmatpush2.xpose.msra.mxu0 0.0
    %8383 = vmatprep.subr.mxu0 0.0
    %8384 = vmatpush2.xpose.msra.mxu0 0.0
    %8385 = vmatprep.subr.mxu0 0.0
    %8386 = vmatpush2.xpose.msra.mxu0 0.0
    %8387 = vmatprep.subr.mxu0 0.0
    %8388 = vmatpush2.xpose.msra.mxu0 0.0
    %8389 = vmatprep.subr.mxu0 0.0
    %8390 = vmatpush2.xpose.msra.mxu0 0.0
    %8391 = vmatprep.subr.mxu0 0.0
    %8392 = vmatpush2.xpose.msra.mxu0 0.0
    %8393 = vmatprep.subr.mxu0 0.0
    %8394 = vmatpush2.xpose.msra.mxu0 0.0
    %8395 = vmatprep.subr.mxu0 0.0
    %8396 = vmatpush2.xpose.msra.mxu0 0.0
    %8397 = vmatprep.mubr.f32.mxu0 0.0
    %8398 = vmatmul.mubr.f32.gmra.mxu0 %v8329
    %v8399 = vpop.f32.mrf.mxu0
    %v8400 = vadd.f32 0.0, %v8399
    %v8401 = vpop.f32.mrf.mxu0
    %8402 = vdwg.mxu0
    %8403 = vrot.lane.b32.xlu0 %v266, 80
    %v8404 = vpop.permute.xlu0 %8403
    %8405 = vrot.lane.b32.xlu0 %v187, 16
    %v8406 = vpop.permute.xlu0 %8405
    %v8407 = vsel %vm282, %v8404, 0
    %v8409 = vsel %vm282, %v8406, 0
    %8411 = vmatprep.subr.mxu0 0.0
    %8412 = vmatpush1.xpose.msra.mxu0 0.0
    %8413 = vmatprep.subr.mxu0 0.0
    %8414 = vmatpush1.xpose.msra.mxu0 0.0
    %8415 = vmatprep.subr.mxu0 0.0
    %8416 = vmatpush1.xpose.msra.mxu0 0.0
    %8417 = vmatprep.subr.mxu0 0.0
    %8418 = vmatpush1.xpose.msra.mxu0 0.0
    %8419 = vmatprep.subr.mxu0 0.0
    %8420 = vmatpush1.xpose.msra.mxu0 0.0
    %8421 = vmatprep.subr.mxu0 0.0
    %8422 = vmatpush1.xpose.msra.mxu0 0.0
    %8423 = vmatprep.subr.mxu0 0.0
    %8424 = vmatpush1.xpose.msra.mxu0 0.0
    %8425 = vmatprep.subr.mxu0 0.0
    %8426 = vmatpush1.xpose.msra.mxu0 0.0
    %8427 = vmatprep.subr.mxu0 0.0
    %8428 = vmatpush1.xpose.msra.mxu0 0.0
    %8429 = vmatprep.subr.mxu0 0.0
    %8430 = vmatpush1.xpose.msra.mxu0 0.0
    %8431 = vmatprep.subr.mxu0 0.0
    %8432 = vmatpush1.xpose.msra.mxu0 0.0
    %8433 = vmatprep.subr.mxu0 0.0
    %8434 = vmatpush1.xpose.msra.mxu0 0.0
    %8435 = vmatprep.subr.mxu0 0.0
    %8436 = vmatpush1.xpose.msra.mxu0 0.0
    %8437 = vmatprep.subr.mxu0 0.0
    %8438 = vmatpush1.xpose.msra.mxu0 0.0
    %8439 = vmatprep.subr.mxu0 0.0
    %8440 = vmatpush1.xpose.msra.mxu0 0.0
    %8441 = vmatprep.subr.mxu0 0.0
    %8442 = vmatpush1.xpose.msra.mxu0 %v8409
    %8443 = vmatprep.subr.mxu0 0.0
    %8444 = vmatpush2.xpose.msra.mxu0 0.0
    %8445 = vmatprep.subr.mxu0 0.0
    %8446 = vmatpush2.xpose.msra.mxu0 0.0
    %8447 = vmatprep.subr.mxu0 0.0
    %8448 = vmatpush2.xpose.msra.mxu0 0.0
    %8449 = vmatprep.subr.mxu0 0.0
    %8450 = vmatpush2.xpose.msra.mxu0 0.0
    %8451 = vmatprep.subr.mxu0 0.0
    %8452 = vmatpush2.xpose.msra.mxu0 0.0
    %8453 = vmatprep.subr.mxu0 0.0
    %8454 = vmatpush2.xpose.msra.mxu0 0.0
    %8455 = vmatprep.subr.mxu0 0.0
    %8456 = vmatpush2.xpose.msra.mxu0 0.0
    %8457 = vmatprep.subr.mxu0 0.0
    %8458 = vmatpush2.xpose.msra.mxu0 0.0
    %8459 = vmatprep.subr.mxu0 0.0
    %8460 = vmatpush2.xpose.msra.mxu0 0.0
    %8461 = vmatprep.subr.mxu0 0.0
    %8462 = vmatpush2.xpose.msra.mxu0 0.0
    %8463 = vmatprep.subr.mxu0 0.0
    %8464 = vmatpush2.xpose.msra.mxu0 0.0
    %8465 = vmatprep.subr.mxu0 0.0
    %8466 = vmatpush2.xpose.msra.mxu0 0.0
    %8467 = vmatprep.subr.mxu0 0.0
    %8468 = vmatpush2.xpose.msra.mxu0 0.0
    %8469 = vmatprep.subr.mxu0 0.0
    %8470 = vmatpush2.xpose.msra.mxu0 0.0
    %8471 = vmatprep.subr.mxu0 0.0
    %8472 = vmatpush2.xpose.msra.mxu0 0.0
    %8473 = vmatprep.subr.mxu0 0.0
    %8474 = vmatpush2.xpose.msra.mxu0 0.0
    %8475 = vmatprep.mubr.f32.mxu0 0.0
    %8476 = vmatmul.mubr.f32.gmra.mxu0 %v8407
    %v8477 = vpop.f32.mrf.mxu0
    %v8478 = vadd.f32 0.0, %v8477
    %v8479 = vpop.f32.mrf.mxu0
    %8480 = vdwg.mxu0
    %8481 = vrot.lane.b32.xlu0 %v267, 80
    %v8482 = vpop.permute.xlu0 %8481
    %8483 = vrot.lane.b32.xlu0 %v193, 16
    %v8484 = vpop.permute.xlu0 %8483
    %v8485 = vsel %vm282, %v8482, 0
    %v8487 = vsel %vm282, %v8484, 0
    %8489 = vmatprep.subr.mxu0 0.0
    %8490 = vmatpush1.xpose.msra.mxu0 0.0
    %8491 = vmatprep.subr.mxu0 0.0
    %8492 = vmatpush1.xpose.msra.mxu0 0.0
    %8493 = vmatprep.subr.mxu0 0.0
    %8494 = vmatpush1.xpose.msra.mxu0 0.0
    %8495 = vmatprep.subr.mxu0 0.0
    %8496 = vmatpush1.xpose.msra.mxu0 0.0
    %8497 = vmatprep.subr.mxu0 0.0
    %8498 = vmatpush1.xpose.msra.mxu0 0.0
    %8499 = vmatprep.subr.mxu0 0.0
    %8500 = vmatpush1.xpose.msra.mxu0 0.0
    %8501 = vmatprep.subr.mxu0 0.0
    %8502 = vmatpush1.xpose.msra.mxu0 0.0
    %8503 = vmatprep.subr.mxu0 0.0
    %8504 = vmatpush1.xpose.msra.mxu0 0.0
    %8505 = vmatprep.subr.mxu0 0.0
    %8506 = vmatpush1.xpose.msra.mxu0 0.0
    %8507 = vmatprep.subr.mxu0 0.0
    %8508 = vmatpush1.xpose.msra.mxu0 0.0
    %8509 = vmatprep.subr.mxu0 0.0
    %8510 = vmatpush1.xpose.msra.mxu0 0.0
    %8511 = vmatprep.subr.mxu0 0.0
    %8512 = vmatpush1.xpose.msra.mxu0 0.0
    %8513 = vmatprep.subr.mxu0 0.0
    %8514 = vmatpush1.xpose.msra.mxu0 0.0
    %8515 = vmatprep.subr.mxu0 0.0
    %8516 = vmatpush1.xpose.msra.mxu0 0.0
    %8517 = vmatprep.subr.mxu0 0.0
    %8518 = vmatpush1.xpose.msra.mxu0 0.0
    %8519 = vmatprep.subr.mxu0 0.0
    %8520 = vmatpush1.xpose.msra.mxu0 %v8487
    %8521 = vmatprep.subr.mxu0 0.0
    %8522 = vmatpush2.xpose.msra.mxu0 0.0
    %8523 = vmatprep.subr.mxu0 0.0
    %8524 = vmatpush2.xpose.msra.mxu0 0.0
    %8525 = vmatprep.subr.mxu0 0.0
    %8526 = vmatpush2.xpose.msra.mxu0 0.0
    %8527 = vmatprep.subr.mxu0 0.0
    %8528 = vmatpush2.xpose.msra.mxu0 0.0
    %8529 = vmatprep.subr.mxu0 0.0
    %8530 = vmatpush2.xpose.msra.mxu0 0.0
    %8531 = vmatprep.subr.mxu0 0.0
    %8532 = vmatpush2.xpose.msra.mxu0 0.0
    %8533 = vmatprep.subr.mxu0 0.0
    %8534 = vmatpush2.xpose.msra.mxu0 0.0
    %8535 = vmatprep.subr.mxu0 0.0
    %8536 = vmatpush2.xpose.msra.mxu0 0.0
    %8537 = vmatprep.subr.mxu0 0.0
    %8538 = vmatpush2.xpose.msra.mxu0 0.0
    %8539 = vmatprep.subr.mxu0 0.0
    %8540 = vmatpush2.xpose.msra.mxu0 0.0
    %8541 = vmatprep.subr.mxu0 0.0
    %8542 = vmatpush2.xpose.msra.mxu0 0.0
    %8543 = vmatprep.subr.mxu0 0.0
    %8544 = vmatpush2.xpose.msra.mxu0 0.0
    %8545 = vmatprep.subr.mxu0 0.0
    %8546 = vmatpush2.xpose.msra.mxu0 0.0
    %8547 = vmatprep.subr.mxu0 0.0
    %8548 = vmatpush2.xpose.msra.mxu0 0.0
    %8549 = vmatprep.subr.mxu0 0.0
    %8550 = vmatpush2.xpose.msra.mxu0 0.0
    %8551 = vmatprep.subr.mxu0 0.0
    %8552 = vmatpush2.xpose.msra.mxu0 0.0
    %8553 = vmatprep.mubr.f32.mxu0 0.0
    %8554 = vmatmul.mubr.f32.gmra.mxu0 %v8485
    %v8555 = vpop.f32.mrf.mxu0
    %v8556 = vadd.f32 0.0, %v8555
    %v8557 = vpop.f32.mrf.mxu0
    %8558 = vdwg.mxu0
    %8559 = vrot.lane.b32.xlu0 %v268, 80
    %v8560 = vpop.permute.xlu0 %8559
    %8561 = vrot.lane.b32.xlu0 %v199, 16
    %v8562 = vpop.permute.xlu0 %8561
    %v8563 = vsel %vm282, %v8560, 0
    %v8565 = vsel %vm282, %v8562, 0
    %8567 = vmatprep.subr.mxu0 0.0
    %8568 = vmatpush1.xpose.msra.mxu0 0.0
    %8569 = vmatprep.subr.mxu0 0.0
    %8570 = vmatpush1.xpose.msra.mxu0 0.0
    %8571 = vmatprep.subr.mxu0 0.0
    %8572 = vmatpush1.xpose.msra.mxu0 0.0
    %8573 = vmatprep.subr.mxu0 0.0
    %8574 = vmatpush1.xpose.msra.mxu0 0.0
    %8575 = vmatprep.subr.mxu0 0.0
    %8576 = vmatpush1.xpose.msra.mxu0 0.0
    %8577 = vmatprep.subr.mxu0 0.0
    %8578 = vmatpush1.xpose.msra.mxu0 0.0
    %8579 = vmatprep.subr.mxu0 0.0
    %8580 = vmatpush1.xpose.msra.mxu0 0.0
    %8581 = vmatprep.subr.mxu0 0.0
    %8582 = vmatpush1.xpose.msra.mxu0 0.0
    %8583 = vmatprep.subr.mxu0 0.0
    %8584 = vmatpush1.xpose.msra.mxu0 0.0
    %8585 = vmatprep.subr.mxu0 0.0
    %8586 = vmatpush1.xpose.msra.mxu0 0.0
    %8587 = vmatprep.subr.mxu0 0.0
    %8588 = vmatpush1.xpose.msra.mxu0 0.0
    %8589 = vmatprep.subr.mxu0 0.0
    %8590 = vmatpush1.xpose.msra.mxu0 0.0
    %8591 = vmatprep.subr.mxu0 0.0
    %8592 = vmatpush1.xpose.msra.mxu0 0.0
    %8593 = vmatprep.subr.mxu0 0.0
    %8594 = vmatpush1.xpose.msra.mxu0 0.0
    %8595 = vmatprep.subr.mxu0 0.0
    %8596 = vmatpush1.xpose.msra.mxu0 0.0
    %8597 = vmatprep.subr.mxu0 0.0
    %8598 = vmatpush1.xpose.msra.mxu0 %v8565
    %8599 = vmatprep.subr.mxu0 0.0
    %8600 = vmatpush2.xpose.msra.mxu0 0.0
    %8601 = vmatprep.subr.mxu0 0.0
    %8602 = vmatpush2.xpose.msra.mxu0 0.0
    %8603 = vmatprep.subr.mxu0 0.0
    %8604 = vmatpush2.xpose.msra.mxu0 0.0
    %8605 = vmatprep.subr.mxu0 0.0
    %8606 = vmatpush2.xpose.msra.mxu0 0.0
    %8607 = vmatprep.subr.mxu0 0.0
    %8608 = vmatpush2.xpose.msra.mxu0 0.0
    %8609 = vmatprep.subr.mxu0 0.0
    %8610 = vmatpush2.xpose.msra.mxu0 0.0
    %8611 = vmatprep.subr.mxu0 0.0
    %8612 = vmatpush2.xpose.msra.mxu0 0.0
    %8613 = vmatprep.subr.mxu0 0.0
    %8614 = vmatpush2.xpose.msra.mxu0 0.0
    %8615 = vmatprep.subr.mxu0 0.0
    %8616 = vmatpush2.xpose.msra.mxu0 0.0
    %8617 = vmatprep.subr.mxu0 0.0
    %8618 = vmatpush2.xpose.msra.mxu0 0.0
    %8619 = vmatprep.subr.mxu0 0.0
    %8620 = vmatpush2.xpose.msra.mxu0 0.0
    %8621 = vmatprep.subr.mxu0 0.0
    %8622 = vmatpush2.xpose.msra.mxu0 0.0
    %8623 = vmatprep.subr.mxu0 0.0
    %8624 = vmatpush2.xpose.msra.mxu0 0.0
    %8625 = vmatprep.subr.mxu0 0.0
    %8626 = vmatpush2.xpose.msra.mxu0 0.0
    %8627 = vmatprep.subr.mxu0 0.0
    %8628 = vmatpush2.xpose.msra.mxu0 0.0
    %8629 = vmatprep.subr.mxu0 0.0
    %8630 = vmatpush2.xpose.msra.mxu0 0.0
    %8631 = vmatprep.mubr.f32.mxu0 0.0
    %8632 = vmatmul.mubr.f32.gmra.mxu0 %v8563
    %v8633 = vpop.f32.mrf.mxu0
    %v8634 = vadd.f32 0.0, %v8633
    %v8635 = vpop.f32.mrf.mxu0
    %8636 = vdwg.mxu0
    %8637 = vrot.lane.b32.xlu0 %v269, 80
    %v8638 = vpop.permute.xlu0 %8637
    %8639 = vrot.lane.b32.xlu0 %v205, 16
    %v8640 = vpop.permute.xlu0 %8639
    %v8641 = vsel %vm282, %v8638, 0
    %v8643 = vsel %vm282, %v8640, 0
    %8645 = vmatprep.subr.mxu0 0.0
    %8646 = vmatpush1.xpose.msra.mxu0 0.0
    %8647 = vmatprep.subr.mxu0 0.0
    %8648 = vmatpush1.xpose.msra.mxu0 0.0
    %8649 = vmatprep.subr.mxu0 0.0
    %8650 = vmatpush1.xpose.msra.mxu0 0.0
    %8651 = vmatprep.subr.mxu0 0.0
    %8652 = vmatpush1.xpose.msra.mxu0 0.0
    %8653 = vmatprep.subr.mxu0 0.0
    %8654 = vmatpush1.xpose.msra.mxu0 0.0
    %8655 = vmatprep.subr.mxu0 0.0
    %8656 = vmatpush1.xpose.msra.mxu0 0.0
    %8657 = vmatprep.subr.mxu0 0.0
    %8658 = vmatpush1.xpose.msra.mxu0 0.0
    %8659 = vmatprep.subr.mxu0 0.0
    %8660 = vmatpush1.xpose.msra.mxu0 0.0
    %8661 = vmatprep.subr.mxu0 0.0
    %8662 = vmatpush1.xpose.msra.mxu0 0.0
    %8663 = vmatprep.subr.mxu0 0.0
    %8664 = vmatpush1.xpose.msra.mxu0 0.0
    %8665 = vmatprep.subr.mxu0 0.0
    %8666 = vmatpush1.xpose.msra.mxu0 0.0
    %8667 = vmatprep.subr.mxu0 0.0
    %8668 = vmatpush1.xpose.msra.mxu0 0.0
    %8669 = vmatprep.subr.mxu0 0.0
    %8670 = vmatpush1.xpose.msra.mxu0 0.0
    %8671 = vmatprep.subr.mxu0 0.0
    %8672 = vmatpush1.xpose.msra.mxu0 0.0
    %8673 = vmatprep.subr.mxu0 0.0
    %8674 = vmatpush1.xpose.msra.mxu0 0.0
    %8675 = vmatprep.subr.mxu0 0.0
    %8676 = vmatpush1.xpose.msra.mxu0 %v8643
    %8677 = vmatprep.subr.mxu0 0.0
    %8678 = vmatpush2.xpose.msra.mxu0 0.0
    %8679 = vmatprep.subr.mxu0 0.0
    %8680 = vmatpush2.xpose.msra.mxu0 0.0
    %8681 = vmatprep.subr.mxu0 0.0
    %8682 = vmatpush2.xpose.msra.mxu0 0.0
    %8683 = vmatprep.subr.mxu0 0.0
    %8684 = vmatpush2.xpose.msra.mxu0 0.0
    %8685 = vmatprep.subr.mxu0 0.0
    %8686 = vmatpush2.xpose.msra.mxu0 0.0
    %8687 = vmatprep.subr.mxu0 0.0
    %8688 = vmatpush2.xpose.msra.mxu0 0.0
    %8689 = vmatprep.subr.mxu0 0.0
    %8690 = vmatpush2.xpose.msra.mxu0 0.0
    %8691 = vmatprep.subr.mxu0 0.0
    %8692 = vmatpush2.xpose.msra.mxu0 0.0
    %8693 = vmatprep.subr.mxu0 0.0
    %8694 = vmatpush2.xpose.msra.mxu0 0.0
    %8695 = vmatprep.subr.mxu0 0.0
    %8696 = vmatpush2.xpose.msra.mxu0 0.0
    %8697 = vmatprep.subr.mxu0 0.0
    %8698 = vmatpush2.xpose.msra.mxu0 0.0
    %8699 = vmatprep.subr.mxu0 0.0
    %8700 = vmatpush2.xpose.msra.mxu0 0.0
    %8701 = vmatprep.subr.mxu0 0.0
    %8702 = vmatpush2.xpose.msra.mxu0 0.0
    %8703 = vmatprep.subr.mxu0 0.0
    %8704 = vmatpush2.xpose.msra.mxu0 0.0
    %8705 = vmatprep.subr.mxu0 0.0
    %8706 = vmatpush2.xpose.msra.mxu0 0.0
    %8707 = vmatprep.subr.mxu0 0.0
    %8708 = vmatpush2.xpose.msra.mxu0 0.0
    %8709 = vmatprep.mubr.f32.mxu0 0.0
    %8710 = vmatmul.mubr.f32.gmra.mxu0 %v8641
    %v8711 = vpop.f32.mrf.mxu0
    %v8712 = vadd.f32 0.0, %v8711
    %v8713 = vpop.f32.mrf.mxu0
    %8714 = vdwg.mxu0
    %8715 = vrot.lane.b32.xlu0 %v270, 80
    %v8716 = vpop.permute.xlu0 %8715
    %8717 = vrot.lane.b32.xlu0 %v211, 16
    %v8718 = vpop.permute.xlu0 %8717
    %v8719 = vsel %vm282, %v8716, 0
    %v8721 = vsel %vm282, %v8718, 0
    %8723 = vmatprep.subr.mxu0 0.0
    %8724 = vmatpush1.xpose.msra.mxu0 0.0
    %8725 = vmatprep.subr.mxu0 0.0
    %8726 = vmatpush1.xpose.msra.mxu0 0.0
    %8727 = vmatprep.subr.mxu0 0.0
    %8728 = vmatpush1.xpose.msra.mxu0 0.0
    %8729 = vmatprep.subr.mxu0 0.0
    %8730 = vmatpush1.xpose.msra.mxu0 0.0
    %8731 = vmatprep.subr.mxu0 0.0
    %8732 = vmatpush1.xpose.msra.mxu0 0.0
    %8733 = vmatprep.subr.mxu0 0.0
    %8734 = vmatpush1.xpose.msra.mxu0 0.0
    %8735 = vmatprep.subr.mxu0 0.0
    %8736 = vmatpush1.xpose.msra.mxu0 0.0
    %8737 = vmatprep.subr.mxu0 0.0
    %8738 = vmatpush1.xpose.msra.mxu0 0.0
    %8739 = vmatprep.subr.mxu0 0.0
    %8740 = vmatpush1.xpose.msra.mxu0 0.0
    %8741 = vmatprep.subr.mxu0 0.0
    %8742 = vmatpush1.xpose.msra.mxu0 0.0
    %8743 = vmatprep.subr.mxu0 0.0
    %8744 = vmatpush1.xpose.msra.mxu0 0.0
    %8745 = vmatprep.subr.mxu0 0.0
    %8746 = vmatpush1.xpose.msra.mxu0 0.0
    %8747 = vmatprep.subr.mxu0 0.0
    %8748 = vmatpush1.xpose.msra.mxu0 0.0
    %8749 = vmatprep.subr.mxu0 0.0
    %8750 = vmatpush1.xpose.msra.mxu0 0.0
    %8751 = vmatprep.subr.mxu0 0.0
    %8752 = vmatpush1.xpose.msra.mxu0 0.0
    %8753 = vmatprep.subr.mxu0 0.0
    %8754 = vmatpush1.xpose.msra.mxu0 %v8721
    %8755 = vmatprep.subr.mxu0 0.0
    %8756 = vmatpush2.xpose.msra.mxu0 0.0
    %8757 = vmatprep.subr.mxu0 0.0
    %8758 = vmatpush2.xpose.msra.mxu0 0.0
    %8759 = vmatprep.subr.mxu0 0.0
    %8760 = vmatpush2.xpose.msra.mxu0 0.0
    %8761 = vmatprep.subr.mxu0 0.0
    %8762 = vmatpush2.xpose.msra.mxu0 0.0
    %8763 = vmatprep.subr.mxu0 0.0
    %8764 = vmatpush2.xpose.msra.mxu0 0.0
    %8765 = vmatprep.subr.mxu0 0.0
    %8766 = vmatpush2.xpose.msra.mxu0 0.0
    %8767 = vmatprep.subr.mxu0 0.0
    %8768 = vmatpush2.xpose.msra.mxu0 0.0
    %8769 = vmatprep.subr.mxu0 0.0
    %8770 = vmatpush2.xpose.msra.mxu0 0.0
    %8771 = vmatprep.subr.mxu0 0.0
    %8772 = vmatpush2.xpose.msra.mxu0 0.0
    %8773 = vmatprep.subr.mxu0 0.0
    %8774 = vmatpush2.xpose.msra.mxu0 0.0
    %8775 = vmatprep.subr.mxu0 0.0
    %8776 = vmatpush2.xpose.msra.mxu0 0.0
    %8777 = vmatprep.subr.mxu0 0.0
    %8778 = vmatpush2.xpose.msra.mxu0 0.0
    %8779 = vmatprep.subr.mxu0 0.0
    %8780 = vmatpush2.xpose.msra.mxu0 0.0
    %8781 = vmatprep.subr.mxu0 0.0
    %8782 = vmatpush2.xpose.msra.mxu0 0.0
    %8783 = vmatprep.subr.mxu0 0.0
    %8784 = vmatpush2.xpose.msra.mxu0 0.0
    %8785 = vmatprep.subr.mxu0 0.0
    %8786 = vmatpush2.xpose.msra.mxu0 0.0
    %8787 = vmatprep.mubr.f32.mxu0 0.0
    %8788 = vmatmul.mubr.f32.gmra.mxu0 %v8719
    %v8789 = vpop.f32.mrf.mxu0
    %v8790 = vadd.f32 0.0, %v8789
    %v8791 = vpop.f32.mrf.mxu0
    %8792 = vdwg.mxu0
    %8793 = vrot.lane.b32.xlu0 %v271, 80
    %v8794 = vpop.permute.xlu0 %8793
    %8795 = vrot.lane.b32.xlu0 %v217, 16
    %v8796 = vpop.permute.xlu0 %8795
    %v8797 = vsel %vm282, %v8794, 0
    %v8799 = vsel %vm282, %v8796, 0
    %8801 = vmatprep.subr.mxu0 0.0
    %8802 = vmatpush1.xpose.msra.mxu0 0.0
    %8803 = vmatprep.subr.mxu0 0.0
    %8804 = vmatpush1.xpose.msra.mxu0 0.0
    %8805 = vmatprep.subr.mxu0 0.0
    %8806 = vmatpush1.xpose.msra.mxu0 0.0
    %8807 = vmatprep.subr.mxu0 0.0
    %8808 = vmatpush1.xpose.msra.mxu0 0.0
    %8809 = vmatprep.subr.mxu0 0.0
    %8810 = vmatpush1.xpose.msra.mxu0 0.0
    %8811 = vmatprep.subr.mxu0 0.0
    %8812 = vmatpush1.xpose.msra.mxu0 0.0
    %8813 = vmatprep.subr.mxu0 0.0
    %8814 = vmatpush1.xpose.msra.mxu0 0.0
    %8815 = vmatprep.subr.mxu0 0.0
    %8816 = vmatpush1.xpose.msra.mxu0 0.0
    %8817 = vmatprep.subr.mxu0 0.0
    %8818 = vmatpush1.xpose.msra.mxu0 0.0
    %8819 = vmatprep.subr.mxu0 0.0
    %8820 = vmatpush1.xpose.msra.mxu0 0.0
    %8821 = vmatprep.subr.mxu0 0.0
    %8822 = vmatpush1.xpose.msra.mxu0 0.0
    %8823 = vmatprep.subr.mxu0 0.0
    %8824 = vmatpush1.xpose.msra.mxu0 0.0
    %8825 = vmatprep.subr.mxu0 0.0
    %8826 = vmatpush1.xpose.msra.mxu0 0.0
    %8827 = vmatprep.subr.mxu0 0.0
    %8828 = vmatpush1.xpose.msra.mxu0 0.0
    %8829 = vmatprep.subr.mxu0 0.0
    %8830 = vmatpush1.xpose.msra.mxu0 0.0
    %8831 = vmatprep.subr.mxu0 0.0
    %8832 = vmatpush1.xpose.msra.mxu0 %v8799
    %8833 = vmatprep.subr.mxu0 0.0
    %8834 = vmatpush2.xpose.msra.mxu0 0.0
    %8835 = vmatprep.subr.mxu0 0.0
    %8836 = vmatpush2.xpose.msra.mxu0 0.0
    %8837 = vmatprep.subr.mxu0 0.0
    %8838 = vmatpush2.xpose.msra.mxu0 0.0
    %8839 = vmatprep.subr.mxu0 0.0
    %8840 = vmatpush2.xpose.msra.mxu0 0.0
    %8841 = vmatprep.subr.mxu0 0.0
    %8842 = vmatpush2.xpose.msra.mxu0 0.0
    %8843 = vmatprep.subr.mxu0 0.0
    %8844 = vmatpush2.xpose.msra.mxu0 0.0
    %8845 = vmatprep.subr.mxu0 0.0
    %8846 = vmatpush2.xpose.msra.mxu0 0.0
    %8847 = vmatprep.subr.mxu0 0.0
    %8848 = vmatpush2.xpose.msra.mxu0 0.0
    %8849 = vmatprep.subr.mxu0 0.0
    %8850 = vmatpush2.xpose.msra.mxu0 0.0
    %8851 = vmatprep.subr.mxu0 0.0
    %8852 = vmatpush2.xpose.msra.mxu0 0.0
    %8853 = vmatprep.subr.mxu0 0.0
    %8854 = vmatpush2.xpose.msra.mxu0 0.0
    %8855 = vmatprep.subr.mxu0 0.0
    %8856 = vmatpush2.xpose.msra.mxu0 0.0
    %8857 = vmatprep.subr.mxu0 0.0
    %8858 = vmatpush2.xpose.msra.mxu0 0.0
    %8859 = vmatprep.subr.mxu0 0.0
    %8860 = vmatpush2.xpose.msra.mxu0 0.0
    %8861 = vmatprep.subr.mxu0 0.0
    %8862 = vmatpush2.xpose.msra.mxu0 0.0
    %8863 = vmatprep.subr.mxu0 0.0
    %8864 = vmatpush2.xpose.msra.mxu0 0.0
    %8865 = vmatprep.mubr.f32.mxu0 0.0
    %8866 = vmatmul.mubr.f32.gmra.mxu0 %v8797
    %v8867 = vpop.f32.mrf.mxu0
    %v8868 = vadd.f32 0.0, %v8867
    %v8869 = vpop.f32.mrf.mxu0
    %8870 = vdwg.mxu0
    %8871 = vrot.lane.b32.xlu0 %v272, 80
    %v8872 = vpop.permute.xlu0 %8871
    %8873 = vrot.lane.b32.xlu0 %v223, 16
    %v8874 = vpop.permute.xlu0 %8873
    %v8875 = vsel %vm282, %v8872, 0
    %v8877 = vsel %vm282, %v8874, 0
    %8879 = vmatprep.subr.mxu0 0.0
    %8880 = vmatpush1.xpose.msra.mxu0 0.0
    %8881 = vmatprep.subr.mxu0 0.0
    %8882 = vmatpush1.xpose.msra.mxu0 0.0
    %8883 = vmatprep.subr.mxu0 0.0
    %8884 = vmatpush1.xpose.msra.mxu0 0.0
    %8885 = vmatprep.subr.mxu0 0.0
    %8886 = vmatpush1.xpose.msra.mxu0 0.0
    %8887 = vmatprep.subr.mxu0 0.0
    %8888 = vmatpush1.xpose.msra.mxu0 0.0
    %8889 = vmatprep.subr.mxu0 0.0
    %8890 = vmatpush1.xpose.msra.mxu0 0.0
    %8891 = vmatprep.subr.mxu0 0.0
    %8892 = vmatpush1.xpose.msra.mxu0 0.0
    %8893 = vmatprep.subr.mxu0 0.0
    %8894 = vmatpush1.xpose.msra.mxu0 0.0
    %8895 = vmatprep.subr.mxu0 0.0
    %8896 = vmatpush1.xpose.msra.mxu0 0.0
    %8897 = vmatprep.subr.mxu0 0.0
    %8898 = vmatpush1.xpose.msra.mxu0 0.0
    %8899 = vmatprep.subr.mxu0 0.0
    %8900 = vmatpush1.xpose.msra.mxu0 0.0
    %8901 = vmatprep.subr.mxu0 0.0
    %8902 = vmatpush1.xpose.msra.mxu0 0.0
    %8903 = vmatprep.subr.mxu0 0.0
    %8904 = vmatpush1.xpose.msra.mxu0 0.0
    %8905 = vmatprep.subr.mxu0 0.0
    %8906 = vmatpush1.xpose.msra.mxu0 0.0
    %8907 = vmatprep.subr.mxu0 0.0
    %8908 = vmatpush1.xpose.msra.mxu0 0.0
    %8909 = vmatprep.subr.mxu0 0.0
    %8910 = vmatpush1.xpose.msra.mxu0 %v8877
    %8911 = vmatprep.subr.mxu0 0.0
    %8912 = vmatpush2.xpose.msra.mxu0 0.0
    %8913 = vmatprep.subr.mxu0 0.0
    %8914 = vmatpush2.xpose.msra.mxu0 0.0
    %8915 = vmatprep.subr.mxu0 0.0
    %8916 = vmatpush2.xpose.msra.mxu0 0.0
    %8917 = vmatprep.subr.mxu0 0.0
    %8918 = vmatpush2.xpose.msra.mxu0 0.0
    %8919 = vmatprep.subr.mxu0 0.0
    %8920 = vmatpush2.xpose.msra.mxu0 0.0
    %8921 = vmatprep.subr.mxu0 0.0
    %8922 = vmatpush2.xpose.msra.mxu0 0.0
    %8923 = vmatprep.subr.mxu0 0.0
    %8924 = vmatpush2.xpose.msra.mxu0 0.0
    %8925 = vmatprep.subr.mxu0 0.0
    %8926 = vmatpush2.xpose.msra.mxu0 0.0
    %8927 = vmatprep.subr.mxu0 0.0
    %8928 = vmatpush2.xpose.msra.mxu0 0.0
    %8929 = vmatprep.subr.mxu0 0.0
    %8930 = vmatpush2.xpose.msra.mxu0 0.0
    %8931 = vmatprep.subr.mxu0 0.0
    %8932 = vmatpush2.xpose.msra.mxu0 0.0
    %8933 = vmatprep.subr.mxu0 0.0
    %8934 = vmatpush2.xpose.msra.mxu0 0.0
    %8935 = vmatprep.subr.mxu0 0.0
    %8936 = vmatpush2.xpose.msra.mxu0 0.0
    %8937 = vmatprep.subr.mxu0 0.0
    %8938 = vmatpush2.xpose.msra.mxu0 0.0
    %8939 = vmatprep.subr.mxu0 0.0
    %8940 = vmatpush2.xpose.msra.mxu0 0.0
    %8941 = vmatprep.subr.mxu0 0.0
    %8942 = vmatpush2.xpose.msra.mxu0 0.0
    %8943 = vmatprep.mubr.f32.mxu0 0.0
    %8944 = vmatmul.mubr.f32.gmra.mxu0 %v8875
    %v8945 = vpop.f32.mrf.mxu0
    %v8946 = vadd.f32 0.0, %v8945
    %v8947 = vpop.f32.mrf.mxu0
    %8948 = vdwg.mxu0
    %8949 = vrot.lane.b32.xlu0 %v273, 80
    %v8950 = vpop.permute.xlu0 %8949
    %8951 = vrot.lane.b32.xlu0 %v229, 16
    %v8952 = vpop.permute.xlu0 %8951
    %v8953 = vsel %vm282, %v8950, 0
    %v8955 = vsel %vm282, %v8952, 0
    %8957 = vmatprep.subr.mxu0 0.0
    %8958 = vmatpush1.xpose.msra.mxu0 0.0
    %8959 = vmatprep.subr.mxu0 0.0
    %8960 = vmatpush1.xpose.msra.mxu0 0.0
    %8961 = vmatprep.subr.mxu0 0.0
    %8962 = vmatpush1.xpose.msra.mxu0 0.0
    %8963 = vmatprep.subr.mxu0 0.0
    %8964 = vmatpush1.xpose.msra.mxu0 0.0
    %8965 = vmatprep.subr.mxu0 0.0
    %8966 = vmatpush1.xpose.msra.mxu0 0.0
    %8967 = vmatprep.subr.mxu0 0.0
    %8968 = vmatpush1.xpose.msra.mxu0 0.0
    %8969 = vmatprep.subr.mxu0 0.0
    %8970 = vmatpush1.xpose.msra.mxu0 0.0
    %8971 = vmatprep.subr.mxu0 0.0
    %8972 = vmatpush1.xpose.msra.mxu0 0.0
    %8973 = vmatprep.subr.mxu0 0.0
    %8974 = vmatpush1.xpose.msra.mxu0 0.0
    %8975 = vmatprep.subr.mxu0 0.0
    %8976 = vmatpush1.xpose.msra.mxu0 0.0
    %8977 = vmatprep.subr.mxu0 0.0
    %8978 = vmatpush1.xpose.msra.mxu0 0.0
    %8979 = vmatprep.subr.mxu0 0.0
    %8980 = vmatpush1.xpose.msra.mxu0 0.0
    %8981 = vmatprep.subr.mxu0 0.0
    %8982 = vmatpush1.xpose.msra.mxu0 0.0
    %8983 = vmatprep.subr.mxu0 0.0
    %8984 = vmatpush1.xpose.msra.mxu0 0.0
    %8985 = vmatprep.subr.mxu0 0.0
    %8986 = vmatpush1.xpose.msra.mxu0 0.0
    %8987 = vmatprep.subr.mxu0 0.0
    %8988 = vmatpush1.xpose.msra.mxu0 %v8955
    %8989 = vmatprep.subr.mxu0 0.0
    %8990 = vmatpush2.xpose.msra.mxu0 0.0
    %8991 = vmatprep.subr.mxu0 0.0
    %8992 = vmatpush2.xpose.msra.mxu0 0.0
    %8993 = vmatprep.subr.mxu0 0.0
    %8994 = vmatpush2.xpose.msra.mxu0 0.0
    %8995 = vmatprep.subr.mxu0 0.0
    %8996 = vmatpush2.xpose.msra.mxu0 0.0
    %8997 = vmatprep.subr.mxu0 0.0
    %8998 = vmatpush2.xpose.msra.mxu0 0.0
    %8999 = vmatprep.subr.mxu0 0.0
    %9000 = vmatpush2.xpose.msra.mxu0 0.0
    %9001 = vmatprep.subr.mxu0 0.0
    %9002 = vmatpush2.xpose.msra.mxu0 0.0
    %9003 = vmatprep.subr.mxu0 0.0
    %9004 = vmatpush2.xpose.msra.mxu0 0.0
    %9005 = vmatprep.subr.mxu0 0.0
    %9006 = vmatpush2.xpose.msra.mxu0 0.0
    %9007 = vmatprep.subr.mxu0 0.0
    %9008 = vmatpush2.xpose.msra.mxu0 0.0
    %9009 = vmatprep.subr.mxu0 0.0
    %9010 = vmatpush2.xpose.msra.mxu0 0.0
    %9011 = vmatprep.subr.mxu0 0.0
    %9012 = vmatpush2.xpose.msra.mxu0 0.0
    %9013 = vmatprep.subr.mxu0 0.0
    %9014 = vmatpush2.xpose.msra.mxu0 0.0
    %9015 = vmatprep.subr.mxu0 0.0
    %9016 = vmatpush2.xpose.msra.mxu0 0.0
    %9017 = vmatprep.subr.mxu0 0.0
    %9018 = vmatpush2.xpose.msra.mxu0 0.0
    %9019 = vmatprep.subr.mxu0 0.0
    %9020 = vmatpush2.xpose.msra.mxu0 0.0
    %9021 = vmatprep.mubr.f32.mxu0 0.0
    %9022 = vmatmul.mubr.f32.gmra.mxu0 %v8953
    %v9023 = vpop.f32.mrf.mxu0
    %v9024 = vadd.f32 0.0, %v9023
    %v9025 = vpop.f32.mrf.mxu0
    %9026 = vdwg.mxu0
    %9027 = vrot.lane.b32.xlu0 %v274, 80
    %v9028 = vpop.permute.xlu0 %9027
    %9029 = vrot.lane.b32.xlu0 %v235, 16
    %v9030 = vpop.permute.xlu0 %9029
    %v9031 = vsel %vm282, %v9028, 0
    %v9033 = vsel %vm282, %v9030, 0
    %9035 = vmatprep.subr.mxu0 0.0
    %9036 = vmatpush1.xpose.msra.mxu0 0.0
    %9037 = vmatprep.subr.mxu0 0.0
    %9038 = vmatpush1.xpose.msra.mxu0 0.0
    %9039 = vmatprep.subr.mxu0 0.0
    %9040 = vmatpush1.xpose.msra.mxu0 0.0
    %9041 = vmatprep.subr.mxu0 0.0
    %9042 = vmatpush1.xpose.msra.mxu0 0.0
    %9043 = vmatprep.subr.mxu0 0.0
    %9044 = vmatpush1.xpose.msra.mxu0 0.0
    %9045 = vmatprep.subr.mxu0 0.0
    %9046 = vmatpush1.xpose.msra.mxu0 0.0
    %9047 = vmatprep.subr.mxu0 0.0
    %9048 = vmatpush1.xpose.msra.mxu0 0.0
    %9049 = vmatprep.subr.mxu0 0.0
    %9050 = vmatpush1.xpose.msra.mxu0 0.0
    %9051 = vmatprep.subr.mxu0 0.0
    %9052 = vmatpush1.xpose.msra.mxu0 0.0
    %9053 = vmatprep.subr.mxu0 0.0
    %9054 = vmatpush1.xpose.msra.mxu0 0.0
    %9055 = vmatprep.subr.mxu0 0.0
    %9056 = vmatpush1.xpose.msra.mxu0 0.0
    %9057 = vmatprep.subr.mxu0 0.0
    %9058 = vmatpush1.xpose.msra.mxu0 0.0
    %9059 = vmatprep.subr.mxu0 0.0
    %9060 = vmatpush1.xpose.msra.mxu0 0.0
    %9061 = vmatprep.subr.mxu0 0.0
    %9062 = vmatpush1.xpose.msra.mxu0 0.0
    %9063 = vmatprep.subr.mxu0 0.0
    %9064 = vmatpush1.xpose.msra.mxu0 0.0
    %9065 = vmatprep.subr.mxu0 0.0
    %9066 = vmatpush1.xpose.msra.mxu0 %v9033
    %9067 = vmatprep.subr.mxu0 0.0
    %9068 = vmatpush2.xpose.msra.mxu0 0.0
    %9069 = vmatprep.subr.mxu0 0.0
    %9070 = vmatpush2.xpose.msra.mxu0 0.0
    %9071 = vmatprep.subr.mxu0 0.0
    %9072 = vmatpush2.xpose.msra.mxu0 0.0
    %9073 = vmatprep.subr.mxu0 0.0
    %9074 = vmatpush2.xpose.msra.mxu0 0.0
    %9075 = vmatprep.subr.mxu0 0.0
    %9076 = vmatpush2.xpose.msra.mxu0 0.0
    %9077 = vmatprep.subr.mxu0 0.0
    %9078 = vmatpush2.xpose.msra.mxu0 0.0
    %9079 = vmatprep.subr.mxu0 0.0
    %9080 = vmatpush2.xpose.msra.mxu0 0.0
    %9081 = vmatprep.subr.mxu0 0.0
    %9082 = vmatpush2.xpose.msra.mxu0 0.0
    %9083 = vmatprep.subr.mxu0 0.0
    %9084 = vmatpush2.xpose.msra.mxu0 0.0
    %9085 = vmatprep.subr.mxu0 0.0
    %9086 = vmatpush2.xpose.msra.mxu0 0.0
    %9087 = vmatprep.subr.mxu0 0.0
    %9088 = vmatpush2.xpose.msra.mxu0 0.0
    %9089 = vmatprep.subr.mxu0 0.0
    %9090 = vmatpush2.xpose.msra.mxu0 0.0
    %9091 = vmatprep.subr.mxu0 0.0
    %9092 = vmatpush2.xpose.msra.mxu0 0.0
    %9093 = vmatprep.subr.mxu0 0.0
    %9094 = vmatpush2.xpose.msra.mxu0 0.0
    %9095 = vmatprep.subr.mxu0 0.0
    %9096 = vmatpush2.xpose.msra.mxu0 0.0
    %9097 = vmatprep.subr.mxu0 0.0
    %9098 = vmatpush2.xpose.msra.mxu0 0.0
    %9099 = vmatprep.mubr.f32.mxu0 0.0
    %9100 = vmatmul.mubr.f32.gmra.mxu0 %v9031
    %v9101 = vpop.f32.mrf.mxu0
    %v9102 = vadd.f32 0.0, %v9101
    %v9103 = vpop.f32.mrf.mxu0
    %9104 = vdwg.mxu0
    %9105 = vrot.lane.b32.xlu0 %v275, 80
    %v9106 = vpop.permute.xlu0 %9105
    %9107 = vrot.lane.b32.xlu0 %v241, 16
    %v9108 = vpop.permute.xlu0 %9107
    %v9109 = vsel %vm282, %v9106, 0
    %v9111 = vsel %vm282, %v9108, 0
    %9113 = vmatprep.subr.mxu0 0.0
    %9114 = vmatpush1.xpose.msra.mxu0 0.0
    %9115 = vmatprep.subr.mxu0 0.0
    %9116 = vmatpush1.xpose.msra.mxu0 0.0
    %9117 = vmatprep.subr.mxu0 0.0
    %9118 = vmatpush1.xpose.msra.mxu0 0.0
    %9119 = vmatprep.subr.mxu0 0.0
    %9120 = vmatpush1.xpose.msra.mxu0 0.0
    %9121 = vmatprep.subr.mxu0 0.0
    %9122 = vmatpush1.xpose.msra.mxu0 0.0
    %9123 = vmatprep.subr.mxu0 0.0
    %9124 = vmatpush1.xpose.msra.mxu0 0.0
    %9125 = vmatprep.subr.mxu0 0.0
    %9126 = vmatpush1.xpose.msra.mxu0 0.0
    %9127 = vmatprep.subr.mxu0 0.0
    %9128 = vmatpush1.xpose.msra.mxu0 0.0
    %9129 = vmatprep.subr.mxu0 0.0
    %9130 = vmatpush1.xpose.msra.mxu0 0.0
    %9131 = vmatprep.subr.mxu0 0.0
    %9132 = vmatpush1.xpose.msra.mxu0 0.0
    %9133 = vmatprep.subr.mxu0 0.0
    %9134 = vmatpush1.xpose.msra.mxu0 0.0
    %9135 = vmatprep.subr.mxu0 0.0
    %9136 = vmatpush1.xpose.msra.mxu0 0.0
    %9137 = vmatprep.subr.mxu0 0.0
    %9138 = vmatpush1.xpose.msra.mxu0 0.0
    %9139 = vmatprep.subr.mxu0 0.0
    %9140 = vmatpush1.xpose.msra.mxu0 0.0
    %9141 = vmatprep.subr.mxu0 0.0
    %9142 = vmatpush1.xpose.msra.mxu0 0.0
    %9143 = vmatprep.subr.mxu0 0.0
    %9144 = vmatpush1.xpose.msra.mxu0 %v9111
    %9145 = vmatprep.subr.mxu0 0.0
    %9146 = vmatpush2.xpose.msra.mxu0 0.0
    %9147 = vmatprep.subr.mxu0 0.0
    %9148 = vmatpush2.xpose.msra.mxu0 0.0
    %9149 = vmatprep.subr.mxu0 0.0
    %9150 = vmatpush2.xpose.msra.mxu0 0.0
    %9151 = vmatprep.subr.mxu0 0.0
    %9152 = vmatpush2.xpose.msra.mxu0 0.0
    %9153 = vmatprep.subr.mxu0 0.0
    %9154 = vmatpush2.xpose.msra.mxu0 0.0
    %9155 = vmatprep.subr.mxu0 0.0
    %9156 = vmatpush2.xpose.msra.mxu0 0.0
    %9157 = vmatprep.subr.mxu0 0.0
    %9158 = vmatpush2.xpose.msra.mxu0 0.0
    %9159 = vmatprep.subr.mxu0 0.0
    %9160 = vmatpush2.xpose.msra.mxu0 0.0
    %9161 = vmatprep.subr.mxu0 0.0
    %9162 = vmatpush2.xpose.msra.mxu0 0.0
    %9163 = vmatprep.subr.mxu0 0.0
    %9164 = vmatpush2.xpose.msra.mxu0 0.0
    %9165 = vmatprep.subr.mxu0 0.0
    %9166 = vmatpush2.xpose.msra.mxu0 0.0
    %9167 = vmatprep.subr.mxu0 0.0
    %9168 = vmatpush2.xpose.msra.mxu0 0.0
    %9169 = vmatprep.subr.mxu0 0.0
    %9170 = vmatpush2.xpose.msra.mxu0 0.0
    %9171 = vmatprep.subr.mxu0 0.0
    %9172 = vmatpush2.xpose.msra.mxu0 0.0
    %9173 = vmatprep.subr.mxu0 0.0
    %9174 = vmatpush2.xpose.msra.mxu0 0.0
    %9175 = vmatprep.subr.mxu0 0.0
    %9176 = vmatpush2.xpose.msra.mxu0 0.0
    %9177 = vmatprep.mubr.f32.mxu0 0.0
    %9178 = vmatmul.mubr.f32.gmra.mxu0 %v9109
    %v9179 = vpop.f32.mrf.mxu0
    %v9180 = vadd.f32 0.0, %v9179
    %v9181 = vpop.f32.mrf.mxu0
    %9182 = vdwg.mxu0
    %9183 = vrot.lane.b32.xlu0 %v276, 80
    %v9184 = vpop.permute.xlu0 %9183
    %9185 = vrot.lane.b32.xlu0 %v247, 16
    %v9186 = vpop.permute.xlu0 %9185
    %v9187 = vsel %vm282, %v9184, 0
    %v9189 = vsel %vm282, %v9186, 0
    %9191 = vmatprep.subr.mxu0 0.0
    %9192 = vmatpush1.xpose.msra.mxu0 0.0
    %9193 = vmatprep.subr.mxu0 0.0
    %9194 = vmatpush1.xpose.msra.mxu0 0.0
    %9195 = vmatprep.subr.mxu0 0.0
    %9196 = vmatpush1.xpose.msra.mxu0 0.0
    %9197 = vmatprep.subr.mxu0 0.0
    %9198 = vmatpush1.xpose.msra.mxu0 0.0
    %9199 = vmatprep.subr.mxu0 0.0
    %9200 = vmatpush1.xpose.msra.mxu0 0.0
    %9201 = vmatprep.subr.mxu0 0.0
    %9202 = vmatpush1.xpose.msra.mxu0 0.0
    %9203 = vmatprep.subr.mxu0 0.0
    %9204 = vmatpush1.xpose.msra.mxu0 0.0
    %9205 = vmatprep.subr.mxu0 0.0
    %9206 = vmatpush1.xpose.msra.mxu0 0.0
    %9207 = vmatprep.subr.mxu0 0.0
    %9208 = vmatpush1.xpose.msra.mxu0 0.0
    %9209 = vmatprep.subr.mxu0 0.0
    %9210 = vmatpush1.xpose.msra.mxu0 0.0
    %9211 = vmatprep.subr.mxu0 0.0
    %9212 = vmatpush1.xpose.msra.mxu0 0.0
    %9213 = vmatprep.subr.mxu0 0.0
    %9214 = vmatpush1.xpose.msra.mxu0 0.0
    %9215 = vmatprep.subr.mxu0 0.0
    %9216 = vmatpush1.xpose.msra.mxu0 0.0
    %9217 = vmatprep.subr.mxu0 0.0
    %9218 = vmatpush1.xpose.msra.mxu0 0.0
    %9219 = vmatprep.subr.mxu0 0.0
    %9220 = vmatpush1.xpose.msra.mxu0 0.0
    %9221 = vmatprep.subr.mxu0 0.0
    %9222 = vmatpush1.xpose.msra.mxu0 %v9189
    %9223 = vmatprep.subr.mxu0 0.0
    %9224 = vmatpush2.xpose.msra.mxu0 0.0
    %9225 = vmatprep.subr.mxu0 0.0
    %9226 = vmatpush2.xpose.msra.mxu0 0.0
    %9227 = vmatprep.subr.mxu0 0.0
    %9228 = vmatpush2.xpose.msra.mxu0 0.0
    %9229 = vmatprep.subr.mxu0 0.0
    %9230 = vmatpush2.xpose.msra.mxu0 0.0
    %9231 = vmatprep.subr.mxu0 0.0
    %9232 = vmatpush2.xpose.msra.mxu0 0.0
    %9233 = vmatprep.subr.mxu0 0.0
    %9234 = vmatpush2.xpose.msra.mxu0 0.0
    %9235 = vmatprep.subr.mxu0 0.0
    %9236 = vmatpush2.xpose.msra.mxu0 0.0
    %9237 = vmatprep.subr.mxu0 0.0
    %9238 = vmatpush2.xpose.msra.mxu0 0.0
    %9239 = vmatprep.subr.mxu0 0.0
    %9240 = vmatpush2.xpose.msra.mxu0 0.0
    %9241 = vmatprep.subr.mxu0 0.0
    %9242 = vmatpush2.xpose.msra.mxu0 0.0
    %9243 = vmatprep.subr.mxu0 0.0
    %9244 = vmatpush2.xpose.msra.mxu0 0.0
    %9245 = vmatprep.subr.mxu0 0.0
    %9246 = vmatpush2.xpose.msra.mxu0 0.0
    %9247 = vmatprep.subr.mxu0 0.0
    %9248 = vmatpush2.xpose.msra.mxu0 0.0
    %9249 = vmatprep.subr.mxu0 0.0
    %9250 = vmatpush2.xpose.msra.mxu0 0.0
    %9251 = vmatprep.subr.mxu0 0.0
    %9252 = vmatpush2.xpose.msra.mxu0 0.0
    %9253 = vmatprep.subr.mxu0 0.0
    %9254 = vmatpush2.xpose.msra.mxu0 0.0
    %9255 = vmatprep.mubr.f32.mxu0 0.0
    %9256 = vmatmul.mubr.f32.gmra.mxu0 %v9187
    %v9257 = vpop.f32.mrf.mxu0
    %v9258 = vadd.f32 0.0, %v9257
    %v9259 = vpop.f32.mrf.mxu0
    %9260 = vdwg.mxu0
    %9261 = vrot.lane.b32.xlu0 %v277, 80
    %v9262 = vpop.permute.xlu0 %9261
    %9263 = vrot.lane.b32.xlu0 %v253, 16
    %v9264 = vpop.permute.xlu0 %9263
    %v9265 = vsel %vm282, %v9262, 0
    %v9267 = vsel %vm282, %v9264, 0
    %9269 = vmatprep.subr.mxu0 0.0
    %9270 = vmatpush1.xpose.msra.mxu0 0.0
    %9271 = vmatprep.subr.mxu0 0.0
    %9272 = vmatpush1.xpose.msra.mxu0 0.0
    %9273 = vmatprep.subr.mxu0 0.0
    %9274 = vmatpush1.xpose.msra.mxu0 0.0
    %9275 = vmatprep.subr.mxu0 0.0
    %9276 = vmatpush1.xpose.msra.mxu0 0.0
    %9277 = vmatprep.subr.mxu0 0.0
    %9278 = vmatpush1.xpose.msra.mxu0 0.0
    %9279 = vmatprep.subr.mxu0 0.0
    %9280 = vmatpush1.xpose.msra.mxu0 0.0
    %9281 = vmatprep.subr.mxu0 0.0
    %9282 = vmatpush1.xpose.msra.mxu0 0.0
    %9283 = vmatprep.subr.mxu0 0.0
    %9284 = vmatpush1.xpose.msra.mxu0 0.0
    %9285 = vmatprep.subr.mxu0 0.0
    %9286 = vmatpush1.xpose.msra.mxu0 0.0
    %9287 = vmatprep.subr.mxu0 0.0
    %9288 = vmatpush1.xpose.msra.mxu0 0.0
    %9289 = vmatprep.subr.mxu0 0.0
    %9290 = vmatpush1.xpose.msra.mxu0 0.0
    %9291 = vmatprep.subr.mxu0 0.0
    %9292 = vmatpush1.xpose.msra.mxu0 0.0
    %9293 = vmatprep.subr.mxu0 0.0
    %9294 = vmatpush1.xpose.msra.mxu0 0.0
    %9295 = vmatprep.subr.mxu0 0.0
    %9296 = vmatpush1.xpose.msra.mxu0 0.0
    %9297 = vmatprep.subr.mxu0 0.0
    %9298 = vmatpush1.xpose.msra.mxu0 0.0
    %9299 = vmatprep.subr.mxu0 0.0
    %9300 = vmatpush1.xpose.msra.mxu0 %v9267
    %9301 = vmatprep.subr.mxu0 0.0
    %9302 = vmatpush2.xpose.msra.mxu0 0.0
    %9303 = vmatprep.subr.mxu0 0.0
    %9304 = vmatpush2.xpose.msra.mxu0 0.0
    %9305 = vmatprep.subr.mxu0 0.0
    %9306 = vmatpush2.xpose.msra.mxu0 0.0
    %9307 = vmatprep.subr.mxu0 0.0
    %9308 = vmatpush2.xpose.msra.mxu0 0.0
    %9309 = vmatprep.subr.mxu0 0.0
    %9310 = vmatpush2.xpose.msra.mxu0 0.0
    %9311 = vmatprep.subr.mxu0 0.0
    %9312 = vmatpush2.xpose.msra.mxu0 0.0
    %9313 = vmatprep.subr.mxu0 0.0
    %9314 = vmatpush2.xpose.msra.mxu0 0.0
    %9315 = vmatprep.subr.mxu0 0.0
    %9316 = vmatpush2.xpose.msra.mxu0 0.0
    %9317 = vmatprep.subr.mxu0 0.0
    %9318 = vmatpush2.xpose.msra.mxu0 0.0
    %9319 = vmatprep.subr.mxu0 0.0
    %9320 = vmatpush2.xpose.msra.mxu0 0.0
    %9321 = vmatprep.subr.mxu0 0.0
    %9322 = vmatpush2.xpose.msra.mxu0 0.0
    %9323 = vmatprep.subr.mxu0 0.0
    %9324 = vmatpush2.xpose.msra.mxu0 0.0
    %9325 = vmatprep.subr.mxu0 0.0
    %9326 = vmatpush2.xpose.msra.mxu0 0.0
    %9327 = vmatprep.subr.mxu0 0.0
    %9328 = vmatpush2.xpose.msra.mxu0 0.0
    %9329 = vmatprep.subr.mxu0 0.0
    %9330 = vmatpush2.xpose.msra.mxu0 0.0
    %9331 = vmatprep.subr.mxu0 0.0
    %9332 = vmatpush2.xpose.msra.mxu0 0.0
    %9333 = vmatprep.mubr.f32.mxu0 0.0
    %9334 = vmatmul.mubr.f32.gmra.mxu0 %v9265
    %v9335 = vpop.f32.mrf.mxu0
    %v9336 = vadd.f32 0.0, %v9335
    %v9337 = vpop.f32.mrf.mxu0
    %9338 = vdwg.mxu0
    %9339 = vrot.lane.b32.xlu0 %v278, 80
    %v9340 = vpop.permute.xlu0 %9339
    %9341 = vrot.lane.b32.xlu0 %v259, 16
    %v9342 = vpop.permute.xlu0 %9341
    %v9343 = vsel %vm282, %v9340, 0
    %v9345 = vsel %vm282, %v9342, 0
    %9347 = vmatprep.subr.mxu0 0.0
    %9348 = vmatpush1.xpose.msra.mxu0 0.0
    %9349 = vmatprep.subr.mxu0 0.0
    %9350 = vmatpush1.xpose.msra.mxu0 0.0
    %9351 = vmatprep.subr.mxu0 0.0
    %9352 = vmatpush1.xpose.msra.mxu0 0.0
    %9353 = vmatprep.subr.mxu0 0.0
    %9354 = vmatpush1.xpose.msra.mxu0 0.0
    %9355 = vmatprep.subr.mxu0 0.0
    %9356 = vmatpush1.xpose.msra.mxu0 0.0
    %9357 = vmatprep.subr.mxu0 0.0
    %9358 = vmatpush1.xpose.msra.mxu0 0.0
    %9359 = vmatprep.subr.mxu0 0.0
    %9360 = vmatpush1.xpose.msra.mxu0 0.0
    %9361 = vmatprep.subr.mxu0 0.0
    %9362 = vmatpush1.xpose.msra.mxu0 0.0
    %9363 = vmatprep.subr.mxu0 0.0
    %9364 = vmatpush1.xpose.msra.mxu0 0.0
    %9365 = vmatprep.subr.mxu0 0.0
    %9366 = vmatpush1.xpose.msra.mxu0 0.0
    %9367 = vmatprep.subr.mxu0 0.0
    %9368 = vmatpush1.xpose.msra.mxu0 0.0
    %9369 = vmatprep.subr.mxu0 0.0
    %9370 = vmatpush1.xpose.msra.mxu0 0.0
    %9371 = vmatprep.subr.mxu0 0.0
    %9372 = vmatpush1.xpose.msra.mxu0 0.0
    %9373 = vmatprep.subr.mxu0 0.0
    %9374 = vmatpush1.xpose.msra.mxu0 0.0
    %9375 = vmatprep.subr.mxu0 0.0
    %9376 = vmatpush1.xpose.msra.mxu0 0.0
    %9377 = vmatprep.subr.mxu0 0.0
    %9378 = vmatpush1.xpose.msra.mxu0 %v9345
    %9379 = vmatprep.subr.mxu0 0.0
    %9380 = vmatpush2.xpose.msra.mxu0 0.0
    %9381 = vmatprep.subr.mxu0 0.0
    %9382 = vmatpush2.xpose.msra.mxu0 0.0
    %9383 = vmatprep.subr.mxu0 0.0
    %9384 = vmatpush2.xpose.msra.mxu0 0.0
    %9385 = vmatprep.subr.mxu0 0.0
    %9386 = vmatpush2.xpose.msra.mxu0 0.0
    %9387 = vmatprep.subr.mxu0 0.0
    %9388 = vmatpush2.xpose.msra.mxu0 0.0
    %9389 = vmatprep.subr.mxu0 0.0
    %9390 = vmatpush2.xpose.msra.mxu0 0.0
    %9391 = vmatprep.subr.mxu0 0.0
    %9392 = vmatpush2.xpose.msra.mxu0 0.0
    %9393 = vmatprep.subr.mxu0 0.0
    %9394 = vmatpush2.xpose.msra.mxu0 0.0
    %9395 = vmatprep.subr.mxu0 0.0
    %9396 = vmatpush2.xpose.msra.mxu0 0.0
    %9397 = vmatprep.subr.mxu0 0.0
    %9398 = vmatpush2.xpose.msra.mxu0 0.0
    %9399 = vmatprep.subr.mxu0 0.0
    %9400 = vmatpush2.xpose.msra.mxu0 0.0
    %9401 = vmatprep.subr.mxu0 0.0
    %9402 = vmatpush2.xpose.msra.mxu0 0.0
    %9403 = vmatprep.subr.mxu0 0.0
    %9404 = vmatpush2.xpose.msra.mxu0 0.0
    %9405 = vmatprep.subr.mxu0 0.0
    %9406 = vmatpush2.xpose.msra.mxu0 0.0
    %9407 = vmatprep.subr.mxu0 0.0
    %9408 = vmatpush2.xpose.msra.mxu0 0.0
    %9409 = vmatprep.subr.mxu0 0.0
    %9410 = vmatpush2.xpose.msra.mxu0 0.0
    %9411 = vmatprep.mubr.f32.mxu0 0.0
    %9412 = vmatmul.mubr.f32.gmra.mxu0 %v9343
    %v9413 = vpop.f32.mrf.mxu0
    %v9414 = vadd.f32 0.0, %v9413
    %v9415 = vpop.f32.mrf.mxu0
    %9416 = vdwg.mxu0
    %v9417 = vsel %vm1528, %v8244, -inf
    %9418 = vmax.xlane.f32.xlu0 %v9417
    %v9419 = vpop.xlane.xlu0 %9418
    %v9420 = vsel %vm1528, %v8322, -inf
    %9421 = vmax.xlane.f32.xlu0 %v9420
    %v9422 = vpop.xlane.xlu0 %9421
    %v9423 = vsel %vm1528, %v8400, -inf
    %9424 = vmax.xlane.f32.xlu0 %v9423
    %v9425 = vpop.xlane.xlu0 %9424
    %v9426 = vsel %vm1528, %v8478, -inf
    %9427 = vmax.xlane.f32.xlu0 %v9426
    %v9428 = vpop.xlane.xlu0 %9427
    %v9429 = vsel %vm1528, %v8556, -inf
    %9430 = vmax.xlane.f32.xlu0 %v9429
    %v9431 = vpop.xlane.xlu0 %9430
    %v9432 = vsel %vm1528, %v8634, -inf
    %9433 = vmax.xlane.f32.xlu0 %v9432
    %v9434 = vpop.xlane.xlu0 %9433
    %v9435 = vsel %vm1528, %v8712, -inf
    %9436 = vmax.xlane.f32.xlu0 %v9435
    %v9437 = vpop.xlane.xlu0 %9436
    %v9438 = vsel %vm1528, %v8790, -inf
    %9439 = vmax.xlane.f32.xlu0 %v9438
    %v9440 = vpop.xlane.xlu0 %9439
    %v9441 = vsel %vm1528, %v8868, -inf
    %9442 = vmax.xlane.f32.xlu0 %v9441
    %v9443 = vpop.xlane.xlu0 %9442
    %v9444 = vsel %vm1528, %v8946, -inf
    %9445 = vmax.xlane.f32.xlu0 %v9444
    %v9446 = vpop.xlane.xlu0 %9445
    %v9447 = vsel %vm1528, %v9024, -inf
    %9448 = vmax.xlane.f32.xlu0 %v9447
    %v9449 = vpop.xlane.xlu0 %9448
    %v9450 = vsel %vm1528, %v9102, -inf
    %9451 = vmax.xlane.f32.xlu0 %v9450
    %v9452 = vpop.xlane.xlu0 %9451
    %v9453 = vsel %vm1528, %v9180, -inf
    %9454 = vmax.xlane.f32.xlu0 %v9453
    %v9455 = vpop.xlane.xlu0 %9454
    %v9456 = vsel %vm1528, %v9258, -inf
    %9457 = vmax.xlane.f32.xlu0 %v9456
    %v9458 = vpop.xlane.xlu0 %9457
    %v9459 = vsel %vm1528, %v9336, -inf
    %9460 = vmax.xlane.f32.xlu0 %v9459
    %v9461 = vpop.xlane.xlu0 %9460
    %v9462 = vsel %vm1528, %v9414, -inf
    %9463 = vmax.xlane.f32.xlu0 %v9462
    %v9464 = vpop.xlane.xlu0 %9463
    %v9465 = vsub.f32 %v8244, %v9419
    %v9466 = vsub.f32 %v8322, %v9422
    %v9467 = vsub.f32 %v8400, %v9425
    %v9468 = vsub.f32 %v8478, %v9428
    %v9469 = vsub.f32 %v8556, %v9431
    %v9470 = vsub.f32 %v8634, %v9434
    %v9471 = vsub.f32 %v8712, %v9437
    %v9472 = vsub.f32 %v8790, %v9440
    %v9473 = vsub.f32 %v8868, %v9443
    %v9474 = vsub.f32 %v8946, %v9446
    %v9475 = vsub.f32 %v9024, %v9449
    %v9476 = vsub.f32 %v9102, %v9452
    %v9477 = vsub.f32 %v9180, %v9455
    %v9478 = vsub.f32 %v9258, %v9458
    %v9479 = vsub.f32 %v9336, %v9461
    %v9480 = vsub.f32 %v9414, %v9464
    %v9481 = vmul.f32 %v9465, 1.442695
    %v9482 = vpow.pop %v9481
    %v9483 = vmul.f32 %v9466, 1.442695
    %v9484 = vpow.pop %v9483
    %v9485 = vmul.f32 %v9467, 1.442695
    %v9486 = vpow.pop %v9485
    %v9487 = vmul.f32 %v9468, 1.442695
    %v9488 = vpow.pop %v9487
    %v9489 = vmul.f32 %v9469, 1.442695
    %v9490 = vpow.pop %v9489
    %v9491 = vmul.f32 %v9470, 1.442695
    %v9492 = vpow.pop %v9491
    %v9493 = vmul.f32 %v9471, 1.442695
    %v9494 = vpow.pop %v9493
    %v9495 = vmul.f32 %v9472, 1.442695
    %v9496 = vpow.pop %v9495
    %v9497 = vmul.f32 %v9473, 1.442695
    %v9498 = vpow.pop %v9497
    %v9499 = vmul.f32 %v9474, 1.442695
    %v9500 = vpow.pop %v9499
    %v9501 = vmul.f32 %v9475, 1.442695
    %v9502 = vpow.pop %v9501
    %v9503 = vmul.f32 %v9476, 1.442695
    %v9504 = vpow.pop %v9503
    %v9505 = vmul.f32 %v9477, 1.442695
    %v9506 = vpow.pop %v9505
    %v9507 = vmul.f32 %v9478, 1.442695
    %v9508 = vpow.pop %v9507
    %v9509 = vmul.f32 %v9479, 1.442695
    %v9510 = vpow.pop %v9509
    %v9511 = vmul.f32 %v9480, 1.442695
    %v9512 = vpow.pop %v9511
    %v9513 = vsel %vm1528, %v9482, 0.0
    %9514 = vadd.xlane.f32.xlu0 %v9513
    %v9515 = vpop.xlane.xlu0 %9514
    %v9516 = vsel %vm1528, %v9484, 0.0
    %9517 = vadd.xlane.f32.xlu0 %v9516
    %v9518 = vpop.xlane.xlu0 %9517
    %v9519 = vsel %vm1528, %v9486, 0.0
    %9520 = vadd.xlane.f32.xlu0 %v9519
    %v9521 = vpop.xlane.xlu0 %9520
    %v9522 = vsel %vm1528, %v9488, 0.0
    %9523 = vadd.xlane.f32.xlu0 %v9522
    %v9524 = vpop.xlane.xlu0 %9523
    %v9525 = vsel %vm1528, %v9490, 0.0
    %9526 = vadd.xlane.f32.xlu0 %v9525
    %v9527 = vpop.xlane.xlu0 %9526
    %v9528 = vsel %vm1528, %v9492, 0.0
    %9529 = vadd.xlane.f32.xlu0 %v9528
    %v9530 = vpop.xlane.xlu0 %9529
    %v9531 = vsel %vm1528, %v9494, 0.0
    %9532 = vadd.xlane.f32.xlu0 %v9531
    %v9533 = vpop.xlane.xlu0 %9532
    %v9534 = vsel %vm1528, %v9496, 0.0
    %9535 = vadd.xlane.f32.xlu0 %v9534
    %v9536 = vpop.xlane.xlu0 %9535
    %v9537 = vsel %vm1528, %v9498, 0.0
    %9538 = vadd.xlane.f32.xlu0 %v9537
    %v9539 = vpop.xlane.xlu0 %9538
    %v9540 = vsel %vm1528, %v9500, 0.0
    %9541 = vadd.xlane.f32.xlu0 %v9540
    %v9542 = vpop.xlane.xlu0 %9541
    %v9543 = vsel %vm1528, %v9502, 0.0
    %9544 = vadd.xlane.f32.xlu0 %v9543
    %v9545 = vpop.xlane.xlu0 %9544
    %v9546 = vsel %vm1528, %v9504, 0.0
    %9547 = vadd.xlane.f32.xlu0 %v9546
    %v9548 = vpop.xlane.xlu0 %9547
    %v9549 = vsel %vm1528, %v9506, 0.0
    %9550 = vadd.xlane.f32.xlu0 %v9549
    %v9551 = vpop.xlane.xlu0 %9550
    %v9552 = vsel %vm1528, %v9508, 0.0
    %9553 = vadd.xlane.f32.xlu0 %v9552
    %v9554 = vpop.xlane.xlu0 %9553
    %v9555 = vsel %vm1528, %v9510, 0.0
    %9556 = vadd.xlane.f32.xlu0 %v9555
    %v9557 = vpop.xlane.xlu0 %9556
    %v9558 = vsel %vm1528, %v9512, 0.0
    %9559 = vadd.xlane.f32.xlu0 %v9558
    %v9560 = vpop.xlane.xlu0 %9559
    %v9561 = vrcp.pop %v9515
    %v9562 = vmul.f32 %v9482, %v9561
    %v9563 = vrcp.pop %v9518
    %v9564 = vmul.f32 %v9484, %v9563
    %v9565 = vrcp.pop %v9521
    %v9566 = vmul.f32 %v9486, %v9565
    %v9567 = vrcp.pop %v9524
    %v9568 = vmul.f32 %v9488, %v9567
    %v9569 = vrcp.pop %v9527
    %v9570 = vmul.f32 %v9490, %v9569
    %v9571 = vrcp.pop %v9530
    %v9572 = vmul.f32 %v9492, %v9571
    %v9573 = vrcp.pop %v9533
    %v9574 = vmul.f32 %v9494, %v9573
    %v9575 = vrcp.pop %v9536
    %v9576 = vmul.f32 %v9496, %v9575
    %v9577 = vrcp.pop %v9539
    %v9578 = vmul.f32 %v9498, %v9577
    %v9579 = vrcp.pop %v9542
    %v9580 = vmul.f32 %v9500, %v9579
    %v9581 = vrcp.pop %v9545
    %v9582 = vmul.f32 %v9502, %v9581
    %v9583 = vrcp.pop %v9548
    %v9584 = vmul.f32 %v9504, %v9583
    %v9585 = vrcp.pop %v9551
    %v9586 = vmul.f32 %v9506, %v9585
    %v9587 = vrcp.pop %v9554
    %v9588 = vmul.f32 %v9508, %v9587
    %v9589 = vrcp.pop %v9557
    %v9590 = vmul.f32 %v9510, %v9589
    %v9591 = vrcp.pop %v9560
    %v9592 = vmul.f32 %v9512, %v9591
    %9593 = vrot.lane.b32.xlu0 %v171, 80
    %v9594 = vpop.permute.xlu0 %9593
    %v9597 = vsel %vm1528, %v9562, 0
    %9599 = vmatprep.subr.mxu0 0.0
    %9600 = vmatpush1.msra.mxu0 0.0
    %9601 = vmatprep.subr.mxu0 0.0
    %9602 = vmatpush1.msra.mxu0 0.0
    %9603 = vmatprep.subr.mxu0 0.0
    %9604 = vmatpush1.msra.mxu0 0.0
    %9605 = vmatprep.subr.mxu0 0.0
    %9606 = vmatpush1.msra.mxu0 0.0
    %9607 = vmatprep.subr.mxu0 0.0
    %9608 = vmatpush1.msra.mxu0 0.0
    %9609 = vmatprep.subr.mxu0 0.0
    %9610 = vmatpush1.msra.mxu0 0.0
    %9611 = vmatprep.subr.mxu0 0.0
    %9612 = vmatpush1.msra.mxu0 0.0
    %9613 = vmatprep.subr.mxu0 0.0
    %9614 = vmatpush1.msra.mxu0 0.0
    %9615 = vmatprep.subr.mxu0 0.0
    %9616 = vmatpush1.msra.mxu0 0.0
    %9617 = vmatprep.subr.mxu0 0.0
    %9618 = vmatpush1.msra.mxu0 0.0
    %9619 = vmatprep.subr.mxu0 0.0
    %9620 = vmatpush1.msra.mxu0 0.0
    %9621 = vmatprep.subr.mxu0 0.0
    %9622 = vmatpush1.msra.mxu0 0.0
    %9623 = vmatprep.subr.mxu0 0.0
    %9624 = vmatpush1.msra.mxu0 0.0
    %9625 = vmatprep.subr.mxu0 0.0
    %9626 = vmatpush1.msra.mxu0 0.0
    %9627 = vmatprep.subr.mxu0 0.0
    %9628 = vmatpush1.msra.mxu0 0.0
    %9629 = vmatprep.subr.mxu0 0.0
    %9630 = vmatpush1.msra.mxu0 %v9594
    %9631 = vmatprep.subr.mxu0 0.0
    %9632 = vmatpush2.msra.mxu0 0.0
    %9633 = vmatprep.subr.mxu0 0.0
    %9634 = vmatpush2.msra.mxu0 0.0
    %9635 = vmatprep.subr.mxu0 0.0
    %9636 = vmatpush2.msra.mxu0 0.0
    %9637 = vmatprep.subr.mxu0 0.0
    %9638 = vmatpush2.msra.mxu0 0.0
    %9639 = vmatprep.subr.mxu0 0.0
    %9640 = vmatpush2.msra.mxu0 0.0
    %9641 = vmatprep.subr.mxu0 0.0
    %9642 = vmatpush2.msra.mxu0 0.0
    %9643 = vmatprep.subr.mxu0 0.0
    %9644 = vmatpush2.msra.mxu0 0.0
    %9645 = vmatprep.subr.mxu0 0.0
    %9646 = vmatpush2.msra.mxu0 0.0
    %9647 = vmatprep.subr.mxu0 0.0
    %9648 = vmatpush2.msra.mxu0 0.0
    %9649 = vmatprep.subr.mxu0 0.0
    %9650 = vmatpush2.msra.mxu0 0.0
    %9651 = vmatprep.subr.mxu0 0.0
    %9652 = vmatpush2.msra.mxu0 0.0
    %9653 = vmatprep.subr.mxu0 0.0
    %9654 = vmatpush2.msra.mxu0 0.0
    %9655 = vmatprep.subr.mxu0 0.0
    %9656 = vmatpush2.msra.mxu0 0.0
    %9657 = vmatprep.subr.mxu0 0.0
    %9658 = vmatpush2.msra.mxu0 0.0
    %9659 = vmatprep.subr.mxu0 0.0
    %9660 = vmatpush2.msra.mxu0 0.0
    %9661 = vmatprep.subr.mxu0 0.0
    %9662 = vmatpush2.msra.mxu0 0.0
    %9663 = vmatprep.mubr.f32.mxu0 0.0
    %9664 = vmatmul.mubr.f32.gmra.mxu0 %v9597
    %v9665 = vpop.f32.mrf.mxu0
    %v9666 = vadd.f32 0.0, %v9665
    %v9667 = vpop.f32.mrf.mxu0
    %9668 = vdwg.mxu0
    %9669 = vrot.lane.b32.xlu0 %v177, 80
    %v9670 = vpop.permute.xlu0 %9669
    %v9673 = vsel %vm1528, %v9564, 0
    %9675 = vmatprep.subr.mxu0 0.0
    %9676 = vmatpush1.msra.mxu0 0.0
    %9677 = vmatprep.subr.mxu0 0.0
    %9678 = vmatpush1.msra.mxu0 0.0
    %9679 = vmatprep.subr.mxu0 0.0
    %9680 = vmatpush1.msra.mxu0 0.0
    %9681 = vmatprep.subr.mxu0 0.0
    %9682 = vmatpush1.msra.mxu0 0.0
    %9683 = vmatprep.subr.mxu0 0.0
    %9684 = vmatpush1.msra.mxu0 0.0
    %9685 = vmatprep.subr.mxu0 0.0
    %9686 = vmatpush1.msra.mxu0 0.0
    %9687 = vmatprep.subr.mxu0 0.0
    %9688 = vmatpush1.msra.mxu0 0.0
    %9689 = vmatprep.subr.mxu0 0.0
    %9690 = vmatpush1.msra.mxu0 0.0
    %9691 = vmatprep.subr.mxu0 0.0
    %9692 = vmatpush1.msra.mxu0 0.0
    %9693 = vmatprep.subr.mxu0 0.0
    %9694 = vmatpush1.msra.mxu0 0.0
    %9695 = vmatprep.subr.mxu0 0.0
    %9696 = vmatpush1.msra.mxu0 0.0
    %9697 = vmatprep.subr.mxu0 0.0
    %9698 = vmatpush1.msra.mxu0 0.0
    %9699 = vmatprep.subr.mxu0 0.0
    %9700 = vmatpush1.msra.mxu0 0.0
    %9701 = vmatprep.subr.mxu0 0.0
    %9702 = vmatpush1.msra.mxu0 0.0
    %9703 = vmatprep.subr.mxu0 0.0
    %9704 = vmatpush1.msra.mxu0 0.0
    %9705 = vmatprep.subr.mxu0 0.0
    %9706 = vmatpush1.msra.mxu0 %v9670
    %9707 = vmatprep.subr.mxu0 0.0
    %9708 = vmatpush2.msra.mxu0 0.0
    %9709 = vmatprep.subr.mxu0 0.0
    %9710 = vmatpush2.msra.mxu0 0.0
    %9711 = vmatprep.subr.mxu0 0.0
    %9712 = vmatpush2.msra.mxu0 0.0
    %9713 = vmatprep.subr.mxu0 0.0
    %9714 = vmatpush2.msra.mxu0 0.0
    %9715 = vmatprep.subr.mxu0 0.0
    %9716 = vmatpush2.msra.mxu0 0.0
    %9717 = vmatprep.subr.mxu0 0.0
    %9718 = vmatpush2.msra.mxu0 0.0
    %9719 = vmatprep.subr.mxu0 0.0
    %9720 = vmatpush2.msra.mxu0 0.0
    %9721 = vmatprep.subr.mxu0 0.0
    %9722 = vmatpush2.msra.mxu0 0.0
    %9723 = vmatprep.subr.mxu0 0.0
    %9724 = vmatpush2.msra.mxu0 0.0
    %9725 = vmatprep.subr.mxu0 0.0
    %9726 = vmatpush2.msra.mxu0 0.0
    %9727 = vmatprep.subr.mxu0 0.0
    %9728 = vmatpush2.msra.mxu0 0.0
    %9729 = vmatprep.subr.mxu0 0.0
    %9730 = vmatpush2.msra.mxu0 0.0
    %9731 = vmatprep.subr.mxu0 0.0
    %9732 = vmatpush2.msra.mxu0 0.0
    %9733 = vmatprep.subr.mxu0 0.0
    %9734 = vmatpush2.msra.mxu0 0.0
    %9735 = vmatprep.subr.mxu0 0.0
    %9736 = vmatpush2.msra.mxu0 0.0
    %9737 = vmatprep.subr.mxu0 0.0
    %9738 = vmatpush2.msra.mxu0 0.0
    %9739 = vmatprep.mubr.f32.mxu0 0.0
    %9740 = vmatmul.mubr.f32.gmra.mxu0 %v9673
    %v9741 = vpop.f32.mrf.mxu0
    %v9742 = vadd.f32 0.0, %v9741
    %v9743 = vpop.f32.mrf.mxu0
    %9744 = vdwg.mxu0
    %9745 = vrot.lane.b32.xlu0 %v183, 80
    %v9746 = vpop.permute.xlu0 %9745
    %v9749 = vsel %vm1528, %v9566, 0
    %9751 = vmatprep.subr.mxu0 0.0
    %9752 = vmatpush1.msra.mxu0 0.0
    %9753 = vmatprep.subr.mxu0 0.0
    %9754 = vmatpush1.msra.mxu0 0.0
    %9755 = vmatprep.subr.mxu0 0.0
    %9756 = vmatpush1.msra.mxu0 0.0
    %9757 = vmatprep.subr.mxu0 0.0
    %9758 = vmatpush1.msra.mxu0 0.0
    %9759 = vmatprep.subr.mxu0 0.0
    %9760 = vmatpush1.msra.mxu0 0.0
    %9761 = vmatprep.subr.mxu0 0.0
    %9762 = vmatpush1.msra.mxu0 0.0
    %9763 = vmatprep.subr.mxu0 0.0
    %9764 = vmatpush1.msra.mxu0 0.0
    %9765 = vmatprep.subr.mxu0 0.0
    %9766 = vmatpush1.msra.mxu0 0.0
    %9767 = vmatprep.subr.mxu0 0.0
    %9768 = vmatpush1.msra.mxu0 0.0
    %9769 = vmatprep.subr.mxu0 0.0
    %9770 = vmatpush1.msra.mxu0 0.0
    %9771 = vmatprep.subr.mxu0 0.0
    %9772 = vmatpush1.msra.mxu0 0.0
    %9773 = vmatprep.subr.mxu0 0.0
    %9774 = vmatpush1.msra.mxu0 0.0
    %9775 = vmatprep.subr.mxu0 0.0
    %9776 = vmatpush1.msra.mxu0 0.0
    %9777 = vmatprep.subr.mxu0 0.0
    %9778 = vmatpush1.msra.mxu0 0.0
    %9779 = vmatprep.subr.mxu0 0.0
    %9780 = vmatpush1.msra.mxu0 0.0
    %9781 = vmatprep.subr.mxu0 0.0
    %9782 = vmatpush1.msra.mxu0 %v9746
    %9783 = vmatprep.subr.mxu0 0.0
    %9784 = vmatpush2.msra.mxu0 0.0
    %9785 = vmatprep.subr.mxu0 0.0
    %9786 = vmatpush2.msra.mxu0 0.0
    %9787 = vmatprep.subr.mxu0 0.0
    %9788 = vmatpush2.msra.mxu0 0.0
    %9789 = vmatprep.subr.mxu0 0.0
    %9790 = vmatpush2.msra.mxu0 0.0
    %9791 = vmatprep.subr.mxu0 0.0
    %9792 = vmatpush2.msra.mxu0 0.0
    %9793 = vmatprep.subr.mxu0 0.0
    %9794 = vmatpush2.msra.mxu0 0.0
    %9795 = vmatprep.subr.mxu0 0.0
    %9796 = vmatpush2.msra.mxu0 0.0
    %9797 = vmatprep.subr.mxu0 0.0
    %9798 = vmatpush2.msra.mxu0 0.0
    %9799 = vmatprep.subr.mxu0 0.0
    %9800 = vmatpush2.msra.mxu0 0.0
    %9801 = vmatprep.subr.mxu0 0.0
    %9802 = vmatpush2.msra.mxu0 0.0
    %9803 = vmatprep.subr.mxu0 0.0
    %9804 = vmatpush2.msra.mxu0 0.0
    %9805 = vmatprep.subr.mxu0 0.0
    %9806 = vmatpush2.msra.mxu0 0.0
    %9807 = vmatprep.subr.mxu0 0.0
    %9808 = vmatpush2.msra.mxu0 0.0
    %9809 = vmatprep.subr.mxu0 0.0
    %9810 = vmatpush2.msra.mxu0 0.0
    %9811 = vmatprep.subr.mxu0 0.0
    %9812 = vmatpush2.msra.mxu0 0.0
    %9813 = vmatprep.subr.mxu0 0.0
    %9814 = vmatpush2.msra.mxu0 0.0
    %9815 = vmatprep.mubr.f32.mxu0 0.0
    %9816 = vmatmul.mubr.f32.gmra.mxu0 %v9749
    %v9817 = vpop.f32.mrf.mxu0
    %v9818 = vadd.f32 0.0, %v9817
    %v9819 = vpop.f32.mrf.mxu0
    %9820 = vdwg.mxu0
    %9821 = vrot.lane.b32.xlu0 %v189, 80
    %v9822 = vpop.permute.xlu0 %9821
    %v9825 = vsel %vm1528, %v9568, 0
    %9827 = vmatprep.subr.mxu0 0.0
    %9828 = vmatpush1.msra.mxu0 0.0
    %9829 = vmatprep.subr.mxu0 0.0
    %9830 = vmatpush1.msra.mxu0 0.0
    %9831 = vmatprep.subr.mxu0 0.0
    %9832 = vmatpush1.msra.mxu0 0.0
    %9833 = vmatprep.subr.mxu0 0.0
    %9834 = vmatpush1.msra.mxu0 0.0
    %9835 = vmatprep.subr.mxu0 0.0
    %9836 = vmatpush1.msra.mxu0 0.0
    %9837 = vmatprep.subr.mxu0 0.0
    %9838 = vmatpush1.msra.mxu0 0.0
    %9839 = vmatprep.subr.mxu0 0.0
    %9840 = vmatpush1.msra.mxu0 0.0
    %9841 = vmatprep.subr.mxu0 0.0
    %9842 = vmatpush1.msra.mxu0 0.0
    %9843 = vmatprep.subr.mxu0 0.0
    %9844 = vmatpush1.msra.mxu0 0.0
    %9845 = vmatprep.subr.mxu0 0.0
    %9846 = vmatpush1.msra.mxu0 0.0
    %9847 = vmatprep.subr.mxu0 0.0
    %9848 = vmatpush1.msra.mxu0 0.0
    %9849 = vmatprep.subr.mxu0 0.0
    %9850 = vmatpush1.msra.mxu0 0.0
    %9851 = vmatprep.subr.mxu0 0.0
    %9852 = vmatpush1.msra.mxu0 0.0
    %9853 = vmatprep.subr.mxu0 0.0
    %9854 = vmatpush1.msra.mxu0 0.0
    %9855 = vmatprep.subr.mxu0 0.0
    %9856 = vmatpush1.msra.mxu0 0.0
    %9857 = vmatprep.subr.mxu0 0.0
    %9858 = vmatpush1.msra.mxu0 %v9822
    %9859 = vmatprep.subr.mxu0 0.0
    %9860 = vmatpush2.msra.mxu0 0.0
    %9861 = vmatprep.subr.mxu0 0.0
    %9862 = vmatpush2.msra.mxu0 0.0
    %9863 = vmatprep.subr.mxu0 0.0
    %9864 = vmatpush2.msra.mxu0 0.0
    %9865 = vmatprep.subr.mxu0 0.0
    %9866 = vmatpush2.msra.mxu0 0.0
    %9867 = vmatprep.subr.mxu0 0.0
    %9868 = vmatpush2.msra.mxu0 0.0
    %9869 = vmatprep.subr.mxu0 0.0
    %9870 = vmatpush2.msra.mxu0 0.0
    %9871 = vmatprep.subr.mxu0 0.0
    %9872 = vmatpush2.msra.mxu0 0.0
    %9873 = vmatprep.subr.mxu0 0.0
    %9874 = vmatpush2.msra.mxu0 0.0
    %9875 = vmatprep.subr.mxu0 0.0
    %9876 = vmatpush2.msra.mxu0 0.0
    %9877 = vmatprep.subr.mxu0 0.0
    %9878 = vmatpush2.msra.mxu0 0.0
    %9879 = vmatprep.subr.mxu0 0.0
    %9880 = vmatpush2.msra.mxu0 0.0
    %9881 = vmatprep.subr.mxu0 0.0
    %9882 = vmatpush2.msra.mxu0 0.0
    %9883 = vmatprep.subr.mxu0 0.0
    %9884 = vmatpush2.msra.mxu0 0.0
    %9885 = vmatprep.subr.mxu0 0.0
    %9886 = vmatpush2.msra.mxu0 0.0
    %9887 = vmatprep.subr.mxu0 0.0
    %9888 = vmatpush2.msra.mxu0 0.0
    %9889 = vmatprep.subr.mxu0 0.0
    %9890 = vmatpush2.msra.mxu0 0.0
    %9891 = vmatprep.mubr.f32.mxu0 0.0
    %9892 = vmatmul.mubr.f32.gmra.mxu0 %v9825
    %v9893 = vpop.f32.mrf.mxu0
    %v9894 = vadd.f32 0.0, %v9893
    %v9895 = vpop.f32.mrf.mxu0
    %9896 = vdwg.mxu0
    %9897 = vrot.lane.b32.xlu0 %v195, 80
    %v9898 = vpop.permute.xlu0 %9897
    %v9901 = vsel %vm1528, %v9570, 0
    %9903 = vmatprep.subr.mxu0 0.0
    %9904 = vmatpush1.msra.mxu0 0.0
    %9905 = vmatprep.subr.mxu0 0.0
    %9906 = vmatpush1.msra.mxu0 0.0
    %9907 = vmatprep.subr.mxu0 0.0
    %9908 = vmatpush1.msra.mxu0 0.0
    %9909 = vmatprep.subr.mxu0 0.0
    %9910 = vmatpush1.msra.mxu0 0.0
    %9911 = vmatprep.subr.mxu0 0.0
    %9912 = vmatpush1.msra.mxu0 0.0
    %9913 = vmatprep.subr.mxu0 0.0
    %9914 = vmatpush1.msra.mxu0 0.0
    %9915 = vmatprep.subr.mxu0 0.0
    %9916 = vmatpush1.msra.mxu0 0.0
    %9917 = vmatprep.subr.mxu0 0.0
    %9918 = vmatpush1.msra.mxu0 0.0
    %9919 = vmatprep.subr.mxu0 0.0
    %9920 = vmatpush1.msra.mxu0 0.0
    %9921 = vmatprep.subr.mxu0 0.0
    %9922 = vmatpush1.msra.mxu0 0.0
    %9923 = vmatprep.subr.mxu0 0.0
    %9924 = vmatpush1.msra.mxu0 0.0
    %9925 = vmatprep.subr.mxu0 0.0
    %9926 = vmatpush1.msra.mxu0 0.0
    %9927 = vmatprep.subr.mxu0 0.0
    %9928 = vmatpush1.msra.mxu0 0.0
    %9929 = vmatprep.subr.mxu0 0.0
    %9930 = vmatpush1.msra.mxu0 0.0
    %9931 = vmatprep.subr.mxu0 0.0
    %9932 = vmatpush1.msra.mxu0 0.0
    %9933 = vmatprep.subr.mxu0 0.0
    %9934 = vmatpush1.msra.mxu0 %v9898
    %9935 = vmatprep.subr.mxu0 0.0
    %9936 = vmatpush2.msra.mxu0 0.0
    %9937 = vmatprep.subr.mxu0 0.0
    %9938 = vmatpush2.msra.mxu0 0.0
    %9939 = vmatprep.subr.mxu0 0.0
    %9940 = vmatpush2.msra.mxu0 0.0
    %9941 = vmatprep.subr.mxu0 0.0
    %9942 = vmatpush2.msra.mxu0 0.0
    %9943 = vmatprep.subr.mxu0 0.0
    %9944 = vmatpush2.msra.mxu0 0.0
    %9945 = vmatprep.subr.mxu0 0.0
    %9946 = vmatpush2.msra.mxu0 0.0
    %9947 = vmatprep.subr.mxu0 0.0
    %9948 = vmatpush2.msra.mxu0 0.0
    %9949 = vmatprep.subr.mxu0 0.0
    %9950 = vmatpush2.msra.mxu0 0.0
    %9951 = vmatprep.subr.mxu0 0.0
    %9952 = vmatpush2.msra.mxu0 0.0
    %9953 = vmatprep.subr.mxu0 0.0
    %9954 = vmatpush2.msra.mxu0 0.0
    %9955 = vmatprep.subr.mxu0 0.0
    %9956 = vmatpush2.msra.mxu0 0.0
    %9957 = vmatprep.subr.mxu0 0.0
    %9958 = vmatpush2.msra.mxu0 0.0
    %9959 = vmatprep.subr.mxu0 0.0
    %9960 = vmatpush2.msra.mxu0 0.0
    %9961 = vmatprep.subr.mxu0 0.0
    %9962 = vmatpush2.msra.mxu0 0.0
    %9963 = vmatprep.subr.mxu0 0.0
    %9964 = vmatpush2.msra.mxu0 0.0
    %9965 = vmatprep.subr.mxu0 0.0
    %9966 = vmatpush2.msra.mxu0 0.0
    %9967 = vmatprep.mubr.f32.mxu0 0.0
    %9968 = vmatmul.mubr.f32.gmra.mxu0 %v9901
    %v9969 = vpop.f32.mrf.mxu0
    %v9970 = vadd.f32 0.0, %v9969
    %v9971 = vpop.f32.mrf.mxu0
    %9972 = vdwg.mxu0
    %9973 = vrot.lane.b32.xlu0 %v201, 80
    %v9974 = vpop.permute.xlu0 %9973
    %v9977 = vsel %vm1528, %v9572, 0
    %9979 = vmatprep.subr.mxu0 0.0
    %9980 = vmatpush1.msra.mxu0 0.0
    %9981 = vmatprep.subr.mxu0 0.0
    %9982 = vmatpush1.msra.mxu0 0.0
    %9983 = vmatprep.subr.mxu0 0.0
    %9984 = vmatpush1.msra.mxu0 0.0
    %9985 = vmatprep.subr.mxu0 0.0
    %9986 = vmatpush1.msra.mxu0 0.0
    %9987 = vmatprep.subr.mxu0 0.0
    %9988 = vmatpush1.msra.mxu0 0.0
    %9989 = vmatprep.subr.mxu0 0.0
    %9990 = vmatpush1.msra.mxu0 0.0
    %9991 = vmatprep.subr.mxu0 0.0
    %9992 = vmatpush1.msra.mxu0 0.0
    %9993 = vmatprep.subr.mxu0 0.0
    %9994 = vmatpush1.msra.mxu0 0.0
    %9995 = vmatprep.subr.mxu0 0.0
    %9996 = vmatpush1.msra.mxu0 0.0
    %9997 = vmatprep.subr.mxu0 0.0
    %9998 = vmatpush1.msra.mxu0 0.0
    %9999 = vmatprep.subr.mxu0 0.0
    %10000 = vmatpush1.msra.mxu0 0.0
    %10001 = vmatprep.subr.mxu0 0.0
    %10002 = vmatpush1.msra.mxu0 0.0
    %10003 = vmatprep.subr.mxu0 0.0
    %10004 = vmatpush1.msra.mxu0 0.0
    %10005 = vmatprep.subr.mxu0 0.0
    %10006 = vmatpush1.msra.mxu0 0.0
    %10007 = vmatprep.subr.mxu0 0.0
    %10008 = vmatpush1.msra.mxu0 0.0
    %10009 = vmatprep.subr.mxu0 0.0
    %10010 = vmatpush1.msra.mxu0 %v9974
    %10011 = vmatprep.subr.mxu0 0.0
    %10012 = vmatpush2.msra.mxu0 0.0
    %10013 = vmatprep.subr.mxu0 0.0
    %10014 = vmatpush2.msra.mxu0 0.0
    %10015 = vmatprep.subr.mxu0 0.0
    %10016 = vmatpush2.msra.mxu0 0.0
    %10017 = vmatprep.subr.mxu0 0.0
    %10018 = vmatpush2.msra.mxu0 0.0
    %10019 = vmatprep.subr.mxu0 0.0
    %10020 = vmatpush2.msra.mxu0 0.0
    %10021 = vmatprep.subr.mxu0 0.0
    %10022 = vmatpush2.msra.mxu0 0.0
    %10023 = vmatprep.subr.mxu0 0.0
    %10024 = vmatpush2.msra.mxu0 0.0
    %10025 = vmatprep.subr.mxu0 0.0
    %10026 = vmatpush2.msra.mxu0 0.0
    %10027 = vmatprep.subr.mxu0 0.0
    %10028 = vmatpush2.msra.mxu0 0.0
    %10029 = vmatprep.subr.mxu0 0.0
    %10030 = vmatpush2.msra.mxu0 0.0
    %10031 = vmatprep.subr.mxu0 0.0
    %10032 = vmatpush2.msra.mxu0 0.0
    %10033 = vmatprep.subr.mxu0 0.0
    %10034 = vmatpush2.msra.mxu0 0.0
    %10035 = vmatprep.subr.mxu0 0.0
    %10036 = vmatpush2.msra.mxu0 0.0
    %10037 = vmatprep.subr.mxu0 0.0
    %10038 = vmatpush2.msra.mxu0 0.0
    %10039 = vmatprep.subr.mxu0 0.0
    %10040 = vmatpush2.msra.mxu0 0.0
    %10041 = vmatprep.subr.mxu0 0.0
    %10042 = vmatpush2.msra.mxu0 0.0
    %10043 = vmatprep.mubr.f32.mxu0 0.0
    %10044 = vmatmul.mubr.f32.gmra.mxu0 %v9977
    %v10045 = vpop.f32.mrf.mxu0
    %v10046 = vadd.f32 0.0, %v10045
    %v10047 = vpop.f32.mrf.mxu0
    %10048 = vdwg.mxu0
    %10049 = vrot.lane.b32.xlu0 %v207, 80
    %v10050 = vpop.permute.xlu0 %10049
    %v10053 = vsel %vm1528, %v9574, 0
    %10055 = vmatprep.subr.mxu0 0.0
    %10056 = vmatpush1.msra.mxu0 0.0
    %10057 = vmatprep.subr.mxu0 0.0
    %10058 = vmatpush1.msra.mxu0 0.0
    %10059 = vmatprep.subr.mxu0 0.0
    %10060 = vmatpush1.msra.mxu0 0.0
    %10061 = vmatprep.subr.mxu0 0.0
    %10062 = vmatpush1.msra.mxu0 0.0
    %10063 = vmatprep.subr.mxu0 0.0
    %10064 = vmatpush1.msra.mxu0 0.0
    %10065 = vmatprep.subr.mxu0 0.0
    %10066 = vmatpush1.msra.mxu0 0.0
    %10067 = vmatprep.subr.mxu0 0.0
    %10068 = vmatpush1.msra.mxu0 0.0
    %10069 = vmatprep.subr.mxu0 0.0
    %10070 = vmatpush1.msra.mxu0 0.0
    %10071 = vmatprep.subr.mxu0 0.0
    %10072 = vmatpush1.msra.mxu0 0.0
    %10073 = vmatprep.subr.mxu0 0.0
    %10074 = vmatpush1.msra.mxu0 0.0
    %10075 = vmatprep.subr.mxu0 0.0
    %10076 = vmatpush1.msra.mxu0 0.0
    %10077 = vmatprep.subr.mxu0 0.0
    %10078 = vmatpush1.msra.mxu0 0.0
    %10079 = vmatprep.subr.mxu0 0.0
    %10080 = vmatpush1.msra.mxu0 0.0
    %10081 = vmatprep.subr.mxu0 0.0
    %10082 = vmatpush1.msra.mxu0 0.0
    %10083 = vmatprep.subr.mxu0 0.0
    %10084 = vmatpush1.msra.mxu0 0.0
    %10085 = vmatprep.subr.mxu0 0.0
    %10086 = vmatpush1.msra.mxu0 %v10050
    %10087 = vmatprep.subr.mxu0 0.0
    %10088 = vmatpush2.msra.mxu0 0.0
    %10089 = vmatprep.subr.mxu0 0.0
    %10090 = vmatpush2.msra.mxu0 0.0
    %10091 = vmatprep.subr.mxu0 0.0
    %10092 = vmatpush2.msra.mxu0 0.0
    %10093 = vmatprep.subr.mxu0 0.0
    %10094 = vmatpush2.msra.mxu0 0.0
    %10095 = vmatprep.subr.mxu0 0.0
    %10096 = vmatpush2.msra.mxu0 0.0
    %10097 = vmatprep.subr.mxu0 0.0
    %10098 = vmatpush2.msra.mxu0 0.0
    %10099 = vmatprep.subr.mxu0 0.0
    %10100 = vmatpush2.msra.mxu0 0.0
    %10101 = vmatprep.subr.mxu0 0.0
    %10102 = vmatpush2.msra.mxu0 0.0
    %10103 = vmatprep.subr.mxu0 0.0
    %10104 = vmatpush2.msra.mxu0 0.0
    %10105 = vmatprep.subr.mxu0 0.0
    %10106 = vmatpush2.msra.mxu0 0.0
    %10107 = vmatprep.subr.mxu0 0.0
    %10108 = vmatpush2.msra.mxu0 0.0
    %10109 = vmatprep.subr.mxu0 0.0
    %10110 = vmatpush2.msra.mxu0 0.0
    %10111 = vmatprep.subr.mxu0 0.0
    %10112 = vmatpush2.msra.mxu0 0.0
    %10113 = vmatprep.subr.mxu0 0.0
    %10114 = vmatpush2.msra.mxu0 0.0
    %10115 = vmatprep.subr.mxu0 0.0
    %10116 = vmatpush2.msra.mxu0 0.0
    %10117 = vmatprep.subr.mxu0 0.0
    %10118 = vmatpush2.msra.mxu0 0.0
    %10119 = vmatprep.mubr.f32.mxu0 0.0
    %10120 = vmatmul.mubr.f32.gmra.mxu0 %v10053
    %v10121 = vpop.f32.mrf.mxu0
    %v10122 = vadd.f32 0.0, %v10121
    %v10123 = vpop.f32.mrf.mxu0
    %10124 = vdwg.mxu0
    %10125 = vrot.lane.b32.xlu0 %v213, 80
    %v10126 = vpop.permute.xlu0 %10125
    %v10129 = vsel %vm1528, %v9576, 0
    %10131 = vmatprep.subr.mxu0 0.0
    %10132 = vmatpush1.msra.mxu0 0.0
    %10133 = vmatprep.subr.mxu0 0.0
    %10134 = vmatpush1.msra.mxu0 0.0
    %10135 = vmatprep.subr.mxu0 0.0
    %10136 = vmatpush1.msra.mxu0 0.0
    %10137 = vmatprep.subr.mxu0 0.0
    %10138 = vmatpush1.msra.mxu0 0.0
    %10139 = vmatprep.subr.mxu0 0.0
    %10140 = vmatpush1.msra.mxu0 0.0
    %10141 = vmatprep.subr.mxu0 0.0
    %10142 = vmatpush1.msra.mxu0 0.0
    %10143 = vmatprep.subr.mxu0 0.0
    %10144 = vmatpush1.msra.mxu0 0.0
    %10145 = vmatprep.subr.mxu0 0.0
    %10146 = vmatpush1.msra.mxu0 0.0
    %10147 = vmatprep.subr.mxu0 0.0
    %10148 = vmatpush1.msra.mxu0 0.0
    %10149 = vmatprep.subr.mxu0 0.0
    %10150 = vmatpush1.msra.mxu0 0.0
    %10151 = vmatprep.subr.mxu0 0.0
    %10152 = vmatpush1.msra.mxu0 0.0
    %10153 = vmatprep.subr.mxu0 0.0
    %10154 = vmatpush1.msra.mxu0 0.0
    %10155 = vmatprep.subr.mxu0 0.0
    %10156 = vmatpush1.msra.mxu0 0.0
    %10157 = vmatprep.subr.mxu0 0.0
    %10158 = vmatpush1.msra.mxu0 0.0
    %10159 = vmatprep.subr.mxu0 0.0
    %10160 = vmatpush1.msra.mxu0 0.0
    %10161 = vmatprep.subr.mxu0 0.0
    %10162 = vmatpush1.msra.mxu0 %v10126
    %10163 = vmatprep.subr.mxu0 0.0
    %10164 = vmatpush2.msra.mxu0 0.0
    %10165 = vmatprep.subr.mxu0 0.0
    %10166 = vmatpush2.msra.mxu0 0.0
    %10167 = vmatprep.subr.mxu0 0.0
    %10168 = vmatpush2.msra.mxu0 0.0
    %10169 = vmatprep.subr.mxu0 0.0
    %10170 = vmatpush2.msra.mxu0 0.0
    %10171 = vmatprep.subr.mxu0 0.0
    %10172 = vmatpush2.msra.mxu0 0.0
    %10173 = vmatprep.subr.mxu0 0.0
    %10174 = vmatpush2.msra.mxu0 0.0
    %10175 = vmatprep.subr.mxu0 0.0
    %10176 = vmatpush2.msra.mxu0 0.0
    %10177 = vmatprep.subr.mxu0 0.0
    %10178 = vmatpush2.msra.mxu0 0.0
    %10179 = vmatprep.subr.mxu0 0.0
    %10180 = vmatpush2.msra.mxu0 0.0
    %10181 = vmatprep.subr.mxu0 0.0
    %10182 = vmatpush2.msra.mxu0 0.0
    %10183 = vmatprep.subr.mxu0 0.0
    %10184 = vmatpush2.msra.mxu0 0.0
    %10185 = vmatprep.subr.mxu0 0.0
    %10186 = vmatpush2.msra.mxu0 0.0
    %10187 = vmatprep.subr.mxu0 0.0
    %10188 = vmatpush2.msra.mxu0 0.0
    %10189 = vmatprep.subr.mxu0 0.0
    %10190 = vmatpush2.msra.mxu0 0.0
    %10191 = vmatprep.subr.mxu0 0.0
    %10192 = vmatpush2.msra.mxu0 0.0
    %10193 = vmatprep.subr.mxu0 0.0
    %10194 = vmatpush2.msra.mxu0 0.0
    %10195 = vmatprep.mubr.f32.mxu0 0.0
    %10196 = vmatmul.mubr.f32.gmra.mxu0 %v10129
    %v10197 = vpop.f32.mrf.mxu0
    %v10198 = vadd.f32 0.0, %v10197
    %v10199 = vpop.f32.mrf.mxu0
    %10200 = vdwg.mxu0
    %10201 = vrot.lane.b32.xlu0 %v219, 80
    %v10202 = vpop.permute.xlu0 %10201
    %v10205 = vsel %vm1528, %v9578, 0
    %10207 = vmatprep.subr.mxu0 0.0
    %10208 = vmatpush1.msra.mxu0 0.0
    %10209 = vmatprep.subr.mxu0 0.0
    %10210 = vmatpush1.msra.mxu0 0.0
    %10211 = vmatprep.subr.mxu0 0.0
    %10212 = vmatpush1.msra.mxu0 0.0
    %10213 = vmatprep.subr.mxu0 0.0
    %10214 = vmatpush1.msra.mxu0 0.0
    %10215 = vmatprep.subr.mxu0 0.0
    %10216 = vmatpush1.msra.mxu0 0.0
    %10217 = vmatprep.subr.mxu0 0.0
    %10218 = vmatpush1.msra.mxu0 0.0
    %10219 = vmatprep.subr.mxu0 0.0
    %10220 = vmatpush1.msra.mxu0 0.0
    %10221 = vmatprep.subr.mxu0 0.0
    %10222 = vmatpush1.msra.mxu0 0.0
    %10223 = vmatprep.subr.mxu0 0.0
    %10224 = vmatpush1.msra.mxu0 0.0
    %10225 = vmatprep.subr.mxu0 0.0
    %10226 = vmatpush1.msra.mxu0 0.0
    %10227 = vmatprep.subr.mxu0 0.0
    %10228 = vmatpush1.msra.mxu0 0.0
    %10229 = vmatprep.subr.mxu0 0.0
    %10230 = vmatpush1.msra.mxu0 0.0
    %10231 = vmatprep.subr.mxu0 0.0
    %10232 = vmatpush1.msra.mxu0 0.0
    %10233 = vmatprep.subr.mxu0 0.0
    %10234 = vmatpush1.msra.mxu0 0.0
    %10235 = vmatprep.subr.mxu0 0.0
    %10236 = vmatpush1.msra.mxu0 0.0
    %10237 = vmatprep.subr.mxu0 0.0
    %10238 = vmatpush1.msra.mxu0 %v10202
    %10239 = vmatprep.subr.mxu0 0.0
    %10240 = vmatpush2.msra.mxu0 0.0
    %10241 = vmatprep.subr.mxu0 0.0
    %10242 = vmatpush2.msra.mxu0 0.0
    %10243 = vmatprep.subr.mxu0 0.0
    %10244 = vmatpush2.msra.mxu0 0.0
    %10245 = vmatprep.subr.mxu0 0.0
    %10246 = vmatpush2.msra.mxu0 0.0
    %10247 = vmatprep.subr.mxu0 0.0
    %10248 = vmatpush2.msra.mxu0 0.0
    %10249 = vmatprep.subr.mxu0 0.0
    %10250 = vmatpush2.msra.mxu0 0.0
    %10251 = vmatprep.subr.mxu0 0.0
    %10252 = vmatpush2.msra.mxu0 0.0
    %10253 = vmatprep.subr.mxu0 0.0
    %10254 = vmatpush2.msra.mxu0 0.0
    %10255 = vmatprep.subr.mxu0 0.0
    %10256 = vmatpush2.msra.mxu0 0.0
    %10257 = vmatprep.subr.mxu0 0.0
    %10258 = vmatpush2.msra.mxu0 0.0
    %10259 = vmatprep.subr.mxu0 0.0
    %10260 = vmatpush2.msra.mxu0 0.0
    %10261 = vmatprep.subr.mxu0 0.0
    %10262 = vmatpush2.msra.mxu0 0.0
    %10263 = vmatprep.subr.mxu0 0.0
    %10264 = vmatpush2.msra.mxu0 0.0
    %10265 = vmatprep.subr.mxu0 0.0
    %10266 = vmatpush2.msra.mxu0 0.0
    %10267 = vmatprep.subr.mxu0 0.0
    %10268 = vmatpush2.msra.mxu0 0.0
    %10269 = vmatprep.subr.mxu0 0.0
    %10270 = vmatpush2.msra.mxu0 0.0
    %10271 = vmatprep.mubr.f32.mxu0 0.0
    %10272 = vmatmul.mubr.f32.gmra.mxu0 %v10205
    %v10273 = vpop.f32.mrf.mxu0
    %v10274 = vadd.f32 0.0, %v10273
    %v10275 = vpop.f32.mrf.mxu0
    %10276 = vdwg.mxu0
    %10277 = vrot.lane.b32.xlu0 %v225, 80
    %v10278 = vpop.permute.xlu0 %10277
    %v10281 = vsel %vm1528, %v9580, 0
    %10283 = vmatprep.subr.mxu0 0.0
    %10284 = vmatpush1.msra.mxu0 0.0
    %10285 = vmatprep.subr.mxu0 0.0
    %10286 = vmatpush1.msra.mxu0 0.0
    %10287 = vmatprep.subr.mxu0 0.0
    %10288 = vmatpush1.msra.mxu0 0.0
    %10289 = vmatprep.subr.mxu0 0.0
    %10290 = vmatpush1.msra.mxu0 0.0
    %10291 = vmatprep.subr.mxu0 0.0
    %10292 = vmatpush1.msra.mxu0 0.0
    %10293 = vmatprep.subr.mxu0 0.0
    %10294 = vmatpush1.msra.mxu0 0.0
    %10295 = vmatprep.subr.mxu0 0.0
    %10296 = vmatpush1.msra.mxu0 0.0
    %10297 = vmatprep.subr.mxu0 0.0
    %10298 = vmatpush1.msra.mxu0 0.0
    %10299 = vmatprep.subr.mxu0 0.0
    %10300 = vmatpush1.msra.mxu0 0.0
    %10301 = vmatprep.subr.mxu0 0.0
    %10302 = vmatpush1.msra.mxu0 0.0
    %10303 = vmatprep.subr.mxu0 0.0
    %10304 = vmatpush1.msra.mxu0 0.0
    %10305 = vmatprep.subr.mxu0 0.0
    %10306 = vmatpush1.msra.mxu0 0.0
    %10307 = vmatprep.subr.mxu0 0.0
    %10308 = vmatpush1.msra.mxu0 0.0
    %10309 = vmatprep.subr.mxu0 0.0
    %10310 = vmatpush1.msra.mxu0 0.0
    %10311 = vmatprep.subr.mxu0 0.0
    %10312 = vmatpush1.msra.mxu0 0.0
    %10313 = vmatprep.subr.mxu0 0.0
    %10314 = vmatpush1.msra.mxu0 %v10278
    %10315 = vmatprep.subr.mxu0 0.0
    %10316 = vmatpush2.msra.mxu0 0.0
    %10317 = vmatprep.subr.mxu0 0.0
    %10318 = vmatpush2.msra.mxu0 0.0
    %10319 = vmatprep.subr.mxu0 0.0
    %10320 = vmatpush2.msra.mxu0 0.0
    %10321 = vmatprep.subr.mxu0 0.0
    %10322 = vmatpush2.msra.mxu0 0.0
    %10323 = vmatprep.subr.mxu0 0.0
    %10324 = vmatpush2.msra.mxu0 0.0
    %10325 = vmatprep.subr.mxu0 0.0
    %10326 = vmatpush2.msra.mxu0 0.0
    %10327 = vmatprep.subr.mxu0 0.0
    %10328 = vmatpush2.msra.mxu0 0.0
    %10329 = vmatprep.subr.mxu0 0.0
    %10330 = vmatpush2.msra.mxu0 0.0
    %10331 = vmatprep.subr.mxu0 0.0
    %10332 = vmatpush2.msra.mxu0 0.0
    %10333 = vmatprep.subr.mxu0 0.0
    %10334 = vmatpush2.msra.mxu0 0.0
    %10335 = vmatprep.subr.mxu0 0.0
    %10336 = vmatpush2.msra.mxu0 0.0
    %10337 = vmatprep.subr.mxu0 0.0
    %10338 = vmatpush2.msra.mxu0 0.0
    %10339 = vmatprep.subr.mxu0 0.0
    %10340 = vmatpush2.msra.mxu0 0.0
    %10341 = vmatprep.subr.mxu0 0.0
    %10342 = vmatpush2.msra.mxu0 0.0
    %10343 = vmatprep.subr.mxu0 0.0
    %10344 = vmatpush2.msra.mxu0 0.0
    %10345 = vmatprep.subr.mxu0 0.0
    %10346 = vmatpush2.msra.mxu0 0.0
    %10347 = vmatprep.mubr.f32.mxu0 0.0
    %10348 = vmatmul.mubr.f32.gmra.mxu0 %v10281
    %v10349 = vpop.f32.mrf.mxu0
    %v10350 = vadd.f32 0.0, %v10349
    %v10351 = vpop.f32.mrf.mxu0
    %10352 = vdwg.mxu0
    %10353 = vrot.lane.b32.xlu0 %v231, 80
    %v10354 = vpop.permute.xlu0 %10353
    %v10357 = vsel %vm1528, %v9582, 0
    %10359 = vmatprep.subr.mxu0 0.0
    %10360 = vmatpush1.msra.mxu0 0.0
    %10361 = vmatprep.subr.mxu0 0.0
    %10362 = vmatpush1.msra.mxu0 0.0
    %10363 = vmatprep.subr.mxu0 0.0
    %10364 = vmatpush1.msra.mxu0 0.0
    %10365 = vmatprep.subr.mxu0 0.0
    %10366 = vmatpush1.msra.mxu0 0.0
    %10367 = vmatprep.subr.mxu0 0.0
    %10368 = vmatpush1.msra.mxu0 0.0
    %10369 = vmatprep.subr.mxu0 0.0
    %10370 = vmatpush1.msra.mxu0 0.0
    %10371 = vmatprep.subr.mxu0 0.0
    %10372 = vmatpush1.msra.mxu0 0.0
    %10373 = vmatprep.subr.mxu0 0.0
    %10374 = vmatpush1.msra.mxu0 0.0
    %10375 = vmatprep.subr.mxu0 0.0
    %10376 = vmatpush1.msra.mxu0 0.0
    %10377 = vmatprep.subr.mxu0 0.0
    %10378 = vmatpush1.msra.mxu0 0.0
    %10379 = vmatprep.subr.mxu0 0.0
    %10380 = vmatpush1.msra.mxu0 0.0
    %10381 = vmatprep.subr.mxu0 0.0
    %10382 = vmatpush1.msra.mxu0 0.0
    %10383 = vmatprep.subr.mxu0 0.0
    %10384 = vmatpush1.msra.mxu0 0.0
    %10385 = vmatprep.subr.mxu0 0.0
    %10386 = vmatpush1.msra.mxu0 0.0
    %10387 = vmatprep.subr.mxu0 0.0
    %10388 = vmatpush1.msra.mxu0 0.0
    %10389 = vmatprep.subr.mxu0 0.0
    %10390 = vmatpush1.msra.mxu0 %v10354
    %10391 = vmatprep.subr.mxu0 0.0
    %10392 = vmatpush2.msra.mxu0 0.0
    %10393 = vmatprep.subr.mxu0 0.0
    %10394 = vmatpush2.msra.mxu0 0.0
    %10395 = vmatprep.subr.mxu0 0.0
    %10396 = vmatpush2.msra.mxu0 0.0
    %10397 = vmatprep.subr.mxu0 0.0
    %10398 = vmatpush2.msra.mxu0 0.0
    %10399 = vmatprep.subr.mxu0 0.0
    %10400 = vmatpush2.msra.mxu0 0.0
    %10401 = vmatprep.subr.mxu0 0.0
    %10402 = vmatpush2.msra.mxu0 0.0
    %10403 = vmatprep.subr.mxu0 0.0
    %10404 = vmatpush2.msra.mxu0 0.0
    %10405 = vmatprep.subr.mxu0 0.0
    %10406 = vmatpush2.msra.mxu0 0.0
    %10407 = vmatprep.subr.mxu0 0.0
    %10408 = vmatpush2.msra.mxu0 0.0
    %10409 = vmatprep.subr.mxu0 0.0
    %10410 = vmatpush2.msra.mxu0 0.0
    %10411 = vmatprep.subr.mxu0 0.0
    %10412 = vmatpush2.msra.mxu0 0.0
    %10413 = vmatprep.subr.mxu0 0.0
    %10414 = vmatpush2.msra.mxu0 0.0
    %10415 = vmatprep.subr.mxu0 0.0
    %10416 = vmatpush2.msra.mxu0 0.0
    %10417 = vmatprep.subr.mxu0 0.0
    %10418 = vmatpush2.msra.mxu0 0.0
    %10419 = vmatprep.subr.mxu0 0.0
    %10420 = vmatpush2.msra.mxu0 0.0
    %10421 = vmatprep.subr.mxu0 0.0
    %10422 = vmatpush2.msra.mxu0 0.0
    %10423 = vmatprep.mubr.f32.mxu0 0.0
    %10424 = vmatmul.mubr.f32.gmra.mxu0 %v10357
    %v10425 = vpop.f32.mrf.mxu0
    %v10426 = vadd.f32 0.0, %v10425
    %v10427 = vpop.f32.mrf.mxu0
    %10428 = vdwg.mxu0
    %10429 = vrot.lane.b32.xlu0 %v237, 80
    %v10430 = vpop.permute.xlu0 %10429
    %v10433 = vsel %vm1528, %v9584, 0
    %10435 = vmatprep.subr.mxu0 0.0
    %10436 = vmatpush1.msra.mxu0 0.0
    %10437 = vmatprep.subr.mxu0 0.0
    %10438 = vmatpush1.msra.mxu0 0.0
    %10439 = vmatprep.subr.mxu0 0.0
    %10440 = vmatpush1.msra.mxu0 0.0
    %10441 = vmatprep.subr.mxu0 0.0
    %10442 = vmatpush1.msra.mxu0 0.0
    %10443 = vmatprep.subr.mxu0 0.0
    %10444 = vmatpush1.msra.mxu0 0.0
    %10445 = vmatprep.subr.mxu0 0.0
    %10446 = vmatpush1.msra.mxu0 0.0
    %10447 = vmatprep.subr.mxu0 0.0
    %10448 = vmatpush1.msra.mxu0 0.0
    %10449 = vmatprep.subr.mxu0 0.0
    %10450 = vmatpush1.msra.mxu0 0.0
    %10451 = vmatprep.subr.mxu0 0.0
    %10452 = vmatpush1.msra.mxu0 0.0
    %10453 = vmatprep.subr.mxu0 0.0
    %10454 = vmatpush1.msra.mxu0 0.0
    %10455 = vmatprep.subr.mxu0 0.0
    %10456 = vmatpush1.msra.mxu0 0.0
    %10457 = vmatprep.subr.mxu0 0.0
    %10458 = vmatpush1.msra.mxu0 0.0
    %10459 = vmatprep.subr.mxu0 0.0
    %10460 = vmatpush1.msra.mxu0 0.0
    %10461 = vmatprep.subr.mxu0 0.0
    %10462 = vmatpush1.msra.mxu0 0.0
    %10463 = vmatprep.subr.mxu0 0.0
    %10464 = vmatpush1.msra.mxu0 0.0
    %10465 = vmatprep.subr.mxu0 0.0
    %10466 = vmatpush1.msra.mxu0 %v10430
    %10467 = vmatprep.subr.mxu0 0.0
    %10468 = vmatpush2.msra.mxu0 0.0
    %10469 = vmatprep.subr.mxu0 0.0
    %10470 = vmatpush2.msra.mxu0 0.0
    %10471 = vmatprep.subr.mxu0 0.0
    %10472 = vmatpush2.msra.mxu0 0.0
    %10473 = vmatprep.subr.mxu0 0.0
    %10474 = vmatpush2.msra.mxu0 0.0
    %10475 = vmatprep.subr.mxu0 0.0
    %10476 = vmatpush2.msra.mxu0 0.0
    %10477 = vmatprep.subr.mxu0 0.0
    %10478 = vmatpush2.msra.mxu0 0.0
    %10479 = vmatprep.subr.mxu0 0.0
    %10480 = vmatpush2.msra.mxu0 0.0
    %10481 = vmatprep.subr.mxu0 0.0
    %10482 = vmatpush2.msra.mxu0 0.0
    %10483 = vmatprep.subr.mxu0 0.0
    %10484 = vmatpush2.msra.mxu0 0.0
    %10485 = vmatprep.subr.mxu0 0.0
    %10486 = vmatpush2.msra.mxu0 0.0
    %10487 = vmatprep.subr.mxu0 0.0
    %10488 = vmatpush2.msra.mxu0 0.0
    %10489 = vmatprep.subr.mxu0 0.0
    %10490 = vmatpush2.msra.mxu0 0.0
    %10491 = vmatprep.subr.mxu0 0.0
    %10492 = vmatpush2.msra.mxu0 0.0
    %10493 = vmatprep.subr.mxu0 0.0
    %10494 = vmatpush2.msra.mxu0 0.0
    %10495 = vmatprep.subr.mxu0 0.0
    %10496 = vmatpush2.msra.mxu0 0.0
    %10497 = vmatprep.subr.mxu0 0.0
    %10498 = vmatpush2.msra.mxu0 0.0
    %10499 = vmatprep.mubr.f32.mxu0 0.0
    %10500 = vmatmul.mubr.f32.gmra.mxu0 %v10433
    %v10501 = vpop.f32.mrf.mxu0
    %v10502 = vadd.f32 0.0, %v10501
    %v10503 = vpop.f32.mrf.mxu0
    %10504 = vdwg.mxu0
    %10505 = vrot.lane.b32.xlu0 %v243, 80
    %v10506 = vpop.permute.xlu0 %10505
    %v10509 = vsel %vm1528, %v9586, 0
    %10511 = vmatprep.subr.mxu0 0.0
    %10512 = vmatpush1.msra.mxu0 0.0
    %10513 = vmatprep.subr.mxu0 0.0
    %10514 = vmatpush1.msra.mxu0 0.0
    %10515 = vmatprep.subr.mxu0 0.0
    %10516 = vmatpush1.msra.mxu0 0.0
    %10517 = vmatprep.subr.mxu0 0.0
    %10518 = vmatpush1.msra.mxu0 0.0
    %10519 = vmatprep.subr.mxu0 0.0
    %10520 = vmatpush1.msra.mxu0 0.0
    %10521 = vmatprep.subr.mxu0 0.0
    %10522 = vmatpush1.msra.mxu0 0.0
    %10523 = vmatprep.subr.mxu0 0.0
    %10524 = vmatpush1.msra.mxu0 0.0
    %10525 = vmatprep.subr.mxu0 0.0
    %10526 = vmatpush1.msra.mxu0 0.0
    %10527 = vmatprep.subr.mxu0 0.0
    %10528 = vmatpush1.msra.mxu0 0.0
    %10529 = vmatprep.subr.mxu0 0.0
    %10530 = vmatpush1.msra.mxu0 0.0
    %10531 = vmatprep.subr.mxu0 0.0
    %10532 = vmatpush1.msra.mxu0 0.0
    %10533 = vmatprep.subr.mxu0 0.0
    %10534 = vmatpush1.msra.mxu0 0.0
    %10535 = vmatprep.subr.mxu0 0.0
    %10536 = vmatpush1.msra.mxu0 0.0
    %10537 = vmatprep.subr.mxu0 0.0
    %10538 = vmatpush1.msra.mxu0 0.0
    %10539 = vmatprep.subr.mxu0 0.0
    %10540 = vmatpush1.msra.mxu0 0.0
    %10541 = vmatprep.subr.mxu0 0.0
    %10542 = vmatpush1.msra.mxu0 %v10506
    %10543 = vmatprep.subr.mxu0 0.0
    %10544 = vmatpush2.msra.mxu0 0.0
    %10545 = vmatprep.subr.mxu0 0.0
    %10546 = vmatpush2.msra.mxu0 0.0
    %10547 = vmatprep.subr.mxu0 0.0
    %10548 = vmatpush2.msra.mxu0 0.0
    %10549 = vmatprep.subr.mxu0 0.0
    %10550 = vmatpush2.msra.mxu0 0.0
    %10551 = vmatprep.subr.mxu0 0.0
    %10552 = vmatpush2.msra.mxu0 0.0
    %10553 = vmatprep.subr.mxu0 0.0
    %10554 = vmatpush2.msra.mxu0 0.0
    %10555 = vmatprep.subr.mxu0 0.0
    %10556 = vmatpush2.msra.mxu0 0.0
    %10557 = vmatprep.subr.mxu0 0.0
    %10558 = vmatpush2.msra.mxu0 0.0
    %10559 = vmatprep.subr.mxu0 0.0
    %10560 = vmatpush2.msra.mxu0 0.0
    %10561 = vmatprep.subr.mxu0 0.0
    %10562 = vmatpush2.msra.mxu0 0.0
    %10563 = vmatprep.subr.mxu0 0.0
    %10564 = vmatpush2.msra.mxu0 0.0
    %10565 = vmatprep.subr.mxu0 0.0
    %10566 = vmatpush2.msra.mxu0 0.0
    %10567 = vmatprep.subr.mxu0 0.0
    %10568 = vmatpush2.msra.mxu0 0.0
    %10569 = vmatprep.subr.mxu0 0.0
    %10570 = vmatpush2.msra.mxu0 0.0
    %10571 = vmatprep.subr.mxu0 0.0
    %10572 = vmatpush2.msra.mxu0 0.0
    %10573 = vmatprep.subr.mxu0 0.0
    %10574 = vmatpush2.msra.mxu0 0.0
    %10575 = vmatprep.mubr.f32.mxu0 0.0
    %10576 = vmatmul.mubr.f32.gmra.mxu0 %v10509
    %v10577 = vpop.f32.mrf.mxu0
    %v10578 = vadd.f32 0.0, %v10577
    %v10579 = vpop.f32.mrf.mxu0
    %10580 = vdwg.mxu0
    %10581 = vrot.lane.b32.xlu0 %v249, 80
    %v10582 = vpop.permute.xlu0 %10581
    %v10585 = vsel %vm1528, %v9588, 0
    %10587 = vmatprep.subr.mxu0 0.0
    %10588 = vmatpush1.msra.mxu0 0.0
    %10589 = vmatprep.subr.mxu0 0.0
    %10590 = vmatpush1.msra.mxu0 0.0
    %10591 = vmatprep.subr.mxu0 0.0
    %10592 = vmatpush1.msra.mxu0 0.0
    %10593 = vmatprep.subr.mxu0 0.0
    %10594 = vmatpush1.msra.mxu0 0.0
    %10595 = vmatprep.subr.mxu0 0.0
    %10596 = vmatpush1.msra.mxu0 0.0
    %10597 = vmatprep.subr.mxu0 0.0
    %10598 = vmatpush1.msra.mxu0 0.0
    %10599 = vmatprep.subr.mxu0 0.0
    %10600 = vmatpush1.msra.mxu0 0.0
    %10601 = vmatprep.subr.mxu0 0.0
    %10602 = vmatpush1.msra.mxu0 0.0
    %10603 = vmatprep.subr.mxu0 0.0
    %10604 = vmatpush1.msra.mxu0 0.0
    %10605 = vmatprep.subr.mxu0 0.0
    %10606 = vmatpush1.msra.mxu0 0.0
    %10607 = vmatprep.subr.mxu0 0.0
    %10608 = vmatpush1.msra.mxu0 0.0
    %10609 = vmatprep.subr.mxu0 0.0
    %10610 = vmatpush1.msra.mxu0 0.0
    %10611 = vmatprep.subr.mxu0 0.0
    %10612 = vmatpush1.msra.mxu0 0.0
    %10613 = vmatprep.subr.mxu0 0.0
    %10614 = vmatpush1.msra.mxu0 0.0
    %10615 = vmatprep.subr.mxu0 0.0
    %10616 = vmatpush1.msra.mxu0 0.0
    %10617 = vmatprep.subr.mxu0 0.0
    %10618 = vmatpush1.msra.mxu0 %v10582
    %10619 = vmatprep.subr.mxu0 0.0
    %10620 = vmatpush2.msra.mxu0 0.0
    %10621 = vmatprep.subr.mxu0 0.0
    %10622 = vmatpush2.msra.mxu0 0.0
    %10623 = vmatprep.subr.mxu0 0.0
    %10624 = vmatpush2.msra.mxu0 0.0
    %10625 = vmatprep.subr.mxu0 0.0
    %10626 = vmatpush2.msra.mxu0 0.0
    %10627 = vmatprep.subr.mxu0 0.0
    %10628 = vmatpush2.msra.mxu0 0.0
    %10629 = vmatprep.subr.mxu0 0.0
    %10630 = vmatpush2.msra.mxu0 0.0
    %10631 = vmatprep.subr.mxu0 0.0
    %10632 = vmatpush2.msra.mxu0 0.0
    %10633 = vmatprep.subr.mxu0 0.0
    %10634 = vmatpush2.msra.mxu0 0.0
    %10635 = vmatprep.subr.mxu0 0.0
    %10636 = vmatpush2.msra.mxu0 0.0
    %10637 = vmatprep.subr.mxu0 0.0
    %10638 = vmatpush2.msra.mxu0 0.0
    %10639 = vmatprep.subr.mxu0 0.0
    %10640 = vmatpush2.msra.mxu0 0.0
    %10641 = vmatprep.subr.mxu0 0.0
    %10642 = vmatpush2.msra.mxu0 0.0
    %10643 = vmatprep.subr.mxu0 0.0
    %10644 = vmatpush2.msra.mxu0 0.0
    %10645 = vmatprep.subr.mxu0 0.0
    %10646 = vmatpush2.msra.mxu0 0.0
    %10647 = vmatprep.subr.mxu0 0.0
    %10648 = vmatpush2.msra.mxu0 0.0
    %10649 = vmatprep.subr.mxu0 0.0
    %10650 = vmatpush2.msra.mxu0 0.0
    %10651 = vmatprep.mubr.f32.mxu0 0.0
    %10652 = vmatmul.mubr.f32.gmra.mxu0 %v10585
    %v10653 = vpop.f32.mrf.mxu0
    %v10654 = vadd.f32 0.0, %v10653
    %v10655 = vpop.f32.mrf.mxu0
    %10656 = vdwg.mxu0
    %10657 = vrot.lane.b32.xlu0 %v255, 80
    %v10658 = vpop.permute.xlu0 %10657
    %v10661 = vsel %vm1528, %v9590, 0
    %10663 = vmatprep.subr.mxu0 0.0
    %10664 = vmatpush1.msra.mxu0 0.0
    %10665 = vmatprep.subr.mxu0 0.0
    %10666 = vmatpush1.msra.mxu0 0.0
    %10667 = vmatprep.subr.mxu0 0.0
    %10668 = vmatpush1.msra.mxu0 0.0
    %10669 = vmatprep.subr.mxu0 0.0
    %10670 = vmatpush1.msra.mxu0 0.0
    %10671 = vmatprep.subr.mxu0 0.0
    %10672 = vmatpush1.msra.mxu0 0.0
    %10673 = vmatprep.subr.mxu0 0.0
    %10674 = vmatpush1.msra.mxu0 0.0
    %10675 = vmatprep.subr.mxu0 0.0
    %10676 = vmatpush1.msra.mxu0 0.0
    %10677 = vmatprep.subr.mxu0 0.0
    %10678 = vmatpush1.msra.mxu0 0.0
    %10679 = vmatprep.subr.mxu0 0.0
    %10680 = vmatpush1.msra.mxu0 0.0
    %10681 = vmatprep.subr.mxu0 0.0
    %10682 = vmatpush1.msra.mxu0 0.0
    %10683 = vmatprep.subr.mxu0 0.0
    %10684 = vmatpush1.msra.mxu0 0.0
    %10685 = vmatprep.subr.mxu0 0.0
    %10686 = vmatpush1.msra.mxu0 0.0
    %10687 = vmatprep.subr.mxu0 0.0
    %10688 = vmatpush1.msra.mxu0 0.0
    %10689 = vmatprep.subr.mxu0 0.0
    %10690 = vmatpush1.msra.mxu0 0.0
    %10691 = vmatprep.subr.mxu0 0.0
    %10692 = vmatpush1.msra.mxu0 0.0
    %10693 = vmatprep.subr.mxu0 0.0
    %10694 = vmatpush1.msra.mxu0 %v10658
    %10695 = vmatprep.subr.mxu0 0.0
    %10696 = vmatpush2.msra.mxu0 0.0
    %10697 = vmatprep.subr.mxu0 0.0
    %10698 = vmatpush2.msra.mxu0 0.0
    %10699 = vmatprep.subr.mxu0 0.0
    %10700 = vmatpush2.msra.mxu0 0.0
    %10701 = vmatprep.subr.mxu0 0.0
    %10702 = vmatpush2.msra.mxu0 0.0
    %10703 = vmatprep.subr.mxu0 0.0
    %10704 = vmatpush2.msra.mxu0 0.0
    %10705 = vmatprep.subr.mxu0 0.0
    %10706 = vmatpush2.msra.mxu0 0.0
    %10707 = vmatprep.subr.mxu0 0.0
    %10708 = vmatpush2.msra.mxu0 0.0
    %10709 = vmatprep.subr.mxu0 0.0
    %10710 = vmatpush2.msra.mxu0 0.0
    %10711 = vmatprep.subr.mxu0 0.0
    %10712 = vmatpush2.msra.mxu0 0.0
    %10713 = vmatprep.subr.mxu0 0.0
    %10714 = vmatpush2.msra.mxu0 0.0
    %10715 = vmatprep.subr.mxu0 0.0
    %10716 = vmatpush2.msra.mxu0 0.0
    %10717 = vmatprep.subr.mxu0 0.0
    %10718 = vmatpush2.msra.mxu0 0.0
    %10719 = vmatprep.subr.mxu0 0.0
    %10720 = vmatpush2.msra.mxu0 0.0
    %10721 = vmatprep.subr.mxu0 0.0
    %10722 = vmatpush2.msra.mxu0 0.0
    %10723 = vmatprep.subr.mxu0 0.0
    %10724 = vmatpush2.msra.mxu0 0.0
    %10725 = vmatprep.subr.mxu0 0.0
    %10726 = vmatpush2.msra.mxu0 0.0
    %10727 = vmatprep.mubr.f32.mxu0 0.0
    %10728 = vmatmul.mubr.f32.gmra.mxu0 %v10661
    %v10729 = vpop.f32.mrf.mxu0
    %v10730 = vadd.f32 0.0, %v10729
    %v10731 = vpop.f32.mrf.mxu0
    %10732 = vdwg.mxu0
    %10733 = vrot.lane.b32.xlu0 %v261, 80
    %v10734 = vpop.permute.xlu0 %10733
    %v10737 = vsel %vm1528, %v9592, 0
    %10739 = vmatprep.subr.mxu0 0.0
    %10740 = vmatpush1.msra.mxu0 0.0
    %10741 = vmatprep.subr.mxu0 0.0
    %10742 = vmatpush1.msra.mxu0 0.0
    %10743 = vmatprep.subr.mxu0 0.0
    %10744 = vmatpush1.msra.mxu0 0.0
    %10745 = vmatprep.subr.mxu0 0.0
    %10746 = vmatpush1.msra.mxu0 0.0
    %10747 = vmatprep.subr.mxu0 0.0
    %10748 = vmatpush1.msra.mxu0 0.0
    %10749 = vmatprep.subr.mxu0 0.0
    %10750 = vmatpush1.msra.mxu0 0.0
    %10751 = vmatprep.subr.mxu0 0.0
    %10752 = vmatpush1.msra.mxu0 0.0
    %10753 = vmatprep.subr.mxu0 0.0
    %10754 = vmatpush1.msra.mxu0 0.0
    %10755 = vmatprep.subr.mxu0 0.0
    %10756 = vmatpush1.msra.mxu0 0.0
    %10757 = vmatprep.subr.mxu0 0.0
    %10758 = vmatpush1.msra.mxu0 0.0
    %10759 = vmatprep.subr.mxu0 0.0
    %10760 = vmatpush1.msra.mxu0 0.0
    %10761 = vmatprep.subr.mxu0 0.0
    %10762 = vmatpush1.msra.mxu0 0.0
    %10763 = vmatprep.subr.mxu0 0.0
    %10764 = vmatpush1.msra.mxu0 0.0
    %10765 = vmatprep.subr.mxu0 0.0
    %10766 = vmatpush1.msra.mxu0 0.0
    %10767 = vmatprep.subr.mxu0 0.0
    %10768 = vmatpush1.msra.mxu0 0.0
    %10769 = vmatprep.subr.mxu0 0.0
    %10770 = vmatpush1.msra.mxu0 %v10734
    %10771 = vmatprep.subr.mxu0 0.0
    %10772 = vmatpush2.msra.mxu0 0.0
    %10773 = vmatprep.subr.mxu0 0.0
    %10774 = vmatpush2.msra.mxu0 0.0
    %10775 = vmatprep.subr.mxu0 0.0
    %10776 = vmatpush2.msra.mxu0 0.0
    %10777 = vmatprep.subr.mxu0 0.0
    %10778 = vmatpush2.msra.mxu0 0.0
    %10779 = vmatprep.subr.mxu0 0.0
    %10780 = vmatpush2.msra.mxu0 0.0
    %10781 = vmatprep.subr.mxu0 0.0
    %10782 = vmatpush2.msra.mxu0 0.0
    %10783 = vmatprep.subr.mxu0 0.0
    %10784 = vmatpush2.msra.mxu0 0.0
    %10785 = vmatprep.subr.mxu0 0.0
    %10786 = vmatpush2.msra.mxu0 0.0
    %10787 = vmatprep.subr.mxu0 0.0
    %10788 = vmatpush2.msra.mxu0 0.0
    %10789 = vmatprep.subr.mxu0 0.0
    %10790 = vmatpush2.msra.mxu0 0.0
    %10791 = vmatprep.subr.mxu0 0.0
    %10792 = vmatpush2.msra.mxu0 0.0
    %10793 = vmatprep.subr.mxu0 0.0
    %10794 = vmatpush2.msra.mxu0 0.0
    %10795 = vmatprep.subr.mxu0 0.0
    %10796 = vmatpush2.msra.mxu0 0.0
    %10797 = vmatprep.subr.mxu0 0.0
    %10798 = vmatpush2.msra.mxu0 0.0
    %10799 = vmatprep.subr.mxu0 0.0
    %10800 = vmatpush2.msra.mxu0 0.0
    %10801 = vmatprep.subr.mxu0 0.0
    %10802 = vmatpush2.msra.mxu0 0.0
    %10803 = vmatprep.mubr.f32.mxu0 0.0
    %10804 = vmatmul.mubr.f32.gmra.mxu0 %v10737
    %v10805 = vpop.f32.mrf.mxu0
    %v10806 = vadd.f32 0.0, %v10805
    %v10807 = vpop.f32.mrf.mxu0
    %10808 = vdwg.mxu0
    %10825 = vrot.lane.b32.xlu0 %v4371, 16
    %v10826 = vpop.permute.xlu0 %10825
    %10827 = vrot.lane.b32.xlu0 %v4448, 16
    %v10828 = vpop.permute.xlu0 %10827
    %10829 = vrot.lane.b32.xlu0 %v4525, 16
    %v10830 = vpop.permute.xlu0 %10829
    %10831 = vrot.lane.b32.xlu0 %v4602, 16
    %v10832 = vpop.permute.xlu0 %10831
    %10833 = vrot.lane.b32.xlu0 %v4679, 16
    %v10834 = vpop.permute.xlu0 %10833
    %10835 = vrot.lane.b32.xlu0 %v4756, 16
    %v10836 = vpop.permute.xlu0 %10835
    %10837 = vrot.lane.b32.xlu0 %v4833, 16
    %v10838 = vpop.permute.xlu0 %10837
    %10839 = vrot.lane.b32.xlu0 %v4910, 16
    %v10840 = vpop.permute.xlu0 %10839
    %10841 = vrot.lane.b32.xlu0 %v4987, 16
    %v10842 = vpop.permute.xlu0 %10841
    %10843 = vrot.lane.b32.xlu0 %v5064, 16
    %v10844 = vpop.permute.xlu0 %10843
    %10845 = vrot.lane.b32.xlu0 %v5141, 16
    %v10846 = vpop.permute.xlu0 %10845
    %10847 = vrot.lane.b32.xlu0 %v5218, 16
    %v10848 = vpop.permute.xlu0 %10847
    %10849 = vrot.lane.b32.xlu0 %v5295, 16
    %v10850 = vpop.permute.xlu0 %10849
    %10851 = vrot.lane.b32.xlu0 %v5372, 16
    %v10852 = vpop.permute.xlu0 %10851
    %10853 = vrot.lane.b32.xlu0 %v5449, 16
    %v10854 = vpop.permute.xlu0 %10853
    %10855 = vrot.lane.b32.xlu0 %v5526, 16
    %v10856 = vpop.permute.xlu0 %10855
    %10889 = vrot.lane.b32.xlu0 %v7026, 32
    %v10890 = vpop.permute.xlu0 %10889
    %10891 = vrot.lane.b32.xlu0 %v7102, 32
    %v10892 = vpop.permute.xlu0 %10891
    %10893 = vrot.lane.b32.xlu0 %v7178, 32
    %v10894 = vpop.permute.xlu0 %10893
    %10895 = vrot.lane.b32.xlu0 %v7254, 32
    %v10896 = vpop.permute.xlu0 %10895
    %10897 = vrot.lane.b32.xlu0 %v7330, 32
    %v10898 = vpop.permute.xlu0 %10897
    %10899 = vrot.lane.b32.xlu0 %v7406, 32
    %v10900 = vpop.permute.xlu0 %10899
    %10901 = vrot.lane.b32.xlu0 %v7482, 32
    %v10902 = vpop.permute.xlu0 %10901
    %10903 = vrot.lane.b32.xlu0 %v7558, 32
    %v10904 = vpop.permute.xlu0 %10903
    %10905 = vrot.lane.b32.xlu0 %v7634, 32
    %v10906 = vpop.permute.xlu0 %10905
    %10907 = vrot.lane.b32.xlu0 %v7710, 32
    %v10908 = vpop.permute.xlu0 %10907
    %10909 = vrot.lane.b32.xlu0 %v7786, 32
    %v10910 = vpop.permute.xlu0 %10909
    %10911 = vrot.lane.b32.xlu0 %v7862, 32
    %v10912 = vpop.permute.xlu0 %10911
    %10913 = vrot.lane.b32.xlu0 %v7938, 32
    %v10914 = vpop.permute.xlu0 %10913
    %10915 = vrot.lane.b32.xlu0 %v8014, 32
    %v10916 = vpop.permute.xlu0 %10915
    %10917 = vrot.lane.b32.xlu0 %v8090, 32
    %v10918 = vpop.permute.xlu0 %10917
    %10919 = vrot.lane.b32.xlu0 %v8166, 32
    %v10920 = vpop.permute.xlu0 %10919
    %10953 = vrot.lane.b32.xlu0 %v9666, 48
    %v10954 = vpop.permute.xlu0 %10953
    %10955 = vrot.lane.b32.xlu0 %v9742, 48
    %v10956 = vpop.permute.xlu0 %10955
    %10957 = vrot.lane.b32.xlu0 %v9818, 48
    %v10958 = vpop.permute.xlu0 %10957
    %10959 = vrot.lane.b32.xlu0 %v9894, 48
    %v10960 = vpop.permute.xlu0 %10959
    %10961 = vrot.lane.b32.xlu0 %v9970, 48
    %v10962 = vpop.permute.xlu0 %10961
    %10963 = vrot.lane.b32.xlu0 %v10046, 48
    %v10964 = vpop.permute.xlu0 %10963
    %10965 = vrot.lane.b32.xlu0 %v10122, 48
    %v10966 = vpop.permute.xlu0 %10965
    %10967 = vrot.lane.b32.xlu0 %v10198, 48
    %v10968 = vpop.permute.xlu0 %10967
    %10969 = vrot.lane.b32.xlu0 %v10274, 48
    %v10970 = vpop.permute.xlu0 %10969
    %10971 = vrot.lane.b32.xlu0 %v10350, 48
    %v10972 = vpop.permute.xlu0 %10971
    %10973 = vrot.lane.b32.xlu0 %v10426, 48
    %v10974 = vpop.permute.xlu0 %10973
    %10975 = vrot.lane.b32.xlu0 %v10502, 48
    %v10976 = vpop.permute.xlu0 %10975
    %10977 = vrot.lane.b32.xlu0 %v10578, 48
    %v10978 = vpop.permute.xlu0 %10977
    %10979 = vrot.lane.b32.xlu0 %v10654, 48
    %v10980 = vpop.permute.xlu0 %10979
    %10981 = vrot.lane.b32.xlu0 %v10730, 48
    %v10982 = vpop.permute.xlu0 %10981
    %10983 = vrot.lane.b32.xlu0 %v10806, 48
    %v10984 = vpop.permute.xlu0 %10983
    %v11001 = vsel %vm282, %v1775, %v10826
    %v11002 = vsel %vm282, %v1848, %v10828
    %v11003 = vsel %vm282, %v1921, %v10830
    %v11004 = vsel %vm282, %v1994, %v10832
    %v11005 = vsel %vm282, %v2067, %v10834
    %v11006 = vsel %vm282, %v2140, %v10836
    %v11007 = vsel %vm282, %v2213, %v10838
    %v11008 = vsel %vm282, %v2286, %v10840
    %v11009 = vsel %vm282, %v2359, %v10842
    %v11010 = vsel %vm282, %v2432, %v10844
    %v11011 = vsel %vm282, %v2505, %v10846
    %v11012 = vsel %vm282, %v2578, %v10848
    %v11013 = vsel %vm282, %v2651, %v10850
    %v11014 = vsel %vm282, %v2724, %v10852
    %v11015 = vsel %vm282, %v2797, %v10854
    %v11016 = vsel %vm282, %v2870, %v10856
    %v11017 = vsel %vm53, %v11001, %v10890
    %v11018 = vsel %vm53, %v11002, %v10892
    %v11019 = vsel %vm53, %v11003, %v10894
    %v11020 = vsel %vm53, %v11004, %v10896
    %v11021 = vsel %vm53, %v11005, %v10898
    %v11022 = vsel %vm53, %v11006, %v10900
    %v11023 = vsel %vm53, %v11007, %v10902
    %v11024 = vsel %vm53, %v11008, %v10904
    %v11025 = vsel %vm53, %v11009, %v10906
    %v11026 = vsel %vm53, %v11010, %v10908
    %v11027 = vsel %vm53, %v11011, %v10910
    %v11028 = vsel %vm53, %v11012, %v10912
    %v11029 = vsel %vm53, %v11013, %v10914
    %v11030 = vsel %vm53, %v11014, %v10916
    %v11031 = vsel %vm53, %v11015, %v10918
    %v11032 = vsel %vm53, %v11016, %v10920
    %vm11033 = vcmask 392192
    %v11034 = vsel %vm11033, %v11017, %v10954
    %v11035 = vsel %vm11033, %v11018, %v10956
    %v11036 = vsel %vm11033, %v11019, %v10958
    %v11037 = vsel %vm11033, %v11020, %v10960
    %v11038 = vsel %vm11033, %v11021, %v10962
    %v11039 = vsel %vm11033, %v11022, %v10964
    %v11040 = vsel %vm11033, %v11023, %v10966
    %v11041 = vsel %vm11033, %v11024, %v10968
    %v11042 = vsel %vm11033, %v11025, %v10970
    %v11043 = vsel %vm11033, %v11026, %v10972
    %v11044 = vsel %vm11033, %v11027, %v10974
    %v11045 = vsel %vm11033, %v11028, %v10976
    %v11046 = vsel %vm11033, %v11029, %v10978
    %v11047 = vsel %vm11033, %v11030, %v10980
    %v11048 = vsel %vm11033, %v11031, %v10982
    %v11049 = vsel %vm11033, %v11032, %v10984
    %v11050 = vld [vmem:[%s2] sm:$0xff]
    %v11051 = vld [vmem:[%s2 + $0x8] sm:$0xff]
    %v11052 = vld [vmem:[%s2 + $0x10] sm:$0xff]
    %v11053 = vld [vmem:[%s2 + $0x18] sm:$0xff]
    %v11054 = vld [vmem:[%s2 + $0x20] sm:$0xff]
    %v11055 = vld [vmem:[%s2 + $0x28] sm:$0xff]
    %v11056 = vld [vmem:[%s2 + $0x30] sm:$0xff]
    %v11057 = vld [vmem:[%s2 + $0x38] sm:$0xff]
    %vm11058 = vcmask 523264
    %v11060 = vsel %vm11058, %v11034, 0
    %v11063 = vsel %vm11058, %v11035, 0
    %v11066 = vsel %vm11058, %v11036, 0
    %v11069 = vsel %vm11058, %v11037, 0
    %v11072 = vsel %vm11058, %v11038, 0
    %v11075 = vsel %vm11058, %v11039, 0
    %v11078 = vsel %vm11058, %v11040, 0
    %v11081 = vsel %vm11058, %v11041, 0
    %v11084 = vsel %vm11058, %v11042, 0
    %v11087 = vsel %vm11058, %v11043, 0
    %v11090 = vsel %vm11058, %v11044, 0
    %v11093 = vsel %vm11058, %v11045, 0
    %v11096 = vsel %vm11058, %v11046, 0
    %v11099 = vsel %vm11058, %v11047, 0
    %v11102 = vsel %vm11058, %v11048, 0
    %v11105 = vsel %vm11058, %v11049, 0
    %11107 = vmatprep.subr.mxu0 0.0
    %11108 = vmatpush1.msra.mxu0 0.0
    %11109 = vmatprep.subr.mxu0 0.0
    %11110 = vmatpush1.msra.mxu0 0.0
    %11111 = vmatprep.subr.mxu0 0.0
    %11112 = vmatpush1.msra.mxu0 0.0
    %11113 = vmatprep.subr.mxu0 0.0
    %11114 = vmatpush1.msra.mxu0 0.0
    %11115 = vmatprep.subr.mxu0 0.0
    %11116 = vmatpush1.msra.mxu0 0.0
    %11117 = vmatprep.subr.mxu0 0.0
    %11118 = vmatpush1.msra.mxu0 0.0
    %11119 = vmatprep.subr.mxu0 0.0
    %11120 = vmatpush1.msra.mxu0 0.0
    %11121 = vmatprep.subr.mxu0 0.0
    %11122 = vmatpush1.msra.mxu0 0.0
    %11123 = vmatprep.subr.mxu0 0.0
    %11124 = vmatpush1.msra.mxu0 %v11057
    %11125 = vmatprep.subr.mxu0 0.0
    %11126 = vmatpush1.msra.mxu0 %v11056
    %11127 = vmatprep.subr.mxu0 0.0
    %11128 = vmatpush1.msra.mxu0 %v11055
    %11129 = vmatprep.subr.mxu0 0.0
    %11130 = vmatpush1.msra.mxu0 %v11054
    %11131 = vmatprep.subr.mxu0 0.0
    %11132 = vmatpush1.msra.mxu0 %v11053
    %11133 = vmatprep.subr.mxu0 0.0
    %11134 = vmatpush1.msra.mxu0 %v11052
    %11135 = vmatprep.subr.mxu0 0.0
    %11136 = vmatpush1.msra.mxu0 %v11051
    %11137 = vmatprep.subr.mxu0 0.0
    %11138 = vmatpush1.msra.mxu0 %v11050
    %11139 = vmatprep.subr.mxu0 0.0
    %11140 = vmatpush2.msra.mxu0 0.0
    %11141 = vmatprep.subr.mxu0 0.0
    %11142 = vmatpush2.msra.mxu0 0.0
    %11143 = vmatprep.subr.mxu0 0.0
    %11144 = vmatpush2.msra.mxu0 0.0
    %11145 = vmatprep.subr.mxu0 0.0
    %11146 = vmatpush2.msra.mxu0 0.0
    %11147 = vmatprep.subr.mxu0 0.0
    %11148 = vmatpush2.msra.mxu0 0.0
    %11149 = vmatprep.subr.mxu0 0.0
    %11150 = vmatpush2.msra.mxu0 0.0
    %11151 = vmatprep.subr.mxu0 0.0
    %11152 = vmatpush2.msra.mxu0 0.0
    %11153 = vmatprep.subr.mxu0 0.0
    %11154 = vmatpush2.msra.mxu0 0.0
    %11155 = vmatprep.subr.mxu0 0.0
    %11156 = vmatpush2.msra.mxu0 0.0
    %11157 = vmatprep.subr.mxu0 0.0
    %11158 = vmatpush2.msra.mxu0 0.0
    %11159 = vmatprep.subr.mxu0 0.0
    %11160 = vmatpush2.msra.mxu0 0.0
    %11161 = vmatprep.subr.mxu0 0.0
    %11162 = vmatpush2.msra.mxu0 0.0
    %11163 = vmatprep.subr.mxu0 0.0
    %11164 = vmatpush2.msra.mxu0 0.0
    %11165 = vmatprep.subr.mxu0 0.0
    %11166 = vmatpush2.msra.mxu0 0.0
    %11167 = vmatprep.subr.mxu0 0.0
    %11168 = vmatpush2.msra.mxu0 0.0
    %11169 = vmatprep.subr.mxu0 0.0
    %11170 = vmatpush2.msra.mxu0 0.0
    %11171 = vmatprep.mubr.f32.mxu0 0.0
    %11172 = vmatmul.mubr.f32.gmra.mxu0 %v11060
    %v11173 = vpop.f32.mrf.mxu0
    %v11174 = vadd.f32 0.0, %v11173
    %v11175 = vpop.f32.mrf.mxu0
    %11176 = vmatprep.mubr.f32.mxu0 0.0
    %11177 = vmatmul.mubr.f32.gmra.mxu0 %v11063
    %v11178 = vpop.f32.mrf.mxu0
    %v11179 = vadd.f32 0.0, %v11178
    %v11180 = vpop.f32.mrf.mxu0
    %11181 = vmatprep.mubr.f32.mxu0 0.0
    %11182 = vmatmul.mubr.f32.gmra.mxu0 %v11066
    %v11183 = vpop.f32.mrf.mxu0
    %v11184 = vadd.f32 0.0, %v11183
    %v11185 = vpop.f32.mrf.mxu0
    %11186 = vmatprep.mubr.f32.mxu0 0.0
    %11187 = vmatmul.mubr.f32.gmra.mxu0 %v11069
    %v11188 = vpop.f32.mrf.mxu0
    %v11189 = vadd.f32 0.0, %v11188
    %v11190 = vpop.f32.mrf.mxu0
    %11191 = vmatprep.mubr.f32.mxu0 0.0
    %11192 = vmatmul.mubr.f32.gmra.mxu0 %v11072
    %v11193 = vpop.f32.mrf.mxu0
    %v11194 = vadd.f32 0.0, %v11193
    %v11195 = vpop.f32.mrf.mxu0
    %11196 = vmatprep.mubr.f32.mxu0 0.0
    %11197 = vmatmul.mubr.f32.gmra.mxu0 %v11075
    %v11198 = vpop.f32.mrf.mxu0
    %v11199 = vadd.f32 0.0, %v11198
    %v11200 = vpop.f32.mrf.mxu0
    %11201 = vmatprep.mubr.f32.mxu0 0.0
    %11202 = vmatmul.mubr.f32.gmra.mxu0 %v11078
    %v11203 = vpop.f32.mrf.mxu0
    %v11204 = vadd.f32 0.0, %v11203
    %v11205 = vpop.f32.mrf.mxu0
    %11206 = vmatprep.mubr.f32.mxu0 0.0
    %11207 = vmatmul.mubr.f32.gmra.mxu0 %v11081
    %v11208 = vpop.f32.mrf.mxu0
    %v11209 = vadd.f32 0.0, %v11208
    %v11210 = vpop.f32.mrf.mxu0
    %11211 = vmatprep.mubr.f32.mxu0 0.0
    %11212 = vmatmul.mubr.f32.gmra.mxu0 %v11084
    %v11213 = vpop.f32.mrf.mxu0
    %v11214 = vadd.f32 0.0, %v11213
    %v11215 = vpop.f32.mrf.mxu0
    %11216 = vmatprep.mubr.f32.mxu0 0.0
    %11217 = vmatmul.mubr.f32.gmra.mxu0 %v11087
    %v11218 = vpop.f32.mrf.mxu0
    %v11219 = vadd.f32 0.0, %v11218
    %v11220 = vpop.f32.mrf.mxu0
    %11221 = vmatprep.mubr.f32.mxu0 0.0
    %11222 = vmatmul.mubr.f32.gmra.mxu0 %v11090
    %v11223 = vpop.f32.mrf.mxu0
    %v11224 = vadd.f32 0.0, %v11223
    %v11225 = vpop.f32.mrf.mxu0
    %11226 = vmatprep.mubr.f32.mxu0 0.0
    %11227 = vmatmul.mubr.f32.gmra.mxu0 %v11093
    %v11228 = vpop.f32.mrf.mxu0
    %v11229 = vadd.f32 0.0, %v11228
    %v11230 = vpop.f32.mrf.mxu0
    %11231 = vmatprep.mubr.f32.mxu0 0.0
    %11232 = vmatmul.mubr.f32.gmra.mxu0 %v11096
    %v11233 = vpop.f32.mrf.mxu0
    %v11234 = vadd.f32 0.0, %v11233
    %v11235 = vpop.f32.mrf.mxu0
    %11236 = vmatprep.mubr.f32.mxu0 0.0
    %11237 = vmatmul.mubr.f32.gmra.mxu0 %v11099
    %v11238 = vpop.f32.mrf.mxu0
    %v11239 = vadd.f32 0.0, %v11238
    %v11240 = vpop.f32.mrf.mxu0
    %11241 = vmatprep.mubr.f32.mxu0 0.0
    %11242 = vmatmul.mubr.f32.gmra.mxu0 %v11102
    %v11243 = vpop.f32.mrf.mxu0
    %v11244 = vadd.f32 0.0, %v11243
    %v11245 = vpop.f32.mrf.mxu0
    %11246 = vmatprep.mubr.f32.mxu0 0.0
    %11247 = vmatmul.mubr.f32.gmra.mxu0 %v11105
    %v11248 = vpop.f32.mrf.mxu0
    %v11249 = vadd.f32 0.0, %v11248
    %v11250 = vpop.f32.mrf.mxu0
    %11251 = vdwg.mxu0
    %11252 = vst.msk [vmem:[#allocation5] sm:$0xff] %vm53, %v11174
    %11253 = vst.msk [vmem:[#allocation5 + $0x8] sm:$0xff] %vm53, %v11179
    %11254 = vst.msk [vmem:[#allocation5 + $0x10] sm:$0xff] %vm53, %v11184
    %11255 = vst.msk [vmem:[#allocation5 + $0x18] sm:$0xff] %vm53, %v11189
    %11256 = vst.msk [vmem:[#allocation5 + $0x20] sm:$0xff] %vm53, %v11194
    %11257 = vst.msk [vmem:[#allocation5 + $0x28] sm:$0xff] %vm53, %v11199
    %11258 = vst.msk [vmem:[#allocation5 + $0x30] sm:$0xff] %vm53, %v11204
    %11259 = vst.msk [vmem:[#allocation5 + $0x38] sm:$0xff] %vm53, %v11209
    %11260 = vst.msk [vmem:[#allocation5 + $0x40] sm:$0xff] %vm53, %v11214
    %11261 = vst.msk [vmem:[#allocation5 + $0x48] sm:$0xff] %vm53, %v11219
    %11262 = vst.msk [vmem:[#allocation5 + $0x50] sm:$0xff] %vm53, %v11224
    %11263 = vst.msk [vmem:[#allocation5 + $0x58] sm:$0xff] %vm53, %v11229
    %11264 = vst.msk [vmem:[#allocation5 + $0x60] sm:$0xff] %vm53, %v11234
    %11265 = vst.msk [vmem:[#allocation5 + $0x68] sm:$0xff] %vm53, %v11239
    %11266 = vst.msk [vmem:[#allocation5 + $0x70] sm:$0xff] %vm53, %v11244
    %11267 = vst.msk [vmem:[#allocation5 + $0x78] sm:$0xff] %vm53, %v11249
    // Predicated region
    $region18: #{multi_head_attention.1} parent=1 // pred_check
      _
    $region19: #{multi_head_attention.1} parent=1 // pred_check_branch
      %11269 = sbr.rel (0) target = $region21
    $region20: #{multi_head_attention.1} parent=1 // pred_region
      %s11271 = ssub.s32 2048, 2048
      %11272 = vsyncadd [#allocation4], %s11271
      %s11273 = sshll.u32 [#allocation5], 4
      %s11274 = int_to_ptr.vmem [resolvable:$true] %s11273
      %11279 = dma.vmem_to_hbm [thread:$0]  %s11274, 2048, %s3, [#allocation4], 128, 128, 8
    $region21: #{multi_head_attention.1} parent=1 // pred_fallthru
      _
    // Predicated region
    $region22: #{multi_head_attention.1} parent=1 // pred_check
      _
    $region23: #{multi_head_attention.1} parent=1 // pred_check_branch
      %11281 = sbr.rel (0) target = $region25
    $region24: #{multi_head_attention.1} parent=1 // pred_region
      %11282 = dma.done [#allocation4], 2048
    $region25: #{multi_head_attention.1} parent=1 // pred_fallthru
      _
    %11283 = vsyncpa [#allocation3], 1
    %11284 = vsyncpa [#allocation4], 1

</llo_original>
